<compile_context>
chip_gen: v6e
topology: v6e:2x2x1
jax: 0.10.0
libtpu: 0.0.40
codegen_flags: <defaults>
</compile_context>

<pallas_src>
import functools

import jax
import jax.numpy as jnp
from jax.experimental import pallas as pl
from jax.experimental.pallas import tpu as pltpu

EPS = 1e-5
LANE = 128


def _round_up(x, m):
    return (x + m - 1) // m * m


# --------------------------- conv + stats kernel ----------------------------
def _conv3x3_block_kernel(*refs, H, W, Wpp, pre_affine):
    """One image: (optional scale/shift + relu) -> 3x3 SAME conv -> BN partials.

    refs (pre_affine=False): x_ref, w_ref, y_ref, stats_ref, pbuf
    refs (pre_affine=True):  x_ref, scale_ref, shift_ref, w_ref, y_ref,
                             stats_ref, pbuf
      x_ref:     (1, H, W, C)      f32  input tile (one image)
      w_ref:     (9, C, C)         bf16 conv taps, k = 3*kh + kw
      y_ref:     (1, H, W, C)      f32  conv output (pre-BN)
      stats_ref: (1, 2, C)         f32  per-image [sum, sum-of-squares]
      pbuf:      (3, H+2, Wpp, C)  f32  scratch; pbuf[j, r, w] == x_pad[r, w+j]
    """
    if pre_affine:
        x_ref, scale_ref, shift_ref, w_ref, y_ref, stats_ref, pbuf = refs
    else:
        x_ref, w_ref, y_ref, stats_ref, pbuf = refs

    C = x_ref.shape[-1]

    xb = x_ref[0]                                          # (H, W, C) f32
    if pre_affine:
        # BN1 folded to one FMA + relu, fused into conv2's input.
        xb = jnp.maximum(xb * scale_ref[...] + shift_ref[...], 0.0)

    # ---- build three W-shifted zero-padded copies of the tile in VMEM ------
    # Only the halo strips are zeroed (every step -> megacore-safe); junk
    # columns >= W never reach a valid output column.
    zrow = jnp.zeros((Wpp, C), jnp.float32)
    zcol = jnp.zeros((H, 1, C), jnp.float32)
    for j in range(3):
        pbuf[j, 0] = zrow                                  # top halo row
        pbuf[j, H + 1] = zrow                              # bottom halo row
    pbuf[0, 1:H + 1, 0:1] = zcol                           # left halo (kw=0)
    pbuf[2, 1:H + 1, W - 1:W] = zcol                       # right halo (kw=2)

    pbuf[1, 1:H + 1, 0:W] = xb                             # x_pad[r, w+1]
    pbuf[0, 1:H + 1, 1:W] = xb[:, :W - 1]                  # x_pad[r, w+0]
    pbuf[2, 1:H + 1, 0:W - 1] = xb[:, 1:]                  # x_pad[r, w+2]

    # ---- 9 MXU matmuls over full-width row bands (free slices/reshapes) ----
    acc = jnp.zeros((H * Wpp, C), jnp.float32)
    for kh in range(3):
        for kw in range(3):
            a = pbuf[kw, kh:kh + H].reshape(H * Wpp, C).astype(jnp.bfloat16)
            acc = acc + jnp.dot(a, w_ref[3 * kh + kw],
                                preferred_element_type=jnp.float32)
    y = acc.reshape(H, Wpp, C)[:, :W, :]                   # crop junk columns

    y_ref[0] = y
    stats_ref[0, 0:1, :] = jnp.sum(y, axis=(0, 1), keepdims=True)[0]
    stats_ref[0, 1:2, :] = jnp.sum(y * y, axis=(0, 1), keepdims=True)[0]


# ------------------------ bn2 + residual + relu kernel -----------------------
def _bn_add_relu_kernel(y_ref, x_ref, scale_ref, shift_ref, out_ref):
    out_ref[0] = jnp.maximum(
        y_ref[0] * scale_ref[...] + shift_ref[...] + x_ref[0], 0.0)


# --------------------------------- wrapper ----------------------------------
def _fold_bn(stats, gamma, beta, count):
    """Reduce per-image partials and fold BN into per-channel scale/shift."""
    s = jnp.sum(stats[:, 0, :], axis=0)
    ss = jnp.sum(stats[:, 1, :], axis=0)
    mean = s / count
    var = ss / count - mean * mean                 # biased variance (PyTorch)
    scale = gamma * jax.lax.rsqrt(var + EPS)
    shift = beta - mean * scale
    return scale.reshape(1, -1), shift.reshape(1, -1)


@jax.jit
def basic_block_forward(x_nchw, w1, w2, g1, b1, g2, b2):
    """x_nchw: (N, C, H, W) f32 -> (N, C, H, W) f32 (stride=1, no downsample)."""
    N, C, H, W = x_nchw.shape
    Cp = _round_up(C, LANE)               # lane-dense channels
    Wpp = _round_up(W + 2, 16)            # aligned reshapes for f32 and bf16
    Hp = H + 2

    # NHWC, channels zero-padded to a lane multiple. No spatial padding in HBM.
    x = jnp.transpose(x_nchw, (0, 2, 3, 1)).astype(jnp.float32)
    x = jnp.pad(x, ((0, 0), (0, 0), (0, 0), (0, Cp - C)))
    pad_w = ((0, 0), (0, Cp - C), (0, Cp - C))
    w1p = jnp.pad(w1, pad_w).astype(jnp.bfloat16)
    w2p = jnp.pad(w2, pad_w).astype(jnp.bfloat16)
    g1p = jnp.pad(g1, (0, Cp - C))
    b1p = jnp.pad(b1, (0, Cp - C))
    g2p = jnp.pad(g2, (0, Cp - C))
    b2p = jnp.pad(b2, (0, Cp - C))

    img_spec = pl.BlockSpec((1, H, W, Cp), lambda n: (n, 0, 0, 0))
    w_spec = pl.BlockSpec((9, Cp, Cp), lambda n: (0, 0, 0))
    vec_spec = pl.BlockSpec((1, Cp), lambda n: (0, 0))
    stats_spec = pl.BlockSpec((1, 2, Cp), lambda n: (n, 0, 0))
    cparams = pltpu.CompilerParams(
        dimension_semantics=("parallel",),
        vmem_limit_bytes=32 * 1024 * 1024)
    scratch = [pltpu.VMEM((3, Hp, Wpp, Cp), jnp.float32)]
    conv_out_shape = (jax.ShapeDtypeStruct((N, H, W, Cp), jnp.float32),
                      jax.ShapeDtypeStruct((N, 2, Cp), jnp.float32))

    # ---- pass 1: conv1 + BN1 partial stats ---------------------------------
    y1, stats1 = pl.pallas_call(
        functools.partial(_conv3x3_block_kernel, H=H, W=W, Wpp=Wpp,
                          pre_affine=False),
        grid=(N,),
        in_specs=[img_spec, w_spec],
        out_specs=(img_spec, stats_spec),
        out_shape=conv_out_shape,
        scratch_shapes=scratch,
        compiler_params=cparams,
    )(x, w1p)
    scale1, shift1 = _fold_bn(stats1, g1p, b1p, N * H * W)

    # ---- pass 2: relu(bn1(.)) fused into conv2 + BN2 partial stats ---------
    y2, stats2 = pl.pallas_call(
        functools.partial(_conv3x3_block_kernel, H=H, W=W, Wpp=Wpp,
                          pre_affine=True),
        grid=(N,),
        in_specs=[img_spec, vec_spec, vec_spec, w_spec],
        out_specs=(img_spec, stats_spec),
        out_shape=conv_out_shape,
        scratch_shapes=scratch,
        compiler_params=cparams,
    )(y1, scale1, shift1, w2p)
    scale2, shift2 = _fold_bn(stats2, g2p, b2p, N * H * W)

    # ---- pass 3: bn2 + residual add + relu ----------------------------------
    out = pl.pallas_call(
        _bn_add_relu_kernel,
        grid=(N,),
        in_specs=[img_spec, img_spec, vec_spec, vec_spec],
        out_specs=img_spec,
        out_shape=jax.ShapeDtypeStruct((N, H, W, Cp), jnp.float32),
        compiler_params=cparams,
    )(y2, x, scale2, shift2)

    return jnp.transpose(out[..., :C], (0, 3, 1, 2))


# ---------------------------- pure-JAX reference ----------------------------
def _conv3x3_ref(x_nhwc, w_taps):
    c_in, c_out = w_taps.shape[1], w_taps.shape[2]
    w_hwio = w_taps.reshape(3, 3, c_in, c_out)
    return jax.lax.conv_general_dilated(
        x_nhwc, w_hwio, window_strides=(1, 1), padding="SAME",
        dimension_numbers=("NHWC", "HWIO", "NHWC"))


def _bn_ref(x, g, b):
    m = jnp.mean(x, axis=(0, 1, 2))
    v = jnp.mean((x - m) ** 2, axis=(0, 1, 2))
    return (x - m) * jax.lax.rsqrt(v + EPS) * g + b


def basic_block_ref(x_nchw, w1, w2, g1, b1, g2, b2):
    x = jnp.transpose(x_nchw, (0, 2, 3, 1))
    out = jnp.maximum(_bn_ref(_conv3x3_ref(x, w1), g1, b1), 0.0)
    out = _bn_ref(_conv3x3_ref(out, w2), g2, b2)
    out = jnp.maximum(out + x, 0.0)
    return jnp.transpose(out, (0, 3, 1, 2))


if __name__ == "__main__":
    N, C, H, W = 2, 4, 16, 16   # in_channel = out_channel = 4, stride = 1
    key = jax.random.PRNGKey(0)
    kx, kw1, kw2, kg1, kb1, kg2, kb2 = jax.random.split(key, 7)

    x = jax.random.normal(kx, (N, C, H, W), jnp.float32)
    std = (2.0 / (9 * C)) ** 0.5
    w1 = std * jax.random.normal(kw1, (9, C, C), jnp.float32)   # conv1 taps
    w2 = std * jax.random.normal(kw2, (9, C, C), jnp.float32)   # conv2 taps
    g1 = 1.0 + 0.1 * jax.random.normal(kg1, (C,), jnp.float32)  # bn1 gamma
    b1 = 0.1 * jax.random.normal(kb1, (C,), jnp.float32)        # bn1 beta
    g2 = 1.0 + 0.1 * jax.random.normal(kg2, (C,), jnp.float32)  # bn2 gamma
    b2 = 0.1 * jax.random.normal(kb2, (C,), jnp.float32)        # bn2 beta

    out = jax.block_until_ready(basic_block_forward(x, w1, w2, g1, b1, g2, b2))
    ref = basic_block_ref(x, w1, w2, g1, b1, g2, b2)

    assert out.shape == (N, C, H, W)
    err = float(jnp.max(jnp.abs(out - ref)))
    # bf16 MXU operands (kernel) vs full-f32 reference -> looser tolerance.
    assert err < 5e-2, f"max abs err = {err}"
    print("KERNEL_OK")
</pallas_src>

<mosaic_0001>
module attributes {stable_mosaic.version = 11 : i64} {
  func.func @_conv3x3_block_kernel(%arg0: i32, %arg1: memref<1x16x16x128xf32, #tpu.memory_space<vmem>>, %arg2: memref<9x128x128xbf16, #tpu.memory_space<vmem>>, %arg3: memref<1x16x16x128xf32, #tpu.memory_space<vmem>>, %arg4: memref<1x2x128xf32, #tpu.memory_space<vmem>>, %arg5: memref<3x18x32x128xf32, #tpu.memory_space<vmem>>) attributes {dimension_semantics = [#tpu.dimension_semantics<parallel>], iteration_bounds = array<i64: 2>, scalar_prefetch = 0 : i64, scratch_operands = 1 : i64, tpu.core_type = #tpu.core_type<tc>, window_params = [{transform_indices = @transform_0, window_bounds = array<i64: 1, 16, 16, 128>}, {pipeline_mode = #tpu.pipeline_mode<synchronous>, transform_indices = @transform_1, window_bounds = array<i64: 9, 128, 128>}, {transform_indices = @transform_2, window_bounds = array<i64: 1, 16, 16, 128>}, {transform_indices = @transform_3, window_bounds = array<i64: 1, 2, 128>}]} {
    %c0 = arith.constant 0 : index
    %c0_0 = arith.constant 0 : index
    %c0_1 = arith.constant 0 : index
    %c0_2 = arith.constant 0 : index
    %0 = vector.load %arg1[%c0, %c0_0, %c0_1, %c0_2] : memref<1x16x16x128xf32, #tpu.memory_space<vmem>>, vector<1x16x16x128xf32>
    %1 = vector.shape_cast %0 : vector<1x16x16x128xf32> to vector<16x16x128xf32>
    %cst = arith.constant 0.000000e+00 : f32
    %2 = vector.broadcast %cst : f32 to vector<32x128xf32>
    %cst_3 = arith.constant 0.000000e+00 : f32
    %3 = vector.broadcast %cst_3 : f32 to vector<16x1x128xf32>
    %c0_4 = arith.constant 0 : index
    %c0_5 = arith.constant 0 : index
    %c0_6 = arith.constant 0 : index
    %c0_7 = arith.constant 0 : index
    %4 = vector.load %arg5[%c0_4, %c0_5, %c0_6, %c0_7] : memref<3x18x32x128xf32, #tpu.memory_space<vmem>>, vector<1x1x32x128xf32>
    %5 = vector.shape_cast %4 : vector<1x1x32x128xf32> to vector<32x128xf32>
    %6 = vector.shape_cast %2 : vector<32x128xf32> to vector<1x1x32x128xf32>
    tpu.vector_store %arg5[%c0_4, %c0_5, %c0_6, %c0_7], %6 {strides = array<i32>} : memref<3x18x32x128xf32, #tpu.memory_space<vmem>>, vector<1x1x32x128xf32>,
    %c0_8 = arith.constant 0 : index
    %c17 = arith.constant 17 : index
    %c0_9 = arith.constant 0 : index
    %c0_10 = arith.constant 0 : index
    %7 = vector.load %arg5[%c0_8, %c17, %c0_9, %c0_10] : memref<3x18x32x128xf32, #tpu.memory_space<vmem>>, vector<1x1x32x128xf32>
    %8 = vector.shape_cast %7 : vector<1x1x32x128xf32> to vector<32x128xf32>
    %9 = vector.shape_cast %2 : vector<32x128xf32> to vector<1x1x32x128xf32>
    tpu.vector_store %arg5[%c0_8, %c17, %c0_9, %c0_10], %9 {strides = array<i32>} : memref<3x18x32x128xf32, #tpu.memory_space<vmem>>, vector<1x1x32x128xf32>,
    %c1 = arith.constant 1 : index
    %c0_11 = arith.constant 0 : index
    %c0_12 = arith.constant 0 : index
    %c0_13 = arith.constant 0 : index
    %10 = vector.load %arg5[%c1, %c0_11, %c0_12, %c0_13] : memref<3x18x32x128xf32, #tpu.memory_space<vmem>>, vector<1x1x32x128xf32>
    %11 = vector.shape_cast %10 : vector<1x1x32x128xf32> to vector<32x128xf32>
    %12 = vector.shape_cast %2 : vector<32x128xf32> to vector<1x1x32x128xf32>
    tpu.vector_store %arg5[%c1, %c0_11, %c0_12, %c0_13], %12 {strides = array<i32>} : memref<3x18x32x128xf32, #tpu.memory_space<vmem>>, vector<1x1x32x128xf32>,
    %c1_14 = arith.constant 1 : index
    %c17_15 = arith.constant 17 : index
    %c0_16 = arith.constant 0 : index
    %c0_17 = arith.constant 0 : index
    %13 = vector.load %arg5[%c1_14, %c17_15, %c0_16, %c0_17] : memref<3x18x32x128xf32, #tpu.memory_space<vmem>>, vector<1x1x32x128xf32>
    %14 = vector.shape_cast %13 : vector<1x1x32x128xf32> to vector<32x128xf32>
    %15 = vector.shape_cast %2 : vector<32x128xf32> to vector<1x1x32x128xf32>
    tpu.vector_store %arg5[%c1_14, %c17_15, %c0_16, %c0_17], %15 {strides = array<i32>} : memref<3x18x32x128xf32, #tpu.memory_space<vmem>>, vector<1x1x32x128xf32>,
    %c2 = arith.constant 2 : index
    %c0_18 = arith.constant 0 : index
    %c0_19 = arith.constant 0 : index
    %c0_20 = arith.constant 0 : index
    %16 = vector.load %arg5[%c2, %c0_18, %c0_19, %c0_20] : memref<3x18x32x128xf32, #tpu.memory_space<vmem>>, vector<1x1x32x128xf32>
    %17 = vector.shape_cast %16 : vector<1x1x32x128xf32> to vector<32x128xf32>
    %18 = vector.shape_cast %2 : vector<32x128xf32> to vector<1x1x32x128xf32>
    tpu.vector_store %arg5[%c2, %c0_18, %c0_19, %c0_20], %18 {strides = array<i32>} : memref<3x18x32x128xf32, #tpu.memory_space<vmem>>, vector<1x1x32x128xf32>,
    %c2_21 = arith.constant 2 : index
    %c17_22 = arith.constant 17 : index
    %c0_23 = arith.constant 0 : index
    %c0_24 = arith.constant 0 : index
    %19 = vector.load %arg5[%c2_21, %c17_22, %c0_23, %c0_24] : memref<3x18x32x128xf32, #tpu.memory_space<vmem>>, vector<1x1x32x128xf32>
    %20 = vector.shape_cast %19 : vector<1x1x32x128xf32> to vector<32x128xf32>
    %21 = vector.shape_cast %2 : vector<32x128xf32> to vector<1x1x32x128xf32>
    tpu.vector_store %arg5[%c2_21, %c17_22, %c0_23, %c0_24], %21 {strides = array<i32>} : memref<3x18x32x128xf32, #tpu.memory_space<vmem>>, vector<1x1x32x128xf32>,
    %c0_25 = arith.constant 0 : index
    %c1_26 = arith.constant 1 : index
    %c0_27 = arith.constant 0 : index
    %c0_28 = arith.constant 0 : index
    %22 = vector.load %arg5[%c0_25, %c1_26, %c0_27, %c0_28] : memref<3x18x32x128xf32, #tpu.memory_space<vmem>>, vector<1x16x1x128xf32>
    %23 = vector.shape_cast %22 : vector<1x16x1x128xf32> to vector<16x1x128xf32>
    %24 = vector.shape_cast %3 : vector<16x1x128xf32> to vector<1x16x1x128xf32>
    tpu.vector_store %arg5[%c0_25, %c1_26, %c0_27, %c0_28], %24 {strides = array<i32>} : memref<3x18x32x128xf32, #tpu.memory_space<vmem>>, vector<1x16x1x128xf32>,
    %c2_29 = arith.constant 2 : index
    %c1_30 = arith.constant 1 : index
    %c15 = arith.constant 15 : index
    %c0_31 = arith.constant 0 : index
    %25 = vector.load %arg5[%c2_29, %c1_30, %c15, %c0_31] : memref<3x18x32x128xf32, #tpu.memory_space<vmem>>, vector<1x16x1x128xf32>
    %26 = vector.shape_cast %25 : vector<1x16x1x128xf32> to vector<16x1x128xf32>
    %27 = vector.shape_cast %3 : vector<16x1x128xf32> to vector<1x16x1x128xf32>
    tpu.vector_store %arg5[%c2_29, %c1_30, %c15, %c0_31], %27 {strides = array<i32>} : memref<3x18x32x128xf32, #tpu.memory_space<vmem>>, vector<1x16x1x128xf32>,
    %c1_32 = arith.constant 1 : index
    %c1_33 = arith.constant 1 : index
    %c0_34 = arith.constant 0 : index
    %c0_35 = arith.constant 0 : index
    %28 = vector.load %arg5[%c1_32, %c1_33, %c0_34, %c0_35] : memref<3x18x32x128xf32, #tpu.memory_space<vmem>>, vector<1x16x16x128xf32>
    %29 = vector.shape_cast %28 : vector<1x16x16x128xf32> to vector<16x16x128xf32>
    %30 = vector.shape_cast %1 : vector<16x16x128xf32> to vector<1x16x16x128xf32>
    tpu.vector_store %arg5[%c1_32, %c1_33, %c0_34, %c0_35], %30 {strides = array<i32>} : memref<3x18x32x128xf32, #tpu.memory_space<vmem>>, vector<1x16x16x128xf32>,
    %31 = vector.extract_strided_slice %1 {offsets = [0, 0, 0], sizes = [16, 15, 128], strides = [1, 1, 1]} : vector<16x16x128xf32> to vector<16x15x128xf32>
    %c0_36 = arith.constant 0 : index
    %c1_37 = arith.constant 1 : index
    %c1_38 = arith.constant 1 : index
    %c0_39 = arith.constant 0 : index
    %32 = vector.load %arg5[%c0_36, %c1_37, %c1_38, %c0_39] : memref<3x18x32x128xf32, #tpu.memory_space<vmem>>, vector<1x16x15x128xf32>
    %33 = vector.shape_cast %32 : vector<1x16x15x128xf32> to vector<16x15x128xf32>
    %34 = vector.shape_cast %31 : vector<16x15x128xf32> to vector<1x16x15x128xf32>
    tpu.vector_store %arg5[%c0_36, %c1_37, %c1_38, %c0_39], %34 {strides = array<i32>} : memref<3x18x32x128xf32, #tpu.memory_space<vmem>>, vector<1x16x15x128xf32>,
    %35 = vector.extract_strided_slice %1 {offsets = [0, 1, 0], sizes = [16, 15, 128], strides = [1, 1, 1]} : vector<16x16x128xf32> to vector<16x15x128xf32>
    %c2_40 = arith.constant 2 : index
    %c1_41 = arith.constant 1 : index
    %c0_42 = arith.constant 0 : index
    %c0_43 = arith.constant 0 : index
    %36 = vector.load %arg5[%c2_40, %c1_41, %c0_42, %c0_43] : memref<3x18x32x128xf32, #tpu.memory_space<vmem>>, vector<1x16x15x128xf32>
    %37 = vector.shape_cast %36 : vector<1x16x15x128xf32> to vector<16x15x128xf32>
    %38 = vector.shape_cast %35 : vector<16x15x128xf32> to vector<1x16x15x128xf32>
    tpu.vector_store %arg5[%c2_40, %c1_41, %c0_42, %c0_43], %38 {strides = array<i32>} : memref<3x18x32x128xf32, #tpu.memory_space<vmem>>, vector<1x16x15x128xf32>,
    %cst_44 = arith.constant 0.000000e+00 : f32
    %39 = vector.broadcast %cst_44 : f32 to vector<512x128xf32>
    %c0_45 = arith.constant 0 : index
    %c0_46 = arith.constant 0 : index
    %c0_47 = arith.constant 0 : index
    %c0_48 = arith.constant 0 : index
    %40 = vector.load %arg5[%c0_45, %c0_46, %c0_47, %c0_48] : memref<3x18x32x128xf32, #tpu.memory_space<vmem>>, vector<1x16x32x128xf32>
    %41 = vector.shape_cast %40 : vector<1x16x32x128xf32> to vector<16x32x128xf32>
    %42 = vector.shape_cast %41 : vector<16x32x128xf32> to vector<512x128xf32>
    %43 = arith.truncf %42 : vector<512x128xf32> to vector<512x128xbf16>
    %c0_49 = arith.constant 0 : index
    %c0_50 = arith.constant 0 : index
    %c0_51 = arith.constant 0 : index
    %44 = vector.load %arg2[%c0_49, %c0_50, %c0_51] : memref<9x128x128xbf16, #tpu.memory_space<vmem>>, vector<1x128x128xbf16>
    %45 = vector.shape_cast %44 : vector<1x128x128xbf16> to vector<128x128xbf16>
    %cst_52 = arith.constant dense<0.000000e+00> : vector<512x128xf32>
    %46 = tpu.matmul %43, %45, %cst_52 {dimension_numbers = #tpu.dot_dimension_numbers<[1], [0], [0], [1], [0, 0, 1, 1], [], []>} : vector<512x128xbf16>, vector<128x128xbf16>, vector<512x128xf32> -> vector<512x128xf32>
    %47 = arith.addf %39, %46 : vector<512x128xf32>
    %c1_53 = arith.constant 1 : index
    %c0_54 = arith.constant 0 : index
    %c0_55 = arith.constant 0 : index
    %c0_56 = arith.constant 0 : index
    %48 = vector.load %arg5[%c1_53, %c0_54, %c0_55, %c0_56] : memref<3x18x32x128xf32, #tpu.memory_space<vmem>>, vector<1x16x32x128xf32>
    %49 = vector.shape_cast %48 : vector<1x16x32x128xf32> to vector<16x32x128xf32>
    %50 = vector.shape_cast %49 : vector<16x32x128xf32> to vector<512x128xf32>
    %51 = arith.truncf %50 : vector<512x128xf32> to vector<512x128xbf16>
    %c1_57 = arith.constant 1 : index
    %c0_58 = arith.constant 0 : index
    %c0_59 = arith.constant 0 : index
    %52 = vector.load %arg2[%c1_57, %c0_58, %c0_59] : memref<9x128x128xbf16, #tpu.memory_space<vmem>>, vector<1x128x128xbf16>
    %53 = vector.shape_cast %52 : vector<1x128x128xbf16> to vector<128x128xbf16>
    %cst_60 = arith.constant dense<0.000000e+00> : vector<512x128xf32>
    %54 = tpu.matmul %51, %53, %cst_60 {dimension_numbers = #tpu.dot_dimension_numbers<[1], [0], [0], [1], [0, 0, 1, 1], [], []>} : vector<512x128xbf16>, vector<128x128xbf16>, vector<512x128xf32> -> vector<512x128xf32>
    %55 = arith.addf %47, %54 : vector<512x128xf32>
    %c2_61 = arith.constant 2 : index
    %c0_62 = arith.constant 0 : index
    %c0_63 = arith.constant 0 : index
    %c0_64 = arith.constant 0 : index
    %56 = vector.load %arg5[%c2_61, %c0_62, %c0_63, %c0_64] : memref<3x18x32x128xf32, #tpu.memory_space<vmem>>, vector<1x16x32x128xf32>
    %57 = vector.shape_cast %56 : vector<1x16x32x128xf32> to vector<16x32x128xf32>
    %58 = vector.shape_cast %57 : vector<16x32x128xf32> to vector<512x128xf32>
    %59 = arith.truncf %58 : vector<512x128xf32> to vector<512x128xbf16>
    %c2_65 = arith.constant 2 : index
    %c0_66 = arith.constant 0 : index
    %c0_67 = arith.constant 0 : index
    %60 = vector.load %arg2[%c2_65, %c0_66, %c0_67] : memref<9x128x128xbf16, #tpu.memory_space<vmem>>, vector<1x128x128xbf16>
    %61 = vector.shape_cast %60 : vector<1x128x128xbf16> to vector<128x128xbf16>
    %cst_68 = arith.constant dense<0.000000e+00> : vector<512x128xf32>
    %62 = tpu.matmul %59, %61, %cst_68 {dimension_numbers = #tpu.dot_dimension_numbers<[1], [0], [0], [1], [0, 0, 1, 1], [], []>} : vector<512x128xbf16>, vector<128x128xbf16>, vector<512x128xf32> -> vector<512x128xf32>
    %63 = arith.addf %55, %62 : vector<512x128xf32>
    %c0_69 = arith.constant 0 : index
    %c1_70 = arith.constant 1 : index
    %c0_71 = arith.constant 0 : index
    %c0_72 = arith.constant 0 : index
    %64 = vector.load %arg5[%c0_69, %c1_70, %c0_71, %c0_72] : memref<3x18x32x128xf32, #tpu.memory_space<vmem>>, vector<1x16x32x128xf32>
    %65 = vector.shape_cast %64 : vector<1x16x32x128xf32> to vector<16x32x128xf32>
    %66 = vector.shape_cast %65 : vector<16x32x128xf32> to vector<512x128xf32>
    %67 = arith.truncf %66 : vector<512x128xf32> to vector<512x128xbf16>
    %c3 = arith.constant 3 : index
    %c0_73 = arith.constant 0 : index
    %c0_74 = arith.constant 0 : index
    %68 = vector.load %arg2[%c3, %c0_73, %c0_74] : memref<9x128x128xbf16, #tpu.memory_space<vmem>>, vector<1x128x128xbf16>
    %69 = vector.shape_cast %68 : vector<1x128x128xbf16> to vector<128x128xbf16>
    %cst_75 = arith.constant dense<0.000000e+00> : vector<512x128xf32>
    %70 = tpu.matmul %67, %69, %cst_75 {dimension_numbers = #tpu.dot_dimension_numbers<[1], [0], [0], [1], [0, 0, 1, 1], [], []>} : vector<512x128xbf16>, vector<128x128xbf16>, vector<512x128xf32> -> vector<512x128xf32>
    %71 = arith.addf %63, %70 : vector<512x128xf32>
    %c1_76 = arith.constant 1 : index
    %c1_77 = arith.constant 1 : index
    %c0_78 = arith.constant 0 : index
    %c0_79 = arith.constant 0 : index
    %72 = vector.load %arg5[%c1_76, %c1_77, %c0_78, %c0_79] : memref<3x18x32x128xf32, #tpu.memory_space<vmem>>, vector<1x16x32x128xf32>
    %73 = vector.shape_cast %72 : vector<1x16x32x128xf32> to vector<16x32x128xf32>
    %74 = vector.shape_cast %73 : vector<16x32x128xf32> to vector<512x128xf32>
    %75 = arith.truncf %74 : vector<512x128xf32> to vector<512x128xbf16>
    %c4 = arith.constant 4 : index
    %c0_80 = arith.constant 0 : index
    %c0_81 = arith.constant 0 : index
    %76 = vector.load %arg2[%c4, %c0_80, %c0_81] : memref<9x128x128xbf16, #tpu.memory_space<vmem>>, vector<1x128x128xbf16>
    %77 = vector.shape_cast %76 : vector<1x128x128xbf16> to vector<128x128xbf16>
    %cst_82 = arith.constant dense<0.000000e+00> : vector<512x128xf32>
    %78 = tpu.matmul %75, %77, %cst_82 {dimension_numbers = #tpu.dot_dimension_numbers<[1], [0], [0], [1], [0, 0, 1, 1], [], []>} : vector<512x128xbf16>, vector<128x128xbf16>, vector<512x128xf32> -> vector<512x128xf32>
    %79 = arith.addf %71, %78 : vector<512x128xf32>
    %c2_83 = arith.constant 2 : index
    %c1_84 = arith.constant 1 : index
    %c0_85 = arith.constant 0 : index
    %c0_86 = arith.constant 0 : index
    %80 = vector.load %arg5[%c2_83, %c1_84, %c0_85, %c0_86] : memref<3x18x32x128xf32, #tpu.memory_space<vmem>>, vector<1x16x32x128xf32>
    %81 = vector.shape_cast %80 : vector<1x16x32x128xf32> to vector<16x32x128xf32>
    %82 = vector.shape_cast %81 : vector<16x32x128xf32> to vector<512x128xf32>
    %83 = arith.truncf %82 : vector<512x128xf32> to vector<512x128xbf16>
    %c5 = arith.constant 5 : index
    %c0_87 = arith.constant 0 : index
    %c0_88 = arith.constant 0 : index
    %84 = vector.load %arg2[%c5, %c0_87, %c0_88] : memref<9x128x128xbf16, #tpu.memory_space<vmem>>, vector<1x128x128xbf16>
    %85 = vector.shape_cast %84 : vector<1x128x128xbf16> to vector<128x128xbf16>
    %cst_89 = arith.constant dense<0.000000e+00> : vector<512x128xf32>
    %86 = tpu.matmul %83, %85, %cst_89 {dimension_numbers = #tpu.dot_dimension_numbers<[1], [0], [0], [1], [0, 0, 1, 1], [], []>} : vector<512x128xbf16>, vector<128x128xbf16>, vector<512x128xf32> -> vector<512x128xf32>
    %87 = arith.addf %79, %86 : vector<512x128xf32>
    %c0_90 = arith.constant 0 : index
    %c2_91 = arith.constant 2 : index
    %c0_92 = arith.constant 0 : index
    %c0_93 = arith.constant 0 : index
    %88 = vector.load %arg5[%c0_90, %c2_91, %c0_92, %c0_93] : memref<3x18x32x128xf32, #tpu.memory_space<vmem>>, vector<1x16x32x128xf32>
    %89 = vector.shape_cast %88 : vector<1x16x32x128xf32> to vector<16x32x128xf32>
    %90 = vector.shape_cast %89 : vector<16x32x128xf32> to vector<512x128xf32>
    %91 = arith.truncf %90 : vector<512x128xf32> to vector<512x128xbf16>
    %c6 = arith.constant 6 : index
    %c0_94 = arith.constant 0 : index
    %c0_95 = arith.constant 0 : index
    %92 = vector.load %arg2[%c6, %c0_94, %c0_95] : memref<9x128x128xbf16, #tpu.memory_space<vmem>>, vector<1x128x128xbf16>
    %93 = vector.shape_cast %92 : vector<1x128x128xbf16> to vector<128x128xbf16>
    %cst_96 = arith.constant dense<0.000000e+00> : vector<512x128xf32>
    %94 = tpu.matmul %91, %93, %cst_96 {dimension_numbers = #tpu.dot_dimension_numbers<[1], [0], [0], [1], [0, 0, 1, 1], [], []>} : vector<512x128xbf16>, vector<128x128xbf16>, vector<512x128xf32> -> vector<512x128xf32>
    %95 = arith.addf %87, %94 : vector<512x128xf32>
    %c1_97 = arith.constant 1 : index
    %c2_98 = arith.constant 2 : index
    %c0_99 = arith.constant 0 : index
    %c0_100 = arith.constant 0 : index
    %96 = vector.load %arg5[%c1_97, %c2_98, %c0_99, %c0_100] : memref<3x18x32x128xf32, #tpu.memory_space<vmem>>, vector<1x16x32x128xf32>
    %97 = vector.shape_cast %96 : vector<1x16x32x128xf32> to vector<16x32x128xf32>
    %98 = vector.shape_cast %97 : vector<16x32x128xf32> to vector<512x128xf32>
    %99 = arith.truncf %98 : vector<512x128xf32> to vector<512x128xbf16>
    %c7 = arith.constant 7 : index
    %c0_101 = arith.constant 0 : index
    %c0_102 = arith.constant 0 : index
    %100 = vector.load %arg2[%c7, %c0_101, %c0_102] : memref<9x128x128xbf16, #tpu.memory_space<vmem>>, vector<1x128x128xbf16>
    %101 = vector.shape_cast %100 : vector<1x128x128xbf16> to vector<128x128xbf16>
    %cst_103 = arith.constant dense<0.000000e+00> : vector<512x128xf32>
    %102 = tpu.matmul %99, %101, %cst_103 {dimension_numbers = #tpu.dot_dimension_numbers<[1], [0], [0], [1], [0, 0, 1, 1], [], []>} : vector<512x128xbf16>, vector<128x128xbf16>, vector<512x128xf32> -> vector<512x128xf32>
    %103 = arith.addf %95, %102 : vector<512x128xf32>
    %c2_104 = arith.constant 2 : index
    %c2_105 = arith.constant 2 : index
    %c0_106 = arith.constant 0 : index
    %c0_107 = arith.constant 0 : index
    %104 = vector.load %arg5[%c2_104, %c2_105, %c0_106, %c0_107] : memref<3x18x32x128xf32, #tpu.memory_space<vmem>>, vector<1x16x32x128xf32>
    %105 = vector.shape_cast %104 : vector<1x16x32x128xf32> to vector<16x32x128xf32>
    %106 = vector.shape_cast %105 : vector<16x32x128xf32> to vector<512x128xf32>
    %107 = arith.truncf %106 : vector<512x128xf32> to vector<512x128xbf16>
    %c8 = arith.constant 8 : index
    %c0_108 = arith.constant 0 : index
    %c0_109 = arith.constant 0 : index
    %108 = vector.load %arg2[%c8, %c0_108, %c0_109] : memref<9x128x128xbf16, #tpu.memory_space<vmem>>, vector<1x128x128xbf16>
    %109 = vector.shape_cast %108 : vector<1x128x128xbf16> to vector<128x128xbf16>
    %cst_110 = arith.constant dense<0.000000e+00> : vector<512x128xf32>
    %110 = tpu.matmul %107, %109, %cst_110 {dimension_numbers = #tpu.dot_dimension_numbers<[1], [0], [0], [1], [0, 0, 1, 1], [], []>} : vector<512x128xbf16>, vector<128x128xbf16>, vector<512x128xf32> -> vector<512x128xf32>
    %111 = arith.addf %103, %110 : vector<512x128xf32>
    %112 = vector.shape_cast %111 : vector<512x128xf32> to vector<16x32x128xf32>
    %113 = vector.extract_strided_slice %112 {offsets = [0, 0, 0], sizes = [16, 16, 128], strides = [1, 1, 1]} : vector<16x32x128xf32> to vector<16x16x128xf32>
    %c0_111 = arith.constant 0 : index
    %c0_112 = arith.constant 0 : index
    %c0_113 = arith.constant 0 : index
    %c0_114 = arith.constant 0 : index
    %114 = vector.load %arg3[%c0_111, %c0_112, %c0_113, %c0_114] : memref<1x16x16x128xf32, #tpu.memory_space<vmem>>, vector<1x16x16x128xf32>
    %115 = vector.shape_cast %114 : vector<1x16x16x128xf32> to vector<16x16x128xf32>
    %116 = vector.shape_cast %113 : vector<16x16x128xf32> to vector<1x16x16x128xf32>
    tpu.vector_store %arg3[%c0_111, %c0_112, %c0_113, %c0_114], %116 {strides = array<i32>} : memref<1x16x16x128xf32, #tpu.memory_space<vmem>>, vector<1x16x16x128xf32>,
    %cst_115 = arith.constant dense<0.000000e+00> : vector<128xf32>
    %117 = vector.multi_reduction <add>, %113, %cst_115 [0, 1] : vector<16x16x128xf32> to vector<128xf32>
    %118 = vector.shape_cast %117 : vector<128xf32> to vector<1x1x128xf32>
    %119 = vector.shape_cast %118 : vector<1x1x128xf32> to vector<1x128xf32>
    %c0_116 = arith.constant 0 : index
    %c0_117 = arith.constant 0 : index
    %c0_118 = arith.constant 0 : index
    %120 = vector.load %arg4[%c0_116, %c0_117, %c0_118] : memref<1x2x128xf32, #tpu.memory_space<vmem>>, vector<1x1x128xf32>
    %121 = vector.shape_cast %120 : vector<1x1x128xf32> to vector<1x128xf32>
    %122 = vector.shape_cast %119 : vector<1x128xf32> to vector<1x1x128xf32>
    tpu.vector_store %arg4[%c0_116, %c0_117, %c0_118], %122 {strides = array<i32>} : memref<1x2x128xf32, #tpu.memory_space<vmem>>, vector<1x1x128xf32>,
    %123 = arith.mulf %113, %113 : vector<16x16x128xf32>
    %cst_119 = arith.constant dense<0.000000e+00> : vector<128xf32>
    %124 = vector.multi_reduction <add>, %123, %cst_119 [0, 1] : vector<16x16x128xf32> to vector<128xf32>
    %125 = vector.shape_cast %124 : vector<128xf32> to vector<1x1x128xf32>
    %126 = vector.shape_cast %125 : vector<1x1x128xf32> to vector<1x128xf32>
    %c0_120 = arith.constant 0 : index
    %c1_121 = arith.constant 1 : index
    %c0_122 = arith.constant 0 : index
    %127 = vector.load %arg4[%c0_120, %c1_121, %c0_122] : memref<1x2x128xf32, #tpu.memory_space<vmem>>, vector<1x1x128xf32>
    %128 = vector.shape_cast %127 : vector<1x1x128xf32> to vector<1x128xf32>
    %129 = vector.shape_cast %126 : vector<1x128xf32> to vector<1x1x128xf32>
    tpu.vector_store %arg4[%c0_120, %c1_121, %c0_122], %129 {strides = array<i32>} : memref<1x2x128xf32, #tpu.memory_space<vmem>>, vector<1x1x128xf32>,
    return
  }
  func.func @transform_0(%arg0: i32) -> (i32, i32, i32, i32) {
    %c0_i32 = arith.constant 0 : i32
    %c0_i32_0 = arith.constant 0 : i32
    %c0_i32_1 = arith.constant 0 : i32
    %c0_i32_2 = arith.constant 0 : i32
    return %arg0, %c0_i32, %c0_i32_0, %c0_i32_1 : i32, i32, i32, i32
  }
  func.func @transform_1(%arg0: i32) -> (i32, i32, i32) {
    %c0_i32 = arith.constant 0 : i32
    %c0_i32_0 = arith.constant 0 : i32
    %c0_i32_1 = arith.constant 0 : i32
    %c0_i32_2 = arith.constant 0 : i32
    return %c0_i32, %c0_i32_0, %c0_i32_1 : i32, i32, i32
  }
  func.func @transform_2(%arg0: i32) -> (i32, i32, i32, i32) {
    %c0_i32 = arith.constant 0 : i32
    %c0_i32_0 = arith.constant 0 : i32
    %c0_i32_1 = arith.constant 0 : i32
    %c0_i32_2 = arith.constant 0 : i32
    return %arg0, %c0_i32, %c0_i32_0, %c0_i32_1 : i32, i32, i32, i32
  }
  func.func @transform_3(%arg0: i32) -> (i32, i32, i32) {
    %c0_i32 = arith.constant 0 : i32
    %c0_i32_0 = arith.constant 0 : i32
    %c0_i32_1 = arith.constant 0 : i32
    return %arg0, %c0_i32, %c0_i32_0 : i32, i32, i32
  }
}

module attributes {stable_mosaic.version = 11 : i64} {
  func.func @_conv3x3_block_kernel(%arg0: i32, %arg1: memref<1x16x16x128xf32, #tpu.memory_space<vmem>>, %arg2: memref<1x128xf32, #tpu.memory_space<vmem>>, %arg3: memref<1x128xf32, #tpu.memory_space<vmem>>, %arg4: memref<9x128x128xbf16, #tpu.memory_space<vmem>>, %arg5: memref<1x16x16x128xf32, #tpu.memory_space<vmem>>, %arg6: memref<1x2x128xf32, #tpu.memory_space<vmem>>, %arg7: memref<3x18x32x128xf32, #tpu.memory_space<vmem>>) attributes {dimension_semantics = [#tpu.dimension_semantics<parallel>], iteration_bounds = array<i64: 2>, scalar_prefetch = 0 : i64, scratch_operands = 1 : i64, tpu.core_type = #tpu.core_type<tc>, window_params = [{transform_indices = @transform_0, window_bounds = array<i64: 1, 16, 16, 128>}, {pipeline_mode = #tpu.pipeline_mode<synchronous>, transform_indices = @transform_1, window_bounds = array<i64: 1, 128>}, {pipeline_mode = #tpu.pipeline_mode<synchronous>, transform_indices = @transform_2, window_bounds = array<i64: 1, 128>}, {pipeline_mode = #tpu.pipeline_mode<synchronous>, transform_indices = @transform_3, window_bounds = array<i64: 9, 128, 128>}, {transform_indices = @transform_4, window_bounds = array<i64: 1, 16, 16, 128>}, {transform_indices = @transform_5, window_bounds = array<i64: 1, 2, 128>}]} {
    %c0 = arith.constant 0 : index
    %c0_0 = arith.constant 0 : index
    %c0_1 = arith.constant 0 : index
    %c0_2 = arith.constant 0 : index
    %0 = vector.load %arg1[%c0, %c0_0, %c0_1, %c0_2] : memref<1x16x16x128xf32, #tpu.memory_space<vmem>>, vector<1x16x16x128xf32>
    %1 = vector.shape_cast %0 : vector<1x16x16x128xf32> to vector<16x16x128xf32>
    %c0_3 = arith.constant 0 : index
    %c0_4 = arith.constant 0 : index
    %2 = vector.load %arg2[%c0_3, %c0_4] : memref<1x128xf32, #tpu.memory_space<vmem>>, vector<1x128xf32>
    %3 = vector.shape_cast %2 : vector<1x128xf32> to vector<1x1x128xf32>
    %4 = vector.broadcast %3 : vector<1x1x128xf32> to vector<16x16x128xf32>
    %5 = arith.mulf %1, %4 : vector<16x16x128xf32>
    %c0_5 = arith.constant 0 : index
    %c0_6 = arith.constant 0 : index
    %6 = vector.load %arg3[%c0_5, %c0_6] : memref<1x128xf32, #tpu.memory_space<vmem>>, vector<1x128xf32>
    %7 = vector.shape_cast %6 : vector<1x128xf32> to vector<1x1x128xf32>
    %8 = vector.broadcast %7 : vector<1x1x128xf32> to vector<16x16x128xf32>
    %9 = arith.addf %5, %8 : vector<16x16x128xf32>
    %cst = arith.constant 0.000000e+00 : f32
    %10 = vector.broadcast %cst : f32 to vector<16x16x128xf32>
    %11 = arith.maximumf %9, %10 : vector<16x16x128xf32>
    %cst_7 = arith.constant 0.000000e+00 : f32
    %12 = vector.broadcast %cst_7 : f32 to vector<32x128xf32>
    %cst_8 = arith.constant 0.000000e+00 : f32
    %13 = vector.broadcast %cst_8 : f32 to vector<16x1x128xf32>
    %c0_9 = arith.constant 0 : index
    %c0_10 = arith.constant 0 : index
    %c0_11 = arith.constant 0 : index
    %c0_12 = arith.constant 0 : index
    %14 = vector.load %arg7[%c0_9, %c0_10, %c0_11, %c0_12] : memref<3x18x32x128xf32, #tpu.memory_space<vmem>>, vector<1x1x32x128xf32>
    %15 = vector.shape_cast %14 : vector<1x1x32x128xf32> to vector<32x128xf32>
    %16 = vector.shape_cast %12 : vector<32x128xf32> to vector<1x1x32x128xf32>
    tpu.vector_store %arg7[%c0_9, %c0_10, %c0_11, %c0_12], %16 {strides = array<i32>} : memref<3x18x32x128xf32, #tpu.memory_space<vmem>>, vector<1x1x32x128xf32>,
    %c0_13 = arith.constant 0 : index
    %c17 = arith.constant 17 : index
    %c0_14 = arith.constant 0 : index
    %c0_15 = arith.constant 0 : index
    %17 = vector.load %arg7[%c0_13, %c17, %c0_14, %c0_15] : memref<3x18x32x128xf32, #tpu.memory_space<vmem>>, vector<1x1x32x128xf32>
    %18 = vector.shape_cast %17 : vector<1x1x32x128xf32> to vector<32x128xf32>
    %19 = vector.shape_cast %12 : vector<32x128xf32> to vector<1x1x32x128xf32>
    tpu.vector_store %arg7[%c0_13, %c17, %c0_14, %c0_15], %19 {strides = array<i32>} : memref<3x18x32x128xf32, #tpu.memory_space<vmem>>, vector<1x1x32x128xf32>,
    %c1 = arith.constant 1 : index
    %c0_16 = arith.constant 0 : index
    %c0_17 = arith.constant 0 : index
    %c0_18 = arith.constant 0 : index
    %20 = vector.load %arg7[%c1, %c0_16, %c0_17, %c0_18] : memref<3x18x32x128xf32, #tpu.memory_space<vmem>>, vector<1x1x32x128xf32>
    %21 = vector.shape_cast %20 : vector<1x1x32x128xf32> to vector<32x128xf32>
    %22 = vector.shape_cast %12 : vector<32x128xf32> to vector<1x1x32x128xf32>
    tpu.vector_store %arg7[%c1, %c0_16, %c0_17, %c0_18], %22 {strides = array<i32>} : memref<3x18x32x128xf32, #tpu.memory_space<vmem>>, vector<1x1x32x128xf32>,
    %c1_19 = arith.constant 1 : index
    %c17_20 = arith.constant 17 : index
    %c0_21 = arith.constant 0 : index
    %c0_22 = arith.constant 0 : index
    %23 = vector.load %arg7[%c1_19, %c17_20, %c0_21, %c0_22] : memref<3x18x32x128xf32, #tpu.memory_space<vmem>>, vector<1x1x32x128xf32>
    %24 = vector.shape_cast %23 : vector<1x1x32x128xf32> to vector<32x128xf32>
    %25 = vector.shape_cast %12 : vector<32x128xf32> to vector<1x1x32x128xf32>
    tpu.vector_store %arg7[%c1_19, %c17_20, %c0_21, %c0_22], %25 {strides = array<i32>} : memref<3x18x32x128xf32, #tpu.memory_space<vmem>>, vector<1x1x32x128xf32>,
    %c2 = arith.constant 2 : index
    %c0_23 = arith.constant 0 : index
    %c0_24 = arith.constant 0 : index
    %c0_25 = arith.constant 0 : index
    %26 = vector.load %arg7[%c2, %c0_23, %c0_24, %c0_25] : memref<3x18x32x128xf32, #tpu.memory_space<vmem>>, vector<1x1x32x128xf32>
    %27 = vector.shape_cast %26 : vector<1x1x32x128xf32> to vector<32x128xf32>
    %28 = vector.shape_cast %12 : vector<32x128xf32> to vector<1x1x32x128xf32>
    tpu.vector_store %arg7[%c2, %c0_23, %c0_24, %c0_25], %28 {strides = array<i32>} : memref<3x18x32x128xf32, #tpu.memory_space<vmem>>, vector<1x1x32x128xf32>,
    %c2_26 = arith.constant 2 : index
    %c17_27 = arith.constant 17 : index
    %c0_28 = arith.constant 0 : index
    %c0_29 = arith.constant 0 : index
    %29 = vector.load %arg7[%c2_26, %c17_27, %c0_28, %c0_29] : memref<3x18x32x128xf32, #tpu.memory_space<vmem>>, vector<1x1x32x128xf32>
    %30 = vector.shape_cast %29 : vector<1x1x32x128xf32> to vector<32x128xf32>
    %31 = vector.shape_cast %12 : vector<32x128xf32> to vector<1x1x32x128xf32>
    tpu.vector_store %arg7[%c2_26, %c17_27, %c0_28, %c0_29], %31 {strides = array<i32>} : memref<3x18x32x128xf32, #tpu.memory_space<vmem>>, vector<1x1x32x128xf32>,
    %c0_30 = arith.constant 0 : index
    %c1_31 = arith.constant 1 : index
    %c0_32 = arith.constant 0 : index
    %c0_33 = arith.constant 0 : index
    %32 = vector.load %arg7[%c0_30, %c1_31, %c0_32, %c0_33] : memref<3x18x32x128xf32, #tpu.memory_space<vmem>>, vector<1x16x1x128xf32>
    %33 = vector.shape_cast %32 : vector<1x16x1x128xf32> to vector<16x1x128xf32>
    %34 = vector.shape_cast %13 : vector<16x1x128xf32> to vector<1x16x1x128xf32>
    tpu.vector_store %arg7[%c0_30, %c1_31, %c0_32, %c0_33], %34 {strides = array<i32>} : memref<3x18x32x128xf32, #tpu.memory_space<vmem>>, vector<1x16x1x128xf32>,
    %c2_34 = arith.constant 2 : index
    %c1_35 = arith.constant 1 : index
    %c15 = arith.constant 15 : index
    %c0_36 = arith.constant 0 : index
    %35 = vector.load %arg7[%c2_34, %c1_35, %c15, %c0_36] : memref<3x18x32x128xf32, #tpu.memory_space<vmem>>, vector<1x16x1x128xf32>
    %36 = vector.shape_cast %35 : vector<1x16x1x128xf32> to vector<16x1x128xf32>
    %37 = vector.shape_cast %13 : vector<16x1x128xf32> to vector<1x16x1x128xf32>
    tpu.vector_store %arg7[%c2_34, %c1_35, %c15, %c0_36], %37 {strides = array<i32>} : memref<3x18x32x128xf32, #tpu.memory_space<vmem>>, vector<1x16x1x128xf32>,
    %c1_37 = arith.constant 1 : index
    %c1_38 = arith.constant 1 : index
    %c0_39 = arith.constant 0 : index
    %c0_40 = arith.constant 0 : index
    %38 = vector.load %arg7[%c1_37, %c1_38, %c0_39, %c0_40] : memref<3x18x32x128xf32, #tpu.memory_space<vmem>>, vector<1x16x16x128xf32>
    %39 = vector.shape_cast %38 : vector<1x16x16x128xf32> to vector<16x16x128xf32>
    %40 = vector.shape_cast %11 : vector<16x16x128xf32> to vector<1x16x16x128xf32>
    tpu.vector_store %arg7[%c1_37, %c1_38, %c0_39, %c0_40], %40 {strides = array<i32>} : memref<3x18x32x128xf32, #tpu.memory_space<vmem>>, vector<1x16x16x128xf32>,
    %41 = vector.extract_strided_slice %11 {offsets = [0, 0, 0], sizes = [16, 15, 128], strides = [1, 1, 1]} : vector<16x16x128xf32> to vector<16x15x128xf32>
    %c0_41 = arith.constant 0 : index
    %c1_42 = arith.constant 1 : index
    %c1_43 = arith.constant 1 : index
    %c0_44 = arith.constant 0 : index
    %42 = vector.load %arg7[%c0_41, %c1_42, %c1_43, %c0_44] : memref<3x18x32x128xf32, #tpu.memory_space<vmem>>, vector<1x16x15x128xf32>
    %43 = vector.shape_cast %42 : vector<1x16x15x128xf32> to vector<16x15x128xf32>
    %44 = vector.shape_cast %41 : vector<16x15x128xf32> to vector<1x16x15x128xf32>
    tpu.vector_store %arg7[%c0_41, %c1_42, %c1_43, %c0_44], %44 {strides = array<i32>} : memref<3x18x32x128xf32, #tpu.memory_space<vmem>>, vector<1x16x15x128xf32>,
    %45 = vector.extract_strided_slice %11 {offsets = [0, 1, 0], sizes = [16, 15, 128], strides = [1, 1, 1]} : vector<16x16x128xf32> to vector<16x15x128xf32>
    %c2_45 = arith.constant 2 : index
    %c1_46 = arith.constant 1 : index
    %c0_47 = arith.constant 0 : index
    %c0_48 = arith.constant 0 : index
    %46 = vector.load %arg7[%c2_45, %c1_46, %c0_47, %c0_48] : memref<3x18x32x128xf32, #tpu.memory_space<vmem>>, vector<1x16x15x128xf32>
    %47 = vector.shape_cast %46 : vector<1x16x15x128xf32> to vector<16x15x128xf32>
    %48 = vector.shape_cast %45 : vector<16x15x128xf32> to vector<1x16x15x128xf32>
    tpu.vector_store %arg7[%c2_45, %c1_46, %c0_47, %c0_48], %48 {strides = array<i32>} : memref<3x18x32x128xf32, #tpu.memory_space<vmem>>, vector<1x16x15x128xf32>,
    %cst_49 = arith.constant 0.000000e+00 : f32
    %49 = vector.broadcast %cst_49 : f32 to vector<512x128xf32>
    %c0_50 = arith.constant 0 : index
    %c0_51 = arith.constant 0 : index
    %c0_52 = arith.constant 0 : index
    %c0_53 = arith.constant 0 : index
    %50 = vector.load %arg7[%c0_50, %c0_51, %c0_52, %c0_53] : memref<3x18x32x128xf32, #tpu.memory_space<vmem>>, vector<1x16x32x128xf32>
    %51 = vector.shape_cast %50 : vector<1x16x32x128xf32> to vector<16x32x128xf32>
    %52 = vector.shape_cast %51 : vector<16x32x128xf32> to vector<512x128xf32>
    %53 = arith.truncf %52 : vector<512x128xf32> to vector<512x128xbf16>
    %c0_54 = arith.constant 0 : index
    %c0_55 = arith.constant 0 : index
    %c0_56 = arith.constant 0 : index
    %54 = vector.load %arg4[%c0_54, %c0_55, %c0_56] : memref<9x128x128xbf16, #tpu.memory_space<vmem>>, vector<1x128x128xbf16>
    %55 = vector.shape_cast %54 : vector<1x128x128xbf16> to vector<128x128xbf16>
    %cst_57 = arith.constant dense<0.000000e+00> : vector<512x128xf32>
    %56 = tpu.matmul %53, %55, %cst_57 {dimension_numbers = #tpu.dot_dimension_numbers<[1], [0], [0], [1], [0, 0, 1, 1], [], []>} : vector<512x128xbf16>, vector<128x128xbf16>, vector<512x128xf32> -> vector<512x128xf32>
    %57 = arith.addf %49, %56 : vector<512x128xf32>
    %c1_58 = arith.constant 1 : index
    %c0_59 = arith.constant 0 : index
    %c0_60 = arith.constant 0 : index
    %c0_61 = arith.constant 0 : index
    %58 = vector.load %arg7[%c1_58, %c0_59, %c0_60, %c0_61] : memref<3x18x32x128xf32, #tpu.memory_space<vmem>>, vector<1x16x32x128xf32>
    %59 = vector.shape_cast %58 : vector<1x16x32x128xf32> to vector<16x32x128xf32>
    %60 = vector.shape_cast %59 : vector<16x32x128xf32> to vector<512x128xf32>
    %61 = arith.truncf %60 : vector<512x128xf32> to vector<512x128xbf16>
    %c1_62 = arith.constant 1 : index
    %c0_63 = arith.constant 0 : index
    %c0_64 = arith.constant 0 : index
    %62 = vector.load %arg4[%c1_62, %c0_63, %c0_64] : memref<9x128x128xbf16, #tpu.memory_space<vmem>>, vector<1x128x128xbf16>
    %63 = vector.shape_cast %62 : vector<1x128x128xbf16> to vector<128x128xbf16>
    %cst_65 = arith.constant dense<0.000000e+00> : vector<512x128xf32>
    %64 = tpu.matmul %61, %63, %cst_65 {dimension_numbers = #tpu.dot_dimension_numbers<[1], [0], [0], [1], [0, 0, 1, 1], [], []>} : vector<512x128xbf16>, vector<128x128xbf16>, vector<512x128xf32> -> vector<512x128xf32>
    %65 = arith.addf %57, %64 : vector<512x128xf32>
    %c2_66 = arith.constant 2 : index
    %c0_67 = arith.constant 0 : index
    %c0_68 = arith.constant 0 : index
    %c0_69 = arith.constant 0 : index
    %66 = vector.load %arg7[%c2_66, %c0_67, %c0_68, %c0_69] : memref<3x18x32x128xf32, #tpu.memory_space<vmem>>, vector<1x16x32x128xf32>
    %67 = vector.shape_cast %66 : vector<1x16x32x128xf32> to vector<16x32x128xf32>
    %68 = vector.shape_cast %67 : vector<16x32x128xf32> to vector<512x128xf32>
    %69 = arith.truncf %68 : vector<512x128xf32> to vector<512x128xbf16>
    %c2_70 = arith.constant 2 : index
    %c0_71 = arith.constant 0 : index
    %c0_72 = arith.constant 0 : index
    %70 = vector.load %arg4[%c2_70, %c0_71, %c0_72] : memref<9x128x128xbf16, #tpu.memory_space<vmem>>, vector<1x128x128xbf16>
    %71 = vector.shape_cast %70 : vector<1x128x128xbf16> to vector<128x128xbf16>
    %cst_73 = arith.constant dense<0.000000e+00> : vector<512x128xf32>
    %72 = tpu.matmul %69, %71, %cst_73 {dimension_numbers = #tpu.dot_dimension_numbers<[1], [0], [0], [1], [0, 0, 1, 1], [], []>} : vector<512x128xbf16>, vector<128x128xbf16>, vector<512x128xf32> -> vector<512x128xf32>
    %73 = arith.addf %65, %72 : vector<512x128xf32>
    %c0_74 = arith.constant 0 : index
    %c1_75 = arith.constant 1 : index
    %c0_76 = arith.constant 0 : index
    %c0_77 = arith.constant 0 : index
    %74 = vector.load %arg7[%c0_74, %c1_75, %c0_76, %c0_77] : memref<3x18x32x128xf32, #tpu.memory_space<vmem>>, vector<1x16x32x128xf32>
    %75 = vector.shape_cast %74 : vector<1x16x32x128xf32> to vector<16x32x128xf32>
    %76 = vector.shape_cast %75 : vector<16x32x128xf32> to vector<512x128xf32>
    %77 = arith.truncf %76 : vector<512x128xf32> to vector<512x128xbf16>
    %c3 = arith.constant 3 : index
    %c0_78 = arith.constant 0 : index
    %c0_79 = arith.constant 0 : index
    %78 = vector.load %arg4[%c3, %c0_78, %c0_79] : memref<9x128x128xbf16, #tpu.memory_space<vmem>>, vector<1x128x128xbf16>
    %79 = vector.shape_cast %78 : vector<1x128x128xbf16> to vector<128x128xbf16>
    %cst_80 = arith.constant dense<0.000000e+00> : vector<512x128xf32>
    %80 = tpu.matmul %77, %79, %cst_80 {dimension_numbers = #tpu.dot_dimension_numbers<[1], [0], [0], [1], [0, 0, 1, 1], [], []>} : vector<512x128xbf16>, vector<128x128xbf16>, vector<512x128xf32> -> vector<512x128xf32>
    %81 = arith.addf %73, %80 : vector<512x128xf32>
    %c1_81 = arith.constant 1 : index
    %c1_82 = arith.constant 1 : index
    %c0_83 = arith.constant 0 : index
    %c0_84 = arith.constant 0 : index
    %82 = vector.load %arg7[%c1_81, %c1_82, %c0_83, %c0_84] : memref<3x18x32x128xf32, #tpu.memory_space<vmem>>, vector<1x16x32x128xf32>
    %83 = vector.shape_cast %82 : vector<1x16x32x128xf32> to vector<16x32x128xf32>
    %84 = vector.shape_cast %83 : vector<16x32x128xf32> to vector<512x128xf32>
    %85 = arith.truncf %84 : vector<512x128xf32> to vector<512x128xbf16>
    %c4 = arith.constant 4 : index
    %c0_85 = arith.constant 0 : index
    %c0_86 = arith.constant 0 : index
    %86 = vector.load %arg4[%c4, %c0_85, %c0_86] : memref<9x128x128xbf16, #tpu.memory_space<vmem>>, vector<1x128x128xbf16>
    %87 = vector.shape_cast %86 : vector<1x128x128xbf16> to vector<128x128xbf16>
    %cst_87 = arith.constant dense<0.000000e+00> : vector<512x128xf32>
    %88 = tpu.matmul %85, %87, %cst_87 {dimension_numbers = #tpu.dot_dimension_numbers<[1], [0], [0], [1], [0, 0, 1, 1], [], []>} : vector<512x128xbf16>, vector<128x128xbf16>, vector<512x128xf32> -> vector<512x128xf32>
    %89 = arith.addf %81, %88 : vector<512x128xf32>
    %c2_88 = arith.constant 2 : index
    %c1_89 = arith.constant 1 : index
    %c0_90 = arith.constant 0 : index
    %c0_91 = arith.constant 0 : index
    %90 = vector.load %arg7[%c2_88, %c1_89, %c0_90, %c0_91] : memref<3x18x32x128xf32, #tpu.memory_space<vmem>>, vector<1x16x32x128xf32>
    %91 = vector.shape_cast %90 : vector<1x16x32x128xf32> to vector<16x32x128xf32>
    %92 = vector.shape_cast %91 : vector<16x32x128xf32> to vector<512x128xf32>
    %93 = arith.truncf %92 : vector<512x128xf32> to vector<512x128xbf16>
    %c5 = arith.constant 5 : index
    %c0_92 = arith.constant 0 : index
    %c0_93 = arith.constant 0 : index
    %94 = vector.load %arg4[%c5, %c0_92, %c0_93] : memref<9x128x128xbf16, #tpu.memory_space<vmem>>, vector<1x128x128xbf16>
    %95 = vector.shape_cast %94 : vector<1x128x128xbf16> to vector<128x128xbf16>
    %cst_94 = arith.constant dense<0.000000e+00> : vector<512x128xf32>
    %96 = tpu.matmul %93, %95, %cst_94 {dimension_numbers = #tpu.dot_dimension_numbers<[1], [0], [0], [1], [0, 0, 1, 1], [], []>} : vector<512x128xbf16>, vector<128x128xbf16>, vector<512x128xf32> -> vector<512x128xf32>
    %97 = arith.addf %89, %96 : vector<512x128xf32>
    %c0_95 = arith.constant 0 : index
    %c2_96 = arith.constant 2 : index
    %c0_97 = arith.constant 0 : index
    %c0_98 = arith.constant 0 : index
    %98 = vector.load %arg7[%c0_95, %c2_96, %c0_97, %c0_98] : memref<3x18x32x128xf32, #tpu.memory_space<vmem>>, vector<1x16x32x128xf32>
    %99 = vector.shape_cast %98 : vector<1x16x32x128xf32> to vector<16x32x128xf32>
    %100 = vector.shape_cast %99 : vector<16x32x128xf32> to vector<512x128xf32>
    %101 = arith.truncf %100 : vector<512x128xf32> to vector<512x128xbf16>
    %c6 = arith.constant 6 : index
    %c0_99 = arith.constant 0 : index
    %c0_100 = arith.constant 0 : index
    %102 = vector.load %arg4[%c6, %c0_99, %c0_100] : memref<9x128x128xbf16, #tpu.memory_space<vmem>>, vector<1x128x128xbf16>
    %103 = vector.shape_cast %102 : vector<1x128x128xbf16> to vector<128x128xbf16>
    %cst_101 = arith.constant dense<0.000000e+00> : vector<512x128xf32>
    %104 = tpu.matmul %101, %103, %cst_101 {dimension_numbers = #tpu.dot_dimension_numbers<[1], [0], [0], [1], [0, 0, 1, 1], [], []>} : vector<512x128xbf16>, vector<128x128xbf16>, vector<512x128xf32> -> vector<512x128xf32>
    %105 = arith.addf %97, %104 : vector<512x128xf32>
    %c1_102 = arith.constant 1 : index
    %c2_103 = arith.constant 2 : index
    %c0_104 = arith.constant 0 : index
    %c0_105 = arith.constant 0 : index
    %106 = vector.load %arg7[%c1_102, %c2_103, %c0_104, %c0_105] : memref<3x18x32x128xf32, #tpu.memory_space<vmem>>, vector<1x16x32x128xf32>
    %107 = vector.shape_cast %106 : vector<1x16x32x128xf32> to vector<16x32x128xf32>
    %108 = vector.shape_cast %107 : vector<16x32x128xf32> to vector<512x128xf32>
    %109 = arith.truncf %108 : vector<512x128xf32> to vector<512x128xbf16>
    %c7 = arith.constant 7 : index
    %c0_106 = arith.constant 0 : index
    %c0_107 = arith.constant 0 : index
    %110 = vector.load %arg4[%c7, %c0_106, %c0_107] : memref<9x128x128xbf16, #tpu.memory_space<vmem>>, vector<1x128x128xbf16>
    %111 = vector.shape_cast %110 : vector<1x128x128xbf16> to vector<128x128xbf16>
    %cst_108 = arith.constant dense<0.000000e+00> : vector<512x128xf32>
    %112 = tpu.matmul %109, %111, %cst_108 {dimension_numbers = #tpu.dot_dimension_numbers<[1], [0], [0], [1], [0, 0, 1, 1], [], []>} : vector<512x128xbf16>, vector<128x128xbf16>, vector<512x128xf32> -> vector<512x128xf32>
    %113 = arith.addf %105, %112 : vector<512x128xf32>
    %c2_109 = arith.constant 2 : index
    %c2_110 = arith.constant 2 : index
    %c0_111 = arith.constant 0 : index
    %c0_112 = arith.constant 0 : index
    %114 = vector.load %arg7[%c2_109, %c2_110, %c0_111, %c0_112] : memref<3x18x32x128xf32, #tpu.memory_space<vmem>>, vector<1x16x32x128xf32>
    %115 = vector.shape_cast %114 : vector<1x16x32x128xf32> to vector<16x32x128xf32>
    %116 = vector.shape_cast %115 : vector<16x32x128xf32> to vector<512x128xf32>
    %117 = arith.truncf %116 : vector<512x128xf32> to vector<512x128xbf16>
    %c8 = arith.constant 8 : index
    %c0_113 = arith.constant 0 : index
    %c0_114 = arith.constant 0 : index
    %118 = vector.load %arg4[%c8, %c0_113, %c0_114] : memref<9x128x128xbf16, #tpu.memory_space<vmem>>, vector<1x128x128xbf16>
    %119 = vector.shape_cast %118 : vector<1x128x128xbf16> to vector<128x128xbf16>
    %cst_115 = arith.constant dense<0.000000e+00> : vector<512x128xf32>
    %120 = tpu.matmul %117, %119, %cst_115 {dimension_numbers = #tpu.dot_dimension_numbers<[1], [0], [0], [1], [0, 0, 1, 1], [], []>} : vector<512x128xbf16>, vector<128x128xbf16>, vector<512x128xf32> -> vector<512x128xf32>
    %121 = arith.addf %113, %120 : vector<512x128xf32>
    %122 = vector.shape_cast %121 : vector<512x128xf32> to vector<16x32x128xf32>
    %123 = vector.extract_strided_slice %122 {offsets = [0, 0, 0], sizes = [16, 16, 128], strides = [1, 1, 1]} : vector<16x32x128xf32> to vector<16x16x128xf32>
    %c0_116 = arith.constant 0 : index
    %c0_117 = arith.constant 0 : index
    %c0_118 = arith.constant 0 : index
    %c0_119 = arith.constant 0 : index
    %124 = vector.load %arg5[%c0_116, %c0_117, %c0_118, %c0_119] : memref<1x16x16x128xf32, #tpu.memory_space<vmem>>, vector<1x16x16x128xf32>
    %125 = vector.shape_cast %124 : vector<1x16x16x128xf32> to vector<16x16x128xf32>
    %126 = vector.shape_cast %123 : vector<16x16x128xf32> to vector<1x16x16x128xf32>
    tpu.vector_store %arg5[%c0_116, %c0_117, %c0_118, %c0_119], %126 {strides = array<i32>} : memref<1x16x16x128xf32, #tpu.memory_space<vmem>>, vector<1x16x16x128xf32>,
    %cst_120 = arith.constant dense<0.000000e+00> : vector<128xf32>
    %127 = vector.multi_reduction <add>, %123, %cst_120 [0, 1] : vector<16x16x128xf32> to vector<128xf32>
    %128 = vector.shape_cast %127 : vector<128xf32> to vector<1x1x128xf32>
    %129 = vector.shape_cast %128 : vector<1x1x128xf32> to vector<1x128xf32>
    %c0_121 = arith.constant 0 : index
    %c0_122 = arith.constant 0 : index
    %c0_123 = arith.constant 0 : index
    %130 = vector.load %arg6[%c0_121, %c0_122, %c0_123] : memref<1x2x128xf32, #tpu.memory_space<vmem>>, vector<1x1x128xf32>
    %131 = vector.shape_cast %130 : vector<1x1x128xf32> to vector<1x128xf32>
    %132 = vector.shape_cast %129 : vector<1x128xf32> to vector<1x1x128xf32>
    tpu.vector_store %arg6[%c0_121, %c0_122, %c0_123], %132 {strides = array<i32>} : memref<1x2x128xf32, #tpu.memory_space<vmem>>, vector<1x1x128xf32>,
    %133 = arith.mulf %123, %123 : vector<16x16x128xf32>
    %cst_124 = arith.constant dense<0.000000e+00> : vector<128xf32>
    %134 = vector.multi_reduction <add>, %133, %cst_124 [0, 1] : vector<16x16x128xf32> to vector<128xf32>
    %135 = vector.shape_cast %134 : vector<128xf32> to vector<1x1x128xf32>
    %136 = vector.shape_cast %135 : vector<1x1x128xf32> to vector<1x128xf32>
    %c0_125 = arith.constant 0 : index
    %c1_126 = arith.constant 1 : index
    %c0_127 = arith.constant 0 : index
    %137 = vector.load %arg6[%c0_125, %c1_126, %c0_127] : memref<1x2x128xf32, #tpu.memory_space<vmem>>, vector<1x1x128xf32>
    %138 = vector.shape_cast %137 : vector<1x1x128xf32> to vector<1x128xf32>
    %139 = vector.shape_cast %136 : vector<1x128xf32> to vector<1x1x128xf32>
    tpu.vector_store %arg6[%c0_125, %c1_126, %c0_127], %139 {strides = array<i32>} : memref<1x2x128xf32, #tpu.memory_space<vmem>>, vector<1x1x128xf32>,
    return
  }
  func.func @transform_0(%arg0: i32) -> (i32, i32, i32, i32) {
    %c0_i32 = arith.constant 0 : i32
    %c0_i32_0 = arith.constant 0 : i32
    %c0_i32_1 = arith.constant 0 : i32
    %c0_i32_2 = arith.constant 0 : i32
    return %arg0, %c0_i32, %c0_i32_0, %c0_i32_1 : i32, i32, i32, i32
  }
  func.func @transform_1(%arg0: i32) -> (i32, i32) {
    %c0_i32 = arith.constant 0 : i32
    %c0_i32_0 = arith.constant 0 : i32
    %c0_i32_1 = arith.constant 0 : i32
    return %c0_i32, %c0_i32_0 : i32, i32
  }
  func.func @transform_2(%arg0: i32) -> (i32, i32) {
    %c0_i32 = arith.constant 0 : i32
    %c0_i32_0 = arith.constant 0 : i32
    %c0_i32_1 = arith.constant 0 : i32
    return %c0_i32, %c0_i32_0 : i32, i32
  }
  func.func @transform_3(%arg0: i32) -> (i32, i32, i32) {
    %c0_i32 = arith.constant 0 : i32
    %c0_i32_0 = arith.constant 0 : i32
    %c0_i32_1 = arith.constant 0 : i32
    %c0_i32_2 = arith.constant 0 : i32
    return %c0_i32, %c0_i32_0, %c0_i32_1 : i32, i32, i32
  }
  func.func @transform_4(%arg0: i32) -> (i32, i32, i32, i32) {
    %c0_i32 = arith.constant 0 : i32
    %c0_i32_0 = arith.constant 0 : i32
    %c0_i32_1 = arith.constant 0 : i32
    %c0_i32_2 = arith.constant 0 : i32
    return %arg0, %c0_i32, %c0_i32_0, %c0_i32_1 : i32, i32, i32, i32
  }
  func.func @transform_5(%arg0: i32) -> (i32, i32, i32) {
    %c0_i32 = arith.constant 0 : i32
    %c0_i32_0 = arith.constant 0 : i32
    %c0_i32_1 = arith.constant 0 : i32
    return %arg0, %c0_i32, %c0_i32_0 : i32, i32, i32
  }
}

module attributes {stable_mosaic.version = 11 : i64} {
  func.func @_bn_add_relu_kernel(%arg0: i32, %arg1: memref<1x16x16x128xf32, #tpu.memory_space<vmem>>, %arg2: memref<1x16x16x128xf32, #tpu.memory_space<vmem>>, %arg3: memref<1x128xf32, #tpu.memory_space<vmem>>, %arg4: memref<1x128xf32, #tpu.memory_space<vmem>>, %arg5: memref<1x16x16x128xf32, #tpu.memory_space<vmem>>) attributes {dimension_semantics = [#tpu.dimension_semantics<parallel>], iteration_bounds = array<i64: 2>, scalar_prefetch = 0 : i64, scratch_operands = 0 : i64, tpu.core_type = #tpu.core_type<tc>, window_params = [{transform_indices = @transform_0, window_bounds = array<i64: 1, 16, 16, 128>}, {transform_indices = @transform_1, window_bounds = array<i64: 1, 16, 16, 128>}, {pipeline_mode = #tpu.pipeline_mode<synchronous>, transform_indices = @transform_2, window_bounds = array<i64: 1, 128>}, {pipeline_mode = #tpu.pipeline_mode<synchronous>, transform_indices = @transform_3, window_bounds = array<i64: 1, 128>}, {transform_indices = @transform_4, window_bounds = array<i64: 1, 16, 16, 128>}]} {
    %c0 = arith.constant 0 : index
    %c0_0 = arith.constant 0 : index
    %c0_1 = arith.constant 0 : index
    %c0_2 = arith.constant 0 : index
    %0 = vector.load %arg1[%c0, %c0_0, %c0_1, %c0_2] : memref<1x16x16x128xf32, #tpu.memory_space<vmem>>, vector<1x16x16x128xf32>
    %1 = vector.shape_cast %0 : vector<1x16x16x128xf32> to vector<16x16x128xf32>
    %c0_3 = arith.constant 0 : index
    %c0_4 = arith.constant 0 : index
    %2 = vector.load %arg3[%c0_3, %c0_4] : memref<1x128xf32, #tpu.memory_space<vmem>>, vector<1x128xf32>
    %3 = vector.shape_cast %2 : vector<1x128xf32> to vector<1x1x128xf32>
    %4 = vector.broadcast %3 : vector<1x1x128xf32> to vector<16x16x128xf32>
    %5 = arith.mulf %1, %4 : vector<16x16x128xf32>
    %c0_5 = arith.constant 0 : index
    %c0_6 = arith.constant 0 : index
    %6 = vector.load %arg4[%c0_5, %c0_6] : memref<1x128xf32, #tpu.memory_space<vmem>>, vector<1x128xf32>
    %7 = vector.shape_cast %6 : vector<1x128xf32> to vector<1x1x128xf32>
    %8 = vector.broadcast %7 : vector<1x1x128xf32> to vector<16x16x128xf32>
    %9 = arith.addf %5, %8 : vector<16x16x128xf32>
    %c0_7 = arith.constant 0 : index
    %c0_8 = arith.constant 0 : index
    %c0_9 = arith.constant 0 : index
    %c0_10 = arith.constant 0 : index
    %10 = vector.load %arg2[%c0_7, %c0_8, %c0_9, %c0_10] : memref<1x16x16x128xf32, #tpu.memory_space<vmem>>, vector<1x16x16x128xf32>
    %11 = vector.shape_cast %10 : vector<1x16x16x128xf32> to vector<16x16x128xf32>
    %12 = arith.addf %9, %11 : vector<16x16x128xf32>
    %cst = arith.constant 0.000000e+00 : f32
    %13 = vector.broadcast %cst : f32 to vector<16x16x128xf32>
    %14 = arith.maximumf %12, %13 : vector<16x16x128xf32>
    %c0_11 = arith.constant 0 : index
    %c0_12 = arith.constant 0 : index
    %c0_13 = arith.constant 0 : index
    %c0_14 = arith.constant 0 : index
    %15 = vector.load %arg5[%c0_11, %c0_12, %c0_13, %c0_14] : memref<1x16x16x128xf32, #tpu.memory_space<vmem>>, vector<1x16x16x128xf32>
    %16 = vector.shape_cast %15 : vector<1x16x16x128xf32> to vector<16x16x128xf32>
    %17 = vector.shape_cast %14 : vector<16x16x128xf32> to vector<1x16x16x128xf32>
    tpu.vector_store %arg5[%c0_11, %c0_12, %c0_13, %c0_14], %17 {strides = array<i32>} : memref<1x16x16x128xf32, #tpu.memory_space<vmem>>, vector<1x16x16x128xf32>,
    return
  }
  func.func @transform_0(%arg0: i32) -> (i32, i32, i32, i32) {
    %c0_i32 = arith.constant 0 : i32
    %c0_i32_0 = arith.constant 0 : i32
    %c0_i32_1 = arith.constant 0 : i32
    %c0_i32_2 = arith.constant 0 : i32
    return %arg0, %c0_i32, %c0_i32_0, %c0_i32_1 : i32, i32, i32, i32
  }
  func.func @transform_1(%arg0: i32) -> (i32, i32, i32, i32) {
    %c0_i32 = arith.constant 0 : i32
    %c0_i32_0 = arith.constant 0 : i32
    %c0_i32_1 = arith.constant 0 : i32
    %c0_i32_2 = arith.constant 0 : i32
    return %arg0, %c0_i32, %c0_i32_0, %c0_i32_1 : i32, i32, i32, i32
  }
  func.func @transform_2(%arg0: i32) -> (i32, i32) {
    %c0_i32 = arith.constant 0 : i32
    %c0_i32_0 = arith.constant 0 : i32
    %c0_i32_1 = arith.constant 0 : i32
    return %c0_i32, %c0_i32_0 : i32, i32
  }
  func.func @transform_3(%arg0: i32) -> (i32, i32) {
    %c0_i32 = arith.constant 0 : i32
    %c0_i32_0 = arith.constant 0 : i32
    %c0_i32_1 = arith.constant 0 : i32
    return %c0_i32, %c0_i32_0 : i32, i32
  }
  func.func @transform_4(%arg0: i32) -> (i32, i32, i32, i32) {
    %c0_i32 = arith.constant 0 : i32
    %c0_i32_0 = arith.constant 0 : i32
    %c0_i32_1 = arith.constant 0 : i32
    %c0_i32_2 = arith.constant 0 : i32
    return %arg0, %c0_i32, %c0_i32_0, %c0_i32_1 : i32, i32, i32, i32
  }
}

</mosaic_0001>

<llo_original>
// kernel: basic_block_forward.5
$region0: #{basic_block_forward.5}
  #allocation0 [shape = 'u32[]', space=smem, size = 0x4, offset = 0x4, fixed_abs, tag = 'smem constant byte address 0x4 - core index']
  #allocation1 [shape = 'u32[144,128]{1,0:T(1,128)}', space=vmem, size = 0x12000, scoped, tag = 'internal scratch']
  %s0 = inlined_call_operand.vmem [shape: f32[2,16,16,128], index: 0, kind: input, shape index: {}]
  %s1 = inlined_call_operand.vmem [shape: f32[2,16,16,128], index: 1, kind: input, shape index: {}]
  %s2 = inlined_call_operand.vmem [shape: f32[1,128], index: 2, kind: input, shape index: {}]
  %s3 = inlined_call_operand.vmem [shape: f32[1,128], index: 3, kind: input, shape index: {}]
  %s4 = inlined_call_operand.vmem [shape: f32[2,16,16,128], index: 4, kind: output, shape index: {}]
  %s5 = sld [smem:[#allocation0]]
  $region49: #{basic_block_forward.5} parent=0
    _
  %s7 = ssub.s32 1, %s5
  %s8 = scalar_select 0, %s7, %s5
  loop: start=0, step=1, limit=4
  $region2: #{basic_block_forward.5} parent=0 // loop_pre_header
    _
  $region3: #{basic_block_forward.5} parent=0 // loop_header
    %s10 = sphi 0, %s14
    %p11 = scmp.ge.s32.totalorder %s10, 4
    %s20 = sphi 0, %s22
    %s23 = sphi 0, %s20
    %s24 = sphi 0, %s23
    %s40 = sphi 0, %s24
    %s46 = sphi 0, %s48
    %s49 = sphi 0, %s46
    %s50 = sphi 0, %s49
    %s66 = sphi 0, %s50
    %s70 = sphi 0, %s70
    %s72 = sphi 0, %s70
    %s73 = sphi 0, %s72
    %s87 = sphi 0, %s73
    %s91 = sphi 0, %s91
    %s93 = sphi 0, %s91
    %s94 = sphi 0, %s93
    %s108 = sphi 0, %s94
    %s114 = sphi 0, %s116
    %s117 = sphi 0, %s114
    %s118 = sphi 0, %s117
    %s134 = sphi 0, %s118
  $region4: #{basic_block_forward.5} parent=0 // loop_header_branch
    %13 = sbr.rel (%p11) target = $region8
  $region5: #{basic_block_forward.5} parent=0 // loop_body
    %s15 = ssub.s32 %s10, 1
    %s16 = ssub.s32 %s10, 2
    %s17 = sadd.s32 %s10, 1
    %s18 = ssub.s32 %s10, %s17
    %p19 = scmp.eq.s32.totalorder %s18, 0
    %s21 = sadd.s32 %s20, 1
    %s22 = scalar_select %p19, %s20, %s21
    %p25 = pneg %p19
    %p26 = scmp.eq.s32.totalorder %s10, 1
    %p27 = por %p25, %p26
    %p28 = scmp.ne.s32.totalorder %s20, %s23
    %p29 = scmp.eq.s32.totalorder %s10, 0
    %p30 = por %p28, %p29
    %p31 = scmp.ne.s32.totalorder %s20, %s23
    %p32 = scmp.eq.s32.totalorder %s15, 1
    %p33 = por %p31, %p32
    %p34 = scmp.ne.s32.totalorder %s23, %s24
    %p35 = scmp.eq.s32.totalorder %s15, 0
    %p36 = por %p34, %p35
    %p37 = scmp.ne.s32.totalorder %s23, %s24
    %p38 = scmp.eq.s32.totalorder %s16, 1
    %p39 = por %p37, %p38
    %p41 = scmp.ne.s32.totalorder %s24, %s40
    %p42 = scmp.eq.s32.totalorder %s16, 0
    %p43 = por %p41, %p42
    %s44 = ssub.s32 %s10, %s17
    %p45 = scmp.eq.s32.totalorder %s44, 0
    %s47 = sadd.s32 %s46, 1
    %s48 = scalar_select %p45, %s46, %s47
    %p51 = pneg %p45
    %p52 = scmp.eq.s32.totalorder %s10, 1
    %p53 = por %p51, %p52
    %p54 = scmp.ne.s32.totalorder %s46, %s49
    %p55 = scmp.eq.s32.totalorder %s10, 0
    %p56 = por %p54, %p55
    %p57 = scmp.ne.s32.totalorder %s46, %s49
    %p58 = scmp.eq.s32.totalorder %s15, 1
    %p59 = por %p57, %p58
    %p60 = scmp.ne.s32.totalorder %s49, %s50
    %p61 = scmp.eq.s32.totalorder %s15, 0
    %p62 = por %p60, %p61
    %p63 = scmp.ne.s32.totalorder %s49, %s50
    %p64 = scmp.eq.s32.totalorder %s16, 1
    %p65 = por %p63, %p64
    %p67 = scmp.ne.s32.totalorder %s50, %s66
    %p68 = scmp.eq.s32.totalorder %s16, 0
    %p69 = por %p67, %p68
    %s71 = sadd.s32 %s70, 1
    %p74 = scmp.eq.s32.totalorder %s10, 1
    %p75 = scmp.ne.s32.totalorder %s70, %s72
    %p76 = scmp.eq.s32.totalorder %s10, 0
    %p77 = por %p75, %p76
    %p78 = scmp.ne.s32.totalorder %s70, %s72
    %p79 = scmp.eq.s32.totalorder %s15, 1
    %p80 = por %p78, %p79
    %p81 = scmp.ne.s32.totalorder %s72, %s73
    %p82 = scmp.eq.s32.totalorder %s15, 0
    %p83 = por %p81, %p82
    %p84 = scmp.ne.s32.totalorder %s72, %s73
    %p85 = scmp.eq.s32.totalorder %s16, 1
    %p86 = por %p84, %p85
    %p88 = scmp.ne.s32.totalorder %s73, %s87
    %p89 = scmp.eq.s32.totalorder %s16, 0
    %p90 = por %p88, %p89
    %s92 = sadd.s32 %s91, 1
    %p95 = scmp.eq.s32.totalorder %s10, 1
    %p96 = scmp.ne.s32.totalorder %s91, %s93
    %p97 = scmp.eq.s32.totalorder %s10, 0
    %p98 = por %p96, %p97
    %p99 = scmp.ne.s32.totalorder %s91, %s93
    %p100 = scmp.eq.s32.totalorder %s15, 1
    %p101 = por %p99, %p100
    %p102 = scmp.ne.s32.totalorder %s93, %s94
    %p103 = scmp.eq.s32.totalorder %s15, 0
    %p104 = por %p102, %p103
    %p105 = scmp.ne.s32.totalorder %s93, %s94
    %p106 = scmp.eq.s32.totalorder %s16, 1
    %p107 = por %p105, %p106
    %p109 = scmp.ne.s32.totalorder %s94, %s108
    %p110 = scmp.eq.s32.totalorder %s16, 0
    %p111 = por %p109, %p110
    %s112 = ssub.s32 %s10, %s17
    %p113 = scmp.eq.s32.totalorder %s112, 0
    %s115 = sadd.s32 %s114, 1
    %s116 = scalar_select %p113, %s114, %s115
    %p119 = pneg %p113
    %p120 = scmp.eq.s32.totalorder %s10, 1
    %p121 = por %p119, %p120
    %p122 = scmp.ne.s32.totalorder %s114, %s117
    %p123 = scmp.eq.s32.totalorder %s10, 0
    %p124 = por %p122, %p123
    %p125 = scmp.ne.s32.totalorder %s114, %s117
    %p126 = scmp.eq.s32.totalorder %s15, 1
    %p127 = por %p125, %p126
    %p128 = scmp.ne.s32.totalorder %s117, %s118
    %p129 = scmp.eq.s32.totalorder %s15, 0
    %p130 = por %p128, %p129
    %p131 = scmp.ne.s32.totalorder %s117, %s118
    %p132 = scmp.eq.s32.totalorder %s16, 1
    %p133 = por %p131, %p132
    %p135 = scmp.ne.s32.totalorder %s118, %s134
    %p136 = scmp.eq.s32.totalorder %s16, 0
    %p137 = por %p135, %p136
    %p138 = scmp.le.s32.totalorder 1, %s10
    %p139 = scmp.lt.s32.totalorder %s10, 3
    %p140 = pnand %p138, %p139
    %p141 = pneg %p140
    // Predicated region
    $region9: #{basic_block_forward.5} parent=5 // pred_check
      _
    $region10: #{basic_block_forward.5} parent=5 // pred_check_branch
      %143 = sbr.rel (%p140) target = $region12
    $region11: #{basic_block_forward.5} parent=5 // pred_region
      %s144 = ssub.s32 %s10, 1
      // Predicated region
      $region13: #{basic_block_forward.5} parent=11 // pred_check
        %p145 = pneg %p83
      $region14: #{basic_block_forward.5} parent=11 // pred_check_branch
        %147 = sbr.rel (%p145) target = $region16
      $region15: #{basic_block_forward.5} parent=11 // pred_region
        _
      $region16: #{basic_block_forward.5} parent=11 // pred_fallthru
        _
      // Predicated region
      $region17: #{basic_block_forward.5} parent=11 // pred_check
        %p148 = pneg %p104
      $region18: #{basic_block_forward.5} parent=11 // pred_check_branch
        %150 = sbr.rel (%p148) target = $region20
      $region19: #{basic_block_forward.5} parent=11 // pred_region
        _
      $region20: #{basic_block_forward.5} parent=11 // pred_fallthru
        _
    $region12: #{basic_block_forward.5} parent=5 // pred_fallthru
      _
    %p151 = scmp.lt.s32.totalorder %s10, 2
    // Predicated region
    $region21: #{basic_block_forward.5} parent=5 // pred_check
      %p152 = pneg %p151
    $region22: #{basic_block_forward.5} parent=5 // pred_check_branch
      %154 = sbr.rel (%p152) target = $region24
    $region23: #{basic_block_forward.5} parent=5 // pred_region
      // Predicated region
      $region25: #{basic_block_forward.5} parent=23 // pred_check
        %p155 = pneg %p30
      $region26: #{basic_block_forward.5} parent=23 // pred_check_branch
        %157 = sbr.rel (%p155) target = $region28
      $region27: #{basic_block_forward.5} parent=23 // pred_region
        %p158 = scmp.lt.s32.totalorder %s10, 1
        %s159 = scalar_select %p158, %s10, 1
        %s160 = smul.addr %s159, 32
        %s161 = smul.addr %s160, 8
        %s162 = scalar_lea.vmem %s0, %s161
      $region28: #{basic_block_forward.5} parent=23 // pred_fallthru
        _
      // Predicated region
      $region29: #{basic_block_forward.5} parent=23 // pred_check
        %p163 = pneg %p56
      $region30: #{basic_block_forward.5} parent=23 // pred_check_branch
        %165 = sbr.rel (%p163) target = $region32
      $region31: #{basic_block_forward.5} parent=23 // pred_region
        %p166 = scmp.lt.s32.totalorder %s10, 1
        %s167 = scalar_select %p166, %s10, 1
        %s168 = smul.addr %s167, 32
        %s169 = smul.addr %s168, 8
        %s170 = scalar_lea.vmem %s1, %s169
      $region32: #{basic_block_forward.5} parent=23 // pred_fallthru
        _
    $region24: #{basic_block_forward.5} parent=5 // pred_fallthru
      _
    %p171 = scmp.le.s32.totalorder 1, %s10
    %p172 = scmp.lt.s32.totalorder %s10, 3
    %p173 = pnand %p171, %p172
    %p174 = pneg %p173
    // Predicated region
    $region33: #{basic_block_forward.5} parent=5 // pred_check
      _
    $region34: #{basic_block_forward.5} parent=5 // pred_check_branch
      %176 = sbr.rel (%p173) target = $region36
    $region35: #{basic_block_forward.5} parent=5 // pred_region
      %s177 = ssub.s32 %s10, 1
      %p178 = scmp.lt.s32.totalorder %s15, 1
      %s179 = scalar_select %p178, %s15, 1
      %s180 = smul.addr %s179, 32
      %s181 = smul.addr %s180, 8
      %s182 = scalar_lea.vmem %s0, %s181
      %p183 = pneg %p36
      %p184 = pneg %p33
      %p185 = scmp.lt.s32.totalorder %s15, 1
      %s186 = scalar_select %p185, %s15, 1
      %s187 = smul.addr %s186, 32
      %s188 = smul.addr %s187, 8
      %s189 = scalar_lea.vmem %s1, %s188
      %p190 = pneg %p62
      %p191 = pneg %p59
      %p192 = pneg %p83
      %p193 = pneg %p80
      %p194 = pneg %p104
      %p195 = pneg %p101
      %p196 = pneg %p130
      %p197 = pneg %p127
      %p198 = scmp.lt.s32.totalorder %s15, 1
      %s199 = scalar_select %p198, %s15, 1
      %s200 = smul.addr %s199, 32
      %s201 = smul.addr %s200, 8
      %s202 = scalar_lea.vmem %s4, %s201
      %p203 = scmp.lt.s32.totalorder %s15, 1
      %s204 = scalar_select %p203, %s15, 1
      %s205 = smul.addr %s204, 32
      %s206 = smul.addr %s205, 8
      %s207 = scalar_lea.vmem %s0, %s206
      %p208 = scmp.lt.s32.totalorder %s15, 1
      %s209 = scalar_select %p208, %s15, 1
      %s210 = smul.addr %s209, 32
      %s211 = smul.addr %s210, 8
      %s212 = scalar_lea.vmem %s1, %s211
      %p213 = scmp.lt.s32.totalorder %s15, 1
      %s214 = scalar_select %p213, %s15, 1
      %s215 = smul.addr %s214, 32
      %s216 = smul.addr %s215, 8
      %s217 = scalar_lea.vmem %s4, %s216
      %v218 = vld [vmem:[%s207] sm:$0xff]
      %v219 = vld [vmem:[%s207 + $0x8] sm:$0xff]
      %v220 = vld [vmem:[%s207 + $0x10] sm:$0xff]
      %v221 = vld [vmem:[%s207 + $0x18] sm:$0xff]
      %v222 = vld [vmem:[%s207 + $0x20] sm:$0xff]
      %v223 = vld [vmem:[%s207 + $0x28] sm:$0xff]
      %v224 = vld [vmem:[%s207 + $0x30] sm:$0xff]
      %v225 = vld [vmem:[%s207 + $0x38] sm:$0xff]
      %v226 = vld [vmem:[%s207 + $0x40] sm:$0xff]
      %v227 = vld [vmem:[%s207 + $0x48] sm:$0xff]
      %v228 = vld [vmem:[%s207 + $0x50] sm:$0xff]
      %v229 = vld [vmem:[%s207 + $0x58] sm:$0xff]
      %v230 = vld [vmem:[%s207 + $0x60] sm:$0xff]
      %v231 = vld [vmem:[%s207 + $0x68] sm:$0xff]
      %v232 = vld [vmem:[%s207 + $0x70] sm:$0xff]
      %v233 = vld [vmem:[%s207 + $0x78] sm:$0xff]
      %v234 = vld [vmem:[%s207 + $0x80] sm:$0xff]
      %v235 = vld [vmem:[%s207 + $0x88] sm:$0xff]
      %v236 = vld [vmem:[%s207 + $0x90] sm:$0xff]
      %v237 = vld [vmem:[%s207 + $0x98] sm:$0xff]
      %v238 = vld [vmem:[%s207 + $0xa0] sm:$0xff]
      %v239 = vld [vmem:[%s207 + $0xa8] sm:$0xff]
      %v240 = vld [vmem:[%s207 + $0xb0] sm:$0xff]
      %v241 = vld [vmem:[%s207 + $0xb8] sm:$0xff]
      %v242 = vld [vmem:[%s207 + $0xc0] sm:$0xff]
      %v243 = vld [vmem:[%s207 + $0xc8] sm:$0xff]
      %v244 = vld [vmem:[%s207 + $0xd0] sm:$0xff]
      %v245 = vld [vmem:[%s207 + $0xd8] sm:$0xff]
      %v246 = vld [vmem:[%s207 + $0xe0] sm:$0xff]
      %v247 = vld [vmem:[%s207 + $0xe8] sm:$0xff]
      %v248 = vld [vmem:[%s207 + $0xf0] sm:$0xff]
      %v249 = vld [vmem:[%s207 + $0xf8] sm:$0xff]
      %v250 = vld [vmem:[%s2] sm:$0x1]
      %v252 = vlaneseq
      %v253 = vshrl.u32 %v252, 7
      %v254 = vsub.s32 0, %v253
      %v255 = vrot.slane %v250, %v254
      %v257 = vmul.f32 %v218, %v255
      %v258 = vmul.f32 %v219, %v255
      %v259 = vmul.f32 %v220, %v255
      %v260 = vmul.f32 %v221, %v255
      %v261 = vmul.f32 %v222, %v255
      %v262 = vmul.f32 %v223, %v255
      %v263 = vmul.f32 %v224, %v255
      %v264 = vmul.f32 %v225, %v255
      %v265 = vmul.f32 %v226, %v255
      %v266 = vmul.f32 %v227, %v255
      %v267 = vmul.f32 %v228, %v255
      %v268 = vmul.f32 %v229, %v255
      %v269 = vmul.f32 %v230, %v255
      %v270 = vmul.f32 %v231, %v255
      %v271 = vmul.f32 %v232, %v255
      %v272 = vmul.f32 %v233, %v255
      %v273 = vmul.f32 %v234, %v255
      %v274 = vmul.f32 %v235, %v255
      %v275 = vmul.f32 %v236, %v255
      %v276 = vmul.f32 %v237, %v255
      %v277 = vmul.f32 %v238, %v255
      %v278 = vmul.f32 %v239, %v255
      %v279 = vmul.f32 %v240, %v255
      %v280 = vmul.f32 %v241, %v255
      %v281 = vmul.f32 %v242, %v255
      %v282 = vmul.f32 %v243, %v255
      %v283 = vmul.f32 %v244, %v255
      %v284 = vmul.f32 %v245, %v255
      %v285 = vmul.f32 %v246, %v255
      %v286 = vmul.f32 %v247, %v255
      %v287 = vmul.f32 %v248, %v255
      %v288 = vmul.f32 %v249, %v255
      %v289 = vld [vmem:[%s3] sm:$0x1]
      %v291 = vlaneseq
      %v292 = vshrl.u32 %v291, 7
      %v293 = vsub.s32 0, %v292
      %v294 = vrot.slane %v289, %v293
      %v296 = vadd.f32 %v257, %v294
      %v297 = vadd.f32 %v258, %v294
      %v298 = vadd.f32 %v259, %v294
      %v299 = vadd.f32 %v260, %v294
      %v300 = vadd.f32 %v261, %v294
      %v301 = vadd.f32 %v262, %v294
      %v302 = vadd.f32 %v263, %v294
      %v303 = vadd.f32 %v264, %v294
      %v304 = vadd.f32 %v265, %v294
      %v305 = vadd.f32 %v266, %v294
      %v306 = vadd.f32 %v267, %v294
      %v307 = vadd.f32 %v268, %v294
      %v308 = vadd.f32 %v269, %v294
      %v309 = vadd.f32 %v270, %v294
      %v310 = vadd.f32 %v271, %v294
      %v311 = vadd.f32 %v272, %v294
      %v312 = vadd.f32 %v273, %v294
      %v313 = vadd.f32 %v274, %v294
      %v314 = vadd.f32 %v275, %v294
      %v315 = vadd.f32 %v276, %v294
      %v316 = vadd.f32 %v277, %v294
      %v317 = vadd.f32 %v278, %v294
      %v318 = vadd.f32 %v279, %v294
      %v319 = vadd.f32 %v280, %v294
      %v320 = vadd.f32 %v281, %v294
      %v321 = vadd.f32 %v282, %v294
      %v322 = vadd.f32 %v283, %v294
      %v323 = vadd.f32 %v284, %v294
      %v324 = vadd.f32 %v285, %v294
      %v325 = vadd.f32 %v286, %v294
      %v326 = vadd.f32 %v287, %v294
      %v327 = vadd.f32 %v288, %v294
      %v328 = vld [vmem:[%s212] sm:$0xff]
      %v329 = vld [vmem:[%s212 + $0x8] sm:$0xff]
      %v330 = vld [vmem:[%s212 + $0x10] sm:$0xff]
      %v331 = vld [vmem:[%s212 + $0x18] sm:$0xff]
      %v332 = vld [vmem:[%s212 + $0x20] sm:$0xff]
      %v333 = vld [vmem:[%s212 + $0x28] sm:$0xff]
      %v334 = vld [vmem:[%s212 + $0x30] sm:$0xff]
      %v335 = vld [vmem:[%s212 + $0x38] sm:$0xff]
      %v336 = vld [vmem:[%s212 + $0x40] sm:$0xff]
      %v337 = vld [vmem:[%s212 + $0x48] sm:$0xff]
      %v338 = vld [vmem:[%s212 + $0x50] sm:$0xff]
      %v339 = vld [vmem:[%s212 + $0x58] sm:$0xff]
      %v340 = vld [vmem:[%s212 + $0x60] sm:$0xff]
      %v341 = vld [vmem:[%s212 + $0x68] sm:$0xff]
      %v342 = vld [vmem:[%s212 + $0x70] sm:$0xff]
      %v343 = vld [vmem:[%s212 + $0x78] sm:$0xff]
      %v344 = vld [vmem:[%s212 + $0x80] sm:$0xff]
      %v345 = vld [vmem:[%s212 + $0x88] sm:$0xff]
      %v346 = vld [vmem:[%s212 + $0x90] sm:$0xff]
      %v347 = vld [vmem:[%s212 + $0x98] sm:$0xff]
      %v348 = vld [vmem:[%s212 + $0xa0] sm:$0xff]
      %v349 = vld [vmem:[%s212 + $0xa8] sm:$0xff]
      %v350 = vld [vmem:[%s212 + $0xb0] sm:$0xff]
      %v351 = vld [vmem:[%s212 + $0xb8] sm:$0xff]
      %v352 = vld [vmem:[%s212 + $0xc0] sm:$0xff]
      %v353 = vld [vmem:[%s212 + $0xc8] sm:$0xff]
      %v354 = vld [vmem:[%s212 + $0xd0] sm:$0xff]
      %v355 = vld [vmem:[%s212 + $0xd8] sm:$0xff]
      %v356 = vld [vmem:[%s212 + $0xe0] sm:$0xff]
      %v357 = vld [vmem:[%s212 + $0xe8] sm:$0xff]
      %v358 = vld [vmem:[%s212 + $0xf0] sm:$0xff]
      %v359 = vld [vmem:[%s212 + $0xf8] sm:$0xff]
      %v360 = vadd.f32 %v296, %v328
      %v361 = vadd.f32 %v297, %v329
      %v362 = vadd.f32 %v298, %v330
      %v363 = vadd.f32 %v299, %v331
      %v364 = vadd.f32 %v300, %v332
      %v365 = vadd.f32 %v301, %v333
      %v366 = vadd.f32 %v302, %v334
      %v367 = vadd.f32 %v303, %v335
      %v368 = vadd.f32 %v304, %v336
      %v369 = vadd.f32 %v305, %v337
      %v370 = vadd.f32 %v306, %v338
      %v371 = vadd.f32 %v307, %v339
      %v372 = vadd.f32 %v308, %v340
      %v373 = vadd.f32 %v309, %v341
      %v374 = vadd.f32 %v310, %v342
      %v375 = vadd.f32 %v311, %v343
      %v376 = vadd.f32 %v312, %v344
      %v377 = vadd.f32 %v313, %v345
      %v378 = vadd.f32 %v314, %v346
      %v379 = vadd.f32 %v315, %v347
      %v380 = vadd.f32 %v316, %v348
      %v381 = vadd.f32 %v317, %v349
      %v382 = vadd.f32 %v318, %v350
      %v383 = vadd.f32 %v319, %v351
      %v384 = vadd.f32 %v320, %v352
      %v385 = vadd.f32 %v321, %v353
      %v386 = vadd.f32 %v322, %v354
      %v387 = vadd.f32 %v323, %v355
      %v388 = vadd.f32 %v324, %v356
      %v389 = vadd.f32 %v325, %v357
      %v390 = vadd.f32 %v326, %v358
      %v391 = vadd.f32 %v327, %v359
      %v392 = vmax.f32 %v360, 0.0
      %v393 = vmax.f32 %v361, 0.0
      %v394 = vmax.f32 %v362, 0.0
      %v395 = vmax.f32 %v363, 0.0
      %v396 = vmax.f32 %v364, 0.0
      %v397 = vmax.f32 %v365, 0.0
      %v398 = vmax.f32 %v366, 0.0
      %v399 = vmax.f32 %v367, 0.0
      %v400 = vmax.f32 %v368, 0.0
      %v401 = vmax.f32 %v369, 0.0
      %v402 = vmax.f32 %v370, 0.0
      %v403 = vmax.f32 %v371, 0.0
      %v404 = vmax.f32 %v372, 0.0
      %v405 = vmax.f32 %v373, 0.0
      %v406 = vmax.f32 %v374, 0.0
      %v407 = vmax.f32 %v375, 0.0
      %v408 = vmax.f32 %v376, 0.0
      %v409 = vmax.f32 %v377, 0.0
      %v410 = vmax.f32 %v378, 0.0
      %v411 = vmax.f32 %v379, 0.0
      %v412 = vmax.f32 %v380, 0.0
      %v413 = vmax.f32 %v381, 0.0
      %v414 = vmax.f32 %v382, 0.0
      %v415 = vmax.f32 %v383, 0.0
      %v416 = vmax.f32 %v384, 0.0
      %v417 = vmax.f32 %v385, 0.0
      %v418 = vmax.f32 %v386, 0.0
      %v419 = vmax.f32 %v387, 0.0
      %v420 = vmax.f32 %v388, 0.0
      %v421 = vmax.f32 %v389, 0.0
      %v422 = vmax.f32 %v390, 0.0
      %v423 = vmax.f32 %v391, 0.0
      %424 = vst [vmem:[%s217] sm:$0xff] %v392
      %425 = vst [vmem:[%s217 + $0x8] sm:$0xff] %v393
      %426 = vst [vmem:[%s217 + $0x10] sm:$0xff] %v394
      %427 = vst [vmem:[%s217 + $0x18] sm:$0xff] %v395
      %428 = vst [vmem:[%s217 + $0x20] sm:$0xff] %v396
      %429 = vst [vmem:[%s217 + $0x28] sm:$0xff] %v397
      %430 = vst [vmem:[%s217 + $0x30] sm:$0xff] %v398
      %431 = vst [vmem:[%s217 + $0x38] sm:$0xff] %v399
      %432 = vst [vmem:[%s217 + $0x40] sm:$0xff] %v400
      %433 = vst [vmem:[%s217 + $0x48] sm:$0xff] %v401
      %434 = vst [vmem:[%s217 + $0x50] sm:$0xff] %v402
      %435 = vst [vmem:[%s217 + $0x58] sm:$0xff] %v403
      %436 = vst [vmem:[%s217 + $0x60] sm:$0xff] %v404
      %437 = vst [vmem:[%s217 + $0x68] sm:$0xff] %v405
      %438 = vst [vmem:[%s217 + $0x70] sm:$0xff] %v406
      %439 = vst [vmem:[%s217 + $0x78] sm:$0xff] %v407
      %440 = vst [vmem:[%s217 + $0x80] sm:$0xff] %v408
      %441 = vst [vmem:[%s217 + $0x88] sm:$0xff] %v409
      %442 = vst [vmem:[%s217 + $0x90] sm:$0xff] %v410
      %443 = vst [vmem:[%s217 + $0x98] sm:$0xff] %v411
      %444 = vst [vmem:[%s217 + $0xa0] sm:$0xff] %v412
      %445 = vst [vmem:[%s217 + $0xa8] sm:$0xff] %v413
      %446 = vst [vmem:[%s217 + $0xb0] sm:$0xff] %v414
      %447 = vst [vmem:[%s217 + $0xb8] sm:$0xff] %v415
      %448 = vst [vmem:[%s217 + $0xc0] sm:$0xff] %v416
      %449 = vst [vmem:[%s217 + $0xc8] sm:$0xff] %v417
      %450 = vst [vmem:[%s217 + $0xd0] sm:$0xff] %v418
      %451 = vst [vmem:[%s217 + $0xd8] sm:$0xff] %v419
      %452 = vst [vmem:[%s217 + $0xe0] sm:$0xff] %v420
      %453 = vst [vmem:[%s217 + $0xe8] sm:$0xff] %v421
      %454 = vst [vmem:[%s217 + $0xf0] sm:$0xff] %v422
      %455 = vst [vmem:[%s217 + $0xf8] sm:$0xff] %v423
      %p456 = scmp.lt.s32.totalorder %s15, 1
      %s457 = scalar_select %p456, %s15, 1
      %s458 = smul.addr %s457, 32
      %s459 = smul.addr %s458, 8
      %s460 = scalar_lea.vmem %s4, %s459
      // Predicated region
      $region37: #{basic_block_forward.5} parent=35 // pred_check
        %p461 = pneg %p127
      $region38: #{basic_block_forward.5} parent=35 // pred_check_branch
        %463 = sbr.rel (%p461) target = $region40
      $region39: #{basic_block_forward.5} parent=35 // pred_region
        _
      $region40: #{basic_block_forward.5} parent=35 // pred_fallthru
        _
    $region36: #{basic_block_forward.5} parent=5 // pred_fallthru
      _
    %p464 = scmp.le.s32.totalorder 2, %s10
    // Predicated region
    $region41: #{basic_block_forward.5} parent=5 // pred_check
      %p465 = pneg %p464
    $region42: #{basic_block_forward.5} parent=5 // pred_check_branch
      %467 = sbr.rel (%p465) target = $region44
    $region43: #{basic_block_forward.5} parent=5 // pred_region
      %s468 = ssub.s32 %s10, 2
      // Predicated region
      $region45: #{basic_block_forward.5} parent=43 // pred_check
        %p469 = pneg %p133
      $region46: #{basic_block_forward.5} parent=43 // pred_check_branch
        %471 = sbr.rel (%p469) target = $region48
      $region47: #{basic_block_forward.5} parent=43 // pred_region
        %p472 = scmp.lt.s32.totalorder %s16, 1
        %s473 = scalar_select %p472, %s16, 1
        %s474 = smul.addr %s473, 32
        %s475 = smul.addr %s474, 8
        %s476 = scalar_lea.vmem %s4, %s475
      $region48: #{basic_block_forward.5} parent=43 // pred_fallthru
        _
    $region44: #{basic_block_forward.5} parent=5 // pred_fallthru
      _
  $region6: #{basic_block_forward.5} parent=0 // loop_footer
    %s14 = sadd.s32 1, %s10
  $region7: #{basic_block_forward.5} parent=0 // loop_footer_branch
    %9 = sbr.rel target = $region3
  $region8: #{basic_block_forward.5} parent=0 // loop_exit
    _

// kernel: basic_block_forward.3
$region0: #{basic_block_forward.3}
  #allocation0 [shape = 'u32[]', space=smem, size = 0x4, offset = 0x4, fixed_abs, tag = 'smem constant byte address 0x4 - core index']
  #allocation1 [shape = 'u32[144,128]{1,0:T(1,128)}', space=vmem, size = 0x12000, scoped, tag = 'internal scratch']
  #allocation2 [shape = 'f32[3,18,32,128]{3,2,1,0:T(8,128)}', space=vmem, size = 0xd8000, scoped, tag = 'scratch operand']
  %s0 = inlined_call_operand.vmem [shape: f32[2,16,16,128], index: 0, kind: input, shape index: {}]
  %s1 = inlined_call_operand.vmem [shape: bf16[9,128,128], index: 1, kind: input, shape index: {}]
  %s2 = inlined_call_operand.vmem [shape: f32[2,16,16,128], index: 2, kind: output, shape index: {0}]
  %s3 = inlined_call_operand.vmem [shape: f32[2,2,128], index: 3, kind: output, shape index: {1}]
  %4 = xla_tuple %s2, %s3
  %s5 = sld [smem:[#allocation0]]
  $region49: #{basic_block_forward.3} parent=0
    _
  %s7 = ssub.s32 1, %s5
  %s8 = scalar_select 0, %s7, %s5
  loop: start=0, step=1, limit=4
  $region2: #{basic_block_forward.3} parent=0 // loop_pre_header
    _
  $region3: #{basic_block_forward.3} parent=0 // loop_header
    %s10 = sphi 0, %s14
    %p11 = scmp.ge.s32.totalorder %s10, 4
    %s20 = sphi 0, %s22
    %s23 = sphi 0, %s20
    %s24 = sphi 0, %s23
    %s40 = sphi 0, %s24
    %s44 = sphi 0, %s44
    %s46 = sphi 0, %s44
    %s47 = sphi 0, %s46
    %s61 = sphi 0, %s47
    %s67 = sphi 0, %s69
    %s70 = sphi 0, %s67
    %s71 = sphi 0, %s70
    %s87 = sphi 0, %s71
    %s93 = sphi 0, %s95
    %s96 = sphi 0, %s93
    %s97 = sphi 0, %s96
    %s113 = sphi 0, %s97
  $region4: #{basic_block_forward.3} parent=0 // loop_header_branch
    %13 = sbr.rel (%p11) target = $region8
  $region5: #{basic_block_forward.3} parent=0 // loop_body
    %s15 = ssub.s32 %s10, 1
    %s16 = ssub.s32 %s10, 2
    %s17 = sadd.s32 %s10, 1
    %s18 = ssub.s32 %s10, %s17
    %p19 = scmp.eq.s32.totalorder %s18, 0
    %s21 = sadd.s32 %s20, 1
    %s22 = scalar_select %p19, %s20, %s21
    %p25 = pneg %p19
    %p26 = scmp.eq.s32.totalorder %s10, 1
    %p27 = por %p25, %p26
    %p28 = scmp.ne.s32.totalorder %s20, %s23
    %p29 = scmp.eq.s32.totalorder %s10, 0
    %p30 = por %p28, %p29
    %p31 = scmp.ne.s32.totalorder %s20, %s23
    %p32 = scmp.eq.s32.totalorder %s15, 1
    %p33 = por %p31, %p32
    %p34 = scmp.ne.s32.totalorder %s23, %s24
    %p35 = scmp.eq.s32.totalorder %s15, 0
    %p36 = por %p34, %p35
    %p37 = scmp.ne.s32.totalorder %s23, %s24
    %p38 = scmp.eq.s32.totalorder %s16, 1
    %p39 = por %p37, %p38
    %p41 = scmp.ne.s32.totalorder %s24, %s40
    %p42 = scmp.eq.s32.totalorder %s16, 0
    %p43 = por %p41, %p42
    %s45 = sadd.s32 %s44, 1
    %p48 = scmp.eq.s32.totalorder %s10, 1
    %p49 = scmp.ne.s32.totalorder %s44, %s46
    %p50 = scmp.eq.s32.totalorder %s10, 0
    %p51 = por %p49, %p50
    %p52 = scmp.ne.s32.totalorder %s44, %s46
    %p53 = scmp.eq.s32.totalorder %s15, 1
    %p54 = por %p52, %p53
    %p55 = scmp.ne.s32.totalorder %s46, %s47
    %p56 = scmp.eq.s32.totalorder %s15, 0
    %p57 = por %p55, %p56
    %p58 = scmp.ne.s32.totalorder %s46, %s47
    %p59 = scmp.eq.s32.totalorder %s16, 1
    %p60 = por %p58, %p59
    %p62 = scmp.ne.s32.totalorder %s47, %s61
    %p63 = scmp.eq.s32.totalorder %s16, 0
    %p64 = por %p62, %p63
    %s65 = ssub.s32 %s10, %s17
    %p66 = scmp.eq.s32.totalorder %s65, 0
    %s68 = sadd.s32 %s67, 1
    %s69 = scalar_select %p66, %s67, %s68
    %p72 = pneg %p66
    %p73 = scmp.eq.s32.totalorder %s10, 1
    %p74 = por %p72, %p73
    %p75 = scmp.ne.s32.totalorder %s67, %s70
    %p76 = scmp.eq.s32.totalorder %s10, 0
    %p77 = por %p75, %p76
    %p78 = scmp.ne.s32.totalorder %s67, %s70
    %p79 = scmp.eq.s32.totalorder %s15, 1
    %p80 = por %p78, %p79
    %p81 = scmp.ne.s32.totalorder %s70, %s71
    %p82 = scmp.eq.s32.totalorder %s15, 0
    %p83 = por %p81, %p82
    %p84 = scmp.ne.s32.totalorder %s70, %s71
    %p85 = scmp.eq.s32.totalorder %s16, 1
    %p86 = por %p84, %p85
    %p88 = scmp.ne.s32.totalorder %s71, %s87
    %p89 = scmp.eq.s32.totalorder %s16, 0
    %p90 = por %p88, %p89
    %s91 = ssub.s32 %s10, %s17
    %p92 = scmp.eq.s32.totalorder %s91, 0
    %s94 = sadd.s32 %s93, 1
    %s95 = scalar_select %p92, %s93, %s94
    %p98 = pneg %p92
    %p99 = scmp.eq.s32.totalorder %s10, 1
    %p100 = por %p98, %p99
    %p101 = scmp.ne.s32.totalorder %s93, %s96
    %p102 = scmp.eq.s32.totalorder %s10, 0
    %p103 = por %p101, %p102
    %p104 = scmp.ne.s32.totalorder %s93, %s96
    %p105 = scmp.eq.s32.totalorder %s15, 1
    %p106 = por %p104, %p105
    %p107 = scmp.ne.s32.totalorder %s96, %s97
    %p108 = scmp.eq.s32.totalorder %s15, 0
    %p109 = por %p107, %p108
    %p110 = scmp.ne.s32.totalorder %s96, %s97
    %p111 = scmp.eq.s32.totalorder %s16, 1
    %p112 = por %p110, %p111
    %p114 = scmp.ne.s32.totalorder %s97, %s113
    %p115 = scmp.eq.s32.totalorder %s16, 0
    %p116 = por %p114, %p115
    %p117 = scmp.le.s32.totalorder 1, %s10
    %p118 = scmp.lt.s32.totalorder %s10, 3
    %p119 = pnand %p117, %p118
    %p120 = pneg %p119
    // Predicated region
    $region9: #{basic_block_forward.3} parent=5 // pred_check
      _
    $region10: #{basic_block_forward.3} parent=5 // pred_check_branch
      %122 = sbr.rel (%p119) target = $region12
    $region11: #{basic_block_forward.3} parent=5 // pred_region
      %s123 = ssub.s32 %s10, 1
      // Predicated region
      $region13: #{basic_block_forward.3} parent=11 // pred_check
        %p124 = pneg %p57
      $region14: #{basic_block_forward.3} parent=11 // pred_check_branch
        %126 = sbr.rel (%p124) target = $region16
      $region15: #{basic_block_forward.3} parent=11 // pred_region
        _
      $region16: #{basic_block_forward.3} parent=11 // pred_fallthru
        _
    $region12: #{basic_block_forward.3} parent=5 // pred_fallthru
      _
    %p127 = scmp.lt.s32.totalorder %s10, 2
    // Predicated region
    $region17: #{basic_block_forward.3} parent=5 // pred_check
      %p128 = pneg %p127
    $region18: #{basic_block_forward.3} parent=5 // pred_check_branch
      %130 = sbr.rel (%p128) target = $region20
    $region19: #{basic_block_forward.3} parent=5 // pred_region
      // Predicated region
      $region21: #{basic_block_forward.3} parent=19 // pred_check
        %p131 = pneg %p30
      $region22: #{basic_block_forward.3} parent=19 // pred_check_branch
        %133 = sbr.rel (%p131) target = $region24
      $region23: #{basic_block_forward.3} parent=19 // pred_region
        %p134 = scmp.lt.s32.totalorder %s10, 1
        %s135 = scalar_select %p134, %s10, 1
        %s136 = smul.addr %s135, 32
        %s137 = smul.addr %s136, 8
        %s138 = scalar_lea.vmem %s0, %s137
      $region24: #{basic_block_forward.3} parent=19 // pred_fallthru
        _
    $region20: #{basic_block_forward.3} parent=5 // pred_fallthru
      _
    %p139 = scmp.le.s32.totalorder 1, %s10
    %p140 = scmp.lt.s32.totalorder %s10, 3
    %p141 = pnand %p139, %p140
    %p142 = pneg %p141
    // Predicated region
    $region25: #{basic_block_forward.3} parent=5 // pred_check
      _
    $region26: #{basic_block_forward.3} parent=5 // pred_check_branch
      %144 = sbr.rel (%p141) target = $region28
    $region27: #{basic_block_forward.3} parent=5 // pred_region
      %s145 = ssub.s32 %s10, 1
      %p146 = scmp.lt.s32.totalorder %s15, 1
      %s147 = scalar_select %p146, %s15, 1
      %s148 = smul.addr %s147, 32
      %s149 = smul.addr %s148, 8
      %s150 = scalar_lea.vmem %s0, %s149
      %p151 = pneg %p36
      %p152 = pneg %p33
      %p153 = pneg %p57
      %p154 = pneg %p54
      %p155 = pneg %p83
      %p156 = pneg %p80
      %p157 = scmp.lt.s32.totalorder %s15, 1
      %s158 = scalar_select %p157, %s15, 1
      %s159 = smul.addr %s158, 32
      %s160 = smul.addr %s159, 8
      %s161 = scalar_lea.vmem %s2, %s160
      %p162 = pneg %p109
      %p163 = pneg %p106
      %p164 = scmp.lt.s32.totalorder %s15, 1
      %s165 = scalar_select %p164, %s15, 1
      %s166 = smul.addr %s165, 2
      %s167 = scalar_lea.vmem %s3, %s166
      %p168 = scmp.lt.s32.totalorder %s15, 1
      %s169 = scalar_select %p168, %s15, 1
      %s170 = smul.addr %s169, 32
      %s171 = smul.addr %s170, 8
      %s172 = scalar_lea.vmem %s0, %s171
      %p173 = scmp.lt.s32.totalorder %s15, 1
      %s174 = scalar_select %p173, %s15, 1
      %s175 = smul.addr %s174, 32
      %s176 = smul.addr %s175, 8
      %s177 = scalar_lea.vmem %s2, %s176
      %p178 = scmp.lt.s32.totalorder %s15, 1
      %s179 = scalar_select %p178, %s15, 1
      %s180 = smul.addr %s179, 2
      %s181 = scalar_lea.vmem %s3, %s180
      %v183 = vld [vmem:[%s172] sm:$0xff]
      %v184 = vld [vmem:[%s172 + $0x8] sm:$0xff]
      %v185 = vld [vmem:[%s172 + $0x10] sm:$0xff]
      %v186 = vld [vmem:[%s172 + $0x18] sm:$0xff]
      %v187 = vld [vmem:[%s172 + $0x20] sm:$0xff]
      %v188 = vld [vmem:[%s172 + $0x28] sm:$0xff]
      %v189 = vld [vmem:[%s172 + $0x30] sm:$0xff]
      %v190 = vld [vmem:[%s172 + $0x38] sm:$0xff]
      %v191 = vld [vmem:[%s172 + $0x40] sm:$0xff]
      %v192 = vld [vmem:[%s172 + $0x48] sm:$0xff]
      %v193 = vld [vmem:[%s172 + $0x50] sm:$0xff]
      %v194 = vld [vmem:[%s172 + $0x58] sm:$0xff]
      %v195 = vld [vmem:[%s172 + $0x60] sm:$0xff]
      %v196 = vld [vmem:[%s172 + $0x68] sm:$0xff]
      %v197 = vld [vmem:[%s172 + $0x70] sm:$0xff]
      %v198 = vld [vmem:[%s172 + $0x78] sm:$0xff]
      %v199 = vld [vmem:[%s172 + $0x80] sm:$0xff]
      %v200 = vld [vmem:[%s172 + $0x88] sm:$0xff]
      %v201 = vld [vmem:[%s172 + $0x90] sm:$0xff]
      %v202 = vld [vmem:[%s172 + $0x98] sm:$0xff]
      %v203 = vld [vmem:[%s172 + $0xa0] sm:$0xff]
      %v204 = vld [vmem:[%s172 + $0xa8] sm:$0xff]
      %v205 = vld [vmem:[%s172 + $0xb0] sm:$0xff]
      %v206 = vld [vmem:[%s172 + $0xb8] sm:$0xff]
      %v207 = vld [vmem:[%s172 + $0xc0] sm:$0xff]
      %v208 = vld [vmem:[%s172 + $0xc8] sm:$0xff]
      %v209 = vld [vmem:[%s172 + $0xd0] sm:$0xff]
      %v210 = vld [vmem:[%s172 + $0xd8] sm:$0xff]
      %v211 = vld [vmem:[%s172 + $0xe0] sm:$0xff]
      %v212 = vld [vmem:[%s172 + $0xe8] sm:$0xff]
      %v213 = vld [vmem:[%s172 + $0xf0] sm:$0xff]
      %v214 = vld [vmem:[%s172 + $0xf8] sm:$0xff]
      %215 = vst [vmem:[#allocation2] sm:$0xff] 0.0
      %216 = vst [vmem:[#allocation2 + $0x8] sm:$0xff] 0.0
      %217 = vst [vmem:[#allocation2 + $0x10] sm:$0xff] 0.0
      %218 = vst [vmem:[#allocation2 + $0x18] sm:$0xff] 0.0
      %s219 = scalar_lea.vmem [#allocation2], 544
      %220 = vst [vmem:[%s219] sm:$0xff] 0.0
      %221 = vst [vmem:[%s219 + $0x8] sm:$0xff] 0.0
      %222 = vst [vmem:[%s219 + $0x10] sm:$0xff] 0.0
      %223 = vst [vmem:[%s219 + $0x18] sm:$0xff] 0.0
      %s224 = scalar_lea.vmem [#allocation2], 576
      %225 = vst [vmem:[%s224] sm:$0xff] 0.0
      %226 = vst [vmem:[%s224 + $0x8] sm:$0xff] 0.0
      %227 = vst [vmem:[%s224 + $0x10] sm:$0xff] 0.0
      %228 = vst [vmem:[%s224 + $0x18] sm:$0xff] 0.0
      %s229 = scalar_lea.vmem [#allocation2], 1120
      %230 = vst [vmem:[%s229] sm:$0xff] 0.0
      %231 = vst [vmem:[%s229 + $0x8] sm:$0xff] 0.0
      %232 = vst [vmem:[%s229 + $0x10] sm:$0xff] 0.0
      %233 = vst [vmem:[%s229 + $0x18] sm:$0xff] 0.0
      %s234 = scalar_lea.vmem [#allocation2], 1152
      %235 = vst [vmem:[%s234] sm:$0xff] 0.0
      %236 = vst [vmem:[%s234 + $0x8] sm:$0xff] 0.0
      %237 = vst [vmem:[%s234 + $0x10] sm:$0xff] 0.0
      %238 = vst [vmem:[%s234 + $0x18] sm:$0xff] 0.0
      %s239 = scalar_lea.vmem [#allocation2], 1696
      %240 = vst [vmem:[%s239] sm:$0xff] 0.0
      %241 = vst [vmem:[%s239 + $0x8] sm:$0xff] 0.0
      %242 = vst [vmem:[%s239 + $0x10] sm:$0xff] 0.0
      %243 = vst [vmem:[%s239 + $0x18] sm:$0xff] 0.0
      %s244 = scalar_lea.vmem [#allocation2], 32
      %245 = vst [vmem:[%s244] sm:$0x1] 0.0
      %246 = vst [vmem:[%s244 + $0x20] sm:$0x1] 0.0
      %247 = vst [vmem:[%s244 + $0x40] sm:$0x1] 0.0
      %248 = vst [vmem:[%s244 + $0x60] sm:$0x1] 0.0
      %249 = vst [vmem:[%s244 + $0x80] sm:$0x1] 0.0
      %250 = vst [vmem:[%s244 + $0xa0] sm:$0x1] 0.0
      %251 = vst [vmem:[%s244 + $0xc0] sm:$0x1] 0.0
      %252 = vst [vmem:[%s244 + $0xe0] sm:$0x1] 0.0
      %253 = vst [vmem:[%s244 + $0x100] sm:$0x1] 0.0
      %254 = vst [vmem:[%s244 + $0x120] sm:$0x1] 0.0
      %255 = vst [vmem:[%s244 + $0x140] sm:$0x1] 0.0
      %256 = vst [vmem:[%s244 + $0x160] sm:$0x1] 0.0
      %257 = vst [vmem:[%s244 + $0x180] sm:$0x1] 0.0
      %258 = vst [vmem:[%s244 + $0x1a0] sm:$0x1] 0.0
      %259 = vst [vmem:[%s244 + $0x1c0] sm:$0x1] 0.0
      %260 = vst [vmem:[%s244 + $0x1e0] sm:$0x1] 0.0
      %s261 = scalar_lea.vmem [#allocation2], 1184
      %262 = vst [vmem:[%s261 + $0xf] sm:$0x1] 0.0
      %263 = vst [vmem:[%s261 + $0x2f] sm:$0x1] 0.0
      %264 = vst [vmem:[%s261 + $0x4f] sm:$0x1] 0.0
      %265 = vst [vmem:[%s261 + $0x6f] sm:$0x1] 0.0
      %266 = vst [vmem:[%s261 + $0x8f] sm:$0x1] 0.0
      %267 = vst [vmem:[%s261 + $0xaf] sm:$0x1] 0.0
      %268 = vst [vmem:[%s261 + $0xcf] sm:$0x1] 0.0
      %269 = vst [vmem:[%s261 + $0xef] sm:$0x1] 0.0
      %270 = vst [vmem:[%s261 + $0x10f] sm:$0x1] 0.0
      %271 = vst [vmem:[%s261 + $0x12f] sm:$0x1] 0.0
      %272 = vst [vmem:[%s261 + $0x14f] sm:$0x1] 0.0
      %273 = vst [vmem:[%s261 + $0x16f] sm:$0x1] 0.0
      %274 = vst [vmem:[%s261 + $0x18f] sm:$0x1] 0.0
      %275 = vst [vmem:[%s261 + $0x1af] sm:$0x1] 0.0
      %276 = vst [vmem:[%s261 + $0x1cf] sm:$0x1] 0.0
      %277 = vst [vmem:[%s261 + $0x1ef] sm:$0x1] 0.0
      %s278 = scalar_lea.vmem [#allocation2], 608
      %279 = vst [vmem:[%s278] sm:$0xff] %v183
      %280 = vst [vmem:[%s278 + $0x8] sm:$0xff] %v184
      %281 = vst [vmem:[%s278 + $0x20] sm:$0xff] %v185
      %282 = vst [vmem:[%s278 + $0x28] sm:$0xff] %v186
      %283 = vst [vmem:[%s278 + $0x40] sm:$0xff] %v187
      %284 = vst [vmem:[%s278 + $0x48] sm:$0xff] %v188
      %285 = vst [vmem:[%s278 + $0x60] sm:$0xff] %v189
      %286 = vst [vmem:[%s278 + $0x68] sm:$0xff] %v190
      %287 = vst [vmem:[%s278 + $0x80] sm:$0xff] %v191
      %288 = vst [vmem:[%s278 + $0x88] sm:$0xff] %v192
      %289 = vst [vmem:[%s278 + $0xa0] sm:$0xff] %v193
      %290 = vst [vmem:[%s278 + $0xa8] sm:$0xff] %v194
      %291 = vst [vmem:[%s278 + $0xc0] sm:$0xff] %v195
      %292 = vst [vmem:[%s278 + $0xc8] sm:$0xff] %v196
      %293 = vst [vmem:[%s278 + $0xe0] sm:$0xff] %v197
      %294 = vst [vmem:[%s278 + $0xe8] sm:$0xff] %v198
      %295 = vst [vmem:[%s278 + $0x100] sm:$0xff] %v199
      %296 = vst [vmem:[%s278 + $0x108] sm:$0xff] %v200
      %297 = vst [vmem:[%s278 + $0x120] sm:$0xff] %v201
      %298 = vst [vmem:[%s278 + $0x128] sm:$0xff] %v202
      %299 = vst [vmem:[%s278 + $0x140] sm:$0xff] %v203
      %300 = vst [vmem:[%s278 + $0x148] sm:$0xff] %v204
      %301 = vst [vmem:[%s278 + $0x160] sm:$0xff] %v205
      %302 = vst [vmem:[%s278 + $0x168] sm:$0xff] %v206
      %303 = vst [vmem:[%s278 + $0x180] sm:$0xff] %v207
      %304 = vst [vmem:[%s278 + $0x188] sm:$0xff] %v208
      %305 = vst [vmem:[%s278 + $0x1a0] sm:$0xff] %v209
      %306 = vst [vmem:[%s278 + $0x1a8] sm:$0xff] %v210
      %307 = vst [vmem:[%s278 + $0x1c0] sm:$0xff] %v211
      %308 = vst [vmem:[%s278 + $0x1c8] sm:$0xff] %v212
      %309 = vst [vmem:[%s278 + $0x1e0] sm:$0xff] %v213
      %310 = vst [vmem:[%s278 + $0x1e8] sm:$0xff] %v214
      %311 = vst [vmem:[%s244 + $0x1] sm:$0xff] %v183
      %312 = vst [vmem:[%s244 + $0x9] sm:$0x7f] %v184
      %313 = vst [vmem:[%s244 + $0x21] sm:$0xff] %v185
      %314 = vst [vmem:[%s244 + $0x29] sm:$0x7f] %v186
      %315 = vst [vmem:[%s244 + $0x41] sm:$0xff] %v187
      %316 = vst [vmem:[%s244 + $0x49] sm:$0x7f] %v188
      %317 = vst [vmem:[%s244 + $0x61] sm:$0xff] %v189
      %318 = vst [vmem:[%s244 + $0x69] sm:$0x7f] %v190
      %319 = vst [vmem:[%s244 + $0x81] sm:$0xff] %v191
      %320 = vst [vmem:[%s244 + $0x89] sm:$0x7f] %v192
      %321 = vst [vmem:[%s244 + $0xa1] sm:$0xff] %v193
      %322 = vst [vmem:[%s244 + $0xa9] sm:$0x7f] %v194
      %323 = vst [vmem:[%s244 + $0xc1] sm:$0xff] %v195
      %324 = vst [vmem:[%s244 + $0xc9] sm:$0x7f] %v196
      %325 = vst [vmem:[%s244 + $0xe1] sm:$0xff] %v197
      %326 = vst [vmem:[%s244 + $0xe9] sm:$0x7f] %v198
      %327 = vst [vmem:[%s244 + $0x101] sm:$0xff] %v199
      %328 = vst [vmem:[%s244 + $0x109] sm:$0x7f] %v200
      %329 = vst [vmem:[%s244 + $0x121] sm:$0xff] %v201
      %330 = vst [vmem:[%s244 + $0x129] sm:$0x7f] %v202
      %331 = vst [vmem:[%s244 + $0x141] sm:$0xff] %v203
      %332 = vst [vmem:[%s244 + $0x149] sm:$0x7f] %v204
      %333 = vst [vmem:[%s244 + $0x161] sm:$0xff] %v205
      %334 = vst [vmem:[%s244 + $0x169] sm:$0x7f] %v206
      %335 = vst [vmem:[%s244 + $0x181] sm:$0xff] %v207
      %336 = vst [vmem:[%s244 + $0x189] sm:$0x7f] %v208
      %337 = vst [vmem:[%s244 + $0x1a1] sm:$0xff] %v209
      %338 = vst [vmem:[%s244 + $0x1a9] sm:$0x7f] %v210
      %339 = vst [vmem:[%s244 + $0x1c1] sm:$0xff] %v211
      %340 = vst [vmem:[%s244 + $0x1c9] sm:$0x7f] %v212
      %341 = vst [vmem:[%s244 + $0x1e1] sm:$0xff] %v213
      %342 = vst [vmem:[%s244 + $0x1e9] sm:$0x7f] %v214
      %343 = vst [vmem:[%s261 - $0x1] sm:$0xfe] %v183
      %344 = vst [vmem:[%s261 + $0x7] sm:$0xff] %v184
      %345 = vst [vmem:[%s261 + $0x1f] sm:$0xfe] %v185
      %346 = vst [vmem:[%s261 + $0x27] sm:$0xff] %v186
      %347 = vst [vmem:[%s261 + $0x3f] sm:$0xfe] %v187
      %348 = vst [vmem:[%s261 + $0x47] sm:$0xff] %v188
      %349 = vst [vmem:[%s261 + $0x5f] sm:$0xfe] %v189
      %350 = vst [vmem:[%s261 + $0x67] sm:$0xff] %v190
      %351 = vst [vmem:[%s261 + $0x7f] sm:$0xfe] %v191
      %352 = vst [vmem:[%s261 + $0x87] sm:$0xff] %v192
      %353 = vst [vmem:[%s261 + $0x9f] sm:$0xfe] %v193
      %354 = vst [vmem:[%s261 + $0xa7] sm:$0xff] %v194
      %355 = vst [vmem:[%s261 + $0xbf] sm:$0xfe] %v195
      %356 = vst [vmem:[%s261 + $0xc7] sm:$0xff] %v196
      %357 = vst [vmem:[%s261 + $0xdf] sm:$0xfe] %v197
      %358 = vst [vmem:[%s261 + $0xe7] sm:$0xff] %v198
      %359 = vst [vmem:[%s261 + $0xff] sm:$0xfe] %v199
      %360 = vst [vmem:[%s261 + $0x107] sm:$0xff] %v200
      %361 = vst [vmem:[%s261 + $0x11f] sm:$0xfe] %v201
      %362 = vst [vmem:[%s261 + $0x127] sm:$0xff] %v202
      %363 = vst [vmem:[%s261 + $0x13f] sm:$0xfe] %v203
      %364 = vst [vmem:[%s261 + $0x147] sm:$0xff] %v204
      %365 = vst [vmem:[%s261 + $0x15f] sm:$0xfe] %v205
      %366 = vst [vmem:[%s261 + $0x167] sm:$0xff] %v206
      %367 = vst [vmem:[%s261 + $0x17f] sm:$0xfe] %v207
      %368 = vst [vmem:[%s261 + $0x187] sm:$0xff] %v208
      %369 = vst [vmem:[%s261 + $0x19f] sm:$0xfe] %v209
      %370 = vst [vmem:[%s261 + $0x1a7] sm:$0xff] %v210
      %371 = vst [vmem:[%s261 + $0x1bf] sm:$0xfe] %v211
      %372 = vst [vmem:[%s261 + $0x1c7] sm:$0xff] %v212
      %373 = vst [vmem:[%s261 + $0x1df] sm:$0xfe] %v213
      %374 = vst [vmem:[%s261 + $0x1e7] sm:$0xff] %v214
      %v375 = vld [vmem:[#allocation2] sm:$0xff]
      %v376 = vld [vmem:[#allocation2 + $0x8] sm:$0xff]
      %v377 = vld [vmem:[#allocation2 + $0x10] sm:$0xff]
      %v378 = vld [vmem:[#allocation2 + $0x18] sm:$0xff]
      %v379 = vld [vmem:[#allocation2 + $0x20] sm:$0xff]
      %v380 = vld [vmem:[#allocation2 + $0x28] sm:$0xff]
      %v381 = vld [vmem:[#allocation2 + $0x30] sm:$0xff]
      %v382 = vld [vmem:[#allocation2 + $0x38] sm:$0xff]
      %v383 = vld [vmem:[#allocation2 + $0x40] sm:$0xff]
      %v384 = vld [vmem:[#allocation2 + $0x48] sm:$0xff]
      %v385 = vld [vmem:[#allocation2 + $0x50] sm:$0xff]
      %v386 = vld [vmem:[#allocation2 + $0x58] sm:$0xff]
      %v387 = vld [vmem:[#allocation2 + $0x60] sm:$0xff]
      %v388 = vld [vmem:[#allocation2 + $0x68] sm:$0xff]
      %v389 = vld [vmem:[#allocation2 + $0x70] sm:$0xff]
      %v390 = vld [vmem:[#allocation2 + $0x78] sm:$0xff]
      %v391 = vld [vmem:[#allocation2 + $0x80] sm:$0xff]
      %v392 = vld [vmem:[#allocation2 + $0x88] sm:$0xff]
      %v393 = vld [vmem:[#allocation2 + $0x90] sm:$0xff]
      %v394 = vld [vmem:[#allocation2 + $0x98] sm:$0xff]
      %v395 = vld [vmem:[#allocation2 + $0xa0] sm:$0xff]
      %v396 = vld [vmem:[#allocation2 + $0xa8] sm:$0xff]
      %v397 = vld [vmem:[#allocation2 + $0xb0] sm:$0xff]
      %v398 = vld [vmem:[#allocation2 + $0xb8] sm:$0xff]
      %v399 = vld [vmem:[#allocation2 + $0xc0] sm:$0xff]
      %v400 = vld [vmem:[#allocation2 + $0xc8] sm:$0xff]
      %v401 = vld [vmem:[#allocation2 + $0xd0] sm:$0xff]
      %v402 = vld [vmem:[#allocation2 + $0xd8] sm:$0xff]
      %v403 = vld [vmem:[#allocation2 + $0xe0] sm:$0xff]
      %v404 = vld [vmem:[#allocation2 + $0xe8] sm:$0xff]
      %v405 = vld [vmem:[#allocation2 + $0xf0] sm:$0xff]
      %v406 = vld [vmem:[#allocation2 + $0xf8] sm:$0xff]
      %v407 = vld [vmem:[#allocation2 + $0x100] sm:$0xff]
      %v408 = vld [vmem:[#allocation2 + $0x108] sm:$0xff]
      %v409 = vld [vmem:[#allocation2 + $0x110] sm:$0xff]
      %v410 = vld [vmem:[#allocation2 + $0x118] sm:$0xff]
      %v411 = vld [vmem:[#allocation2 + $0x120] sm:$0xff]
      %v412 = vld [vmem:[#allocation2 + $0x128] sm:$0xff]
      %v413 = vld [vmem:[#allocation2 + $0x130] sm:$0xff]
      %v414 = vld [vmem:[#allocation2 + $0x138] sm:$0xff]
      %v415 = vld [vmem:[#allocation2 + $0x140] sm:$0xff]
      %v416 = vld [vmem:[#allocation2 + $0x148] sm:$0xff]
      %v417 = vld [vmem:[#allocation2 + $0x150] sm:$0xff]
      %v418 = vld [vmem:[#allocation2 + $0x158] sm:$0xff]
      %v419 = vld [vmem:[#allocation2 + $0x160] sm:$0xff]
      %v420 = vld [vmem:[#allocation2 + $0x168] sm:$0xff]
      %v421 = vld [vmem:[#allocation2 + $0x170] sm:$0xff]
      %v422 = vld [vmem:[#allocation2 + $0x178] sm:$0xff]
      %v423 = vld [vmem:[#allocation2 + $0x180] sm:$0xff]
      %v424 = vld [vmem:[#allocation2 + $0x188] sm:$0xff]
      %v425 = vld [vmem:[#allocation2 + $0x190] sm:$0xff]
      %v426 = vld [vmem:[#allocation2 + $0x198] sm:$0xff]
      %v427 = vld [vmem:[#allocation2 + $0x1a0] sm:$0xff]
      %v428 = vld [vmem:[#allocation2 + $0x1a8] sm:$0xff]
      %v429 = vld [vmem:[#allocation2 + $0x1b0] sm:$0xff]
      %v430 = vld [vmem:[#allocation2 + $0x1b8] sm:$0xff]
      %v431 = vld [vmem:[#allocation2 + $0x1c0] sm:$0xff]
      %v432 = vld [vmem:[#allocation2 + $0x1c8] sm:$0xff]
      %v433 = vld [vmem:[#allocation2 + $0x1d0] sm:$0xff]
      %v434 = vld [vmem:[#allocation2 + $0x1d8] sm:$0xff]
      %v435 = vld [vmem:[#allocation2 + $0x1e0] sm:$0xff]
      %v436 = vld [vmem:[#allocation2 + $0x1e8] sm:$0xff]
      %v437 = vld [vmem:[#allocation2 + $0x1f0] sm:$0xff]
      %v438 = vld [vmem:[#allocation2 + $0x1f8] sm:$0xff]
      %v439 = vpack.c.bf16 %v376, %v375
      %v440 = vpack.c.bf16 %v378, %v377
      %v441 = vpack.c.bf16 %v380, %v379
      %v442 = vpack.c.bf16 %v382, %v381
      %v443 = vpack.c.bf16 %v384, %v383
      %v444 = vpack.c.bf16 %v386, %v385
      %v445 = vpack.c.bf16 %v388, %v387
      %v446 = vpack.c.bf16 %v390, %v389
      %v447 = vpack.c.bf16 %v392, %v391
      %v448 = vpack.c.bf16 %v394, %v393
      %v449 = vpack.c.bf16 %v396, %v395
      %v450 = vpack.c.bf16 %v398, %v397
      %v451 = vpack.c.bf16 %v400, %v399
      %v452 = vpack.c.bf16 %v402, %v401
      %v453 = vpack.c.bf16 %v404, %v403
      %v454 = vpack.c.bf16 %v406, %v405
      %v455 = vpack.c.bf16 %v408, %v407
      %v456 = vpack.c.bf16 %v410, %v409
      %v457 = vpack.c.bf16 %v412, %v411
      %v458 = vpack.c.bf16 %v414, %v413
      %v459 = vpack.c.bf16 %v416, %v415
      %v460 = vpack.c.bf16 %v418, %v417
      %v461 = vpack.c.bf16 %v420, %v419
      %v462 = vpack.c.bf16 %v422, %v421
      %v463 = vpack.c.bf16 %v424, %v423
      %v464 = vpack.c.bf16 %v426, %v425
      %v465 = vpack.c.bf16 %v428, %v427
      %v466 = vpack.c.bf16 %v430, %v429
      %v467 = vpack.c.bf16 %v432, %v431
      %v468 = vpack.c.bf16 %v434, %v433
      %v469 = vpack.c.bf16 %v436, %v435
      %v470 = vpack.c.bf16 %v438, %v437
      %v471 = vld [vmem:[%s1] sm:$0xf]
      %v472 = vld [vmem:[%s1 + $0x4] sm:$0xf]
      %v473 = vld [vmem:[%s1 + $0x8] sm:$0xf]
      %v474 = vld [vmem:[%s1 + $0xc] sm:$0xf]
      %v475 = vld [vmem:[%s1 + $0x10] sm:$0xf]
      %v476 = vld [vmem:[%s1 + $0x14] sm:$0xf]
      %v477 = vld [vmem:[%s1 + $0x18] sm:$0xf]
      %v478 = vld [vmem:[%s1 + $0x1c] sm:$0xf]
      %v479 = vld [vmem:[%s1 + $0x20] sm:$0xf]
      %v480 = vld [vmem:[%s1 + $0x24] sm:$0xf]
      %v481 = vld [vmem:[%s1 + $0x28] sm:$0xf]
      %v482 = vld [vmem:[%s1 + $0x2c] sm:$0xf]
      %v483 = vld [vmem:[%s1 + $0x30] sm:$0xf]
      %v484 = vld [vmem:[%s1 + $0x34] sm:$0xf]
      %v485 = vld [vmem:[%s1 + $0x38] sm:$0xf]
      %v486 = vld [vmem:[%s1 + $0x3c] sm:$0xf]
      %v487 = vld [vmem:[%s224] sm:$0xff]
      %v488 = vld [vmem:[%s224 + $0x8] sm:$0xff]
      %v489 = vld [vmem:[%s224 + $0x10] sm:$0xff]
      %v490 = vld [vmem:[%s224 + $0x18] sm:$0xff]
      %v491 = vld [vmem:[%s224 + $0x20] sm:$0xff]
      %v492 = vld [vmem:[%s224 + $0x28] sm:$0xff]
      %v493 = vld [vmem:[%s224 + $0x30] sm:$0xff]
      %v494 = vld [vmem:[%s224 + $0x38] sm:$0xff]
      %v495 = vld [vmem:[%s224 + $0x40] sm:$0xff]
      %v496 = vld [vmem:[%s224 + $0x48] sm:$0xff]
      %v497 = vld [vmem:[%s224 + $0x50] sm:$0xff]
      %v498 = vld [vmem:[%s224 + $0x58] sm:$0xff]
      %v499 = vld [vmem:[%s224 + $0x60] sm:$0xff]
      %v500 = vld [vmem:[%s224 + $0x68] sm:$0xff]
      %v501 = vld [vmem:[%s224 + $0x70] sm:$0xff]
      %v502 = vld [vmem:[%s224 + $0x78] sm:$0xff]
      %v503 = vld [vmem:[%s224 + $0x80] sm:$0xff]
      %v504 = vld [vmem:[%s224 + $0x88] sm:$0xff]
      %v505 = vld [vmem:[%s224 + $0x90] sm:$0xff]
      %v506 = vld [vmem:[%s224 + $0x98] sm:$0xff]
      %v507 = vld [vmem:[%s224 + $0xa0] sm:$0xff]
      %v508 = vld [vmem:[%s224 + $0xa8] sm:$0xff]
      %v509 = vld [vmem:[%s224 + $0xb0] sm:$0xff]
      %v510 = vld [vmem:[%s224 + $0xb8] sm:$0xff]
      %v511 = vld [vmem:[%s224 + $0xc0] sm:$0xff]
      %v512 = vld [vmem:[%s224 + $0xc8] sm:$0xff]
      %v513 = vld [vmem:[%s224 + $0xd0] sm:$0xff]
      %v514 = vld [vmem:[%s224 + $0xd8] sm:$0xff]
      %v515 = vld [vmem:[%s224 + $0xe0] sm:$0xff]
      %v516 = vld [vmem:[%s224 + $0xe8] sm:$0xff]
      %v517 = vld [vmem:[%s224 + $0xf0] sm:$0xff]
      %v518 = vld [vmem:[%s224 + $0xf8] sm:$0xff]
      %v519 = vld [vmem:[%s224 + $0x100] sm:$0xff]
      %v520 = vld [vmem:[%s224 + $0x108] sm:$0xff]
      %v521 = vld [vmem:[%s224 + $0x110] sm:$0xff]
      %v522 = vld [vmem:[%s224 + $0x118] sm:$0xff]
      %v523 = vld [vmem:[%s224 + $0x120] sm:$0xff]
      %v524 = vld [vmem:[%s224 + $0x128] sm:$0xff]
      %v525 = vld [vmem:[%s224 + $0x130] sm:$0xff]
      %v526 = vld [vmem:[%s224 + $0x138] sm:$0xff]
      %v527 = vld [vmem:[%s224 + $0x140] sm:$0xff]
      %v528 = vld [vmem:[%s224 + $0x148] sm:$0xff]
      %v529 = vld [vmem:[%s224 + $0x150] sm:$0xff]
      %v530 = vld [vmem:[%s224 + $0x158] sm:$0xff]
      %v531 = vld [vmem:[%s224 + $0x160] sm:$0xff]
      %v532 = vld [vmem:[%s224 + $0x168] sm:$0xff]
      %v533 = vld [vmem:[%s224 + $0x170] sm:$0xff]
      %v534 = vld [vmem:[%s224 + $0x178] sm:$0xff]
      %v535 = vld [vmem:[%s224 + $0x180] sm:$0xff]
      %v536 = vld [vmem:[%s224 + $0x188] sm:$0xff]
      %v537 = vld [vmem:[%s224 + $0x190] sm:$0xff]
      %v538 = vld [vmem:[%s224 + $0x198] sm:$0xff]
      %v539 = vld [vmem:[%s224 + $0x1a0] sm:$0xff]
      %v540 = vld [vmem:[%s224 + $0x1a8] sm:$0xff]
      %v541 = vld [vmem:[%s224 + $0x1b0] sm:$0xff]
      %v542 = vld [vmem:[%s224 + $0x1b8] sm:$0xff]
      %v543 = vld [vmem:[%s224 + $0x1c0] sm:$0xff]
      %v544 = vld [vmem:[%s224 + $0x1c8] sm:$0xff]
      %v545 = vld [vmem:[%s224 + $0x1d0] sm:$0xff]
      %v546 = vld [vmem:[%s224 + $0x1d8] sm:$0xff]
      %v547 = vld [vmem:[%s224 + $0x1e0] sm:$0xff]
      %v548 = vld [vmem:[%s224 + $0x1e8] sm:$0xff]
      %v549 = vld [vmem:[%s224 + $0x1f0] sm:$0xff]
      %v550 = vld [vmem:[%s224 + $0x1f8] sm:$0xff]
      %v551 = vpack.c.bf16 %v488, %v487
      %v552 = vpack.c.bf16 %v490, %v489
      %v553 = vpack.c.bf16 %v492, %v491
      %v554 = vpack.c.bf16 %v494, %v493
      %v555 = vpack.c.bf16 %v496, %v495
      %v556 = vpack.c.bf16 %v498, %v497
      %v557 = vpack.c.bf16 %v500, %v499
      %v558 = vpack.c.bf16 %v502, %v501
      %v559 = vpack.c.bf16 %v504, %v503
      %v560 = vpack.c.bf16 %v506, %v505
      %v561 = vpack.c.bf16 %v508, %v507
      %v562 = vpack.c.bf16 %v510, %v509
      %v563 = vpack.c.bf16 %v512, %v511
      %v564 = vpack.c.bf16 %v514, %v513
      %v565 = vpack.c.bf16 %v516, %v515
      %v566 = vpack.c.bf16 %v518, %v517
      %v567 = vpack.c.bf16 %v520, %v519
      %v568 = vpack.c.bf16 %v522, %v521
      %v569 = vpack.c.bf16 %v524, %v523
      %v570 = vpack.c.bf16 %v526, %v525
      %v571 = vpack.c.bf16 %v528, %v527
      %v572 = vpack.c.bf16 %v530, %v529
      %v573 = vpack.c.bf16 %v532, %v531
      %v574 = vpack.c.bf16 %v534, %v533
      %v575 = vpack.c.bf16 %v536, %v535
      %v576 = vpack.c.bf16 %v538, %v537
      %v577 = vpack.c.bf16 %v540, %v539
      %v578 = vpack.c.bf16 %v542, %v541
      %v579 = vpack.c.bf16 %v544, %v543
      %v580 = vpack.c.bf16 %v546, %v545
      %v581 = vpack.c.bf16 %v548, %v547
      %v582 = vpack.c.bf16 %v550, %v549
      %s583 = scalar_lea.vmem %s1, 64
      %v584 = vld [vmem:[%s583] sm:$0xf]
      %v585 = vld [vmem:[%s583 + $0x4] sm:$0xf]
      %v586 = vld [vmem:[%s583 + $0x8] sm:$0xf]
      %v587 = vld [vmem:[%s583 + $0xc] sm:$0xf]
      %v588 = vld [vmem:[%s583 + $0x10] sm:$0xf]
      %v589 = vld [vmem:[%s583 + $0x14] sm:$0xf]
      %v590 = vld [vmem:[%s583 + $0x18] sm:$0xf]
      %v591 = vld [vmem:[%s583 + $0x1c] sm:$0xf]
      %v592 = vld [vmem:[%s583 + $0x20] sm:$0xf]
      %v593 = vld [vmem:[%s583 + $0x24] sm:$0xf]
      %v594 = vld [vmem:[%s583 + $0x28] sm:$0xf]
      %v595 = vld [vmem:[%s583 + $0x2c] sm:$0xf]
      %v596 = vld [vmem:[%s583 + $0x30] sm:$0xf]
      %v597 = vld [vmem:[%s583 + $0x34] sm:$0xf]
      %v598 = vld [vmem:[%s583 + $0x38] sm:$0xf]
      %v599 = vld [vmem:[%s583 + $0x3c] sm:$0xf]
      %v616 = vunpack.c.l.b16 %v584
      %v617 = vunpack.c.l.b16 %v585
      %v618 = vunpack.c.l.b16 %v586
      %v619 = vunpack.c.l.b16 %v587
      %v620 = vunpack.c.l.b16 %v588
      %v621 = vunpack.c.l.b16 %v589
      %v622 = vunpack.c.l.b16 %v590
      %v623 = vunpack.c.l.b16 %v591
      %v624 = vunpack.c.l.b16 %v592
      %v625 = vunpack.c.l.b16 %v593
      %v626 = vunpack.c.l.b16 %v594
      %v627 = vunpack.c.l.b16 %v595
      %v628 = vunpack.c.l.b16 %v596
      %v629 = vunpack.c.l.b16 %v597
      %v630 = vunpack.c.l.b16 %v598
      %v631 = vunpack.c.l.b16 %v599
      %v632 = vpack.c.b16 %v617, %v616
      %v633 = vpack.c.b16 %v619, %v618
      %v634 = vpack.c.b16 %v621, %v620
      %v635 = vpack.c.b16 %v623, %v622
      %v636 = vpack.c.b16 %v625, %v624
      %v637 = vpack.c.b16 %v627, %v626
      %v638 = vpack.c.b16 %v629, %v628
      %v639 = vpack.c.b16 %v631, %v630
      %648 = vmatprep.subr.bf16.mxu0 0
      %649 = vmatpush1.bf16.msra.mxu0 %v639
      %650 = vmatprep.subr.bf16.mxu0 0
      %651 = vmatpush1.bf16.msra.mxu0 %v638
      %652 = vmatprep.subr.bf16.mxu0 0
      %653 = vmatpush1.bf16.msra.mxu0 %v637
      %654 = vmatprep.subr.bf16.mxu0 0
      %655 = vmatpush1.bf16.msra.mxu0 %v636
      %656 = vmatprep.subr.bf16.mxu0 0
      %657 = vmatpush1.bf16.msra.mxu0 %v635
      %658 = vmatprep.subr.bf16.mxu0 0
      %659 = vmatpush1.bf16.msra.mxu0 %v634
      %660 = vmatprep.subr.bf16.mxu0 0
      %661 = vmatpush1.bf16.msra.mxu0 %v633
      %662 = vmatprep.subr.bf16.mxu0 0
      %663 = vmatpush1.bf16.msra.mxu0 %v632
      %664 = vmatprep.subr.bf16.mxu0 0
      %665 = vmatpush2.bf16.msra.mxu0 0
      %666 = vmatprep.subr.bf16.mxu0 0
      %667 = vmatpush2.bf16.msra.mxu0 0
      %668 = vmatprep.subr.bf16.mxu0 0
      %669 = vmatpush2.bf16.msra.mxu0 0
      %670 = vmatprep.subr.bf16.mxu0 0
      %671 = vmatpush2.bf16.msra.mxu0 0
      %672 = vmatprep.subr.bf16.mxu0 0
      %673 = vmatpush2.bf16.msra.mxu0 0
      %674 = vmatprep.subr.bf16.mxu0 0
      %675 = vmatpush2.bf16.msra.mxu0 0
      %676 = vmatprep.subr.bf16.mxu0 0
      %677 = vmatpush2.bf16.msra.mxu0 0
      %678 = vmatprep.subr.bf16.mxu0 0
      %679 = vmatpush2.bf16.msra.mxu0 0
      %680 = vmatprep.mubr.bf16.mxu0 0
      %681 = vmatmul.mubr.bf16.gmra.mxu0 %v551
      %v682 = vpop.f32.mrf.mxu0
      %v683 = vadd.f32 0.0, %v682
      %v684 = vpop.f32.mrf.mxu0
      %v685 = vpop.f32.mrf.mxu0
      %v686 = vadd.f32 0.0, %v685
      %v687 = vpop.f32.mrf.mxu0
      %688 = vmatprep.mubr.bf16.mxu0 0
      %689 = vmatmul.mubr.bf16.gmra.mxu0 %v552
      %v690 = vpop.f32.mrf.mxu0
      %v691 = vpop.f32.mrf.mxu0
      %v692 = vpop.f32.mrf.mxu0
      %v693 = vpop.f32.mrf.mxu0
      %694 = vmatprep.mubr.bf16.mxu0 0
      %695 = vmatmul.mubr.bf16.gmra.mxu0 %v553
      %v696 = vpop.f32.mrf.mxu0
      %v697 = vadd.f32 0.0, %v696
      %v698 = vpop.f32.mrf.mxu0
      %v699 = vpop.f32.mrf.mxu0
      %v700 = vadd.f32 0.0, %v699
      %v701 = vpop.f32.mrf.mxu0
      %702 = vmatprep.mubr.bf16.mxu0 0
      %703 = vmatmul.mubr.bf16.gmra.mxu0 %v554
      %v704 = vpop.f32.mrf.mxu0
      %v705 = vpop.f32.mrf.mxu0
      %v706 = vpop.f32.mrf.mxu0
      %v707 = vpop.f32.mrf.mxu0
      %708 = vmatprep.mubr.bf16.mxu0 0
      %709 = vmatmul.mubr.bf16.gmra.mxu0 %v555
      %v710 = vpop.f32.mrf.mxu0
      %v711 = vadd.f32 0.0, %v710
      %v712 = vpop.f32.mrf.mxu0
      %v713 = vpop.f32.mrf.mxu0
      %v714 = vadd.f32 0.0, %v713
      %v715 = vpop.f32.mrf.mxu0
      %716 = vmatprep.mubr.bf16.mxu0 0
      %717 = vmatmul.mubr.bf16.gmra.mxu0 %v556
      %v718 = vpop.f32.mrf.mxu0
      %v719 = vpop.f32.mrf.mxu0
      %v720 = vpop.f32.mrf.mxu0
      %v721 = vpop.f32.mrf.mxu0
      %722 = vmatprep.mubr.bf16.mxu0 0
      %723 = vmatmul.mubr.bf16.gmra.mxu0 %v557
      %v724 = vpop.f32.mrf.mxu0
      %v725 = vadd.f32 0.0, %v724
      %v726 = vpop.f32.mrf.mxu0
      %v727 = vpop.f32.mrf.mxu0
      %v728 = vadd.f32 0.0, %v727
      %v729 = vpop.f32.mrf.mxu0
      %730 = vmatprep.mubr.bf16.mxu0 0
      %731 = vmatmul.mubr.bf16.gmra.mxu0 %v558
      %v732 = vpop.f32.mrf.mxu0
      %v733 = vpop.f32.mrf.mxu0
      %v734 = vpop.f32.mrf.mxu0
      %v735 = vpop.f32.mrf.mxu0
      %736 = vmatprep.mubr.bf16.mxu0 0
      %737 = vmatmul.mubr.bf16.gmra.mxu0 %v559
      %v738 = vpop.f32.mrf.mxu0
      %v739 = vadd.f32 0.0, %v738
      %v740 = vpop.f32.mrf.mxu0
      %v741 = vpop.f32.mrf.mxu0
      %v742 = vadd.f32 0.0, %v741
      %v743 = vpop.f32.mrf.mxu0
      %744 = vmatprep.mubr.bf16.mxu0 0
      %745 = vmatmul.mubr.bf16.gmra.mxu0 %v560
      %v746 = vpop.f32.mrf.mxu0
      %v747 = vpop.f32.mrf.mxu0
      %v748 = vpop.f32.mrf.mxu0
      %v749 = vpop.f32.mrf.mxu0
      %750 = vmatprep.mubr.bf16.mxu0 0
      %751 = vmatmul.mubr.bf16.gmra.mxu0 %v561
      %v752 = vpop.f32.mrf.mxu0
      %v753 = vadd.f32 0.0, %v752
      %v754 = vpop.f32.mrf.mxu0
      %v755 = vpop.f32.mrf.mxu0
      %v756 = vadd.f32 0.0, %v755
      %v757 = vpop.f32.mrf.mxu0
      %758 = vmatprep.mubr.bf16.mxu0 0
      %759 = vmatmul.mubr.bf16.gmra.mxu0 %v562
      %v760 = vpop.f32.mrf.mxu0
      %v761 = vpop.f32.mrf.mxu0
      %v762 = vpop.f32.mrf.mxu0
      %v763 = vpop.f32.mrf.mxu0
      %764 = vmatprep.mubr.bf16.mxu0 0
      %765 = vmatmul.mubr.bf16.gmra.mxu0 %v563
      %v766 = vpop.f32.mrf.mxu0
      %v767 = vadd.f32 0.0, %v766
      %v768 = vpop.f32.mrf.mxu0
      %v769 = vpop.f32.mrf.mxu0
      %v770 = vadd.f32 0.0, %v769
      %v771 = vpop.f32.mrf.mxu0
      %772 = vmatprep.mubr.bf16.mxu0 0
      %773 = vmatmul.mubr.bf16.gmra.mxu0 %v564
      %v774 = vpop.f32.mrf.mxu0
      %v775 = vpop.f32.mrf.mxu0
      %v776 = vpop.f32.mrf.mxu0
      %v777 = vpop.f32.mrf.mxu0
      %778 = vmatprep.mubr.bf16.mxu0 0
      %779 = vmatmul.mubr.bf16.gmra.mxu0 %v565
      %v780 = vpop.f32.mrf.mxu0
      %v781 = vadd.f32 0.0, %v780
      %v782 = vpop.f32.mrf.mxu0
      %v783 = vpop.f32.mrf.mxu0
      %v784 = vadd.f32 0.0, %v783
      %v785 = vpop.f32.mrf.mxu0
      %786 = vmatprep.mubr.bf16.mxu0 0
      %787 = vmatmul.mubr.bf16.gmra.mxu0 %v566
      %v788 = vpop.f32.mrf.mxu0
      %v789 = vpop.f32.mrf.mxu0
      %v790 = vpop.f32.mrf.mxu0
      %v791 = vpop.f32.mrf.mxu0
      %792 = vmatprep.mubr.bf16.mxu0 0
      %793 = vmatmul.mubr.bf16.gmra.mxu0 %v567
      %v794 = vpop.f32.mrf.mxu0
      %v795 = vadd.f32 0.0, %v794
      %v796 = vpop.f32.mrf.mxu0
      %v797 = vpop.f32.mrf.mxu0
      %v798 = vadd.f32 0.0, %v797
      %v799 = vpop.f32.mrf.mxu0
      %800 = vmatprep.mubr.bf16.mxu0 0
      %801 = vmatmul.mubr.bf16.gmra.mxu0 %v568
      %v802 = vpop.f32.mrf.mxu0
      %v803 = vpop.f32.mrf.mxu0
      %v804 = vpop.f32.mrf.mxu0
      %v805 = vpop.f32.mrf.mxu0
      %806 = vmatprep.mubr.bf16.mxu0 0
      %807 = vmatmul.mubr.bf16.gmra.mxu0 %v569
      %v808 = vpop.f32.mrf.mxu0
      %v809 = vadd.f32 0.0, %v808
      %v810 = vpop.f32.mrf.mxu0
      %v811 = vpop.f32.mrf.mxu0
      %v812 = vadd.f32 0.0, %v811
      %v813 = vpop.f32.mrf.mxu0
      %814 = vmatprep.mubr.bf16.mxu0 0
      %815 = vmatmul.mubr.bf16.gmra.mxu0 %v570
      %v816 = vpop.f32.mrf.mxu0
      %v817 = vpop.f32.mrf.mxu0
      %v818 = vpop.f32.mrf.mxu0
      %v819 = vpop.f32.mrf.mxu0
      %820 = vmatprep.mubr.bf16.mxu0 0
      %821 = vmatmul.mubr.bf16.gmra.mxu0 %v571
      %v822 = vpop.f32.mrf.mxu0
      %v823 = vadd.f32 0.0, %v822
      %v824 = vpop.f32.mrf.mxu0
      %v825 = vpop.f32.mrf.mxu0
      %v826 = vadd.f32 0.0, %v825
      %v827 = vpop.f32.mrf.mxu0
      %828 = vmatprep.mubr.bf16.mxu0 0
      %829 = vmatmul.mubr.bf16.gmra.mxu0 %v572
      %v830 = vpop.f32.mrf.mxu0
      %v831 = vpop.f32.mrf.mxu0
      %v832 = vpop.f32.mrf.mxu0
      %v833 = vpop.f32.mrf.mxu0
      %834 = vmatprep.mubr.bf16.mxu0 0
      %835 = vmatmul.mubr.bf16.gmra.mxu0 %v573
      %v836 = vpop.f32.mrf.mxu0
      %v837 = vadd.f32 0.0, %v836
      %v838 = vpop.f32.mrf.mxu0
      %v839 = vpop.f32.mrf.mxu0
      %v840 = vadd.f32 0.0, %v839
      %v841 = vpop.f32.mrf.mxu0
      %842 = vmatprep.mubr.bf16.mxu0 0
      %843 = vmatmul.mubr.bf16.gmra.mxu0 %v574
      %v844 = vpop.f32.mrf.mxu0
      %v845 = vpop.f32.mrf.mxu0
      %v846 = vpop.f32.mrf.mxu0
      %v847 = vpop.f32.mrf.mxu0
      %848 = vmatprep.mubr.bf16.mxu0 0
      %849 = vmatmul.mubr.bf16.gmra.mxu0 %v575
      %v850 = vpop.f32.mrf.mxu0
      %v851 = vadd.f32 0.0, %v850
      %v852 = vpop.f32.mrf.mxu0
      %v853 = vpop.f32.mrf.mxu0
      %v854 = vadd.f32 0.0, %v853
      %v855 = vpop.f32.mrf.mxu0
      %856 = vmatprep.mubr.bf16.mxu0 0
      %857 = vmatmul.mubr.bf16.gmra.mxu0 %v576
      %v858 = vpop.f32.mrf.mxu0
      %v859 = vpop.f32.mrf.mxu0
      %v860 = vpop.f32.mrf.mxu0
      %v861 = vpop.f32.mrf.mxu0
      %862 = vmatprep.mubr.bf16.mxu0 0
      %863 = vmatmul.mubr.bf16.gmra.mxu0 %v577
      %v864 = vpop.f32.mrf.mxu0
      %v865 = vadd.f32 0.0, %v864
      %v866 = vpop.f32.mrf.mxu0
      %v867 = vpop.f32.mrf.mxu0
      %v868 = vadd.f32 0.0, %v867
      %v869 = vpop.f32.mrf.mxu0
      %870 = vmatprep.mubr.bf16.mxu0 0
      %871 = vmatmul.mubr.bf16.gmra.mxu0 %v578
      %v872 = vpop.f32.mrf.mxu0
      %v873 = vpop.f32.mrf.mxu0
      %v874 = vpop.f32.mrf.mxu0
      %v875 = vpop.f32.mrf.mxu0
      %876 = vmatprep.mubr.bf16.mxu0 0
      %877 = vmatmul.mubr.bf16.gmra.mxu0 %v579
      %v878 = vpop.f32.mrf.mxu0
      %v879 = vadd.f32 0.0, %v878
      %v880 = vpop.f32.mrf.mxu0
      %v881 = vpop.f32.mrf.mxu0
      %v882 = vadd.f32 0.0, %v881
      %v883 = vpop.f32.mrf.mxu0
      %884 = vmatprep.mubr.bf16.mxu0 0
      %885 = vmatmul.mubr.bf16.gmra.mxu0 %v580
      %v886 = vpop.f32.mrf.mxu0
      %v887 = vpop.f32.mrf.mxu0
      %v888 = vpop.f32.mrf.mxu0
      %v889 = vpop.f32.mrf.mxu0
      %890 = vmatprep.mubr.bf16.mxu0 0
      %891 = vmatmul.mubr.bf16.gmra.mxu0 %v581
      %v892 = vpop.f32.mrf.mxu0
      %v893 = vadd.f32 0.0, %v892
      %v894 = vpop.f32.mrf.mxu0
      %v895 = vpop.f32.mrf.mxu0
      %v896 = vadd.f32 0.0, %v895
      %v897 = vpop.f32.mrf.mxu0
      %898 = vmatprep.mubr.bf16.mxu0 0
      %899 = vmatmul.mubr.bf16.gmra.mxu0 %v582
      %v900 = vpop.f32.mrf.mxu0
      %v901 = vpop.f32.mrf.mxu0
      %v902 = vpop.f32.mrf.mxu0
      %v903 = vpop.f32.mrf.mxu0
      %904 = vdwg.mxu0
      %v921 = vunpack.c.l.b16 %v471
      %v922 = vunpack.c.l.b16 %v472
      %v923 = vunpack.c.l.b16 %v473
      %v924 = vunpack.c.l.b16 %v474
      %v925 = vunpack.c.l.b16 %v475
      %v926 = vunpack.c.l.b16 %v476
      %v927 = vunpack.c.l.b16 %v477
      %v928 = vunpack.c.l.b16 %v478
      %v929 = vunpack.c.l.b16 %v479
      %v930 = vunpack.c.l.b16 %v480
      %v931 = vunpack.c.l.b16 %v481
      %v932 = vunpack.c.l.b16 %v482
      %v933 = vunpack.c.l.b16 %v483
      %v934 = vunpack.c.l.b16 %v484
      %v935 = vunpack.c.l.b16 %v485
      %v936 = vunpack.c.l.b16 %v486
      %v937 = vpack.c.b16 %v922, %v921
      %v938 = vpack.c.b16 %v924, %v923
      %v939 = vpack.c.b16 %v926, %v925
      %v940 = vpack.c.b16 %v928, %v927
      %v941 = vpack.c.b16 %v930, %v929
      %v942 = vpack.c.b16 %v932, %v931
      %v943 = vpack.c.b16 %v934, %v933
      %v944 = vpack.c.b16 %v936, %v935
      %953 = vmatprep.subr.bf16.mxu0 0
      %954 = vmatpush1.bf16.msra.mxu0 %v944
      %955 = vmatprep.subr.bf16.mxu0 0
      %956 = vmatpush1.bf16.msra.mxu0 %v943
      %957 = vmatprep.subr.bf16.mxu0 0
      %958 = vmatpush1.bf16.msra.mxu0 %v942
      %959 = vmatprep.subr.bf16.mxu0 0
      %960 = vmatpush1.bf16.msra.mxu0 %v941
      %961 = vmatprep.subr.bf16.mxu0 0
      %962 = vmatpush1.bf16.msra.mxu0 %v940
      %963 = vmatprep.subr.bf16.mxu0 0
      %964 = vmatpush1.bf16.msra.mxu0 %v939
      %965 = vmatprep.subr.bf16.mxu0 0
      %966 = vmatpush1.bf16.msra.mxu0 %v938
      %967 = vmatprep.subr.bf16.mxu0 0
      %968 = vmatpush1.bf16.msra.mxu0 %v937
      %969 = vmatprep.subr.bf16.mxu0 0
      %970 = vmatpush2.bf16.msra.mxu0 0
      %971 = vmatprep.subr.bf16.mxu0 0
      %972 = vmatpush2.bf16.msra.mxu0 0
      %973 = vmatprep.subr.bf16.mxu0 0
      %974 = vmatpush2.bf16.msra.mxu0 0
      %975 = vmatprep.subr.bf16.mxu0 0
      %976 = vmatpush2.bf16.msra.mxu0 0
      %977 = vmatprep.subr.bf16.mxu0 0
      %978 = vmatpush2.bf16.msra.mxu0 0
      %979 = vmatprep.subr.bf16.mxu0 0
      %980 = vmatpush2.bf16.msra.mxu0 0
      %981 = vmatprep.subr.bf16.mxu0 0
      %982 = vmatpush2.bf16.msra.mxu0 0
      %983 = vmatprep.subr.bf16.mxu0 0
      %984 = vmatpush2.bf16.msra.mxu0 0
      %985 = vmatprep.mubr.bf16.mxu0 0
      %986 = vmatmul.mubr.bf16.gmra.mxu0 %v439
      %v987 = vpop.f32.mrf.mxu0
      %v988 = vadd.f32 %v683, %v987
      %v989 = vpop.f32.mrf.mxu0
      %v990 = vpop.f32.mrf.mxu0
      %v991 = vadd.f32 %v686, %v990
      %v992 = vpop.f32.mrf.mxu0
      %993 = vmatprep.mubr.bf16.mxu0 0
      %994 = vmatmul.mubr.bf16.gmra.mxu0 %v440
      %v995 = vpop.f32.mrf.mxu0
      %v996 = vpop.f32.mrf.mxu0
      %v997 = vpop.f32.mrf.mxu0
      %v998 = vpop.f32.mrf.mxu0
      %999 = vmatprep.mubr.bf16.mxu0 0
      %1000 = vmatmul.mubr.bf16.gmra.mxu0 %v441
      %v1001 = vpop.f32.mrf.mxu0
      %v1002 = vadd.f32 %v697, %v1001
      %v1003 = vpop.f32.mrf.mxu0
      %v1004 = vpop.f32.mrf.mxu0
      %v1005 = vadd.f32 %v700, %v1004
      %v1006 = vpop.f32.mrf.mxu0
      %1007 = vmatprep.mubr.bf16.mxu0 0
      %1008 = vmatmul.mubr.bf16.gmra.mxu0 %v442
      %v1009 = vpop.f32.mrf.mxu0
      %v1010 = vpop.f32.mrf.mxu0
      %v1011 = vpop.f32.mrf.mxu0
      %v1012 = vpop.f32.mrf.mxu0
      %1013 = vmatprep.mubr.bf16.mxu0 0
      %1014 = vmatmul.mubr.bf16.gmra.mxu0 %v443
      %v1015 = vpop.f32.mrf.mxu0
      %v1016 = vadd.f32 %v711, %v1015
      %v1017 = vpop.f32.mrf.mxu0
      %v1018 = vpop.f32.mrf.mxu0
      %v1019 = vadd.f32 %v714, %v1018
      %v1020 = vpop.f32.mrf.mxu0
      %1021 = vmatprep.mubr.bf16.mxu0 0
      %1022 = vmatmul.mubr.bf16.gmra.mxu0 %v444
      %v1023 = vpop.f32.mrf.mxu0
      %v1024 = vpop.f32.mrf.mxu0
      %v1025 = vpop.f32.mrf.mxu0
      %v1026 = vpop.f32.mrf.mxu0
      %1027 = vmatprep.mubr.bf16.mxu0 0
      %1028 = vmatmul.mubr.bf16.gmra.mxu0 %v445
      %v1029 = vpop.f32.mrf.mxu0
      %v1030 = vadd.f32 %v725, %v1029
      %v1031 = vpop.f32.mrf.mxu0
      %v1032 = vpop.f32.mrf.mxu0
      %v1033 = vadd.f32 %v728, %v1032
      %v1034 = vpop.f32.mrf.mxu0
      %1035 = vmatprep.mubr.bf16.mxu0 0
      %1036 = vmatmul.mubr.bf16.gmra.mxu0 %v446
      %v1037 = vpop.f32.mrf.mxu0
      %v1038 = vpop.f32.mrf.mxu0
      %v1039 = vpop.f32.mrf.mxu0
      %v1040 = vpop.f32.mrf.mxu0
      %1041 = vmatprep.mubr.bf16.mxu0 0
      %1042 = vmatmul.mubr.bf16.gmra.mxu0 %v447
      %v1043 = vpop.f32.mrf.mxu0
      %v1044 = vadd.f32 %v739, %v1043
      %v1045 = vpop.f32.mrf.mxu0
      %v1046 = vpop.f32.mrf.mxu0
      %v1047 = vadd.f32 %v742, %v1046
      %v1048 = vpop.f32.mrf.mxu0
      %1049 = vmatprep.mubr.bf16.mxu0 0
      %1050 = vmatmul.mubr.bf16.gmra.mxu0 %v448
      %v1051 = vpop.f32.mrf.mxu0
      %v1052 = vpop.f32.mrf.mxu0
      %v1053 = vpop.f32.mrf.mxu0
      %v1054 = vpop.f32.mrf.mxu0
      %1055 = vmatprep.mubr.bf16.mxu0 0
      %1056 = vmatmul.mubr.bf16.gmra.mxu0 %v449
      %v1057 = vpop.f32.mrf.mxu0
      %v1058 = vadd.f32 %v753, %v1057
      %v1059 = vpop.f32.mrf.mxu0
      %v1060 = vpop.f32.mrf.mxu0
      %v1061 = vadd.f32 %v756, %v1060
      %v1062 = vpop.f32.mrf.mxu0
      %1063 = vmatprep.mubr.bf16.mxu0 0
      %1064 = vmatmul.mubr.bf16.gmra.mxu0 %v450
      %v1065 = vpop.f32.mrf.mxu0
      %v1066 = vpop.f32.mrf.mxu0
      %v1067 = vpop.f32.mrf.mxu0
      %v1068 = vpop.f32.mrf.mxu0
      %1069 = vmatprep.mubr.bf16.mxu0 0
      %1070 = vmatmul.mubr.bf16.gmra.mxu0 %v451
      %v1071 = vpop.f32.mrf.mxu0
      %v1072 = vadd.f32 %v767, %v1071
      %v1073 = vpop.f32.mrf.mxu0
      %v1074 = vpop.f32.mrf.mxu0
      %v1075 = vadd.f32 %v770, %v1074
      %v1076 = vpop.f32.mrf.mxu0
      %1077 = vmatprep.mubr.bf16.mxu0 0
      %1078 = vmatmul.mubr.bf16.gmra.mxu0 %v452
      %v1079 = vpop.f32.mrf.mxu0
      %v1080 = vpop.f32.mrf.mxu0
      %v1081 = vpop.f32.mrf.mxu0
      %v1082 = vpop.f32.mrf.mxu0
      %1083 = vmatprep.mubr.bf16.mxu0 0
      %1084 = vmatmul.mubr.bf16.gmra.mxu0 %v453
      %v1085 = vpop.f32.mrf.mxu0
      %v1086 = vadd.f32 %v781, %v1085
      %v1087 = vpop.f32.mrf.mxu0
      %v1088 = vpop.f32.mrf.mxu0
      %v1089 = vadd.f32 %v784, %v1088
      %v1090 = vpop.f32.mrf.mxu0
      %1091 = vmatprep.mubr.bf16.mxu0 0
      %1092 = vmatmul.mubr.bf16.gmra.mxu0 %v454
      %v1093 = vpop.f32.mrf.mxu0
      %v1094 = vpop.f32.mrf.mxu0
      %v1095 = vpop.f32.mrf.mxu0
      %v1096 = vpop.f32.mrf.mxu0
      %1097 = vmatprep.mubr.bf16.mxu0 0
      %1098 = vmatmul.mubr.bf16.gmra.mxu0 %v455
      %v1099 = vpop.f32.mrf.mxu0
      %v1100 = vadd.f32 %v795, %v1099
      %v1101 = vpop.f32.mrf.mxu0
      %v1102 = vpop.f32.mrf.mxu0
      %v1103 = vadd.f32 %v798, %v1102
      %v1104 = vpop.f32.mrf.mxu0
      %1105 = vmatprep.mubr.bf16.mxu0 0
      %1106 = vmatmul.mubr.bf16.gmra.mxu0 %v456
      %v1107 = vpop.f32.mrf.mxu0
      %v1108 = vpop.f32.mrf.mxu0
      %v1109 = vpop.f32.mrf.mxu0
      %v1110 = vpop.f32.mrf.mxu0
      %1111 = vmatprep.mubr.bf16.mxu0 0
      %1112 = vmatmul.mubr.bf16.gmra.mxu0 %v457
      %v1113 = vpop.f32.mrf.mxu0
      %v1114 = vadd.f32 %v809, %v1113
      %v1115 = vpop.f32.mrf.mxu0
      %v1116 = vpop.f32.mrf.mxu0
      %v1117 = vadd.f32 %v812, %v1116
      %v1118 = vpop.f32.mrf.mxu0
      %1119 = vmatprep.mubr.bf16.mxu0 0
      %1120 = vmatmul.mubr.bf16.gmra.mxu0 %v458
      %v1121 = vpop.f32.mrf.mxu0
      %v1122 = vpop.f32.mrf.mxu0
      %v1123 = vpop.f32.mrf.mxu0
      %v1124 = vpop.f32.mrf.mxu0
      %1125 = vmatprep.mubr.bf16.mxu0 0
      %1126 = vmatmul.mubr.bf16.gmra.mxu0 %v459
      %v1127 = vpop.f32.mrf.mxu0
      %v1128 = vadd.f32 %v823, %v1127
      %v1129 = vpop.f32.mrf.mxu0
      %v1130 = vpop.f32.mrf.mxu0
      %v1131 = vadd.f32 %v826, %v1130
      %v1132 = vpop.f32.mrf.mxu0
      %1133 = vmatprep.mubr.bf16.mxu0 0
      %1134 = vmatmul.mubr.bf16.gmra.mxu0 %v460
      %v1135 = vpop.f32.mrf.mxu0
      %v1136 = vpop.f32.mrf.mxu0
      %v1137 = vpop.f32.mrf.mxu0
      %v1138 = vpop.f32.mrf.mxu0
      %1139 = vmatprep.mubr.bf16.mxu0 0
      %1140 = vmatmul.mubr.bf16.gmra.mxu0 %v461
      %v1141 = vpop.f32.mrf.mxu0
      %v1142 = vadd.f32 %v837, %v1141
      %v1143 = vpop.f32.mrf.mxu0
      %v1144 = vpop.f32.mrf.mxu0
      %v1145 = vadd.f32 %v840, %v1144
      %v1146 = vpop.f32.mrf.mxu0
      %1147 = vmatprep.mubr.bf16.mxu0 0
      %1148 = vmatmul.mubr.bf16.gmra.mxu0 %v462
      %v1149 = vpop.f32.mrf.mxu0
      %v1150 = vpop.f32.mrf.mxu0
      %v1151 = vpop.f32.mrf.mxu0
      %v1152 = vpop.f32.mrf.mxu0
      %1153 = vmatprep.mubr.bf16.mxu0 0
      %1154 = vmatmul.mubr.bf16.gmra.mxu0 %v463
      %v1155 = vpop.f32.mrf.mxu0
      %v1156 = vadd.f32 %v851, %v1155
      %v1157 = vpop.f32.mrf.mxu0
      %v1158 = vpop.f32.mrf.mxu0
      %v1159 = vadd.f32 %v854, %v1158
      %v1160 = vpop.f32.mrf.mxu0
      %1161 = vmatprep.mubr.bf16.mxu0 0
      %1162 = vmatmul.mubr.bf16.gmra.mxu0 %v464
      %v1163 = vpop.f32.mrf.mxu0
      %v1164 = vpop.f32.mrf.mxu0
      %v1165 = vpop.f32.mrf.mxu0
      %v1166 = vpop.f32.mrf.mxu0
      %1167 = vmatprep.mubr.bf16.mxu0 0
      %1168 = vmatmul.mubr.bf16.gmra.mxu0 %v465
      %v1169 = vpop.f32.mrf.mxu0
      %v1170 = vadd.f32 %v865, %v1169
      %v1171 = vpop.f32.mrf.mxu0
      %v1172 = vpop.f32.mrf.mxu0
      %v1173 = vadd.f32 %v868, %v1172
      %v1174 = vpop.f32.mrf.mxu0
      %1175 = vmatprep.mubr.bf16.mxu0 0
      %1176 = vmatmul.mubr.bf16.gmra.mxu0 %v466
      %v1177 = vpop.f32.mrf.mxu0
      %v1178 = vpop.f32.mrf.mxu0
      %v1179 = vpop.f32.mrf.mxu0
      %v1180 = vpop.f32.mrf.mxu0
      %1181 = vmatprep.mubr.bf16.mxu0 0
      %1182 = vmatmul.mubr.bf16.gmra.mxu0 %v467
      %v1183 = vpop.f32.mrf.mxu0
      %v1184 = vadd.f32 %v879, %v1183
      %v1185 = vpop.f32.mrf.mxu0
      %v1186 = vpop.f32.mrf.mxu0
      %v1187 = vadd.f32 %v882, %v1186
      %v1188 = vpop.f32.mrf.mxu0
      %1189 = vmatprep.mubr.bf16.mxu0 0
      %1190 = vmatmul.mubr.bf16.gmra.mxu0 %v468
      %v1191 = vpop.f32.mrf.mxu0
      %v1192 = vpop.f32.mrf.mxu0
      %v1193 = vpop.f32.mrf.mxu0
      %v1194 = vpop.f32.mrf.mxu0
      %1195 = vmatprep.mubr.bf16.mxu0 0
      %1196 = vmatmul.mubr.bf16.gmra.mxu0 %v469
      %v1197 = vpop.f32.mrf.mxu0
      %v1198 = vadd.f32 %v893, %v1197
      %v1199 = vpop.f32.mrf.mxu0
      %v1200 = vpop.f32.mrf.mxu0
      %v1201 = vadd.f32 %v896, %v1200
      %v1202 = vpop.f32.mrf.mxu0
      %1203 = vmatprep.mubr.bf16.mxu0 0
      %1204 = vmatmul.mubr.bf16.gmra.mxu0 %v470
      %v1205 = vpop.f32.mrf.mxu0
      %v1206 = vpop.f32.mrf.mxu0
      %v1207 = vpop.f32.mrf.mxu0
      %v1208 = vpop.f32.mrf.mxu0
      %1209 = vdwg.mxu0
      %v1210 = vld [vmem:[%s234] sm:$0xff]
      %v1211 = vld [vmem:[%s234 + $0x8] sm:$0xff]
      %v1212 = vld [vmem:[%s234 + $0x10] sm:$0xff]
      %v1213 = vld [vmem:[%s234 + $0x18] sm:$0xff]
      %v1214 = vld [vmem:[%s234 + $0x20] sm:$0xff]
      %v1215 = vld [vmem:[%s234 + $0x28] sm:$0xff]
      %v1216 = vld [vmem:[%s234 + $0x30] sm:$0xff]
      %v1217 = vld [vmem:[%s234 + $0x38] sm:$0xff]
      %v1218 = vld [vmem:[%s234 + $0x40] sm:$0xff]
      %v1219 = vld [vmem:[%s234 + $0x48] sm:$0xff]
      %v1220 = vld [vmem:[%s234 + $0x50] sm:$0xff]
      %v1221 = vld [vmem:[%s234 + $0x58] sm:$0xff]
      %v1222 = vld [vmem:[%s234 + $0x60] sm:$0xff]
      %v1223 = vld [vmem:[%s234 + $0x68] sm:$0xff]
      %v1224 = vld [vmem:[%s234 + $0x70] sm:$0xff]
      %v1225 = vld [vmem:[%s234 + $0x78] sm:$0xff]
      %v1226 = vld [vmem:[%s234 + $0x80] sm:$0xff]
      %v1227 = vld [vmem:[%s234 + $0x88] sm:$0xff]
      %v1228 = vld [vmem:[%s234 + $0x90] sm:$0xff]
      %v1229 = vld [vmem:[%s234 + $0x98] sm:$0xff]
      %v1230 = vld [vmem:[%s234 + $0xa0] sm:$0xff]
      %v1231 = vld [vmem:[%s234 + $0xa8] sm:$0xff]
      %v1232 = vld [vmem:[%s234 + $0xb0] sm:$0xff]
      %v1233 = vld [vmem:[%s234 + $0xb8] sm:$0xff]
      %v1234 = vld [vmem:[%s234 + $0xc0] sm:$0xff]
      %v1235 = vld [vmem:[%s234 + $0xc8] sm:$0xff]
      %v1236 = vld [vmem:[%s234 + $0xd0] sm:$0xff]
      %v1237 = vld [vmem:[%s234 + $0xd8] sm:$0xff]
      %v1238 = vld [vmem:[%s234 + $0xe0] sm:$0xff]
      %v1239 = vld [vmem:[%s234 + $0xe8] sm:$0xff]
      %v1240 = vld [vmem:[%s234 + $0xf0] sm:$0xff]
      %v1241 = vld [vmem:[%s234 + $0xf8] sm:$0xff]
      %v1242 = vld [vmem:[%s234 + $0x100] sm:$0xff]
      %v1243 = vld [vmem:[%s234 + $0x108] sm:$0xff]
      %v1244 = vld [vmem:[%s234 + $0x110] sm:$0xff]
      %v1245 = vld [vmem:[%s234 + $0x118] sm:$0xff]
      %v1246 = vld [vmem:[%s234 + $0x120] sm:$0xff]
      %v1247 = vld [vmem:[%s234 + $0x128] sm:$0xff]
      %v1248 = vld [vmem:[%s234 + $0x130] sm:$0xff]
      %v1249 = vld [vmem:[%s234 + $0x138] sm:$0xff]
      %v1250 = vld [vmem:[%s234 + $0x140] sm:$0xff]
      %v1251 = vld [vmem:[%s234 + $0x148] sm:$0xff]
      %v1252 = vld [vmem:[%s234 + $0x150] sm:$0xff]
      %v1253 = vld [vmem:[%s234 + $0x158] sm:$0xff]
      %v1254 = vld [vmem:[%s234 + $0x160] sm:$0xff]
      %v1255 = vld [vmem:[%s234 + $0x168] sm:$0xff]
      %v1256 = vld [vmem:[%s234 + $0x170] sm:$0xff]
      %v1257 = vld [vmem:[%s234 + $0x178] sm:$0xff]
      %v1258 = vld [vmem:[%s234 + $0x180] sm:$0xff]
      %v1259 = vld [vmem:[%s234 + $0x188] sm:$0xff]
      %v1260 = vld [vmem:[%s234 + $0x190] sm:$0xff]
      %v1261 = vld [vmem:[%s234 + $0x198] sm:$0xff]
      %v1262 = vld [vmem:[%s234 + $0x1a0] sm:$0xff]
      %v1263 = vld [vmem:[%s234 + $0x1a8] sm:$0xff]
      %v1264 = vld [vmem:[%s234 + $0x1b0] sm:$0xff]
      %v1265 = vld [vmem:[%s234 + $0x1b8] sm:$0xff]
      %v1266 = vld [vmem:[%s234 + $0x1c0] sm:$0xff]
      %v1267 = vld [vmem:[%s234 + $0x1c8] sm:$0xff]
      %v1268 = vld [vmem:[%s234 + $0x1d0] sm:$0xff]
      %v1269 = vld [vmem:[%s234 + $0x1d8] sm:$0xff]
      %v1270 = vld [vmem:[%s234 + $0x1e0] sm:$0xff]
      %v1271 = vld [vmem:[%s234 + $0x1e8] sm:$0xff]
      %v1272 = vld [vmem:[%s234 + $0x1f0] sm:$0xff]
      %v1273 = vld [vmem:[%s234 + $0x1f8] sm:$0xff]
      %v1274 = vpack.c.bf16 %v1211, %v1210
      %v1275 = vpack.c.bf16 %v1213, %v1212
      %v1276 = vpack.c.bf16 %v1215, %v1214
      %v1277 = vpack.c.bf16 %v1217, %v1216
      %v1278 = vpack.c.bf16 %v1219, %v1218
      %v1279 = vpack.c.bf16 %v1221, %v1220
      %v1280 = vpack.c.bf16 %v1223, %v1222
      %v1281 = vpack.c.bf16 %v1225, %v1224
      %v1282 = vpack.c.bf16 %v1227, %v1226
      %v1283 = vpack.c.bf16 %v1229, %v1228
      %v1284 = vpack.c.bf16 %v1231, %v1230
      %v1285 = vpack.c.bf16 %v1233, %v1232
      %v1286 = vpack.c.bf16 %v1235, %v1234
      %v1287 = vpack.c.bf16 %v1237, %v1236
      %v1288 = vpack.c.bf16 %v1239, %v1238
      %v1289 = vpack.c.bf16 %v1241, %v1240
      %v1290 = vpack.c.bf16 %v1243, %v1242
      %v1291 = vpack.c.bf16 %v1245, %v1244
      %v1292 = vpack.c.bf16 %v1247, %v1246
      %v1293 = vpack.c.bf16 %v1249, %v1248
      %v1294 = vpack.c.bf16 %v1251, %v1250
      %v1295 = vpack.c.bf16 %v1253, %v1252
      %v1296 = vpack.c.bf16 %v1255, %v1254
      %v1297 = vpack.c.bf16 %v1257, %v1256
      %v1298 = vpack.c.bf16 %v1259, %v1258
      %v1299 = vpack.c.bf16 %v1261, %v1260
      %v1300 = vpack.c.bf16 %v1263, %v1262
      %v1301 = vpack.c.bf16 %v1265, %v1264
      %v1302 = vpack.c.bf16 %v1267, %v1266
      %v1303 = vpack.c.bf16 %v1269, %v1268
      %v1304 = vpack.c.bf16 %v1271, %v1270
      %v1305 = vpack.c.bf16 %v1273, %v1272
      %s1306 = scalar_lea.vmem %s1, 128
      %v1307 = vld [vmem:[%s1306] sm:$0xf]
      %v1308 = vld [vmem:[%s1306 + $0x4] sm:$0xf]
      %v1309 = vld [vmem:[%s1306 + $0x8] sm:$0xf]
      %v1310 = vld [vmem:[%s1306 + $0xc] sm:$0xf]
      %v1311 = vld [vmem:[%s1306 + $0x10] sm:$0xf]
      %v1312 = vld [vmem:[%s1306 + $0x14] sm:$0xf]
      %v1313 = vld [vmem:[%s1306 + $0x18] sm:$0xf]
      %v1314 = vld [vmem:[%s1306 + $0x1c] sm:$0xf]
      %v1315 = vld [vmem:[%s1306 + $0x20] sm:$0xf]
      %v1316 = vld [vmem:[%s1306 + $0x24] sm:$0xf]
      %v1317 = vld [vmem:[%s1306 + $0x28] sm:$0xf]
      %v1318 = vld [vmem:[%s1306 + $0x2c] sm:$0xf]
      %v1319 = vld [vmem:[%s1306 + $0x30] sm:$0xf]
      %v1320 = vld [vmem:[%s1306 + $0x34] sm:$0xf]
      %v1321 = vld [vmem:[%s1306 + $0x38] sm:$0xf]
      %v1322 = vld [vmem:[%s1306 + $0x3c] sm:$0xf]
      %v1339 = vunpack.c.l.b16 %v1307
      %v1340 = vunpack.c.l.b16 %v1308
      %v1341 = vunpack.c.l.b16 %v1309
      %v1342 = vunpack.c.l.b16 %v1310
      %v1343 = vunpack.c.l.b16 %v1311
      %v1344 = vunpack.c.l.b16 %v1312
      %v1345 = vunpack.c.l.b16 %v1313
      %v1346 = vunpack.c.l.b16 %v1314
      %v1347 = vunpack.c.l.b16 %v1315
      %v1348 = vunpack.c.l.b16 %v1316
      %v1349 = vunpack.c.l.b16 %v1317
      %v1350 = vunpack.c.l.b16 %v1318
      %v1351 = vunpack.c.l.b16 %v1319
      %v1352 = vunpack.c.l.b16 %v1320
      %v1353 = vunpack.c.l.b16 %v1321
      %v1354 = vunpack.c.l.b16 %v1322
      %v1355 = vpack.c.b16 %v1340, %v1339
      %v1356 = vpack.c.b16 %v1342, %v1341
      %v1357 = vpack.c.b16 %v1344, %v1343
      %v1358 = vpack.c.b16 %v1346, %v1345
      %v1359 = vpack.c.b16 %v1348, %v1347
      %v1360 = vpack.c.b16 %v1350, %v1349
      %v1361 = vpack.c.b16 %v1352, %v1351
      %v1362 = vpack.c.b16 %v1354, %v1353
      %1371 = vmatprep.subr.bf16.mxu0 0
      %1372 = vmatpush1.bf16.msra.mxu0 %v1362
      %1373 = vmatprep.subr.bf16.mxu0 0
      %1374 = vmatpush1.bf16.msra.mxu0 %v1361
      %1375 = vmatprep.subr.bf16.mxu0 0
      %1376 = vmatpush1.bf16.msra.mxu0 %v1360
      %1377 = vmatprep.subr.bf16.mxu0 0
      %1378 = vmatpush1.bf16.msra.mxu0 %v1359
      %1379 = vmatprep.subr.bf16.mxu0 0
      %1380 = vmatpush1.bf16.msra.mxu0 %v1358
      %1381 = vmatprep.subr.bf16.mxu0 0
      %1382 = vmatpush1.bf16.msra.mxu0 %v1357
      %1383 = vmatprep.subr.bf16.mxu0 0
      %1384 = vmatpush1.bf16.msra.mxu0 %v1356
      %1385 = vmatprep.subr.bf16.mxu0 0
      %1386 = vmatpush1.bf16.msra.mxu0 %v1355
      %1387 = vmatprep.subr.bf16.mxu0 0
      %1388 = vmatpush2.bf16.msra.mxu0 0
      %1389 = vmatprep.subr.bf16.mxu0 0
      %1390 = vmatpush2.bf16.msra.mxu0 0
      %1391 = vmatprep.subr.bf16.mxu0 0
      %1392 = vmatpush2.bf16.msra.mxu0 0
      %1393 = vmatprep.subr.bf16.mxu0 0
      %1394 = vmatpush2.bf16.msra.mxu0 0
      %1395 = vmatprep.subr.bf16.mxu0 0
      %1396 = vmatpush2.bf16.msra.mxu0 0
      %1397 = vmatprep.subr.bf16.mxu0 0
      %1398 = vmatpush2.bf16.msra.mxu0 0
      %1399 = vmatprep.subr.bf16.mxu0 0
      %1400 = vmatpush2.bf16.msra.mxu0 0
      %1401 = vmatprep.subr.bf16.mxu0 0
      %1402 = vmatpush2.bf16.msra.mxu0 0
      %1403 = vmatprep.mubr.bf16.mxu0 0
      %1404 = vmatmul.mubr.bf16.gmra.mxu0 %v1274
      %v1405 = vpop.f32.mrf.mxu0
      %v1406 = vadd.f32 0.0, %v1405
      %v1407 = vpop.f32.mrf.mxu0
      %v1408 = vpop.f32.mrf.mxu0
      %v1409 = vadd.f32 0.0, %v1408
      %v1410 = vpop.f32.mrf.mxu0
      %1411 = vmatprep.mubr.bf16.mxu0 0
      %1412 = vmatmul.mubr.bf16.gmra.mxu0 %v1275
      %v1413 = vpop.f32.mrf.mxu0
      %v1414 = vpop.f32.mrf.mxu0
      %v1415 = vpop.f32.mrf.mxu0
      %v1416 = vpop.f32.mrf.mxu0
      %1417 = vmatprep.mubr.bf16.mxu0 0
      %1418 = vmatmul.mubr.bf16.gmra.mxu0 %v1276
      %v1419 = vpop.f32.mrf.mxu0
      %v1420 = vadd.f32 0.0, %v1419
      %v1421 = vpop.f32.mrf.mxu0
      %v1422 = vpop.f32.mrf.mxu0
      %v1423 = vadd.f32 0.0, %v1422
      %v1424 = vpop.f32.mrf.mxu0
      %1425 = vmatprep.mubr.bf16.mxu0 0
      %1426 = vmatmul.mubr.bf16.gmra.mxu0 %v1277
      %v1427 = vpop.f32.mrf.mxu0
      %v1428 = vpop.f32.mrf.mxu0
      %v1429 = vpop.f32.mrf.mxu0
      %v1430 = vpop.f32.mrf.mxu0
      %1431 = vmatprep.mubr.bf16.mxu0 0
      %1432 = vmatmul.mubr.bf16.gmra.mxu0 %v1278
      %v1433 = vpop.f32.mrf.mxu0
      %v1434 = vadd.f32 0.0, %v1433
      %v1435 = vpop.f32.mrf.mxu0
      %v1436 = vpop.f32.mrf.mxu0
      %v1437 = vadd.f32 0.0, %v1436
      %v1438 = vpop.f32.mrf.mxu0
      %1439 = vmatprep.mubr.bf16.mxu0 0
      %1440 = vmatmul.mubr.bf16.gmra.mxu0 %v1279
      %v1441 = vpop.f32.mrf.mxu0
      %v1442 = vpop.f32.mrf.mxu0
      %v1443 = vpop.f32.mrf.mxu0
      %v1444 = vpop.f32.mrf.mxu0
      %1445 = vmatprep.mubr.bf16.mxu0 0
      %1446 = vmatmul.mubr.bf16.gmra.mxu0 %v1280
      %v1447 = vpop.f32.mrf.mxu0
      %v1448 = vadd.f32 0.0, %v1447
      %v1449 = vpop.f32.mrf.mxu0
      %v1450 = vpop.f32.mrf.mxu0
      %v1451 = vadd.f32 0.0, %v1450
      %v1452 = vpop.f32.mrf.mxu0
      %1453 = vmatprep.mubr.bf16.mxu0 0
      %1454 = vmatmul.mubr.bf16.gmra.mxu0 %v1281
      %v1455 = vpop.f32.mrf.mxu0
      %v1456 = vpop.f32.mrf.mxu0
      %v1457 = vpop.f32.mrf.mxu0
      %v1458 = vpop.f32.mrf.mxu0
      %1459 = vmatprep.mubr.bf16.mxu0 0
      %1460 = vmatmul.mubr.bf16.gmra.mxu0 %v1282
      %v1461 = vpop.f32.mrf.mxu0
      %v1462 = vadd.f32 0.0, %v1461
      %v1463 = vpop.f32.mrf.mxu0
      %v1464 = vpop.f32.mrf.mxu0
      %v1465 = vadd.f32 0.0, %v1464
      %v1466 = vpop.f32.mrf.mxu0
      %1467 = vmatprep.mubr.bf16.mxu0 0
      %1468 = vmatmul.mubr.bf16.gmra.mxu0 %v1283
      %v1469 = vpop.f32.mrf.mxu0
      %v1470 = vpop.f32.mrf.mxu0
      %v1471 = vpop.f32.mrf.mxu0
      %v1472 = vpop.f32.mrf.mxu0
      %1473 = vmatprep.mubr.bf16.mxu0 0
      %1474 = vmatmul.mubr.bf16.gmra.mxu0 %v1284
      %v1475 = vpop.f32.mrf.mxu0
      %v1476 = vadd.f32 0.0, %v1475
      %v1477 = vpop.f32.mrf.mxu0
      %v1478 = vpop.f32.mrf.mxu0
      %v1479 = vadd.f32 0.0, %v1478
      %v1480 = vpop.f32.mrf.mxu0
      %1481 = vmatprep.mubr.bf16.mxu0 0
      %1482 = vmatmul.mubr.bf16.gmra.mxu0 %v1285
      %v1483 = vpop.f32.mrf.mxu0
      %v1484 = vpop.f32.mrf.mxu0
      %v1485 = vpop.f32.mrf.mxu0
      %v1486 = vpop.f32.mrf.mxu0
      %1487 = vmatprep.mubr.bf16.mxu0 0
      %1488 = vmatmul.mubr.bf16.gmra.mxu0 %v1286
      %v1489 = vpop.f32.mrf.mxu0
      %v1490 = vadd.f32 0.0, %v1489
      %v1491 = vpop.f32.mrf.mxu0
      %v1492 = vpop.f32.mrf.mxu0
      %v1493 = vadd.f32 0.0, %v1492
      %v1494 = vpop.f32.mrf.mxu0
      %1495 = vmatprep.mubr.bf16.mxu0 0
      %1496 = vmatmul.mubr.bf16.gmra.mxu0 %v1287
      %v1497 = vpop.f32.mrf.mxu0
      %v1498 = vpop.f32.mrf.mxu0
      %v1499 = vpop.f32.mrf.mxu0
      %v1500 = vpop.f32.mrf.mxu0
      %1501 = vmatprep.mubr.bf16.mxu0 0
      %1502 = vmatmul.mubr.bf16.gmra.mxu0 %v1288
      %v1503 = vpop.f32.mrf.mxu0
      %v1504 = vadd.f32 0.0, %v1503
      %v1505 = vpop.f32.mrf.mxu0
      %v1506 = vpop.f32.mrf.mxu0
      %v1507 = vadd.f32 0.0, %v1506
      %v1508 = vpop.f32.mrf.mxu0
      %1509 = vmatprep.mubr.bf16.mxu0 0
      %1510 = vmatmul.mubr.bf16.gmra.mxu0 %v1289
      %v1511 = vpop.f32.mrf.mxu0
      %v1512 = vpop.f32.mrf.mxu0
      %v1513 = vpop.f32.mrf.mxu0
      %v1514 = vpop.f32.mrf.mxu0
      %1515 = vmatprep.mubr.bf16.mxu0 0
      %1516 = vmatmul.mubr.bf16.gmra.mxu0 %v1290
      %v1517 = vpop.f32.mrf.mxu0
      %v1518 = vadd.f32 0.0, %v1517
      %v1519 = vpop.f32.mrf.mxu0
      %v1520 = vpop.f32.mrf.mxu0
      %v1521 = vadd.f32 0.0, %v1520
      %v1522 = vpop.f32.mrf.mxu0
      %1523 = vmatprep.mubr.bf16.mxu0 0
      %1524 = vmatmul.mubr.bf16.gmra.mxu0 %v1291
      %v1525 = vpop.f32.mrf.mxu0
      %v1526 = vpop.f32.mrf.mxu0
      %v1527 = vpop.f32.mrf.mxu0
      %v1528 = vpop.f32.mrf.mxu0
      %1529 = vmatprep.mubr.bf16.mxu0 0
      %1530 = vmatmul.mubr.bf16.gmra.mxu0 %v1292
      %v1531 = vpop.f32.mrf.mxu0
      %v1532 = vadd.f32 0.0, %v1531
      %v1533 = vpop.f32.mrf.mxu0
      %v1534 = vpop.f32.mrf.mxu0
      %v1535 = vadd.f32 0.0, %v1534
      %v1536 = vpop.f32.mrf.mxu0
      %1537 = vmatprep.mubr.bf16.mxu0 0
      %1538 = vmatmul.mubr.bf16.gmra.mxu0 %v1293
      %v1539 = vpop.f32.mrf.mxu0
      %v1540 = vpop.f32.mrf.mxu0
      %v1541 = vpop.f32.mrf.mxu0
      %v1542 = vpop.f32.mrf.mxu0
      %1543 = vmatprep.mubr.bf16.mxu0 0
      %1544 = vmatmul.mubr.bf16.gmra.mxu0 %v1294
      %v1545 = vpop.f32.mrf.mxu0
      %v1546 = vadd.f32 0.0, %v1545
      %v1547 = vpop.f32.mrf.mxu0
      %v1548 = vpop.f32.mrf.mxu0
      %v1549 = vadd.f32 0.0, %v1548
      %v1550 = vpop.f32.mrf.mxu0
      %1551 = vmatprep.mubr.bf16.mxu0 0
      %1552 = vmatmul.mubr.bf16.gmra.mxu0 %v1295
      %v1553 = vpop.f32.mrf.mxu0
      %v1554 = vpop.f32.mrf.mxu0
      %v1555 = vpop.f32.mrf.mxu0
      %v1556 = vpop.f32.mrf.mxu0
      %1557 = vmatprep.mubr.bf16.mxu0 0
      %1558 = vmatmul.mubr.bf16.gmra.mxu0 %v1296
      %v1559 = vpop.f32.mrf.mxu0
      %v1560 = vadd.f32 0.0, %v1559
      %v1561 = vpop.f32.mrf.mxu0
      %v1562 = vpop.f32.mrf.mxu0
      %v1563 = vadd.f32 0.0, %v1562
      %v1564 = vpop.f32.mrf.mxu0
      %1565 = vmatprep.mubr.bf16.mxu0 0
      %1566 = vmatmul.mubr.bf16.gmra.mxu0 %v1297
      %v1567 = vpop.f32.mrf.mxu0
      %v1568 = vpop.f32.mrf.mxu0
      %v1569 = vpop.f32.mrf.mxu0
      %v1570 = vpop.f32.mrf.mxu0
      %1571 = vmatprep.mubr.bf16.mxu0 0
      %1572 = vmatmul.mubr.bf16.gmra.mxu0 %v1298
      %v1573 = vpop.f32.mrf.mxu0
      %v1574 = vadd.f32 0.0, %v1573
      %v1575 = vpop.f32.mrf.mxu0
      %v1576 = vpop.f32.mrf.mxu0
      %v1577 = vadd.f32 0.0, %v1576
      %v1578 = vpop.f32.mrf.mxu0
      %1579 = vmatprep.mubr.bf16.mxu0 0
      %1580 = vmatmul.mubr.bf16.gmra.mxu0 %v1299
      %v1581 = vpop.f32.mrf.mxu0
      %v1582 = vpop.f32.mrf.mxu0
      %v1583 = vpop.f32.mrf.mxu0
      %v1584 = vpop.f32.mrf.mxu0
      %1585 = vmatprep.mubr.bf16.mxu0 0
      %1586 = vmatmul.mubr.bf16.gmra.mxu0 %v1300
      %v1587 = vpop.f32.mrf.mxu0
      %v1588 = vadd.f32 0.0, %v1587
      %v1589 = vpop.f32.mrf.mxu0
      %v1590 = vpop.f32.mrf.mxu0
      %v1591 = vadd.f32 0.0, %v1590
      %v1592 = vpop.f32.mrf.mxu0
      %1593 = vmatprep.mubr.bf16.mxu0 0
      %1594 = vmatmul.mubr.bf16.gmra.mxu0 %v1301
      %v1595 = vpop.f32.mrf.mxu0
      %v1596 = vpop.f32.mrf.mxu0
      %v1597 = vpop.f32.mrf.mxu0
      %v1598 = vpop.f32.mrf.mxu0
      %1599 = vmatprep.mubr.bf16.mxu0 0
      %1600 = vmatmul.mubr.bf16.gmra.mxu0 %v1302
      %v1601 = vpop.f32.mrf.mxu0
      %v1602 = vadd.f32 0.0, %v1601
      %v1603 = vpop.f32.mrf.mxu0
      %v1604 = vpop.f32.mrf.mxu0
      %v1605 = vadd.f32 0.0, %v1604
      %v1606 = vpop.f32.mrf.mxu0
      %1607 = vmatprep.mubr.bf16.mxu0 0
      %1608 = vmatmul.mubr.bf16.gmra.mxu0 %v1303
      %v1609 = vpop.f32.mrf.mxu0
      %v1610 = vpop.f32.mrf.mxu0
      %v1611 = vpop.f32.mrf.mxu0
      %v1612 = vpop.f32.mrf.mxu0
      %1613 = vmatprep.mubr.bf16.mxu0 0
      %1614 = vmatmul.mubr.bf16.gmra.mxu0 %v1304
      %v1615 = vpop.f32.mrf.mxu0
      %v1616 = vadd.f32 0.0, %v1615
      %v1617 = vpop.f32.mrf.mxu0
      %v1618 = vpop.f32.mrf.mxu0
      %v1619 = vadd.f32 0.0, %v1618
      %v1620 = vpop.f32.mrf.mxu0
      %1621 = vmatprep.mubr.bf16.mxu0 0
      %1622 = vmatmul.mubr.bf16.gmra.mxu0 %v1305
      %v1623 = vpop.f32.mrf.mxu0
      %v1624 = vpop.f32.mrf.mxu0
      %v1625 = vpop.f32.mrf.mxu0
      %v1626 = vpop.f32.mrf.mxu0
      %1627 = vdwg.mxu0
      %v1628 = vadd.f32 %v988, %v1406
      %v1629 = vadd.f32 %v991, %v1409
      %v1630 = vadd.f32 %v1002, %v1420
      %v1631 = vadd.f32 %v1005, %v1423
      %v1632 = vadd.f32 %v1016, %v1434
      %v1633 = vadd.f32 %v1019, %v1437
      %v1634 = vadd.f32 %v1030, %v1448
      %v1635 = vadd.f32 %v1033, %v1451
      %v1636 = vadd.f32 %v1044, %v1462
      %v1637 = vadd.f32 %v1047, %v1465
      %v1638 = vadd.f32 %v1058, %v1476
      %v1639 = vadd.f32 %v1061, %v1479
      %v1640 = vadd.f32 %v1072, %v1490
      %v1641 = vadd.f32 %v1075, %v1493
      %v1642 = vadd.f32 %v1086, %v1504
      %v1643 = vadd.f32 %v1089, %v1507
      %v1644 = vadd.f32 %v1100, %v1518
      %v1645 = vadd.f32 %v1103, %v1521
      %v1646 = vadd.f32 %v1114, %v1532
      %v1647 = vadd.f32 %v1117, %v1535
      %v1648 = vadd.f32 %v1128, %v1546
      %v1649 = vadd.f32 %v1131, %v1549
      %v1650 = vadd.f32 %v1142, %v1560
      %v1651 = vadd.f32 %v1145, %v1563
      %v1652 = vadd.f32 %v1156, %v1574
      %v1653 = vadd.f32 %v1159, %v1577
      %v1654 = vadd.f32 %v1170, %v1588
      %v1655 = vadd.f32 %v1173, %v1591
      %v1656 = vadd.f32 %v1184, %v1602
      %v1657 = vadd.f32 %v1187, %v1605
      %v1658 = vadd.f32 %v1198, %v1616
      %v1659 = vadd.f32 %v1201, %v1619
      %v1660 = vld [vmem:[%s244] sm:$0xff]
      %v1661 = vld [vmem:[%s244 + $0x8] sm:$0xff]
      %v1662 = vld [vmem:[%s244 + $0x10] sm:$0xff]
      %v1663 = vld [vmem:[%s244 + $0x18] sm:$0xff]
      %v1664 = vld [vmem:[%s244 + $0x20] sm:$0xff]
      %v1665 = vld [vmem:[%s244 + $0x28] sm:$0xff]
      %v1666 = vld [vmem:[%s244 + $0x30] sm:$0xff]
      %v1667 = vld [vmem:[%s244 + $0x38] sm:$0xff]
      %v1668 = vld [vmem:[%s244 + $0x40] sm:$0xff]
      %v1669 = vld [vmem:[%s244 + $0x48] sm:$0xff]
      %v1670 = vld [vmem:[%s244 + $0x50] sm:$0xff]
      %v1671 = vld [vmem:[%s244 + $0x58] sm:$0xff]
      %v1672 = vld [vmem:[%s244 + $0x60] sm:$0xff]
      %v1673 = vld [vmem:[%s244 + $0x68] sm:$0xff]
      %v1674 = vld [vmem:[%s244 + $0x70] sm:$0xff]
      %v1675 = vld [vmem:[%s244 + $0x78] sm:$0xff]
      %v1676 = vld [vmem:[%s244 + $0x80] sm:$0xff]
      %v1677 = vld [vmem:[%s244 + $0x88] sm:$0xff]
      %v1678 = vld [vmem:[%s244 + $0x90] sm:$0xff]
      %v1679 = vld [vmem:[%s244 + $0x98] sm:$0xff]
      %v1680 = vld [vmem:[%s244 + $0xa0] sm:$0xff]
      %v1681 = vld [vmem:[%s244 + $0xa8] sm:$0xff]
      %v1682 = vld [vmem:[%s244 + $0xb0] sm:$0xff]
      %v1683 = vld [vmem:[%s244 + $0xb8] sm:$0xff]
      %v1684 = vld [vmem:[%s244 + $0xc0] sm:$0xff]
      %v1685 = vld [vmem:[%s244 + $0xc8] sm:$0xff]
      %v1686 = vld [vmem:[%s244 + $0xd0] sm:$0xff]
      %v1687 = vld [vmem:[%s244 + $0xd8] sm:$0xff]
      %v1688 = vld [vmem:[%s244 + $0xe0] sm:$0xff]
      %v1689 = vld [vmem:[%s244 + $0xe8] sm:$0xff]
      %v1690 = vld [vmem:[%s244 + $0xf0] sm:$0xff]
      %v1691 = vld [vmem:[%s244 + $0xf8] sm:$0xff]
      %v1692 = vld [vmem:[%s244 + $0x100] sm:$0xff]
      %v1693 = vld [vmem:[%s244 + $0x108] sm:$0xff]
      %v1694 = vld [vmem:[%s244 + $0x110] sm:$0xff]
      %v1695 = vld [vmem:[%s244 + $0x118] sm:$0xff]
      %v1696 = vld [vmem:[%s244 + $0x120] sm:$0xff]
      %v1697 = vld [vmem:[%s244 + $0x128] sm:$0xff]
      %v1698 = vld [vmem:[%s244 + $0x130] sm:$0xff]
      %v1699 = vld [vmem:[%s244 + $0x138] sm:$0xff]
      %v1700 = vld [vmem:[%s244 + $0x140] sm:$0xff]
      %v1701 = vld [vmem:[%s244 + $0x148] sm:$0xff]
      %v1702 = vld [vmem:[%s244 + $0x150] sm:$0xff]
      %v1703 = vld [vmem:[%s244 + $0x158] sm:$0xff]
      %v1704 = vld [vmem:[%s244 + $0x160] sm:$0xff]
      %v1705 = vld [vmem:[%s244 + $0x168] sm:$0xff]
      %v1706 = vld [vmem:[%s244 + $0x170] sm:$0xff]
      %v1707 = vld [vmem:[%s244 + $0x178] sm:$0xff]
      %v1708 = vld [vmem:[%s244 + $0x180] sm:$0xff]
      %v1709 = vld [vmem:[%s244 + $0x188] sm:$0xff]
      %v1710 = vld [vmem:[%s244 + $0x190] sm:$0xff]
      %v1711 = vld [vmem:[%s244 + $0x198] sm:$0xff]
      %v1712 = vld [vmem:[%s244 + $0x1a0] sm:$0xff]
      %v1713 = vld [vmem:[%s244 + $0x1a8] sm:$0xff]
      %v1714 = vld [vmem:[%s244 + $0x1b0] sm:$0xff]
      %v1715 = vld [vmem:[%s244 + $0x1b8] sm:$0xff]
      %v1716 = vld [vmem:[%s244 + $0x1c0] sm:$0xff]
      %v1717 = vld [vmem:[%s244 + $0x1c8] sm:$0xff]
      %v1718 = vld [vmem:[%s244 + $0x1d0] sm:$0xff]
      %v1719 = vld [vmem:[%s244 + $0x1d8] sm:$0xff]
      %v1720 = vld [vmem:[%s244 + $0x1e0] sm:$0xff]
      %v1721 = vld [vmem:[%s244 + $0x1e8] sm:$0xff]
      %v1722 = vld [vmem:[%s244 + $0x1f0] sm:$0xff]
      %v1723 = vld [vmem:[%s244 + $0x1f8] sm:$0xff]
      %v1724 = vpack.c.bf16 %v1661, %v1660
      %v1725 = vpack.c.bf16 %v1663, %v1662
      %v1726 = vpack.c.bf16 %v1665, %v1664
      %v1727 = vpack.c.bf16 %v1667, %v1666
      %v1728 = vpack.c.bf16 %v1669, %v1668
      %v1729 = vpack.c.bf16 %v1671, %v1670
      %v1730 = vpack.c.bf16 %v1673, %v1672
      %v1731 = vpack.c.bf16 %v1675, %v1674
      %v1732 = vpack.c.bf16 %v1677, %v1676
      %v1733 = vpack.c.bf16 %v1679, %v1678
      %v1734 = vpack.c.bf16 %v1681, %v1680
      %v1735 = vpack.c.bf16 %v1683, %v1682
      %v1736 = vpack.c.bf16 %v1685, %v1684
      %v1737 = vpack.c.bf16 %v1687, %v1686
      %v1738 = vpack.c.bf16 %v1689, %v1688
      %v1739 = vpack.c.bf16 %v1691, %v1690
      %v1740 = vpack.c.bf16 %v1693, %v1692
      %v1741 = vpack.c.bf16 %v1695, %v1694
      %v1742 = vpack.c.bf16 %v1697, %v1696
      %v1743 = vpack.c.bf16 %v1699, %v1698
      %v1744 = vpack.c.bf16 %v1701, %v1700
      %v1745 = vpack.c.bf16 %v1703, %v1702
      %v1746 = vpack.c.bf16 %v1705, %v1704
      %v1747 = vpack.c.bf16 %v1707, %v1706
      %v1748 = vpack.c.bf16 %v1709, %v1708
      %v1749 = vpack.c.bf16 %v1711, %v1710
      %v1750 = vpack.c.bf16 %v1713, %v1712
      %v1751 = vpack.c.bf16 %v1715, %v1714
      %v1752 = vpack.c.bf16 %v1717, %v1716
      %v1753 = vpack.c.bf16 %v1719, %v1718
      %v1754 = vpack.c.bf16 %v1721, %v1720
      %v1755 = vpack.c.bf16 %v1723, %v1722
      %s1756 = scalar_lea.vmem %s1, 192
      %v1757 = vld [vmem:[%s1756] sm:$0xf]
      %v1758 = vld [vmem:[%s1756 + $0x4] sm:$0xf]
      %v1759 = vld [vmem:[%s1756 + $0x8] sm:$0xf]
      %v1760 = vld [vmem:[%s1756 + $0xc] sm:$0xf]
      %v1761 = vld [vmem:[%s1756 + $0x10] sm:$0xf]
      %v1762 = vld [vmem:[%s1756 + $0x14] sm:$0xf]
      %v1763 = vld [vmem:[%s1756 + $0x18] sm:$0xf]
      %v1764 = vld [vmem:[%s1756 + $0x1c] sm:$0xf]
      %v1765 = vld [vmem:[%s1756 + $0x20] sm:$0xf]
      %v1766 = vld [vmem:[%s1756 + $0x24] sm:$0xf]
      %v1767 = vld [vmem:[%s1756 + $0x28] sm:$0xf]
      %v1768 = vld [vmem:[%s1756 + $0x2c] sm:$0xf]
      %v1769 = vld [vmem:[%s1756 + $0x30] sm:$0xf]
      %v1770 = vld [vmem:[%s1756 + $0x34] sm:$0xf]
      %v1771 = vld [vmem:[%s1756 + $0x38] sm:$0xf]
      %v1772 = vld [vmem:[%s1756 + $0x3c] sm:$0xf]
      %v1789 = vunpack.c.l.b16 %v1757
      %v1790 = vunpack.c.l.b16 %v1758
      %v1791 = vunpack.c.l.b16 %v1759
      %v1792 = vunpack.c.l.b16 %v1760
      %v1793 = vunpack.c.l.b16 %v1761
      %v1794 = vunpack.c.l.b16 %v1762
      %v1795 = vunpack.c.l.b16 %v1763
      %v1796 = vunpack.c.l.b16 %v1764
      %v1797 = vunpack.c.l.b16 %v1765
      %v1798 = vunpack.c.l.b16 %v1766
      %v1799 = vunpack.c.l.b16 %v1767
      %v1800 = vunpack.c.l.b16 %v1768
      %v1801 = vunpack.c.l.b16 %v1769
      %v1802 = vunpack.c.l.b16 %v1770
      %v1803 = vunpack.c.l.b16 %v1771
      %v1804 = vunpack.c.l.b16 %v1772
      %v1805 = vpack.c.b16 %v1790, %v1789
      %v1806 = vpack.c.b16 %v1792, %v1791
      %v1807 = vpack.c.b16 %v1794, %v1793
      %v1808 = vpack.c.b16 %v1796, %v1795
      %v1809 = vpack.c.b16 %v1798, %v1797
      %v1810 = vpack.c.b16 %v1800, %v1799
      %v1811 = vpack.c.b16 %v1802, %v1801
      %v1812 = vpack.c.b16 %v1804, %v1803
      %1821 = vmatprep.subr.bf16.mxu0 0
      %1822 = vmatpush1.bf16.msra.mxu0 %v1812
      %1823 = vmatprep.subr.bf16.mxu0 0
      %1824 = vmatpush1.bf16.msra.mxu0 %v1811
      %1825 = vmatprep.subr.bf16.mxu0 0
      %1826 = vmatpush1.bf16.msra.mxu0 %v1810
      %1827 = vmatprep.subr.bf16.mxu0 0
      %1828 = vmatpush1.bf16.msra.mxu0 %v1809
      %1829 = vmatprep.subr.bf16.mxu0 0
      %1830 = vmatpush1.bf16.msra.mxu0 %v1808
      %1831 = vmatprep.subr.bf16.mxu0 0
      %1832 = vmatpush1.bf16.msra.mxu0 %v1807
      %1833 = vmatprep.subr.bf16.mxu0 0
      %1834 = vmatpush1.bf16.msra.mxu0 %v1806
      %1835 = vmatprep.subr.bf16.mxu0 0
      %1836 = vmatpush1.bf16.msra.mxu0 %v1805
      %1837 = vmatprep.subr.bf16.mxu0 0
      %1838 = vmatpush2.bf16.msra.mxu0 0
      %1839 = vmatprep.subr.bf16.mxu0 0
      %1840 = vmatpush2.bf16.msra.mxu0 0
      %1841 = vmatprep.subr.bf16.mxu0 0
      %1842 = vmatpush2.bf16.msra.mxu0 0
      %1843 = vmatprep.subr.bf16.mxu0 0
      %1844 = vmatpush2.bf16.msra.mxu0 0
      %1845 = vmatprep.subr.bf16.mxu0 0
      %1846 = vmatpush2.bf16.msra.mxu0 0
      %1847 = vmatprep.subr.bf16.mxu0 0
      %1848 = vmatpush2.bf16.msra.mxu0 0
      %1849 = vmatprep.subr.bf16.mxu0 0
      %1850 = vmatpush2.bf16.msra.mxu0 0
      %1851 = vmatprep.subr.bf16.mxu0 0
      %1852 = vmatpush2.bf16.msra.mxu0 0
      %1853 = vmatprep.mubr.bf16.mxu0 0
      %1854 = vmatmul.mubr.bf16.gmra.mxu0 %v1724
      %v1855 = vpop.f32.mrf.mxu0
      %v1856 = vadd.f32 0.0, %v1855
      %v1857 = vpop.f32.mrf.mxu0
      %v1858 = vpop.f32.mrf.mxu0
      %v1859 = vadd.f32 0.0, %v1858
      %v1860 = vpop.f32.mrf.mxu0
      %1861 = vmatprep.mubr.bf16.mxu0 0
      %1862 = vmatmul.mubr.bf16.gmra.mxu0 %v1725
      %v1863 = vpop.f32.mrf.mxu0
      %v1864 = vpop.f32.mrf.mxu0
      %v1865 = vpop.f32.mrf.mxu0
      %v1866 = vpop.f32.mrf.mxu0
      %1867 = vmatprep.mubr.bf16.mxu0 0
      %1868 = vmatmul.mubr.bf16.gmra.mxu0 %v1726
      %v1869 = vpop.f32.mrf.mxu0
      %v1870 = vadd.f32 0.0, %v1869
      %v1871 = vpop.f32.mrf.mxu0
      %v1872 = vpop.f32.mrf.mxu0
      %v1873 = vadd.f32 0.0, %v1872
      %v1874 = vpop.f32.mrf.mxu0
      %1875 = vmatprep.mubr.bf16.mxu0 0
      %1876 = vmatmul.mubr.bf16.gmra.mxu0 %v1727
      %v1877 = vpop.f32.mrf.mxu0
      %v1878 = vpop.f32.mrf.mxu0
      %v1879 = vpop.f32.mrf.mxu0
      %v1880 = vpop.f32.mrf.mxu0
      %1881 = vmatprep.mubr.bf16.mxu0 0
      %1882 = vmatmul.mubr.bf16.gmra.mxu0 %v1728
      %v1883 = vpop.f32.mrf.mxu0
      %v1884 = vadd.f32 0.0, %v1883
      %v1885 = vpop.f32.mrf.mxu0
      %v1886 = vpop.f32.mrf.mxu0
      %v1887 = vadd.f32 0.0, %v1886
      %v1888 = vpop.f32.mrf.mxu0
      %1889 = vmatprep.mubr.bf16.mxu0 0
      %1890 = vmatmul.mubr.bf16.gmra.mxu0 %v1729
      %v1891 = vpop.f32.mrf.mxu0
      %v1892 = vpop.f32.mrf.mxu0
      %v1893 = vpop.f32.mrf.mxu0
      %v1894 = vpop.f32.mrf.mxu0
      %1895 = vmatprep.mubr.bf16.mxu0 0
      %1896 = vmatmul.mubr.bf16.gmra.mxu0 %v1730
      %v1897 = vpop.f32.mrf.mxu0
      %v1898 = vadd.f32 0.0, %v1897
      %v1899 = vpop.f32.mrf.mxu0
      %v1900 = vpop.f32.mrf.mxu0
      %v1901 = vadd.f32 0.0, %v1900
      %v1902 = vpop.f32.mrf.mxu0
      %1903 = vmatprep.mubr.bf16.mxu0 0
      %1904 = vmatmul.mubr.bf16.gmra.mxu0 %v1731
      %v1905 = vpop.f32.mrf.mxu0
      %v1906 = vpop.f32.mrf.mxu0
      %v1907 = vpop.f32.mrf.mxu0
      %v1908 = vpop.f32.mrf.mxu0
      %1909 = vmatprep.mubr.bf16.mxu0 0
      %1910 = vmatmul.mubr.bf16.gmra.mxu0 %v1732
      %v1911 = vpop.f32.mrf.mxu0
      %v1912 = vadd.f32 0.0, %v1911
      %v1913 = vpop.f32.mrf.mxu0
      %v1914 = vpop.f32.mrf.mxu0
      %v1915 = vadd.f32 0.0, %v1914
      %v1916 = vpop.f32.mrf.mxu0
      %1917 = vmatprep.mubr.bf16.mxu0 0
      %1918 = vmatmul.mubr.bf16.gmra.mxu0 %v1733
      %v1919 = vpop.f32.mrf.mxu0
      %v1920 = vpop.f32.mrf.mxu0
      %v1921 = vpop.f32.mrf.mxu0
      %v1922 = vpop.f32.mrf.mxu0
      %1923 = vmatprep.mubr.bf16.mxu0 0
      %1924 = vmatmul.mubr.bf16.gmra.mxu0 %v1734
      %v1925 = vpop.f32.mrf.mxu0
      %v1926 = vadd.f32 0.0, %v1925
      %v1927 = vpop.f32.mrf.mxu0
      %v1928 = vpop.f32.mrf.mxu0
      %v1929 = vadd.f32 0.0, %v1928
      %v1930 = vpop.f32.mrf.mxu0
      %1931 = vmatprep.mubr.bf16.mxu0 0
      %1932 = vmatmul.mubr.bf16.gmra.mxu0 %v1735
      %v1933 = vpop.f32.mrf.mxu0
      %v1934 = vpop.f32.mrf.mxu0
      %v1935 = vpop.f32.mrf.mxu0
      %v1936 = vpop.f32.mrf.mxu0
      %1937 = vmatprep.mubr.bf16.mxu0 0
      %1938 = vmatmul.mubr.bf16.gmra.mxu0 %v1736
      %v1939 = vpop.f32.mrf.mxu0
      %v1940 = vadd.f32 0.0, %v1939
      %v1941 = vpop.f32.mrf.mxu0
      %v1942 = vpop.f32.mrf.mxu0
      %v1943 = vadd.f32 0.0, %v1942
      %v1944 = vpop.f32.mrf.mxu0
      %1945 = vmatprep.mubr.bf16.mxu0 0
      %1946 = vmatmul.mubr.bf16.gmra.mxu0 %v1737
      %v1947 = vpop.f32.mrf.mxu0
      %v1948 = vpop.f32.mrf.mxu0
      %v1949 = vpop.f32.mrf.mxu0
      %v1950 = vpop.f32.mrf.mxu0
      %1951 = vmatprep.mubr.bf16.mxu0 0
      %1952 = vmatmul.mubr.bf16.gmra.mxu0 %v1738
      %v1953 = vpop.f32.mrf.mxu0
      %v1954 = vadd.f32 0.0, %v1953
      %v1955 = vpop.f32.mrf.mxu0
      %v1956 = vpop.f32.mrf.mxu0
      %v1957 = vadd.f32 0.0, %v1956
      %v1958 = vpop.f32.mrf.mxu0
      %1959 = vmatprep.mubr.bf16.mxu0 0
      %1960 = vmatmul.mubr.bf16.gmra.mxu0 %v1739
      %v1961 = vpop.f32.mrf.mxu0
      %v1962 = vpop.f32.mrf.mxu0
      %v1963 = vpop.f32.mrf.mxu0
      %v1964 = vpop.f32.mrf.mxu0
      %1965 = vmatprep.mubr.bf16.mxu0 0
      %1966 = vmatmul.mubr.bf16.gmra.mxu0 %v1740
      %v1967 = vpop.f32.mrf.mxu0
      %v1968 = vadd.f32 0.0, %v1967
      %v1969 = vpop.f32.mrf.mxu0
      %v1970 = vpop.f32.mrf.mxu0
      %v1971 = vadd.f32 0.0, %v1970
      %v1972 = vpop.f32.mrf.mxu0
      %1973 = vmatprep.mubr.bf16.mxu0 0
      %1974 = vmatmul.mubr.bf16.gmra.mxu0 %v1741
      %v1975 = vpop.f32.mrf.mxu0
      %v1976 = vpop.f32.mrf.mxu0
      %v1977 = vpop.f32.mrf.mxu0
      %v1978 = vpop.f32.mrf.mxu0
      %1979 = vmatprep.mubr.bf16.mxu0 0
      %1980 = vmatmul.mubr.bf16.gmra.mxu0 %v1742
      %v1981 = vpop.f32.mrf.mxu0
      %v1982 = vadd.f32 0.0, %v1981
      %v1983 = vpop.f32.mrf.mxu0
      %v1984 = vpop.f32.mrf.mxu0
      %v1985 = vadd.f32 0.0, %v1984
      %v1986 = vpop.f32.mrf.mxu0
      %1987 = vmatprep.mubr.bf16.mxu0 0
      %1988 = vmatmul.mubr.bf16.gmra.mxu0 %v1743
      %v1989 = vpop.f32.mrf.mxu0
      %v1990 = vpop.f32.mrf.mxu0
      %v1991 = vpop.f32.mrf.mxu0
      %v1992 = vpop.f32.mrf.mxu0
      %1993 = vmatprep.mubr.bf16.mxu0 0
      %1994 = vmatmul.mubr.bf16.gmra.mxu0 %v1744
      %v1995 = vpop.f32.mrf.mxu0
      %v1996 = vadd.f32 0.0, %v1995
      %v1997 = vpop.f32.mrf.mxu0
      %v1998 = vpop.f32.mrf.mxu0
      %v1999 = vadd.f32 0.0, %v1998
      %v2000 = vpop.f32.mrf.mxu0
      %2001 = vmatprep.mubr.bf16.mxu0 0
      %2002 = vmatmul.mubr.bf16.gmra.mxu0 %v1745
      %v2003 = vpop.f32.mrf.mxu0
      %v2004 = vpop.f32.mrf.mxu0
      %v2005 = vpop.f32.mrf.mxu0
      %v2006 = vpop.f32.mrf.mxu0
      %2007 = vmatprep.mubr.bf16.mxu0 0
      %2008 = vmatmul.mubr.bf16.gmra.mxu0 %v1746
      %v2009 = vpop.f32.mrf.mxu0
      %v2010 = vadd.f32 0.0, %v2009
      %v2011 = vpop.f32.mrf.mxu0
      %v2012 = vpop.f32.mrf.mxu0
      %v2013 = vadd.f32 0.0, %v2012
      %v2014 = vpop.f32.mrf.mxu0
      %2015 = vmatprep.mubr.bf16.mxu0 0
      %2016 = vmatmul.mubr.bf16.gmra.mxu0 %v1747
      %v2017 = vpop.f32.mrf.mxu0
      %v2018 = vpop.f32.mrf.mxu0
      %v2019 = vpop.f32.mrf.mxu0
      %v2020 = vpop.f32.mrf.mxu0
      %2021 = vmatprep.mubr.bf16.mxu0 0
      %2022 = vmatmul.mubr.bf16.gmra.mxu0 %v1748
      %v2023 = vpop.f32.mrf.mxu0
      %v2024 = vadd.f32 0.0, %v2023
      %v2025 = vpop.f32.mrf.mxu0
      %v2026 = vpop.f32.mrf.mxu0
      %v2027 = vadd.f32 0.0, %v2026
      %v2028 = vpop.f32.mrf.mxu0
      %2029 = vmatprep.mubr.bf16.mxu0 0
      %2030 = vmatmul.mubr.bf16.gmra.mxu0 %v1749
      %v2031 = vpop.f32.mrf.mxu0
      %v2032 = vpop.f32.mrf.mxu0
      %v2033 = vpop.f32.mrf.mxu0
      %v2034 = vpop.f32.mrf.mxu0
      %2035 = vmatprep.mubr.bf16.mxu0 0
      %2036 = vmatmul.mubr.bf16.gmra.mxu0 %v1750
      %v2037 = vpop.f32.mrf.mxu0
      %v2038 = vadd.f32 0.0, %v2037
      %v2039 = vpop.f32.mrf.mxu0
      %v2040 = vpop.f32.mrf.mxu0
      %v2041 = vadd.f32 0.0, %v2040
      %v2042 = vpop.f32.mrf.mxu0
      %2043 = vmatprep.mubr.bf16.mxu0 0
      %2044 = vmatmul.mubr.bf16.gmra.mxu0 %v1751
      %v2045 = vpop.f32.mrf.mxu0
      %v2046 = vpop.f32.mrf.mxu0
      %v2047 = vpop.f32.mrf.mxu0
      %v2048 = vpop.f32.mrf.mxu0
      %2049 = vmatprep.mubr.bf16.mxu0 0
      %2050 = vmatmul.mubr.bf16.gmra.mxu0 %v1752
      %v2051 = vpop.f32.mrf.mxu0
      %v2052 = vadd.f32 0.0, %v2051
      %v2053 = vpop.f32.mrf.mxu0
      %v2054 = vpop.f32.mrf.mxu0
      %v2055 = vadd.f32 0.0, %v2054
      %v2056 = vpop.f32.mrf.mxu0
      %2057 = vmatprep.mubr.bf16.mxu0 0
      %2058 = vmatmul.mubr.bf16.gmra.mxu0 %v1753
      %v2059 = vpop.f32.mrf.mxu0
      %v2060 = vpop.f32.mrf.mxu0
      %v2061 = vpop.f32.mrf.mxu0
      %v2062 = vpop.f32.mrf.mxu0
      %2063 = vmatprep.mubr.bf16.mxu0 0
      %2064 = vmatmul.mubr.bf16.gmra.mxu0 %v1754
      %v2065 = vpop.f32.mrf.mxu0
      %v2066 = vadd.f32 0.0, %v2065
      %v2067 = vpop.f32.mrf.mxu0
      %v2068 = vpop.f32.mrf.mxu0
      %v2069 = vadd.f32 0.0, %v2068
      %v2070 = vpop.f32.mrf.mxu0
      %2071 = vmatprep.mubr.bf16.mxu0 0
      %2072 = vmatmul.mubr.bf16.gmra.mxu0 %v1755
      %v2073 = vpop.f32.mrf.mxu0
      %v2074 = vpop.f32.mrf.mxu0
      %v2075 = vpop.f32.mrf.mxu0
      %v2076 = vpop.f32.mrf.mxu0
      %2077 = vdwg.mxu0
      %v2078 = vadd.f32 %v1628, %v1856
      %v2079 = vadd.f32 %v1629, %v1859
      %v2080 = vadd.f32 %v1630, %v1870
      %v2081 = vadd.f32 %v1631, %v1873
      %v2082 = vadd.f32 %v1632, %v1884
      %v2083 = vadd.f32 %v1633, %v1887
      %v2084 = vadd.f32 %v1634, %v1898
      %v2085 = vadd.f32 %v1635, %v1901
      %v2086 = vadd.f32 %v1636, %v1912
      %v2087 = vadd.f32 %v1637, %v1915
      %v2088 = vadd.f32 %v1638, %v1926
      %v2089 = vadd.f32 %v1639, %v1929
      %v2090 = vadd.f32 %v1640, %v1940
      %v2091 = vadd.f32 %v1641, %v1943
      %v2092 = vadd.f32 %v1642, %v1954
      %v2093 = vadd.f32 %v1643, %v1957
      %v2094 = vadd.f32 %v1644, %v1968
      %v2095 = vadd.f32 %v1645, %v1971
      %v2096 = vadd.f32 %v1646, %v1982
      %v2097 = vadd.f32 %v1647, %v1985
      %v2098 = vadd.f32 %v1648, %v1996
      %v2099 = vadd.f32 %v1649, %v1999
      %v2100 = vadd.f32 %v1650, %v2010
      %v2101 = vadd.f32 %v1651, %v2013
      %v2102 = vadd.f32 %v1652, %v2024
      %v2103 = vadd.f32 %v1653, %v2027
      %v2104 = vadd.f32 %v1654, %v2038
      %v2105 = vadd.f32 %v1655, %v2041
      %v2106 = vadd.f32 %v1656, %v2052
      %v2107 = vadd.f32 %v1657, %v2055
      %v2108 = vadd.f32 %v1658, %v2066
      %v2109 = vadd.f32 %v1659, %v2069
      %v2110 = vld [vmem:[%s278] sm:$0xff]
      %v2111 = vld [vmem:[%s278 + $0x8] sm:$0xff]
      %v2112 = vld [vmem:[%s278 + $0x10] sm:$0xff]
      %v2113 = vld [vmem:[%s278 + $0x18] sm:$0xff]
      %v2114 = vld [vmem:[%s278 + $0x20] sm:$0xff]
      %v2115 = vld [vmem:[%s278 + $0x28] sm:$0xff]
      %v2116 = vld [vmem:[%s278 + $0x30] sm:$0xff]
      %v2117 = vld [vmem:[%s278 + $0x38] sm:$0xff]
      %v2118 = vld [vmem:[%s278 + $0x40] sm:$0xff]
      %v2119 = vld [vmem:[%s278 + $0x48] sm:$0xff]
      %v2120 = vld [vmem:[%s278 + $0x50] sm:$0xff]
      %v2121 = vld [vmem:[%s278 + $0x58] sm:$0xff]
      %v2122 = vld [vmem:[%s278 + $0x60] sm:$0xff]
      %v2123 = vld [vmem:[%s278 + $0x68] sm:$0xff]
      %v2124 = vld [vmem:[%s278 + $0x70] sm:$0xff]
      %v2125 = vld [vmem:[%s278 + $0x78] sm:$0xff]
      %v2126 = vld [vmem:[%s278 + $0x80] sm:$0xff]
      %v2127 = vld [vmem:[%s278 + $0x88] sm:$0xff]
      %v2128 = vld [vmem:[%s278 + $0x90] sm:$0xff]
      %v2129 = vld [vmem:[%s278 + $0x98] sm:$0xff]
      %v2130 = vld [vmem:[%s278 + $0xa0] sm:$0xff]
      %v2131 = vld [vmem:[%s278 + $0xa8] sm:$0xff]
      %v2132 = vld [vmem:[%s278 + $0xb0] sm:$0xff]
      %v2133 = vld [vmem:[%s278 + $0xb8] sm:$0xff]
      %v2134 = vld [vmem:[%s278 + $0xc0] sm:$0xff]
      %v2135 = vld [vmem:[%s278 + $0xc8] sm:$0xff]
      %v2136 = vld [vmem:[%s278 + $0xd0] sm:$0xff]
      %v2137 = vld [vmem:[%s278 + $0xd8] sm:$0xff]
      %v2138 = vld [vmem:[%s278 + $0xe0] sm:$0xff]
      %v2139 = vld [vmem:[%s278 + $0xe8] sm:$0xff]
      %v2140 = vld [vmem:[%s278 + $0xf0] sm:$0xff]
      %v2141 = vld [vmem:[%s278 + $0xf8] sm:$0xff]
      %v2142 = vld [vmem:[%s278 + $0x100] sm:$0xff]
      %v2143 = vld [vmem:[%s278 + $0x108] sm:$0xff]
      %v2144 = vld [vmem:[%s278 + $0x110] sm:$0xff]
      %v2145 = vld [vmem:[%s278 + $0x118] sm:$0xff]
      %v2146 = vld [vmem:[%s278 + $0x120] sm:$0xff]
      %v2147 = vld [vmem:[%s278 + $0x128] sm:$0xff]
      %v2148 = vld [vmem:[%s278 + $0x130] sm:$0xff]
      %v2149 = vld [vmem:[%s278 + $0x138] sm:$0xff]
      %v2150 = vld [vmem:[%s278 + $0x140] sm:$0xff]
      %v2151 = vld [vmem:[%s278 + $0x148] sm:$0xff]
      %v2152 = vld [vmem:[%s278 + $0x150] sm:$0xff]
      %v2153 = vld [vmem:[%s278 + $0x158] sm:$0xff]
      %v2154 = vld [vmem:[%s278 + $0x160] sm:$0xff]
      %v2155 = vld [vmem:[%s278 + $0x168] sm:$0xff]
      %v2156 = vld [vmem:[%s278 + $0x170] sm:$0xff]
      %v2157 = vld [vmem:[%s278 + $0x178] sm:$0xff]
      %v2158 = vld [vmem:[%s278 + $0x180] sm:$0xff]
      %v2159 = vld [vmem:[%s278 + $0x188] sm:$0xff]
      %v2160 = vld [vmem:[%s278 + $0x190] sm:$0xff]
      %v2161 = vld [vmem:[%s278 + $0x198] sm:$0xff]
      %v2162 = vld [vmem:[%s278 + $0x1a0] sm:$0xff]
      %v2163 = vld [vmem:[%s278 + $0x1a8] sm:$0xff]
      %v2164 = vld [vmem:[%s278 + $0x1b0] sm:$0xff]
      %v2165 = vld [vmem:[%s278 + $0x1b8] sm:$0xff]
      %v2166 = vld [vmem:[%s278 + $0x1c0] sm:$0xff]
      %v2167 = vld [vmem:[%s278 + $0x1c8] sm:$0xff]
      %v2168 = vld [vmem:[%s278 + $0x1d0] sm:$0xff]
      %v2169 = vld [vmem:[%s278 + $0x1d8] sm:$0xff]
      %v2170 = vld [vmem:[%s278 + $0x1e0] sm:$0xff]
      %v2171 = vld [vmem:[%s278 + $0x1e8] sm:$0xff]
      %v2172 = vld [vmem:[%s278 + $0x1f0] sm:$0xff]
      %v2173 = vld [vmem:[%s278 + $0x1f8] sm:$0xff]
      %v2174 = vpack.c.bf16 %v2111, %v2110
      %v2175 = vpack.c.bf16 %v2113, %v2112
      %v2176 = vpack.c.bf16 %v2115, %v2114
      %v2177 = vpack.c.bf16 %v2117, %v2116
      %v2178 = vpack.c.bf16 %v2119, %v2118
      %v2179 = vpack.c.bf16 %v2121, %v2120
      %v2180 = vpack.c.bf16 %v2123, %v2122
      %v2181 = vpack.c.bf16 %v2125, %v2124
      %v2182 = vpack.c.bf16 %v2127, %v2126
      %v2183 = vpack.c.bf16 %v2129, %v2128
      %v2184 = vpack.c.bf16 %v2131, %v2130
      %v2185 = vpack.c.bf16 %v2133, %v2132
      %v2186 = vpack.c.bf16 %v2135, %v2134
      %v2187 = vpack.c.bf16 %v2137, %v2136
      %v2188 = vpack.c.bf16 %v2139, %v2138
      %v2189 = vpack.c.bf16 %v2141, %v2140
      %v2190 = vpack.c.bf16 %v2143, %v2142
      %v2191 = vpack.c.bf16 %v2145, %v2144
      %v2192 = vpack.c.bf16 %v2147, %v2146
      %v2193 = vpack.c.bf16 %v2149, %v2148
      %v2194 = vpack.c.bf16 %v2151, %v2150
      %v2195 = vpack.c.bf16 %v2153, %v2152
      %v2196 = vpack.c.bf16 %v2155, %v2154
      %v2197 = vpack.c.bf16 %v2157, %v2156
      %v2198 = vpack.c.bf16 %v2159, %v2158
      %v2199 = vpack.c.bf16 %v2161, %v2160
      %v2200 = vpack.c.bf16 %v2163, %v2162
      %v2201 = vpack.c.bf16 %v2165, %v2164
      %v2202 = vpack.c.bf16 %v2167, %v2166
      %v2203 = vpack.c.bf16 %v2169, %v2168
      %v2204 = vpack.c.bf16 %v2171, %v2170
      %v2205 = vpack.c.bf16 %v2173, %v2172
      %s2206 = scalar_lea.vmem %s1, 256
      %v2207 = vld [vmem:[%s2206] sm:$0xf]
      %v2208 = vld [vmem:[%s2206 + $0x4] sm:$0xf]
      %v2209 = vld [vmem:[%s2206 + $0x8] sm:$0xf]
      %v2210 = vld [vmem:[%s2206 + $0xc] sm:$0xf]
      %v2211 = vld [vmem:[%s2206 + $0x10] sm:$0xf]
      %v2212 = vld [vmem:[%s2206 + $0x14] sm:$0xf]
      %v2213 = vld [vmem:[%s2206 + $0x18] sm:$0xf]
      %v2214 = vld [vmem:[%s2206 + $0x1c] sm:$0xf]
      %v2215 = vld [vmem:[%s2206 + $0x20] sm:$0xf]
      %v2216 = vld [vmem:[%s2206 + $0x24] sm:$0xf]
      %v2217 = vld [vmem:[%s2206 + $0x28] sm:$0xf]
      %v2218 = vld [vmem:[%s2206 + $0x2c] sm:$0xf]
      %v2219 = vld [vmem:[%s2206 + $0x30] sm:$0xf]
      %v2220 = vld [vmem:[%s2206 + $0x34] sm:$0xf]
      %v2221 = vld [vmem:[%s2206 + $0x38] sm:$0xf]
      %v2222 = vld [vmem:[%s2206 + $0x3c] sm:$0xf]
      %v2239 = vunpack.c.l.b16 %v2207
      %v2240 = vunpack.c.l.b16 %v2208
      %v2241 = vunpack.c.l.b16 %v2209
      %v2242 = vunpack.c.l.b16 %v2210
      %v2243 = vunpack.c.l.b16 %v2211
      %v2244 = vunpack.c.l.b16 %v2212
      %v2245 = vunpack.c.l.b16 %v2213
      %v2246 = vunpack.c.l.b16 %v2214
      %v2247 = vunpack.c.l.b16 %v2215
      %v2248 = vunpack.c.l.b16 %v2216
      %v2249 = vunpack.c.l.b16 %v2217
      %v2250 = vunpack.c.l.b16 %v2218
      %v2251 = vunpack.c.l.b16 %v2219
      %v2252 = vunpack.c.l.b16 %v2220
      %v2253 = vunpack.c.l.b16 %v2221
      %v2254 = vunpack.c.l.b16 %v2222
      %v2255 = vpack.c.b16 %v2240, %v2239
      %v2256 = vpack.c.b16 %v2242, %v2241
      %v2257 = vpack.c.b16 %v2244, %v2243
      %v2258 = vpack.c.b16 %v2246, %v2245
      %v2259 = vpack.c.b16 %v2248, %v2247
      %v2260 = vpack.c.b16 %v2250, %v2249
      %v2261 = vpack.c.b16 %v2252, %v2251
      %v2262 = vpack.c.b16 %v2254, %v2253
      %2271 = vmatprep.subr.bf16.mxu0 0
      %2272 = vmatpush1.bf16.msra.mxu0 %v2262
      %2273 = vmatprep.subr.bf16.mxu0 0
      %2274 = vmatpush1.bf16.msra.mxu0 %v2261
      %2275 = vmatprep.subr.bf16.mxu0 0
      %2276 = vmatpush1.bf16.msra.mxu0 %v2260
      %2277 = vmatprep.subr.bf16.mxu0 0
      %2278 = vmatpush1.bf16.msra.mxu0 %v2259
      %2279 = vmatprep.subr.bf16.mxu0 0
      %2280 = vmatpush1.bf16.msra.mxu0 %v2258
      %2281 = vmatprep.subr.bf16.mxu0 0
      %2282 = vmatpush1.bf16.msra.mxu0 %v2257
      %2283 = vmatprep.subr.bf16.mxu0 0
      %2284 = vmatpush1.bf16.msra.mxu0 %v2256
      %2285 = vmatprep.subr.bf16.mxu0 0
      %2286 = vmatpush1.bf16.msra.mxu0 %v2255
      %2287 = vmatprep.subr.bf16.mxu0 0
      %2288 = vmatpush2.bf16.msra.mxu0 0
      %2289 = vmatprep.subr.bf16.mxu0 0
      %2290 = vmatpush2.bf16.msra.mxu0 0
      %2291 = vmatprep.subr.bf16.mxu0 0
      %2292 = vmatpush2.bf16.msra.mxu0 0
      %2293 = vmatprep.subr.bf16.mxu0 0
      %2294 = vmatpush2.bf16.msra.mxu0 0
      %2295 = vmatprep.subr.bf16.mxu0 0
      %2296 = vmatpush2.bf16.msra.mxu0 0
      %2297 = vmatprep.subr.bf16.mxu0 0
      %2298 = vmatpush2.bf16.msra.mxu0 0
      %2299 = vmatprep.subr.bf16.mxu0 0
      %2300 = vmatpush2.bf16.msra.mxu0 0
      %2301 = vmatprep.subr.bf16.mxu0 0
      %2302 = vmatpush2.bf16.msra.mxu0 0
      %2303 = vmatprep.mubr.bf16.mxu0 0
      %2304 = vmatmul.mubr.bf16.gmra.mxu0 %v2174
      %v2305 = vpop.f32.mrf.mxu0
      %v2306 = vadd.f32 0.0, %v2305
      %v2307 = vpop.f32.mrf.mxu0
      %v2308 = vpop.f32.mrf.mxu0
      %v2309 = vadd.f32 0.0, %v2308
      %v2310 = vpop.f32.mrf.mxu0
      %2311 = vmatprep.mubr.bf16.mxu0 0
      %2312 = vmatmul.mubr.bf16.gmra.mxu0 %v2175
      %v2313 = vpop.f32.mrf.mxu0
      %v2314 = vpop.f32.mrf.mxu0
      %v2315 = vpop.f32.mrf.mxu0
      %v2316 = vpop.f32.mrf.mxu0
      %2317 = vmatprep.mubr.bf16.mxu0 0
      %2318 = vmatmul.mubr.bf16.gmra.mxu0 %v2176
      %v2319 = vpop.f32.mrf.mxu0
      %v2320 = vadd.f32 0.0, %v2319
      %v2321 = vpop.f32.mrf.mxu0
      %v2322 = vpop.f32.mrf.mxu0
      %v2323 = vadd.f32 0.0, %v2322
      %v2324 = vpop.f32.mrf.mxu0
      %2325 = vmatprep.mubr.bf16.mxu0 0
      %2326 = vmatmul.mubr.bf16.gmra.mxu0 %v2177
      %v2327 = vpop.f32.mrf.mxu0
      %v2328 = vpop.f32.mrf.mxu0
      %v2329 = vpop.f32.mrf.mxu0
      %v2330 = vpop.f32.mrf.mxu0
      %2331 = vmatprep.mubr.bf16.mxu0 0
      %2332 = vmatmul.mubr.bf16.gmra.mxu0 %v2178
      %v2333 = vpop.f32.mrf.mxu0
      %v2334 = vadd.f32 0.0, %v2333
      %v2335 = vpop.f32.mrf.mxu0
      %v2336 = vpop.f32.mrf.mxu0
      %v2337 = vadd.f32 0.0, %v2336
      %v2338 = vpop.f32.mrf.mxu0
      %2339 = vmatprep.mubr.bf16.mxu0 0
      %2340 = vmatmul.mubr.bf16.gmra.mxu0 %v2179
      %v2341 = vpop.f32.mrf.mxu0
      %v2342 = vpop.f32.mrf.mxu0
      %v2343 = vpop.f32.mrf.mxu0
      %v2344 = vpop.f32.mrf.mxu0
      %2345 = vmatprep.mubr.bf16.mxu0 0
      %2346 = vmatmul.mubr.bf16.gmra.mxu0 %v2180
      %v2347 = vpop.f32.mrf.mxu0
      %v2348 = vadd.f32 0.0, %v2347
      %v2349 = vpop.f32.mrf.mxu0
      %v2350 = vpop.f32.mrf.mxu0
      %v2351 = vadd.f32 0.0, %v2350
      %v2352 = vpop.f32.mrf.mxu0
      %2353 = vmatprep.mubr.bf16.mxu0 0
      %2354 = vmatmul.mubr.bf16.gmra.mxu0 %v2181
      %v2355 = vpop.f32.mrf.mxu0
      %v2356 = vpop.f32.mrf.mxu0
      %v2357 = vpop.f32.mrf.mxu0
      %v2358 = vpop.f32.mrf.mxu0
      %2359 = vmatprep.mubr.bf16.mxu0 0
      %2360 = vmatmul.mubr.bf16.gmra.mxu0 %v2182
      %v2361 = vpop.f32.mrf.mxu0
      %v2362 = vadd.f32 0.0, %v2361
      %v2363 = vpop.f32.mrf.mxu0
      %v2364 = vpop.f32.mrf.mxu0
      %v2365 = vadd.f32 0.0, %v2364
      %v2366 = vpop.f32.mrf.mxu0
      %2367 = vmatprep.mubr.bf16.mxu0 0
      %2368 = vmatmul.mubr.bf16.gmra.mxu0 %v2183
      %v2369 = vpop.f32.mrf.mxu0
      %v2370 = vpop.f32.mrf.mxu0
      %v2371 = vpop.f32.mrf.mxu0
      %v2372 = vpop.f32.mrf.mxu0
      %2373 = vmatprep.mubr.bf16.mxu0 0
      %2374 = vmatmul.mubr.bf16.gmra.mxu0 %v2184
      %v2375 = vpop.f32.mrf.mxu0
      %v2376 = vadd.f32 0.0, %v2375
      %v2377 = vpop.f32.mrf.mxu0
      %v2378 = vpop.f32.mrf.mxu0
      %v2379 = vadd.f32 0.0, %v2378
      %v2380 = vpop.f32.mrf.mxu0
      %2381 = vmatprep.mubr.bf16.mxu0 0
      %2382 = vmatmul.mubr.bf16.gmra.mxu0 %v2185
      %v2383 = vpop.f32.mrf.mxu0
      %v2384 = vpop.f32.mrf.mxu0
      %v2385 = vpop.f32.mrf.mxu0
      %v2386 = vpop.f32.mrf.mxu0
      %2387 = vmatprep.mubr.bf16.mxu0 0
      %2388 = vmatmul.mubr.bf16.gmra.mxu0 %v2186
      %v2389 = vpop.f32.mrf.mxu0
      %v2390 = vadd.f32 0.0, %v2389
      %v2391 = vpop.f32.mrf.mxu0
      %v2392 = vpop.f32.mrf.mxu0
      %v2393 = vadd.f32 0.0, %v2392
      %v2394 = vpop.f32.mrf.mxu0
      %2395 = vmatprep.mubr.bf16.mxu0 0
      %2396 = vmatmul.mubr.bf16.gmra.mxu0 %v2187
      %v2397 = vpop.f32.mrf.mxu0
      %v2398 = vpop.f32.mrf.mxu0
      %v2399 = vpop.f32.mrf.mxu0
      %v2400 = vpop.f32.mrf.mxu0
      %2401 = vmatprep.mubr.bf16.mxu0 0
      %2402 = vmatmul.mubr.bf16.gmra.mxu0 %v2188
      %v2403 = vpop.f32.mrf.mxu0
      %v2404 = vadd.f32 0.0, %v2403
      %v2405 = vpop.f32.mrf.mxu0
      %v2406 = vpop.f32.mrf.mxu0
      %v2407 = vadd.f32 0.0, %v2406
      %v2408 = vpop.f32.mrf.mxu0
      %2409 = vmatprep.mubr.bf16.mxu0 0
      %2410 = vmatmul.mubr.bf16.gmra.mxu0 %v2189
      %v2411 = vpop.f32.mrf.mxu0
      %v2412 = vpop.f32.mrf.mxu0
      %v2413 = vpop.f32.mrf.mxu0
      %v2414 = vpop.f32.mrf.mxu0
      %2415 = vmatprep.mubr.bf16.mxu0 0
      %2416 = vmatmul.mubr.bf16.gmra.mxu0 %v2190
      %v2417 = vpop.f32.mrf.mxu0
      %v2418 = vadd.f32 0.0, %v2417
      %v2419 = vpop.f32.mrf.mxu0
      %v2420 = vpop.f32.mrf.mxu0
      %v2421 = vadd.f32 0.0, %v2420
      %v2422 = vpop.f32.mrf.mxu0
      %2423 = vmatprep.mubr.bf16.mxu0 0
      %2424 = vmatmul.mubr.bf16.gmra.mxu0 %v2191
      %v2425 = vpop.f32.mrf.mxu0
      %v2426 = vpop.f32.mrf.mxu0
      %v2427 = vpop.f32.mrf.mxu0
      %v2428 = vpop.f32.mrf.mxu0
      %2429 = vmatprep.mubr.bf16.mxu0 0
      %2430 = vmatmul.mubr.bf16.gmra.mxu0 %v2192
      %v2431 = vpop.f32.mrf.mxu0
      %v2432 = vadd.f32 0.0, %v2431
      %v2433 = vpop.f32.mrf.mxu0
      %v2434 = vpop.f32.mrf.mxu0
      %v2435 = vadd.f32 0.0, %v2434
      %v2436 = vpop.f32.mrf.mxu0
      %2437 = vmatprep.mubr.bf16.mxu0 0
      %2438 = vmatmul.mubr.bf16.gmra.mxu0 %v2193
      %v2439 = vpop.f32.mrf.mxu0
      %v2440 = vpop.f32.mrf.mxu0
      %v2441 = vpop.f32.mrf.mxu0
      %v2442 = vpop.f32.mrf.mxu0
      %2443 = vmatprep.mubr.bf16.mxu0 0
      %2444 = vmatmul.mubr.bf16.gmra.mxu0 %v2194
      %v2445 = vpop.f32.mrf.mxu0
      %v2446 = vadd.f32 0.0, %v2445
      %v2447 = vpop.f32.mrf.mxu0
      %v2448 = vpop.f32.mrf.mxu0
      %v2449 = vadd.f32 0.0, %v2448
      %v2450 = vpop.f32.mrf.mxu0
      %2451 = vmatprep.mubr.bf16.mxu0 0
      %2452 = vmatmul.mubr.bf16.gmra.mxu0 %v2195
      %v2453 = vpop.f32.mrf.mxu0
      %v2454 = vpop.f32.mrf.mxu0
      %v2455 = vpop.f32.mrf.mxu0
      %v2456 = vpop.f32.mrf.mxu0
      %2457 = vmatprep.mubr.bf16.mxu0 0
      %2458 = vmatmul.mubr.bf16.gmra.mxu0 %v2196
      %v2459 = vpop.f32.mrf.mxu0
      %v2460 = vadd.f32 0.0, %v2459
      %v2461 = vpop.f32.mrf.mxu0
      %v2462 = vpop.f32.mrf.mxu0
      %v2463 = vadd.f32 0.0, %v2462
      %v2464 = vpop.f32.mrf.mxu0
      %2465 = vmatprep.mubr.bf16.mxu0 0
      %2466 = vmatmul.mubr.bf16.gmra.mxu0 %v2197
      %v2467 = vpop.f32.mrf.mxu0
      %v2468 = vpop.f32.mrf.mxu0
      %v2469 = vpop.f32.mrf.mxu0
      %v2470 = vpop.f32.mrf.mxu0
      %2471 = vmatprep.mubr.bf16.mxu0 0
      %2472 = vmatmul.mubr.bf16.gmra.mxu0 %v2198
      %v2473 = vpop.f32.mrf.mxu0
      %v2474 = vadd.f32 0.0, %v2473
      %v2475 = vpop.f32.mrf.mxu0
      %v2476 = vpop.f32.mrf.mxu0
      %v2477 = vadd.f32 0.0, %v2476
      %v2478 = vpop.f32.mrf.mxu0
      %2479 = vmatprep.mubr.bf16.mxu0 0
      %2480 = vmatmul.mubr.bf16.gmra.mxu0 %v2199
      %v2481 = vpop.f32.mrf.mxu0
      %v2482 = vpop.f32.mrf.mxu0
      %v2483 = vpop.f32.mrf.mxu0
      %v2484 = vpop.f32.mrf.mxu0
      %2485 = vmatprep.mubr.bf16.mxu0 0
      %2486 = vmatmul.mubr.bf16.gmra.mxu0 %v2200
      %v2487 = vpop.f32.mrf.mxu0
      %v2488 = vadd.f32 0.0, %v2487
      %v2489 = vpop.f32.mrf.mxu0
      %v2490 = vpop.f32.mrf.mxu0
      %v2491 = vadd.f32 0.0, %v2490
      %v2492 = vpop.f32.mrf.mxu0
      %2493 = vmatprep.mubr.bf16.mxu0 0
      %2494 = vmatmul.mubr.bf16.gmra.mxu0 %v2201
      %v2495 = vpop.f32.mrf.mxu0
      %v2496 = vpop.f32.mrf.mxu0
      %v2497 = vpop.f32.mrf.mxu0
      %v2498 = vpop.f32.mrf.mxu0
      %2499 = vmatprep.mubr.bf16.mxu0 0
      %2500 = vmatmul.mubr.bf16.gmra.mxu0 %v2202
      %v2501 = vpop.f32.mrf.mxu0
      %v2502 = vadd.f32 0.0, %v2501
      %v2503 = vpop.f32.mrf.mxu0
      %v2504 = vpop.f32.mrf.mxu0
      %v2505 = vadd.f32 0.0, %v2504
      %v2506 = vpop.f32.mrf.mxu0
      %2507 = vmatprep.mubr.bf16.mxu0 0
      %2508 = vmatmul.mubr.bf16.gmra.mxu0 %v2203
      %v2509 = vpop.f32.mrf.mxu0
      %v2510 = vpop.f32.mrf.mxu0
      %v2511 = vpop.f32.mrf.mxu0
      %v2512 = vpop.f32.mrf.mxu0
      %2513 = vmatprep.mubr.bf16.mxu0 0
      %2514 = vmatmul.mubr.bf16.gmra.mxu0 %v2204
      %v2515 = vpop.f32.mrf.mxu0
      %v2516 = vadd.f32 0.0, %v2515
      %v2517 = vpop.f32.mrf.mxu0
      %v2518 = vpop.f32.mrf.mxu0
      %v2519 = vadd.f32 0.0, %v2518
      %v2520 = vpop.f32.mrf.mxu0
      %2521 = vmatprep.mubr.bf16.mxu0 0
      %2522 = vmatmul.mubr.bf16.gmra.mxu0 %v2205
      %v2523 = vpop.f32.mrf.mxu0
      %v2524 = vpop.f32.mrf.mxu0
      %v2525 = vpop.f32.mrf.mxu0
      %v2526 = vpop.f32.mrf.mxu0
      %2527 = vdwg.mxu0
      %v2528 = vadd.f32 %v2078, %v2306
      %v2529 = vadd.f32 %v2079, %v2309
      %v2530 = vadd.f32 %v2080, %v2320
      %v2531 = vadd.f32 %v2081, %v2323
      %v2532 = vadd.f32 %v2082, %v2334
      %v2533 = vadd.f32 %v2083, %v2337
      %v2534 = vadd.f32 %v2084, %v2348
      %v2535 = vadd.f32 %v2085, %v2351
      %v2536 = vadd.f32 %v2086, %v2362
      %v2537 = vadd.f32 %v2087, %v2365
      %v2538 = vadd.f32 %v2088, %v2376
      %v2539 = vadd.f32 %v2089, %v2379
      %v2540 = vadd.f32 %v2090, %v2390
      %v2541 = vadd.f32 %v2091, %v2393
      %v2542 = vadd.f32 %v2092, %v2404
      %v2543 = vadd.f32 %v2093, %v2407
      %v2544 = vadd.f32 %v2094, %v2418
      %v2545 = vadd.f32 %v2095, %v2421
      %v2546 = vadd.f32 %v2096, %v2432
      %v2547 = vadd.f32 %v2097, %v2435
      %v2548 = vadd.f32 %v2098, %v2446
      %v2549 = vadd.f32 %v2099, %v2449
      %v2550 = vadd.f32 %v2100, %v2460
      %v2551 = vadd.f32 %v2101, %v2463
      %v2552 = vadd.f32 %v2102, %v2474
      %v2553 = vadd.f32 %v2103, %v2477
      %v2554 = vadd.f32 %v2104, %v2488
      %v2555 = vadd.f32 %v2105, %v2491
      %v2556 = vadd.f32 %v2106, %v2502
      %v2557 = vadd.f32 %v2107, %v2505
      %v2558 = vadd.f32 %v2108, %v2516
      %v2559 = vadd.f32 %v2109, %v2519
      %v2560 = vld [vmem:[%s261] sm:$0xff]
      %v2561 = vld [vmem:[%s261 + $0x8] sm:$0xff]
      %v2562 = vld [vmem:[%s261 + $0x10] sm:$0xff]
      %v2563 = vld [vmem:[%s261 + $0x18] sm:$0xff]
      %v2564 = vld [vmem:[%s261 + $0x20] sm:$0xff]
      %v2565 = vld [vmem:[%s261 + $0x28] sm:$0xff]
      %v2566 = vld [vmem:[%s261 + $0x30] sm:$0xff]
      %v2567 = vld [vmem:[%s261 + $0x38] sm:$0xff]
      %v2568 = vld [vmem:[%s261 + $0x40] sm:$0xff]
      %v2569 = vld [vmem:[%s261 + $0x48] sm:$0xff]
      %v2570 = vld [vmem:[%s261 + $0x50] sm:$0xff]
      %v2571 = vld [vmem:[%s261 + $0x58] sm:$0xff]
      %v2572 = vld [vmem:[%s261 + $0x60] sm:$0xff]
      %v2573 = vld [vmem:[%s261 + $0x68] sm:$0xff]
      %v2574 = vld [vmem:[%s261 + $0x70] sm:$0xff]
      %v2575 = vld [vmem:[%s261 + $0x78] sm:$0xff]
      %v2576 = vld [vmem:[%s261 + $0x80] sm:$0xff]
      %v2577 = vld [vmem:[%s261 + $0x88] sm:$0xff]
      %v2578 = vld [vmem:[%s261 + $0x90] sm:$0xff]
      %v2579 = vld [vmem:[%s261 + $0x98] sm:$0xff]
      %v2580 = vld [vmem:[%s261 + $0xa0] sm:$0xff]
      %v2581 = vld [vmem:[%s261 + $0xa8] sm:$0xff]
      %v2582 = vld [vmem:[%s261 + $0xb0] sm:$0xff]
      %v2583 = vld [vmem:[%s261 + $0xb8] sm:$0xff]
      %v2584 = vld [vmem:[%s261 + $0xc0] sm:$0xff]
      %v2585 = vld [vmem:[%s261 + $0xc8] sm:$0xff]
      %v2586 = vld [vmem:[%s261 + $0xd0] sm:$0xff]
      %v2587 = vld [vmem:[%s261 + $0xd8] sm:$0xff]
      %v2588 = vld [vmem:[%s261 + $0xe0] sm:$0xff]
      %v2589 = vld [vmem:[%s261 + $0xe8] sm:$0xff]
      %v2590 = vld [vmem:[%s261 + $0xf0] sm:$0xff]
      %v2591 = vld [vmem:[%s261 + $0xf8] sm:$0xff]
      %v2592 = vld [vmem:[%s261 + $0x100] sm:$0xff]
      %v2593 = vld [vmem:[%s261 + $0x108] sm:$0xff]
      %v2594 = vld [vmem:[%s261 + $0x110] sm:$0xff]
      %v2595 = vld [vmem:[%s261 + $0x118] sm:$0xff]
      %v2596 = vld [vmem:[%s261 + $0x120] sm:$0xff]
      %v2597 = vld [vmem:[%s261 + $0x128] sm:$0xff]
      %v2598 = vld [vmem:[%s261 + $0x130] sm:$0xff]
      %v2599 = vld [vmem:[%s261 + $0x138] sm:$0xff]
      %v2600 = vld [vmem:[%s261 + $0x140] sm:$0xff]
      %v2601 = vld [vmem:[%s261 + $0x148] sm:$0xff]
      %v2602 = vld [vmem:[%s261 + $0x150] sm:$0xff]
      %v2603 = vld [vmem:[%s261 + $0x158] sm:$0xff]
      %v2604 = vld [vmem:[%s261 + $0x160] sm:$0xff]
      %v2605 = vld [vmem:[%s261 + $0x168] sm:$0xff]
      %v2606 = vld [vmem:[%s261 + $0x170] sm:$0xff]
      %v2607 = vld [vmem:[%s261 + $0x178] sm:$0xff]
      %v2608 = vld [vmem:[%s261 + $0x180] sm:$0xff]
      %v2609 = vld [vmem:[%s261 + $0x188] sm:$0xff]
      %v2610 = vld [vmem:[%s261 + $0x190] sm:$0xff]
      %v2611 = vld [vmem:[%s261 + $0x198] sm:$0xff]
      %v2612 = vld [vmem:[%s261 + $0x1a0] sm:$0xff]
      %v2613 = vld [vmem:[%s261 + $0x1a8] sm:$0xff]
      %v2614 = vld [vmem:[%s261 + $0x1b0] sm:$0xff]
      %v2615 = vld [vmem:[%s261 + $0x1b8] sm:$0xff]
      %v2616 = vld [vmem:[%s261 + $0x1c0] sm:$0xff]
      %v2617 = vld [vmem:[%s261 + $0x1c8] sm:$0xff]
      %v2618 = vld [vmem:[%s261 + $0x1d0] sm:$0xff]
      %v2619 = vld [vmem:[%s261 + $0x1d8] sm:$0xff]
      %v2620 = vld [vmem:[%s261 + $0x1e0] sm:$0xff]
      %v2621 = vld [vmem:[%s261 + $0x1e8] sm:$0xff]
      %v2622 = vld [vmem:[%s261 + $0x1f0] sm:$0xff]
      %v2623 = vld [vmem:[%s261 + $0x1f8] sm:$0xff]
      %v2624 = vpack.c.bf16 %v2561, %v2560
      %v2625 = vpack.c.bf16 %v2563, %v2562
      %v2626 = vpack.c.bf16 %v2565, %v2564
      %v2627 = vpack.c.bf16 %v2567, %v2566
      %v2628 = vpack.c.bf16 %v2569, %v2568
      %v2629 = vpack.c.bf16 %v2571, %v2570
      %v2630 = vpack.c.bf16 %v2573, %v2572
      %v2631 = vpack.c.bf16 %v2575, %v2574
      %v2632 = vpack.c.bf16 %v2577, %v2576
      %v2633 = vpack.c.bf16 %v2579, %v2578
      %v2634 = vpack.c.bf16 %v2581, %v2580
      %v2635 = vpack.c.bf16 %v2583, %v2582
      %v2636 = vpack.c.bf16 %v2585, %v2584
      %v2637 = vpack.c.bf16 %v2587, %v2586
      %v2638 = vpack.c.bf16 %v2589, %v2588
      %v2639 = vpack.c.bf16 %v2591, %v2590
      %v2640 = vpack.c.bf16 %v2593, %v2592
      %v2641 = vpack.c.bf16 %v2595, %v2594
      %v2642 = vpack.c.bf16 %v2597, %v2596
      %v2643 = vpack.c.bf16 %v2599, %v2598
      %v2644 = vpack.c.bf16 %v2601, %v2600
      %v2645 = vpack.c.bf16 %v2603, %v2602
      %v2646 = vpack.c.bf16 %v2605, %v2604
      %v2647 = vpack.c.bf16 %v2607, %v2606
      %v2648 = vpack.c.bf16 %v2609, %v2608
      %v2649 = vpack.c.bf16 %v2611, %v2610
      %v2650 = vpack.c.bf16 %v2613, %v2612
      %v2651 = vpack.c.bf16 %v2615, %v2614
      %v2652 = vpack.c.bf16 %v2617, %v2616
      %v2653 = vpack.c.bf16 %v2619, %v2618
      %v2654 = vpack.c.bf16 %v2621, %v2620
      %v2655 = vpack.c.bf16 %v2623, %v2622
      %s2656 = scalar_lea.vmem %s1, 320
      %v2657 = vld [vmem:[%s2656] sm:$0xf]
      %v2658 = vld [vmem:[%s2656 + $0x4] sm:$0xf]
      %v2659 = vld [vmem:[%s2656 + $0x8] sm:$0xf]
      %v2660 = vld [vmem:[%s2656 + $0xc] sm:$0xf]
      %v2661 = vld [vmem:[%s2656 + $0x10] sm:$0xf]
      %v2662 = vld [vmem:[%s2656 + $0x14] sm:$0xf]
      %v2663 = vld [vmem:[%s2656 + $0x18] sm:$0xf]
      %v2664 = vld [vmem:[%s2656 + $0x1c] sm:$0xf]
      %v2665 = vld [vmem:[%s2656 + $0x20] sm:$0xf]
      %v2666 = vld [vmem:[%s2656 + $0x24] sm:$0xf]
      %v2667 = vld [vmem:[%s2656 + $0x28] sm:$0xf]
      %v2668 = vld [vmem:[%s2656 + $0x2c] sm:$0xf]
      %v2669 = vld [vmem:[%s2656 + $0x30] sm:$0xf]
      %v2670 = vld [vmem:[%s2656 + $0x34] sm:$0xf]
      %v2671 = vld [vmem:[%s2656 + $0x38] sm:$0xf]
      %v2672 = vld [vmem:[%s2656 + $0x3c] sm:$0xf]
      %v2689 = vunpack.c.l.b16 %v2657
      %v2690 = vunpack.c.l.b16 %v2658
      %v2691 = vunpack.c.l.b16 %v2659
      %v2692 = vunpack.c.l.b16 %v2660
      %v2693 = vunpack.c.l.b16 %v2661
      %v2694 = vunpack.c.l.b16 %v2662
      %v2695 = vunpack.c.l.b16 %v2663
      %v2696 = vunpack.c.l.b16 %v2664
      %v2697 = vunpack.c.l.b16 %v2665
      %v2698 = vunpack.c.l.b16 %v2666
      %v2699 = vunpack.c.l.b16 %v2667
      %v2700 = vunpack.c.l.b16 %v2668
      %v2701 = vunpack.c.l.b16 %v2669
      %v2702 = vunpack.c.l.b16 %v2670
      %v2703 = vunpack.c.l.b16 %v2671
      %v2704 = vunpack.c.l.b16 %v2672
      %v2705 = vpack.c.b16 %v2690, %v2689
      %v2706 = vpack.c.b16 %v2692, %v2691
      %v2707 = vpack.c.b16 %v2694, %v2693
      %v2708 = vpack.c.b16 %v2696, %v2695
      %v2709 = vpack.c.b16 %v2698, %v2697
      %v2710 = vpack.c.b16 %v2700, %v2699
      %v2711 = vpack.c.b16 %v2702, %v2701
      %v2712 = vpack.c.b16 %v2704, %v2703
      %2721 = vmatprep.subr.bf16.mxu0 0
      %2722 = vmatpush1.bf16.msra.mxu0 %v2712
      %2723 = vmatprep.subr.bf16.mxu0 0
      %2724 = vmatpush1.bf16.msra.mxu0 %v2711
      %2725 = vmatprep.subr.bf16.mxu0 0
      %2726 = vmatpush1.bf16.msra.mxu0 %v2710
      %2727 = vmatprep.subr.bf16.mxu0 0
      %2728 = vmatpush1.bf16.msra.mxu0 %v2709
      %2729 = vmatprep.subr.bf16.mxu0 0
      %2730 = vmatpush1.bf16.msra.mxu0 %v2708
      %2731 = vmatprep.subr.bf16.mxu0 0
      %2732 = vmatpush1.bf16.msra.mxu0 %v2707
      %2733 = vmatprep.subr.bf16.mxu0 0
      %2734 = vmatpush1.bf16.msra.mxu0 %v2706
      %2735 = vmatprep.subr.bf16.mxu0 0
      %2736 = vmatpush1.bf16.msra.mxu0 %v2705
      %2737 = vmatprep.subr.bf16.mxu0 0
      %2738 = vmatpush2.bf16.msra.mxu0 0
      %2739 = vmatprep.subr.bf16.mxu0 0
      %2740 = vmatpush2.bf16.msra.mxu0 0
      %2741 = vmatprep.subr.bf16.mxu0 0
      %2742 = vmatpush2.bf16.msra.mxu0 0
      %2743 = vmatprep.subr.bf16.mxu0 0
      %2744 = vmatpush2.bf16.msra.mxu0 0
      %2745 = vmatprep.subr.bf16.mxu0 0
      %2746 = vmatpush2.bf16.msra.mxu0 0
      %2747 = vmatprep.subr.bf16.mxu0 0
      %2748 = vmatpush2.bf16.msra.mxu0 0
      %2749 = vmatprep.subr.bf16.mxu0 0
      %2750 = vmatpush2.bf16.msra.mxu0 0
      %2751 = vmatprep.subr.bf16.mxu0 0
      %2752 = vmatpush2.bf16.msra.mxu0 0
      %2753 = vmatprep.mubr.bf16.mxu0 0
      %2754 = vmatmul.mubr.bf16.gmra.mxu0 %v2624
      %v2755 = vpop.f32.mrf.mxu0
      %v2756 = vadd.f32 0.0, %v2755
      %v2757 = vpop.f32.mrf.mxu0
      %v2758 = vpop.f32.mrf.mxu0
      %v2759 = vadd.f32 0.0, %v2758
      %v2760 = vpop.f32.mrf.mxu0
      %2761 = vmatprep.mubr.bf16.mxu0 0
      %2762 = vmatmul.mubr.bf16.gmra.mxu0 %v2625
      %v2763 = vpop.f32.mrf.mxu0
      %v2764 = vpop.f32.mrf.mxu0
      %v2765 = vpop.f32.mrf.mxu0
      %v2766 = vpop.f32.mrf.mxu0
      %2767 = vmatprep.mubr.bf16.mxu0 0
      %2768 = vmatmul.mubr.bf16.gmra.mxu0 %v2626
      %v2769 = vpop.f32.mrf.mxu0
      %v2770 = vadd.f32 0.0, %v2769
      %v2771 = vpop.f32.mrf.mxu0
      %v2772 = vpop.f32.mrf.mxu0
      %v2773 = vadd.f32 0.0, %v2772
      %v2774 = vpop.f32.mrf.mxu0
      %2775 = vmatprep.mubr.bf16.mxu0 0
      %2776 = vmatmul.mubr.bf16.gmra.mxu0 %v2627
      %v2777 = vpop.f32.mrf.mxu0
      %v2778 = vpop.f32.mrf.mxu0
      %v2779 = vpop.f32.mrf.mxu0
      %v2780 = vpop.f32.mrf.mxu0
      %2781 = vmatprep.mubr.bf16.mxu0 0
      %2782 = vmatmul.mubr.bf16.gmra.mxu0 %v2628
      %v2783 = vpop.f32.mrf.mxu0
      %v2784 = vadd.f32 0.0, %v2783
      %v2785 = vpop.f32.mrf.mxu0
      %v2786 = vpop.f32.mrf.mxu0
      %v2787 = vadd.f32 0.0, %v2786
      %v2788 = vpop.f32.mrf.mxu0
      %2789 = vmatprep.mubr.bf16.mxu0 0
      %2790 = vmatmul.mubr.bf16.gmra.mxu0 %v2629
      %v2791 = vpop.f32.mrf.mxu0
      %v2792 = vpop.f32.mrf.mxu0
      %v2793 = vpop.f32.mrf.mxu0
      %v2794 = vpop.f32.mrf.mxu0
      %2795 = vmatprep.mubr.bf16.mxu0 0
      %2796 = vmatmul.mubr.bf16.gmra.mxu0 %v2630
      %v2797 = vpop.f32.mrf.mxu0
      %v2798 = vadd.f32 0.0, %v2797
      %v2799 = vpop.f32.mrf.mxu0
      %v2800 = vpop.f32.mrf.mxu0
      %v2801 = vadd.f32 0.0, %v2800
      %v2802 = vpop.f32.mrf.mxu0
      %2803 = vmatprep.mubr.bf16.mxu0 0
      %2804 = vmatmul.mubr.bf16.gmra.mxu0 %v2631
      %v2805 = vpop.f32.mrf.mxu0
      %v2806 = vpop.f32.mrf.mxu0
      %v2807 = vpop.f32.mrf.mxu0
      %v2808 = vpop.f32.mrf.mxu0
      %2809 = vmatprep.mubr.bf16.mxu0 0
      %2810 = vmatmul.mubr.bf16.gmra.mxu0 %v2632
      %v2811 = vpop.f32.mrf.mxu0
      %v2812 = vadd.f32 0.0, %v2811
      %v2813 = vpop.f32.mrf.mxu0
      %v2814 = vpop.f32.mrf.mxu0
      %v2815 = vadd.f32 0.0, %v2814
      %v2816 = vpop.f32.mrf.mxu0
      %2817 = vmatprep.mubr.bf16.mxu0 0
      %2818 = vmatmul.mubr.bf16.gmra.mxu0 %v2633
      %v2819 = vpop.f32.mrf.mxu0
      %v2820 = vpop.f32.mrf.mxu0
      %v2821 = vpop.f32.mrf.mxu0
      %v2822 = vpop.f32.mrf.mxu0
      %2823 = vmatprep.mubr.bf16.mxu0 0
      %2824 = vmatmul.mubr.bf16.gmra.mxu0 %v2634
      %v2825 = vpop.f32.mrf.mxu0
      %v2826 = vadd.f32 0.0, %v2825
      %v2827 = vpop.f32.mrf.mxu0
      %v2828 = vpop.f32.mrf.mxu0
      %v2829 = vadd.f32 0.0, %v2828
      %v2830 = vpop.f32.mrf.mxu0
      %2831 = vmatprep.mubr.bf16.mxu0 0
      %2832 = vmatmul.mubr.bf16.gmra.mxu0 %v2635
      %v2833 = vpop.f32.mrf.mxu0
      %v2834 = vpop.f32.mrf.mxu0
      %v2835 = vpop.f32.mrf.mxu0
      %v2836 = vpop.f32.mrf.mxu0
      %2837 = vmatprep.mubr.bf16.mxu0 0
      %2838 = vmatmul.mubr.bf16.gmra.mxu0 %v2636
      %v2839 = vpop.f32.mrf.mxu0
      %v2840 = vadd.f32 0.0, %v2839
      %v2841 = vpop.f32.mrf.mxu0
      %v2842 = vpop.f32.mrf.mxu0
      %v2843 = vadd.f32 0.0, %v2842
      %v2844 = vpop.f32.mrf.mxu0
      %2845 = vmatprep.mubr.bf16.mxu0 0
      %2846 = vmatmul.mubr.bf16.gmra.mxu0 %v2637
      %v2847 = vpop.f32.mrf.mxu0
      %v2848 = vpop.f32.mrf.mxu0
      %v2849 = vpop.f32.mrf.mxu0
      %v2850 = vpop.f32.mrf.mxu0
      %2851 = vmatprep.mubr.bf16.mxu0 0
      %2852 = vmatmul.mubr.bf16.gmra.mxu0 %v2638
      %v2853 = vpop.f32.mrf.mxu0
      %v2854 = vadd.f32 0.0, %v2853
      %v2855 = vpop.f32.mrf.mxu0
      %v2856 = vpop.f32.mrf.mxu0
      %v2857 = vadd.f32 0.0, %v2856
      %v2858 = vpop.f32.mrf.mxu0
      %2859 = vmatprep.mubr.bf16.mxu0 0
      %2860 = vmatmul.mubr.bf16.gmra.mxu0 %v2639
      %v2861 = vpop.f32.mrf.mxu0
      %v2862 = vpop.f32.mrf.mxu0
      %v2863 = vpop.f32.mrf.mxu0
      %v2864 = vpop.f32.mrf.mxu0
      %2865 = vmatprep.mubr.bf16.mxu0 0
      %2866 = vmatmul.mubr.bf16.gmra.mxu0 %v2640
      %v2867 = vpop.f32.mrf.mxu0
      %v2868 = vadd.f32 0.0, %v2867
      %v2869 = vpop.f32.mrf.mxu0
      %v2870 = vpop.f32.mrf.mxu0
      %v2871 = vadd.f32 0.0, %v2870
      %v2872 = vpop.f32.mrf.mxu0
      %2873 = vmatprep.mubr.bf16.mxu0 0
      %2874 = vmatmul.mubr.bf16.gmra.mxu0 %v2641
      %v2875 = vpop.f32.mrf.mxu0
      %v2876 = vpop.f32.mrf.mxu0
      %v2877 = vpop.f32.mrf.mxu0
      %v2878 = vpop.f32.mrf.mxu0
      %2879 = vmatprep.mubr.bf16.mxu0 0
      %2880 = vmatmul.mubr.bf16.gmra.mxu0 %v2642
      %v2881 = vpop.f32.mrf.mxu0
      %v2882 = vadd.f32 0.0, %v2881
      %v2883 = vpop.f32.mrf.mxu0
      %v2884 = vpop.f32.mrf.mxu0
      %v2885 = vadd.f32 0.0, %v2884
      %v2886 = vpop.f32.mrf.mxu0
      %2887 = vmatprep.mubr.bf16.mxu0 0
      %2888 = vmatmul.mubr.bf16.gmra.mxu0 %v2643
      %v2889 = vpop.f32.mrf.mxu0
      %v2890 = vpop.f32.mrf.mxu0
      %v2891 = vpop.f32.mrf.mxu0
      %v2892 = vpop.f32.mrf.mxu0
      %2893 = vmatprep.mubr.bf16.mxu0 0
      %2894 = vmatmul.mubr.bf16.gmra.mxu0 %v2644
      %v2895 = vpop.f32.mrf.mxu0
      %v2896 = vadd.f32 0.0, %v2895
      %v2897 = vpop.f32.mrf.mxu0
      %v2898 = vpop.f32.mrf.mxu0
      %v2899 = vadd.f32 0.0, %v2898
      %v2900 = vpop.f32.mrf.mxu0
      %2901 = vmatprep.mubr.bf16.mxu0 0
      %2902 = vmatmul.mubr.bf16.gmra.mxu0 %v2645
      %v2903 = vpop.f32.mrf.mxu0
      %v2904 = vpop.f32.mrf.mxu0
      %v2905 = vpop.f32.mrf.mxu0
      %v2906 = vpop.f32.mrf.mxu0
      %2907 = vmatprep.mubr.bf16.mxu0 0
      %2908 = vmatmul.mubr.bf16.gmra.mxu0 %v2646
      %v2909 = vpop.f32.mrf.mxu0
      %v2910 = vadd.f32 0.0, %v2909
      %v2911 = vpop.f32.mrf.mxu0
      %v2912 = vpop.f32.mrf.mxu0
      %v2913 = vadd.f32 0.0, %v2912
      %v2914 = vpop.f32.mrf.mxu0
      %2915 = vmatprep.mubr.bf16.mxu0 0
      %2916 = vmatmul.mubr.bf16.gmra.mxu0 %v2647
      %v2917 = vpop.f32.mrf.mxu0
      %v2918 = vpop.f32.mrf.mxu0
      %v2919 = vpop.f32.mrf.mxu0
      %v2920 = vpop.f32.mrf.mxu0
      %2921 = vmatprep.mubr.bf16.mxu0 0
      %2922 = vmatmul.mubr.bf16.gmra.mxu0 %v2648
      %v2923 = vpop.f32.mrf.mxu0
      %v2924 = vadd.f32 0.0, %v2923
      %v2925 = vpop.f32.mrf.mxu0
      %v2926 = vpop.f32.mrf.mxu0
      %v2927 = vadd.f32 0.0, %v2926
      %v2928 = vpop.f32.mrf.mxu0
      %2929 = vmatprep.mubr.bf16.mxu0 0
      %2930 = vmatmul.mubr.bf16.gmra.mxu0 %v2649
      %v2931 = vpop.f32.mrf.mxu0
      %v2932 = vpop.f32.mrf.mxu0
      %v2933 = vpop.f32.mrf.mxu0
      %v2934 = vpop.f32.mrf.mxu0
      %2935 = vmatprep.mubr.bf16.mxu0 0
      %2936 = vmatmul.mubr.bf16.gmra.mxu0 %v2650
      %v2937 = vpop.f32.mrf.mxu0
      %v2938 = vadd.f32 0.0, %v2937
      %v2939 = vpop.f32.mrf.mxu0
      %v2940 = vpop.f32.mrf.mxu0
      %v2941 = vadd.f32 0.0, %v2940
      %v2942 = vpop.f32.mrf.mxu0
      %2943 = vmatprep.mubr.bf16.mxu0 0
      %2944 = vmatmul.mubr.bf16.gmra.mxu0 %v2651
      %v2945 = vpop.f32.mrf.mxu0
      %v2946 = vpop.f32.mrf.mxu0
      %v2947 = vpop.f32.mrf.mxu0
      %v2948 = vpop.f32.mrf.mxu0
      %2949 = vmatprep.mubr.bf16.mxu0 0
      %2950 = vmatmul.mubr.bf16.gmra.mxu0 %v2652
      %v2951 = vpop.f32.mrf.mxu0
      %v2952 = vadd.f32 0.0, %v2951
      %v2953 = vpop.f32.mrf.mxu0
      %v2954 = vpop.f32.mrf.mxu0
      %v2955 = vadd.f32 0.0, %v2954
      %v2956 = vpop.f32.mrf.mxu0
      %2957 = vmatprep.mubr.bf16.mxu0 0
      %2958 = vmatmul.mubr.bf16.gmra.mxu0 %v2653
      %v2959 = vpop.f32.mrf.mxu0
      %v2960 = vpop.f32.mrf.mxu0
      %v2961 = vpop.f32.mrf.mxu0
      %v2962 = vpop.f32.mrf.mxu0
      %2963 = vmatprep.mubr.bf16.mxu0 0
      %2964 = vmatmul.mubr.bf16.gmra.mxu0 %v2654
      %v2965 = vpop.f32.mrf.mxu0
      %v2966 = vadd.f32 0.0, %v2965
      %v2967 = vpop.f32.mrf.mxu0
      %v2968 = vpop.f32.mrf.mxu0
      %v2969 = vadd.f32 0.0, %v2968
      %v2970 = vpop.f32.mrf.mxu0
      %2971 = vmatprep.mubr.bf16.mxu0 0
      %2972 = vmatmul.mubr.bf16.gmra.mxu0 %v2655
      %v2973 = vpop.f32.mrf.mxu0
      %v2974 = vpop.f32.mrf.mxu0
      %v2975 = vpop.f32.mrf.mxu0
      %v2976 = vpop.f32.mrf.mxu0
      %2977 = vdwg.mxu0
      %v2978 = vadd.f32 %v2528, %v2756
      %v2979 = vadd.f32 %v2529, %v2759
      %v2980 = vadd.f32 %v2530, %v2770
      %v2981 = vadd.f32 %v2531, %v2773
      %v2982 = vadd.f32 %v2532, %v2784
      %v2983 = vadd.f32 %v2533, %v2787
      %v2984 = vadd.f32 %v2534, %v2798
      %v2985 = vadd.f32 %v2535, %v2801
      %v2986 = vadd.f32 %v2536, %v2812
      %v2987 = vadd.f32 %v2537, %v2815
      %v2988 = vadd.f32 %v2538, %v2826
      %v2989 = vadd.f32 %v2539, %v2829
      %v2990 = vadd.f32 %v2540, %v2840
      %v2991 = vadd.f32 %v2541, %v2843
      %v2992 = vadd.f32 %v2542, %v2854
      %v2993 = vadd.f32 %v2543, %v2857
      %v2994 = vadd.f32 %v2544, %v2868
      %v2995 = vadd.f32 %v2545, %v2871
      %v2996 = vadd.f32 %v2546, %v2882
      %v2997 = vadd.f32 %v2547, %v2885
      %v2998 = vadd.f32 %v2548, %v2896
      %v2999 = vadd.f32 %v2549, %v2899
      %v3000 = vadd.f32 %v2550, %v2910
      %v3001 = vadd.f32 %v2551, %v2913
      %v3002 = vadd.f32 %v2552, %v2924
      %v3003 = vadd.f32 %v2553, %v2927
      %v3004 = vadd.f32 %v2554, %v2938
      %v3005 = vadd.f32 %v2555, %v2941
      %v3006 = vadd.f32 %v2556, %v2952
      %v3007 = vadd.f32 %v2557, %v2955
      %v3008 = vadd.f32 %v2558, %v2966
      %v3009 = vadd.f32 %v2559, %v2969
      %s3010 = scalar_lea.vmem [#allocation2], 64
      %v3011 = vld [vmem:[%s3010] sm:$0xff]
      %v3012 = vld [vmem:[%s3010 + $0x8] sm:$0xff]
      %v3013 = vld [vmem:[%s3010 + $0x10] sm:$0xff]
      %v3014 = vld [vmem:[%s3010 + $0x18] sm:$0xff]
      %v3015 = vld [vmem:[%s3010 + $0x20] sm:$0xff]
      %v3016 = vld [vmem:[%s3010 + $0x28] sm:$0xff]
      %v3017 = vld [vmem:[%s3010 + $0x30] sm:$0xff]
      %v3018 = vld [vmem:[%s3010 + $0x38] sm:$0xff]
      %v3019 = vld [vmem:[%s3010 + $0x40] sm:$0xff]
      %v3020 = vld [vmem:[%s3010 + $0x48] sm:$0xff]
      %v3021 = vld [vmem:[%s3010 + $0x50] sm:$0xff]
      %v3022 = vld [vmem:[%s3010 + $0x58] sm:$0xff]
      %v3023 = vld [vmem:[%s3010 + $0x60] sm:$0xff]
      %v3024 = vld [vmem:[%s3010 + $0x68] sm:$0xff]
      %v3025 = vld [vmem:[%s3010 + $0x70] sm:$0xff]
      %v3026 = vld [vmem:[%s3010 + $0x78] sm:$0xff]
      %v3027 = vld [vmem:[%s3010 + $0x80] sm:$0xff]
      %v3028 = vld [vmem:[%s3010 + $0x88] sm:$0xff]
      %v3029 = vld [vmem:[%s3010 + $0x90] sm:$0xff]
      %v3030 = vld [vmem:[%s3010 + $0x98] sm:$0xff]
      %v3031 = vld [vmem:[%s3010 + $0xa0] sm:$0xff]
      %v3032 = vld [vmem:[%s3010 + $0xa8] sm:$0xff]
      %v3033 = vld [vmem:[%s3010 + $0xb0] sm:$0xff]
      %v3034 = vld [vmem:[%s3010 + $0xb8] sm:$0xff]
      %v3035 = vld [vmem:[%s3010 + $0xc0] sm:$0xff]
      %v3036 = vld [vmem:[%s3010 + $0xc8] sm:$0xff]
      %v3037 = vld [vmem:[%s3010 + $0xd0] sm:$0xff]
      %v3038 = vld [vmem:[%s3010 + $0xd8] sm:$0xff]
      %v3039 = vld [vmem:[%s3010 + $0xe0] sm:$0xff]
      %v3040 = vld [vmem:[%s3010 + $0xe8] sm:$0xff]
      %v3041 = vld [vmem:[%s3010 + $0xf0] sm:$0xff]
      %v3042 = vld [vmem:[%s3010 + $0xf8] sm:$0xff]
      %v3043 = vld [vmem:[%s3010 + $0x100] sm:$0xff]
      %v3044 = vld [vmem:[%s3010 + $0x108] sm:$0xff]
      %v3045 = vld [vmem:[%s3010 + $0x110] sm:$0xff]
      %v3046 = vld [vmem:[%s3010 + $0x118] sm:$0xff]
      %v3047 = vld [vmem:[%s3010 + $0x120] sm:$0xff]
      %v3048 = vld [vmem:[%s3010 + $0x128] sm:$0xff]
      %v3049 = vld [vmem:[%s3010 + $0x130] sm:$0xff]
      %v3050 = vld [vmem:[%s3010 + $0x138] sm:$0xff]
      %v3051 = vld [vmem:[%s3010 + $0x140] sm:$0xff]
      %v3052 = vld [vmem:[%s3010 + $0x148] sm:$0xff]
      %v3053 = vld [vmem:[%s3010 + $0x150] sm:$0xff]
      %v3054 = vld [vmem:[%s3010 + $0x158] sm:$0xff]
      %v3055 = vld [vmem:[%s3010 + $0x160] sm:$0xff]
      %v3056 = vld [vmem:[%s3010 + $0x168] sm:$0xff]
      %v3057 = vld [vmem:[%s3010 + $0x170] sm:$0xff]
      %v3058 = vld [vmem:[%s3010 + $0x178] sm:$0xff]
      %v3059 = vld [vmem:[%s3010 + $0x180] sm:$0xff]
      %v3060 = vld [vmem:[%s3010 + $0x188] sm:$0xff]
      %v3061 = vld [vmem:[%s3010 + $0x190] sm:$0xff]
      %v3062 = vld [vmem:[%s3010 + $0x198] sm:$0xff]
      %v3063 = vld [vmem:[%s3010 + $0x1a0] sm:$0xff]
      %v3064 = vld [vmem:[%s3010 + $0x1a8] sm:$0xff]
      %v3065 = vld [vmem:[%s3010 + $0x1b0] sm:$0xff]
      %v3066 = vld [vmem:[%s3010 + $0x1b8] sm:$0xff]
      %v3067 = vld [vmem:[%s3010 + $0x1c0] sm:$0xff]
      %v3068 = vld [vmem:[%s3010 + $0x1c8] sm:$0xff]
      %v3069 = vld [vmem:[%s3010 + $0x1d0] sm:$0xff]
      %v3070 = vld [vmem:[%s3010 + $0x1d8] sm:$0xff]
      %v3071 = vld [vmem:[%s3010 + $0x1e0] sm:$0xff]
      %v3072 = vld [vmem:[%s3010 + $0x1e8] sm:$0xff]
      %v3073 = vld [vmem:[%s3010 + $0x1f0] sm:$0xff]
      %v3074 = vld [vmem:[%s3010 + $0x1f8] sm:$0xff]
      %v3075 = vpack.c.bf16 %v3012, %v3011
      %v3076 = vpack.c.bf16 %v3014, %v3013
      %v3077 = vpack.c.bf16 %v3016, %v3015
      %v3078 = vpack.c.bf16 %v3018, %v3017
      %v3079 = vpack.c.bf16 %v3020, %v3019
      %v3080 = vpack.c.bf16 %v3022, %v3021
      %v3081 = vpack.c.bf16 %v3024, %v3023
      %v3082 = vpack.c.bf16 %v3026, %v3025
      %v3083 = vpack.c.bf16 %v3028, %v3027
      %v3084 = vpack.c.bf16 %v3030, %v3029
      %v3085 = vpack.c.bf16 %v3032, %v3031
      %v3086 = vpack.c.bf16 %v3034, %v3033
      %v3087 = vpack.c.bf16 %v3036, %v3035
      %v3088 = vpack.c.bf16 %v3038, %v3037
      %v3089 = vpack.c.bf16 %v3040, %v3039
      %v3090 = vpack.c.bf16 %v3042, %v3041
      %v3091 = vpack.c.bf16 %v3044, %v3043
      %v3092 = vpack.c.bf16 %v3046, %v3045
      %v3093 = vpack.c.bf16 %v3048, %v3047
      %v3094 = vpack.c.bf16 %v3050, %v3049
      %v3095 = vpack.c.bf16 %v3052, %v3051
      %v3096 = vpack.c.bf16 %v3054, %v3053
      %v3097 = vpack.c.bf16 %v3056, %v3055
      %v3098 = vpack.c.bf16 %v3058, %v3057
      %v3099 = vpack.c.bf16 %v3060, %v3059
      %v3100 = vpack.c.bf16 %v3062, %v3061
      %v3101 = vpack.c.bf16 %v3064, %v3063
      %v3102 = vpack.c.bf16 %v3066, %v3065
      %v3103 = vpack.c.bf16 %v3068, %v3067
      %v3104 = vpack.c.bf16 %v3070, %v3069
      %v3105 = vpack.c.bf16 %v3072, %v3071
      %v3106 = vpack.c.bf16 %v3074, %v3073
      %s3107 = scalar_lea.vmem %s1, 384
      %v3108 = vld [vmem:[%s3107] sm:$0xf]
      %v3109 = vld [vmem:[%s3107 + $0x4] sm:$0xf]
      %v3110 = vld [vmem:[%s3107 + $0x8] sm:$0xf]
      %v3111 = vld [vmem:[%s3107 + $0xc] sm:$0xf]
      %v3112 = vld [vmem:[%s3107 + $0x10] sm:$0xf]
      %v3113 = vld [vmem:[%s3107 + $0x14] sm:$0xf]
      %v3114 = vld [vmem:[%s3107 + $0x18] sm:$0xf]
      %v3115 = vld [vmem:[%s3107 + $0x1c] sm:$0xf]
      %v3116 = vld [vmem:[%s3107 + $0x20] sm:$0xf]
      %v3117 = vld [vmem:[%s3107 + $0x24] sm:$0xf]
      %v3118 = vld [vmem:[%s3107 + $0x28] sm:$0xf]
      %v3119 = vld [vmem:[%s3107 + $0x2c] sm:$0xf]
      %v3120 = vld [vmem:[%s3107 + $0x30] sm:$0xf]
      %v3121 = vld [vmem:[%s3107 + $0x34] sm:$0xf]
      %v3122 = vld [vmem:[%s3107 + $0x38] sm:$0xf]
      %v3123 = vld [vmem:[%s3107 + $0x3c] sm:$0xf]
      %v3140 = vunpack.c.l.b16 %v3108
      %v3141 = vunpack.c.l.b16 %v3109
      %v3142 = vunpack.c.l.b16 %v3110
      %v3143 = vunpack.c.l.b16 %v3111
      %v3144 = vunpack.c.l.b16 %v3112
      %v3145 = vunpack.c.l.b16 %v3113
      %v3146 = vunpack.c.l.b16 %v3114
      %v3147 = vunpack.c.l.b16 %v3115
      %v3148 = vunpack.c.l.b16 %v3116
      %v3149 = vunpack.c.l.b16 %v3117
      %v3150 = vunpack.c.l.b16 %v3118
      %v3151 = vunpack.c.l.b16 %v3119
      %v3152 = vunpack.c.l.b16 %v3120
      %v3153 = vunpack.c.l.b16 %v3121
      %v3154 = vunpack.c.l.b16 %v3122
      %v3155 = vunpack.c.l.b16 %v3123
      %v3156 = vpack.c.b16 %v3141, %v3140
      %v3157 = vpack.c.b16 %v3143, %v3142
      %v3158 = vpack.c.b16 %v3145, %v3144
      %v3159 = vpack.c.b16 %v3147, %v3146
      %v3160 = vpack.c.b16 %v3149, %v3148
      %v3161 = vpack.c.b16 %v3151, %v3150
      %v3162 = vpack.c.b16 %v3153, %v3152
      %v3163 = vpack.c.b16 %v3155, %v3154
      %3172 = vmatprep.subr.bf16.mxu0 0
      %3173 = vmatpush1.bf16.msra.mxu0 %v3163
      %3174 = vmatprep.subr.bf16.mxu0 0
      %3175 = vmatpush1.bf16.msra.mxu0 %v3162
      %3176 = vmatprep.subr.bf16.mxu0 0
      %3177 = vmatpush1.bf16.msra.mxu0 %v3161
      %3178 = vmatprep.subr.bf16.mxu0 0
      %3179 = vmatpush1.bf16.msra.mxu0 %v3160
      %3180 = vmatprep.subr.bf16.mxu0 0
      %3181 = vmatpush1.bf16.msra.mxu0 %v3159
      %3182 = vmatprep.subr.bf16.mxu0 0
      %3183 = vmatpush1.bf16.msra.mxu0 %v3158
      %3184 = vmatprep.subr.bf16.mxu0 0
      %3185 = vmatpush1.bf16.msra.mxu0 %v3157
      %3186 = vmatprep.subr.bf16.mxu0 0
      %3187 = vmatpush1.bf16.msra.mxu0 %v3156
      %3188 = vmatprep.subr.bf16.mxu0 0
      %3189 = vmatpush2.bf16.msra.mxu0 0
      %3190 = vmatprep.subr.bf16.mxu0 0
      %3191 = vmatpush2.bf16.msra.mxu0 0
      %3192 = vmatprep.subr.bf16.mxu0 0
      %3193 = vmatpush2.bf16.msra.mxu0 0
      %3194 = vmatprep.subr.bf16.mxu0 0
      %3195 = vmatpush2.bf16.msra.mxu0 0
      %3196 = vmatprep.subr.bf16.mxu0 0
      %3197 = vmatpush2.bf16.msra.mxu0 0
      %3198 = vmatprep.subr.bf16.mxu0 0
      %3199 = vmatpush2.bf16.msra.mxu0 0
      %3200 = vmatprep.subr.bf16.mxu0 0
      %3201 = vmatpush2.bf16.msra.mxu0 0
      %3202 = vmatprep.subr.bf16.mxu0 0
      %3203 = vmatpush2.bf16.msra.mxu0 0
      %3204 = vmatprep.mubr.bf16.mxu0 0
      %3205 = vmatmul.mubr.bf16.gmra.mxu0 %v3075
      %v3206 = vpop.f32.mrf.mxu0
      %v3207 = vadd.f32 0.0, %v3206
      %v3208 = vpop.f32.mrf.mxu0
      %v3209 = vpop.f32.mrf.mxu0
      %v3210 = vadd.f32 0.0, %v3209
      %v3211 = vpop.f32.mrf.mxu0
      %3212 = vmatprep.mubr.bf16.mxu0 0
      %3213 = vmatmul.mubr.bf16.gmra.mxu0 %v3076
      %v3214 = vpop.f32.mrf.mxu0
      %v3215 = vpop.f32.mrf.mxu0
      %v3216 = vpop.f32.mrf.mxu0
      %v3217 = vpop.f32.mrf.mxu0
      %3218 = vmatprep.mubr.bf16.mxu0 0
      %3219 = vmatmul.mubr.bf16.gmra.mxu0 %v3077
      %v3220 = vpop.f32.mrf.mxu0
      %v3221 = vadd.f32 0.0, %v3220
      %v3222 = vpop.f32.mrf.mxu0
      %v3223 = vpop.f32.mrf.mxu0
      %v3224 = vadd.f32 0.0, %v3223
      %v3225 = vpop.f32.mrf.mxu0
      %3226 = vmatprep.mubr.bf16.mxu0 0
      %3227 = vmatmul.mubr.bf16.gmra.mxu0 %v3078
      %v3228 = vpop.f32.mrf.mxu0
      %v3229 = vpop.f32.mrf.mxu0
      %v3230 = vpop.f32.mrf.mxu0
      %v3231 = vpop.f32.mrf.mxu0
      %3232 = vmatprep.mubr.bf16.mxu0 0
      %3233 = vmatmul.mubr.bf16.gmra.mxu0 %v3079
      %v3234 = vpop.f32.mrf.mxu0
      %v3235 = vadd.f32 0.0, %v3234
      %v3236 = vpop.f32.mrf.mxu0
      %v3237 = vpop.f32.mrf.mxu0
      %v3238 = vadd.f32 0.0, %v3237
      %v3239 = vpop.f32.mrf.mxu0
      %3240 = vmatprep.mubr.bf16.mxu0 0
      %3241 = vmatmul.mubr.bf16.gmra.mxu0 %v3080
      %v3242 = vpop.f32.mrf.mxu0
      %v3243 = vpop.f32.mrf.mxu0
      %v3244 = vpop.f32.mrf.mxu0
      %v3245 = vpop.f32.mrf.mxu0
      %3246 = vmatprep.mubr.bf16.mxu0 0
      %3247 = vmatmul.mubr.bf16.gmra.mxu0 %v3081
      %v3248 = vpop.f32.mrf.mxu0
      %v3249 = vadd.f32 0.0, %v3248
      %v3250 = vpop.f32.mrf.mxu0
      %v3251 = vpop.f32.mrf.mxu0
      %v3252 = vadd.f32 0.0, %v3251
      %v3253 = vpop.f32.mrf.mxu0
      %3254 = vmatprep.mubr.bf16.mxu0 0
      %3255 = vmatmul.mubr.bf16.gmra.mxu0 %v3082
      %v3256 = vpop.f32.mrf.mxu0
      %v3257 = vpop.f32.mrf.mxu0
      %v3258 = vpop.f32.mrf.mxu0
      %v3259 = vpop.f32.mrf.mxu0
      %3260 = vmatprep.mubr.bf16.mxu0 0
      %3261 = vmatmul.mubr.bf16.gmra.mxu0 %v3083
      %v3262 = vpop.f32.mrf.mxu0
      %v3263 = vadd.f32 0.0, %v3262
      %v3264 = vpop.f32.mrf.mxu0
      %v3265 = vpop.f32.mrf.mxu0
      %v3266 = vadd.f32 0.0, %v3265
      %v3267 = vpop.f32.mrf.mxu0
      %3268 = vmatprep.mubr.bf16.mxu0 0
      %3269 = vmatmul.mubr.bf16.gmra.mxu0 %v3084
      %v3270 = vpop.f32.mrf.mxu0
      %v3271 = vpop.f32.mrf.mxu0
      %v3272 = vpop.f32.mrf.mxu0
      %v3273 = vpop.f32.mrf.mxu0
      %3274 = vmatprep.mubr.bf16.mxu0 0
      %3275 = vmatmul.mubr.bf16.gmra.mxu0 %v3085
      %v3276 = vpop.f32.mrf.mxu0
      %v3277 = vadd.f32 0.0, %v3276
      %v3278 = vpop.f32.mrf.mxu0
      %v3279 = vpop.f32.mrf.mxu0
      %v3280 = vadd.f32 0.0, %v3279
      %v3281 = vpop.f32.mrf.mxu0
      %3282 = vmatprep.mubr.bf16.mxu0 0
      %3283 = vmatmul.mubr.bf16.gmra.mxu0 %v3086
      %v3284 = vpop.f32.mrf.mxu0
      %v3285 = vpop.f32.mrf.mxu0
      %v3286 = vpop.f32.mrf.mxu0
      %v3287 = vpop.f32.mrf.mxu0
      %3288 = vmatprep.mubr.bf16.mxu0 0
      %3289 = vmatmul.mubr.bf16.gmra.mxu0 %v3087
      %v3290 = vpop.f32.mrf.mxu0
      %v3291 = vadd.f32 0.0, %v3290
      %v3292 = vpop.f32.mrf.mxu0
      %v3293 = vpop.f32.mrf.mxu0
      %v3294 = vadd.f32 0.0, %v3293
      %v3295 = vpop.f32.mrf.mxu0
      %3296 = vmatprep.mubr.bf16.mxu0 0
      %3297 = vmatmul.mubr.bf16.gmra.mxu0 %v3088
      %v3298 = vpop.f32.mrf.mxu0
      %v3299 = vpop.f32.mrf.mxu0
      %v3300 = vpop.f32.mrf.mxu0
      %v3301 = vpop.f32.mrf.mxu0
      %3302 = vmatprep.mubr.bf16.mxu0 0
      %3303 = vmatmul.mubr.bf16.gmra.mxu0 %v3089
      %v3304 = vpop.f32.mrf.mxu0
      %v3305 = vadd.f32 0.0, %v3304
      %v3306 = vpop.f32.mrf.mxu0
      %v3307 = vpop.f32.mrf.mxu0
      %v3308 = vadd.f32 0.0, %v3307
      %v3309 = vpop.f32.mrf.mxu0
      %3310 = vmatprep.mubr.bf16.mxu0 0
      %3311 = vmatmul.mubr.bf16.gmra.mxu0 %v3090
      %v3312 = vpop.f32.mrf.mxu0
      %v3313 = vpop.f32.mrf.mxu0
      %v3314 = vpop.f32.mrf.mxu0
      %v3315 = vpop.f32.mrf.mxu0
      %3316 = vmatprep.mubr.bf16.mxu0 0
      %3317 = vmatmul.mubr.bf16.gmra.mxu0 %v3091
      %v3318 = vpop.f32.mrf.mxu0
      %v3319 = vadd.f32 0.0, %v3318
      %v3320 = vpop.f32.mrf.mxu0
      %v3321 = vpop.f32.mrf.mxu0
      %v3322 = vadd.f32 0.0, %v3321
      %v3323 = vpop.f32.mrf.mxu0
      %3324 = vmatprep.mubr.bf16.mxu0 0
      %3325 = vmatmul.mubr.bf16.gmra.mxu0 %v3092
      %v3326 = vpop.f32.mrf.mxu0
      %v3327 = vpop.f32.mrf.mxu0
      %v3328 = vpop.f32.mrf.mxu0
      %v3329 = vpop.f32.mrf.mxu0
      %3330 = vmatprep.mubr.bf16.mxu0 0
      %3331 = vmatmul.mubr.bf16.gmra.mxu0 %v3093
      %v3332 = vpop.f32.mrf.mxu0
      %v3333 = vadd.f32 0.0, %v3332
      %v3334 = vpop.f32.mrf.mxu0
      %v3335 = vpop.f32.mrf.mxu0
      %v3336 = vadd.f32 0.0, %v3335
      %v3337 = vpop.f32.mrf.mxu0
      %3338 = vmatprep.mubr.bf16.mxu0 0
      %3339 = vmatmul.mubr.bf16.gmra.mxu0 %v3094
      %v3340 = vpop.f32.mrf.mxu0
      %v3341 = vpop.f32.mrf.mxu0
      %v3342 = vpop.f32.mrf.mxu0
      %v3343 = vpop.f32.mrf.mxu0
      %3344 = vmatprep.mubr.bf16.mxu0 0
      %3345 = vmatmul.mubr.bf16.gmra.mxu0 %v3095
      %v3346 = vpop.f32.mrf.mxu0
      %v3347 = vadd.f32 0.0, %v3346
      %v3348 = vpop.f32.mrf.mxu0
      %v3349 = vpop.f32.mrf.mxu0
      %v3350 = vadd.f32 0.0, %v3349
      %v3351 = vpop.f32.mrf.mxu0
      %3352 = vmatprep.mubr.bf16.mxu0 0
      %3353 = vmatmul.mubr.bf16.gmra.mxu0 %v3096
      %v3354 = vpop.f32.mrf.mxu0
      %v3355 = vpop.f32.mrf.mxu0
      %v3356 = vpop.f32.mrf.mxu0
      %v3357 = vpop.f32.mrf.mxu0
      %3358 = vmatprep.mubr.bf16.mxu0 0
      %3359 = vmatmul.mubr.bf16.gmra.mxu0 %v3097
      %v3360 = vpop.f32.mrf.mxu0
      %v3361 = vadd.f32 0.0, %v3360
      %v3362 = vpop.f32.mrf.mxu0
      %v3363 = vpop.f32.mrf.mxu0
      %v3364 = vadd.f32 0.0, %v3363
      %v3365 = vpop.f32.mrf.mxu0
      %3366 = vmatprep.mubr.bf16.mxu0 0
      %3367 = vmatmul.mubr.bf16.gmra.mxu0 %v3098
      %v3368 = vpop.f32.mrf.mxu0
      %v3369 = vpop.f32.mrf.mxu0
      %v3370 = vpop.f32.mrf.mxu0
      %v3371 = vpop.f32.mrf.mxu0
      %3372 = vmatprep.mubr.bf16.mxu0 0
      %3373 = vmatmul.mubr.bf16.gmra.mxu0 %v3099
      %v3374 = vpop.f32.mrf.mxu0
      %v3375 = vadd.f32 0.0, %v3374
      %v3376 = vpop.f32.mrf.mxu0
      %v3377 = vpop.f32.mrf.mxu0
      %v3378 = vadd.f32 0.0, %v3377
      %v3379 = vpop.f32.mrf.mxu0
      %3380 = vmatprep.mubr.bf16.mxu0 0
      %3381 = vmatmul.mubr.bf16.gmra.mxu0 %v3100
      %v3382 = vpop.f32.mrf.mxu0
      %v3383 = vpop.f32.mrf.mxu0
      %v3384 = vpop.f32.mrf.mxu0
      %v3385 = vpop.f32.mrf.mxu0
      %3386 = vmatprep.mubr.bf16.mxu0 0
      %3387 = vmatmul.mubr.bf16.gmra.mxu0 %v3101
      %v3388 = vpop.f32.mrf.mxu0
      %v3389 = vadd.f32 0.0, %v3388
      %v3390 = vpop.f32.mrf.mxu0
      %v3391 = vpop.f32.mrf.mxu0
      %v3392 = vadd.f32 0.0, %v3391
      %v3393 = vpop.f32.mrf.mxu0
      %3394 = vmatprep.mubr.bf16.mxu0 0
      %3395 = vmatmul.mubr.bf16.gmra.mxu0 %v3102
      %v3396 = vpop.f32.mrf.mxu0
      %v3397 = vpop.f32.mrf.mxu0
      %v3398 = vpop.f32.mrf.mxu0
      %v3399 = vpop.f32.mrf.mxu0
      %3400 = vmatprep.mubr.bf16.mxu0 0
      %3401 = vmatmul.mubr.bf16.gmra.mxu0 %v3103
      %v3402 = vpop.f32.mrf.mxu0
      %v3403 = vadd.f32 0.0, %v3402
      %v3404 = vpop.f32.mrf.mxu0
      %v3405 = vpop.f32.mrf.mxu0
      %v3406 = vadd.f32 0.0, %v3405
      %v3407 = vpop.f32.mrf.mxu0
      %3408 = vmatprep.mubr.bf16.mxu0 0
      %3409 = vmatmul.mubr.bf16.gmra.mxu0 %v3104
      %v3410 = vpop.f32.mrf.mxu0
      %v3411 = vpop.f32.mrf.mxu0
      %v3412 = vpop.f32.mrf.mxu0
      %v3413 = vpop.f32.mrf.mxu0
      %3414 = vmatprep.mubr.bf16.mxu0 0
      %3415 = vmatmul.mubr.bf16.gmra.mxu0 %v3105
      %v3416 = vpop.f32.mrf.mxu0
      %v3417 = vadd.f32 0.0, %v3416
      %v3418 = vpop.f32.mrf.mxu0
      %v3419 = vpop.f32.mrf.mxu0
      %v3420 = vadd.f32 0.0, %v3419
      %v3421 = vpop.f32.mrf.mxu0
      %3422 = vmatprep.mubr.bf16.mxu0 0
      %3423 = vmatmul.mubr.bf16.gmra.mxu0 %v3106
      %v3424 = vpop.f32.mrf.mxu0
      %v3425 = vpop.f32.mrf.mxu0
      %v3426 = vpop.f32.mrf.mxu0
      %v3427 = vpop.f32.mrf.mxu0
      %3428 = vdwg.mxu0
      %v3429 = vadd.f32 %v2978, %v3207
      %v3430 = vadd.f32 %v2979, %v3210
      %v3431 = vadd.f32 %v2980, %v3221
      %v3432 = vadd.f32 %v2981, %v3224
      %v3433 = vadd.f32 %v2982, %v3235
      %v3434 = vadd.f32 %v2983, %v3238
      %v3435 = vadd.f32 %v2984, %v3249
      %v3436 = vadd.f32 %v2985, %v3252
      %v3437 = vadd.f32 %v2986, %v3263
      %v3438 = vadd.f32 %v2987, %v3266
      %v3439 = vadd.f32 %v2988, %v3277
      %v3440 = vadd.f32 %v2989, %v3280
      %v3441 = vadd.f32 %v2990, %v3291
      %v3442 = vadd.f32 %v2991, %v3294
      %v3443 = vadd.f32 %v2992, %v3305
      %v3444 = vadd.f32 %v2993, %v3308
      %v3445 = vadd.f32 %v2994, %v3319
      %v3446 = vadd.f32 %v2995, %v3322
      %v3447 = vadd.f32 %v2996, %v3333
      %v3448 = vadd.f32 %v2997, %v3336
      %v3449 = vadd.f32 %v2998, %v3347
      %v3450 = vadd.f32 %v2999, %v3350
      %v3451 = vadd.f32 %v3000, %v3361
      %v3452 = vadd.f32 %v3001, %v3364
      %v3453 = vadd.f32 %v3002, %v3375
      %v3454 = vadd.f32 %v3003, %v3378
      %v3455 = vadd.f32 %v3004, %v3389
      %v3456 = vadd.f32 %v3005, %v3392
      %v3457 = vadd.f32 %v3006, %v3403
      %v3458 = vadd.f32 %v3007, %v3406
      %v3459 = vadd.f32 %v3008, %v3417
      %v3460 = vadd.f32 %v3009, %v3420
      %s3461 = scalar_lea.vmem [#allocation2], 640
      %v3462 = vld [vmem:[%s3461] sm:$0xff]
      %v3463 = vld [vmem:[%s3461 + $0x8] sm:$0xff]
      %v3464 = vld [vmem:[%s3461 + $0x10] sm:$0xff]
      %v3465 = vld [vmem:[%s3461 + $0x18] sm:$0xff]
      %v3466 = vld [vmem:[%s3461 + $0x20] sm:$0xff]
      %v3467 = vld [vmem:[%s3461 + $0x28] sm:$0xff]
      %v3468 = vld [vmem:[%s3461 + $0x30] sm:$0xff]
      %v3469 = vld [vmem:[%s3461 + $0x38] sm:$0xff]
      %v3470 = vld [vmem:[%s3461 + $0x40] sm:$0xff]
      %v3471 = vld [vmem:[%s3461 + $0x48] sm:$0xff]
      %v3472 = vld [vmem:[%s3461 + $0x50] sm:$0xff]
      %v3473 = vld [vmem:[%s3461 + $0x58] sm:$0xff]
      %v3474 = vld [vmem:[%s3461 + $0x60] sm:$0xff]
      %v3475 = vld [vmem:[%s3461 + $0x68] sm:$0xff]
      %v3476 = vld [vmem:[%s3461 + $0x70] sm:$0xff]
      %v3477 = vld [vmem:[%s3461 + $0x78] sm:$0xff]
      %v3478 = vld [vmem:[%s3461 + $0x80] sm:$0xff]
      %v3479 = vld [vmem:[%s3461 + $0x88] sm:$0xff]
      %v3480 = vld [vmem:[%s3461 + $0x90] sm:$0xff]
      %v3481 = vld [vmem:[%s3461 + $0x98] sm:$0xff]
      %v3482 = vld [vmem:[%s3461 + $0xa0] sm:$0xff]
      %v3483 = vld [vmem:[%s3461 + $0xa8] sm:$0xff]
      %v3484 = vld [vmem:[%s3461 + $0xb0] sm:$0xff]
      %v3485 = vld [vmem:[%s3461 + $0xb8] sm:$0xff]
      %v3486 = vld [vmem:[%s3461 + $0xc0] sm:$0xff]
      %v3487 = vld [vmem:[%s3461 + $0xc8] sm:$0xff]
      %v3488 = vld [vmem:[%s3461 + $0xd0] sm:$0xff]
      %v3489 = vld [vmem:[%s3461 + $0xd8] sm:$0xff]
      %v3490 = vld [vmem:[%s3461 + $0xe0] sm:$0xff]
      %v3491 = vld [vmem:[%s3461 + $0xe8] sm:$0xff]
      %v3492 = vld [vmem:[%s3461 + $0xf0] sm:$0xff]
      %v3493 = vld [vmem:[%s3461 + $0xf8] sm:$0xff]
      %v3494 = vld [vmem:[%s3461 + $0x100] sm:$0xff]
      %v3495 = vld [vmem:[%s3461 + $0x108] sm:$0xff]
      %v3496 = vld [vmem:[%s3461 + $0x110] sm:$0xff]
      %v3497 = vld [vmem:[%s3461 + $0x118] sm:$0xff]
      %v3498 = vld [vmem:[%s3461 + $0x120] sm:$0xff]
      %v3499 = vld [vmem:[%s3461 + $0x128] sm:$0xff]
      %v3500 = vld [vmem:[%s3461 + $0x130] sm:$0xff]
      %v3501 = vld [vmem:[%s3461 + $0x138] sm:$0xff]
      %v3502 = vld [vmem:[%s3461 + $0x140] sm:$0xff]
      %v3503 = vld [vmem:[%s3461 + $0x148] sm:$0xff]
      %v3504 = vld [vmem:[%s3461 + $0x150] sm:$0xff]
      %v3505 = vld [vmem:[%s3461 + $0x158] sm:$0xff]
      %v3506 = vld [vmem:[%s3461 + $0x160] sm:$0xff]
      %v3507 = vld [vmem:[%s3461 + $0x168] sm:$0xff]
      %v3508 = vld [vmem:[%s3461 + $0x170] sm:$0xff]
      %v3509 = vld [vmem:[%s3461 + $0x178] sm:$0xff]
      %v3510 = vld [vmem:[%s3461 + $0x180] sm:$0xff]
      %v3511 = vld [vmem:[%s3461 + $0x188] sm:$0xff]
      %v3512 = vld [vmem:[%s3461 + $0x190] sm:$0xff]
      %v3513 = vld [vmem:[%s3461 + $0x198] sm:$0xff]
      %v3514 = vld [vmem:[%s3461 + $0x1a0] sm:$0xff]
      %v3515 = vld [vmem:[%s3461 + $0x1a8] sm:$0xff]
      %v3516 = vld [vmem:[%s3461 + $0x1b0] sm:$0xff]
      %v3517 = vld [vmem:[%s3461 + $0x1b8] sm:$0xff]
      %v3518 = vld [vmem:[%s3461 + $0x1c0] sm:$0xff]
      %v3519 = vld [vmem:[%s3461 + $0x1c8] sm:$0xff]
      %v3520 = vld [vmem:[%s3461 + $0x1d0] sm:$0xff]
      %v3521 = vld [vmem:[%s3461 + $0x1d8] sm:$0xff]
      %v3522 = vld [vmem:[%s3461 + $0x1e0] sm:$0xff]
      %v3523 = vld [vmem:[%s3461 + $0x1e8] sm:$0xff]
      %v3524 = vld [vmem:[%s3461 + $0x1f0] sm:$0xff]
      %v3525 = vld [vmem:[%s3461 + $0x1f8] sm:$0xff]
      %v3526 = vpack.c.bf16 %v3463, %v3462
      %v3527 = vpack.c.bf16 %v3465, %v3464
      %v3528 = vpack.c.bf16 %v3467, %v3466
      %v3529 = vpack.c.bf16 %v3469, %v3468
      %v3530 = vpack.c.bf16 %v3471, %v3470
      %v3531 = vpack.c.bf16 %v3473, %v3472
      %v3532 = vpack.c.bf16 %v3475, %v3474
      %v3533 = vpack.c.bf16 %v3477, %v3476
      %v3534 = vpack.c.bf16 %v3479, %v3478
      %v3535 = vpack.c.bf16 %v3481, %v3480
      %v3536 = vpack.c.bf16 %v3483, %v3482
      %v3537 = vpack.c.bf16 %v3485, %v3484
      %v3538 = vpack.c.bf16 %v3487, %v3486
      %v3539 = vpack.c.bf16 %v3489, %v3488
      %v3540 = vpack.c.bf16 %v3491, %v3490
      %v3541 = vpack.c.bf16 %v3493, %v3492
      %v3542 = vpack.c.bf16 %v3495, %v3494
      %v3543 = vpack.c.bf16 %v3497, %v3496
      %v3544 = vpack.c.bf16 %v3499, %v3498
      %v3545 = vpack.c.bf16 %v3501, %v3500
      %v3546 = vpack.c.bf16 %v3503, %v3502
      %v3547 = vpack.c.bf16 %v3505, %v3504
      %v3548 = vpack.c.bf16 %v3507, %v3506
      %v3549 = vpack.c.bf16 %v3509, %v3508
      %v3550 = vpack.c.bf16 %v3511, %v3510
      %v3551 = vpack.c.bf16 %v3513, %v3512
      %v3552 = vpack.c.bf16 %v3515, %v3514
      %v3553 = vpack.c.bf16 %v3517, %v3516
      %v3554 = vpack.c.bf16 %v3519, %v3518
      %v3555 = vpack.c.bf16 %v3521, %v3520
      %v3556 = vpack.c.bf16 %v3523, %v3522
      %v3557 = vpack.c.bf16 %v3525, %v3524
      %s3558 = scalar_lea.vmem %s1, 448
      %v3559 = vld [vmem:[%s3558] sm:$0xf]
      %v3560 = vld [vmem:[%s3558 + $0x4] sm:$0xf]
      %v3561 = vld [vmem:[%s3558 + $0x8] sm:$0xf]
      %v3562 = vld [vmem:[%s3558 + $0xc] sm:$0xf]
      %v3563 = vld [vmem:[%s3558 + $0x10] sm:$0xf]
      %v3564 = vld [vmem:[%s3558 + $0x14] sm:$0xf]
      %v3565 = vld [vmem:[%s3558 + $0x18] sm:$0xf]
      %v3566 = vld [vmem:[%s3558 + $0x1c] sm:$0xf]
      %v3567 = vld [vmem:[%s3558 + $0x20] sm:$0xf]
      %v3568 = vld [vmem:[%s3558 + $0x24] sm:$0xf]
      %v3569 = vld [vmem:[%s3558 + $0x28] sm:$0xf]
      %v3570 = vld [vmem:[%s3558 + $0x2c] sm:$0xf]
      %v3571 = vld [vmem:[%s3558 + $0x30] sm:$0xf]
      %v3572 = vld [vmem:[%s3558 + $0x34] sm:$0xf]
      %v3573 = vld [vmem:[%s3558 + $0x38] sm:$0xf]
      %v3574 = vld [vmem:[%s3558 + $0x3c] sm:$0xf]
      %v3591 = vunpack.c.l.b16 %v3559
      %v3592 = vunpack.c.l.b16 %v3560
      %v3593 = vunpack.c.l.b16 %v3561
      %v3594 = vunpack.c.l.b16 %v3562
      %v3595 = vunpack.c.l.b16 %v3563
      %v3596 = vunpack.c.l.b16 %v3564
      %v3597 = vunpack.c.l.b16 %v3565
      %v3598 = vunpack.c.l.b16 %v3566
      %v3599 = vunpack.c.l.b16 %v3567
      %v3600 = vunpack.c.l.b16 %v3568
      %v3601 = vunpack.c.l.b16 %v3569
      %v3602 = vunpack.c.l.b16 %v3570
      %v3603 = vunpack.c.l.b16 %v3571
      %v3604 = vunpack.c.l.b16 %v3572
      %v3605 = vunpack.c.l.b16 %v3573
      %v3606 = vunpack.c.l.b16 %v3574
      %v3607 = vpack.c.b16 %v3592, %v3591
      %v3608 = vpack.c.b16 %v3594, %v3593
      %v3609 = vpack.c.b16 %v3596, %v3595
      %v3610 = vpack.c.b16 %v3598, %v3597
      %v3611 = vpack.c.b16 %v3600, %v3599
      %v3612 = vpack.c.b16 %v3602, %v3601
      %v3613 = vpack.c.b16 %v3604, %v3603
      %v3614 = vpack.c.b16 %v3606, %v3605
      %3623 = vmatprep.subr.bf16.mxu0 0
      %3624 = vmatpush1.bf16.msra.mxu0 %v3614
      %3625 = vmatprep.subr.bf16.mxu0 0
      %3626 = vmatpush1.bf16.msra.mxu0 %v3613
      %3627 = vmatprep.subr.bf16.mxu0 0
      %3628 = vmatpush1.bf16.msra.mxu0 %v3612
      %3629 = vmatprep.subr.bf16.mxu0 0
      %3630 = vmatpush1.bf16.msra.mxu0 %v3611
      %3631 = vmatprep.subr.bf16.mxu0 0
      %3632 = vmatpush1.bf16.msra.mxu0 %v3610
      %3633 = vmatprep.subr.bf16.mxu0 0
      %3634 = vmatpush1.bf16.msra.mxu0 %v3609
      %3635 = vmatprep.subr.bf16.mxu0 0
      %3636 = vmatpush1.bf16.msra.mxu0 %v3608
      %3637 = vmatprep.subr.bf16.mxu0 0
      %3638 = vmatpush1.bf16.msra.mxu0 %v3607
      %3639 = vmatprep.subr.bf16.mxu0 0
      %3640 = vmatpush2.bf16.msra.mxu0 0
      %3641 = vmatprep.subr.bf16.mxu0 0
      %3642 = vmatpush2.bf16.msra.mxu0 0
      %3643 = vmatprep.subr.bf16.mxu0 0
      %3644 = vmatpush2.bf16.msra.mxu0 0
      %3645 = vmatprep.subr.bf16.mxu0 0
      %3646 = vmatpush2.bf16.msra.mxu0 0
      %3647 = vmatprep.subr.bf16.mxu0 0
      %3648 = vmatpush2.bf16.msra.mxu0 0
      %3649 = vmatprep.subr.bf16.mxu0 0
      %3650 = vmatpush2.bf16.msra.mxu0 0
      %3651 = vmatprep.subr.bf16.mxu0 0
      %3652 = vmatpush2.bf16.msra.mxu0 0
      %3653 = vmatprep.subr.bf16.mxu0 0
      %3654 = vmatpush2.bf16.msra.mxu0 0
      %3655 = vmatprep.mubr.bf16.mxu0 0
      %3656 = vmatmul.mubr.bf16.gmra.mxu0 %v3526
      %v3657 = vpop.f32.mrf.mxu0
      %v3658 = vadd.f32 0.0, %v3657
      %v3659 = vpop.f32.mrf.mxu0
      %v3660 = vpop.f32.mrf.mxu0
      %v3661 = vadd.f32 0.0, %v3660
      %v3662 = vpop.f32.mrf.mxu0
      %3663 = vmatprep.mubr.bf16.mxu0 0
      %3664 = vmatmul.mubr.bf16.gmra.mxu0 %v3527
      %v3665 = vpop.f32.mrf.mxu0
      %v3666 = vpop.f32.mrf.mxu0
      %v3667 = vpop.f32.mrf.mxu0
      %v3668 = vpop.f32.mrf.mxu0
      %3669 = vmatprep.mubr.bf16.mxu0 0
      %3670 = vmatmul.mubr.bf16.gmra.mxu0 %v3528
      %v3671 = vpop.f32.mrf.mxu0
      %v3672 = vadd.f32 0.0, %v3671
      %v3673 = vpop.f32.mrf.mxu0
      %v3674 = vpop.f32.mrf.mxu0
      %v3675 = vadd.f32 0.0, %v3674
      %v3676 = vpop.f32.mrf.mxu0
      %3677 = vmatprep.mubr.bf16.mxu0 0
      %3678 = vmatmul.mubr.bf16.gmra.mxu0 %v3529
      %v3679 = vpop.f32.mrf.mxu0
      %v3680 = vpop.f32.mrf.mxu0
      %v3681 = vpop.f32.mrf.mxu0
      %v3682 = vpop.f32.mrf.mxu0
      %3683 = vmatprep.mubr.bf16.mxu0 0
      %3684 = vmatmul.mubr.bf16.gmra.mxu0 %v3530
      %v3685 = vpop.f32.mrf.mxu0
      %v3686 = vadd.f32 0.0, %v3685
      %v3687 = vpop.f32.mrf.mxu0
      %v3688 = vpop.f32.mrf.mxu0
      %v3689 = vadd.f32 0.0, %v3688
      %v3690 = vpop.f32.mrf.mxu0
      %3691 = vmatprep.mubr.bf16.mxu0 0
      %3692 = vmatmul.mubr.bf16.gmra.mxu0 %v3531
      %v3693 = vpop.f32.mrf.mxu0
      %v3694 = vpop.f32.mrf.mxu0
      %v3695 = vpop.f32.mrf.mxu0
      %v3696 = vpop.f32.mrf.mxu0
      %3697 = vmatprep.mubr.bf16.mxu0 0
      %3698 = vmatmul.mubr.bf16.gmra.mxu0 %v3532
      %v3699 = vpop.f32.mrf.mxu0
      %v3700 = vadd.f32 0.0, %v3699
      %v3701 = vpop.f32.mrf.mxu0
      %v3702 = vpop.f32.mrf.mxu0
      %v3703 = vadd.f32 0.0, %v3702
      %v3704 = vpop.f32.mrf.mxu0
      %3705 = vmatprep.mubr.bf16.mxu0 0
      %3706 = vmatmul.mubr.bf16.gmra.mxu0 %v3533
      %v3707 = vpop.f32.mrf.mxu0
      %v3708 = vpop.f32.mrf.mxu0
      %v3709 = vpop.f32.mrf.mxu0
      %v3710 = vpop.f32.mrf.mxu0
      %3711 = vmatprep.mubr.bf16.mxu0 0
      %3712 = vmatmul.mubr.bf16.gmra.mxu0 %v3534
      %v3713 = vpop.f32.mrf.mxu0
      %v3714 = vadd.f32 0.0, %v3713
      %v3715 = vpop.f32.mrf.mxu0
      %v3716 = vpop.f32.mrf.mxu0
      %v3717 = vadd.f32 0.0, %v3716
      %v3718 = vpop.f32.mrf.mxu0
      %3719 = vmatprep.mubr.bf16.mxu0 0
      %3720 = vmatmul.mubr.bf16.gmra.mxu0 %v3535
      %v3721 = vpop.f32.mrf.mxu0
      %v3722 = vpop.f32.mrf.mxu0
      %v3723 = vpop.f32.mrf.mxu0
      %v3724 = vpop.f32.mrf.mxu0
      %3725 = vmatprep.mubr.bf16.mxu0 0
      %3726 = vmatmul.mubr.bf16.gmra.mxu0 %v3536
      %v3727 = vpop.f32.mrf.mxu0
      %v3728 = vadd.f32 0.0, %v3727
      %v3729 = vpop.f32.mrf.mxu0
      %v3730 = vpop.f32.mrf.mxu0
      %v3731 = vadd.f32 0.0, %v3730
      %v3732 = vpop.f32.mrf.mxu0
      %3733 = vmatprep.mubr.bf16.mxu0 0
      %3734 = vmatmul.mubr.bf16.gmra.mxu0 %v3537
      %v3735 = vpop.f32.mrf.mxu0
      %v3736 = vpop.f32.mrf.mxu0
      %v3737 = vpop.f32.mrf.mxu0
      %v3738 = vpop.f32.mrf.mxu0
      %3739 = vmatprep.mubr.bf16.mxu0 0
      %3740 = vmatmul.mubr.bf16.gmra.mxu0 %v3538
      %v3741 = vpop.f32.mrf.mxu0
      %v3742 = vadd.f32 0.0, %v3741
      %v3743 = vpop.f32.mrf.mxu0
      %v3744 = vpop.f32.mrf.mxu0
      %v3745 = vadd.f32 0.0, %v3744
      %v3746 = vpop.f32.mrf.mxu0
      %3747 = vmatprep.mubr.bf16.mxu0 0
      %3748 = vmatmul.mubr.bf16.gmra.mxu0 %v3539
      %v3749 = vpop.f32.mrf.mxu0
      %v3750 = vpop.f32.mrf.mxu0
      %v3751 = vpop.f32.mrf.mxu0
      %v3752 = vpop.f32.mrf.mxu0
      %3753 = vmatprep.mubr.bf16.mxu0 0
      %3754 = vmatmul.mubr.bf16.gmra.mxu0 %v3540
      %v3755 = vpop.f32.mrf.mxu0
      %v3756 = vadd.f32 0.0, %v3755
      %v3757 = vpop.f32.mrf.mxu0
      %v3758 = vpop.f32.mrf.mxu0
      %v3759 = vadd.f32 0.0, %v3758
      %v3760 = vpop.f32.mrf.mxu0
      %3761 = vmatprep.mubr.bf16.mxu0 0
      %3762 = vmatmul.mubr.bf16.gmra.mxu0 %v3541
      %v3763 = vpop.f32.mrf.mxu0
      %v3764 = vpop.f32.mrf.mxu0
      %v3765 = vpop.f32.mrf.mxu0
      %v3766 = vpop.f32.mrf.mxu0
      %3767 = vmatprep.mubr.bf16.mxu0 0
      %3768 = vmatmul.mubr.bf16.gmra.mxu0 %v3542
      %v3769 = vpop.f32.mrf.mxu0
      %v3770 = vadd.f32 0.0, %v3769
      %v3771 = vpop.f32.mrf.mxu0
      %v3772 = vpop.f32.mrf.mxu0
      %v3773 = vadd.f32 0.0, %v3772
      %v3774 = vpop.f32.mrf.mxu0
      %3775 = vmatprep.mubr.bf16.mxu0 0
      %3776 = vmatmul.mubr.bf16.gmra.mxu0 %v3543
      %v3777 = vpop.f32.mrf.mxu0
      %v3778 = vpop.f32.mrf.mxu0
      %v3779 = vpop.f32.mrf.mxu0
      %v3780 = vpop.f32.mrf.mxu0
      %3781 = vmatprep.mubr.bf16.mxu0 0
      %3782 = vmatmul.mubr.bf16.gmra.mxu0 %v3544
      %v3783 = vpop.f32.mrf.mxu0
      %v3784 = vadd.f32 0.0, %v3783
      %v3785 = vpop.f32.mrf.mxu0
      %v3786 = vpop.f32.mrf.mxu0
      %v3787 = vadd.f32 0.0, %v3786
      %v3788 = vpop.f32.mrf.mxu0
      %3789 = vmatprep.mubr.bf16.mxu0 0
      %3790 = vmatmul.mubr.bf16.gmra.mxu0 %v3545
      %v3791 = vpop.f32.mrf.mxu0
      %v3792 = vpop.f32.mrf.mxu0
      %v3793 = vpop.f32.mrf.mxu0
      %v3794 = vpop.f32.mrf.mxu0
      %3795 = vmatprep.mubr.bf16.mxu0 0
      %3796 = vmatmul.mubr.bf16.gmra.mxu0 %v3546
      %v3797 = vpop.f32.mrf.mxu0
      %v3798 = vadd.f32 0.0, %v3797
      %v3799 = vpop.f32.mrf.mxu0
      %v3800 = vpop.f32.mrf.mxu0
      %v3801 = vadd.f32 0.0, %v3800
      %v3802 = vpop.f32.mrf.mxu0
      %3803 = vmatprep.mubr.bf16.mxu0 0
      %3804 = vmatmul.mubr.bf16.gmra.mxu0 %v3547
      %v3805 = vpop.f32.mrf.mxu0
      %v3806 = vpop.f32.mrf.mxu0
      %v3807 = vpop.f32.mrf.mxu0
      %v3808 = vpop.f32.mrf.mxu0
      %3809 = vmatprep.mubr.bf16.mxu0 0
      %3810 = vmatmul.mubr.bf16.gmra.mxu0 %v3548
      %v3811 = vpop.f32.mrf.mxu0
      %v3812 = vadd.f32 0.0, %v3811
      %v3813 = vpop.f32.mrf.mxu0
      %v3814 = vpop.f32.mrf.mxu0
      %v3815 = vadd.f32 0.0, %v3814
      %v3816 = vpop.f32.mrf.mxu0
      %3817 = vmatprep.mubr.bf16.mxu0 0
      %3818 = vmatmul.mubr.bf16.gmra.mxu0 %v3549
      %v3819 = vpop.f32.mrf.mxu0
      %v3820 = vpop.f32.mrf.mxu0
      %v3821 = vpop.f32.mrf.mxu0
      %v3822 = vpop.f32.mrf.mxu0
      %3823 = vmatprep.mubr.bf16.mxu0 0
      %3824 = vmatmul.mubr.bf16.gmra.mxu0 %v3550
      %v3825 = vpop.f32.mrf.mxu0
      %v3826 = vadd.f32 0.0, %v3825
      %v3827 = vpop.f32.mrf.mxu0
      %v3828 = vpop.f32.mrf.mxu0
      %v3829 = vadd.f32 0.0, %v3828
      %v3830 = vpop.f32.mrf.mxu0
      %3831 = vmatprep.mubr.bf16.mxu0 0
      %3832 = vmatmul.mubr.bf16.gmra.mxu0 %v3551
      %v3833 = vpop.f32.mrf.mxu0
      %v3834 = vpop.f32.mrf.mxu0
      %v3835 = vpop.f32.mrf.mxu0
      %v3836 = vpop.f32.mrf.mxu0
      %3837 = vmatprep.mubr.bf16.mxu0 0
      %3838 = vmatmul.mubr.bf16.gmra.mxu0 %v3552
      %v3839 = vpop.f32.mrf.mxu0
      %v3840 = vadd.f32 0.0, %v3839
      %v3841 = vpop.f32.mrf.mxu0
      %v3842 = vpop.f32.mrf.mxu0
      %v3843 = vadd.f32 0.0, %v3842
      %v3844 = vpop.f32.mrf.mxu0
      %3845 = vmatprep.mubr.bf16.mxu0 0
      %3846 = vmatmul.mubr.bf16.gmra.mxu0 %v3553
      %v3847 = vpop.f32.mrf.mxu0
      %v3848 = vpop.f32.mrf.mxu0
      %v3849 = vpop.f32.mrf.mxu0
      %v3850 = vpop.f32.mrf.mxu0
      %3851 = vmatprep.mubr.bf16.mxu0 0
      %3852 = vmatmul.mubr.bf16.gmra.mxu0 %v3554
      %v3853 = vpop.f32.mrf.mxu0
      %v3854 = vadd.f32 0.0, %v3853
      %v3855 = vpop.f32.mrf.mxu0
      %v3856 = vpop.f32.mrf.mxu0
      %v3857 = vadd.f32 0.0, %v3856
      %v3858 = vpop.f32.mrf.mxu0
      %3859 = vmatprep.mubr.bf16.mxu0 0
      %3860 = vmatmul.mubr.bf16.gmra.mxu0 %v3555
      %v3861 = vpop.f32.mrf.mxu0
      %v3862 = vpop.f32.mrf.mxu0
      %v3863 = vpop.f32.mrf.mxu0
      %v3864 = vpop.f32.mrf.mxu0
      %3865 = vmatprep.mubr.bf16.mxu0 0
      %3866 = vmatmul.mubr.bf16.gmra.mxu0 %v3556
      %v3867 = vpop.f32.mrf.mxu0
      %v3868 = vadd.f32 0.0, %v3867
      %v3869 = vpop.f32.mrf.mxu0
      %v3870 = vpop.f32.mrf.mxu0
      %v3871 = vadd.f32 0.0, %v3870
      %v3872 = vpop.f32.mrf.mxu0
      %3873 = vmatprep.mubr.bf16.mxu0 0
      %3874 = vmatmul.mubr.bf16.gmra.mxu0 %v3557
      %v3875 = vpop.f32.mrf.mxu0
      %v3876 = vpop.f32.mrf.mxu0
      %v3877 = vpop.f32.mrf.mxu0
      %v3878 = vpop.f32.mrf.mxu0
      %3879 = vdwg.mxu0
      %v3880 = vadd.f32 %v3429, %v3658
      %v3881 = vadd.f32 %v3430, %v3661
      %v3882 = vadd.f32 %v3431, %v3672
      %v3883 = vadd.f32 %v3432, %v3675
      %v3884 = vadd.f32 %v3433, %v3686
      %v3885 = vadd.f32 %v3434, %v3689
      %v3886 = vadd.f32 %v3435, %v3700
      %v3887 = vadd.f32 %v3436, %v3703
      %v3888 = vadd.f32 %v3437, %v3714
      %v3889 = vadd.f32 %v3438, %v3717
      %v3890 = vadd.f32 %v3439, %v3728
      %v3891 = vadd.f32 %v3440, %v3731
      %v3892 = vadd.f32 %v3441, %v3742
      %v3893 = vadd.f32 %v3442, %v3745
      %v3894 = vadd.f32 %v3443, %v3756
      %v3895 = vadd.f32 %v3444, %v3759
      %v3896 = vadd.f32 %v3445, %v3770
      %v3897 = vadd.f32 %v3446, %v3773
      %v3898 = vadd.f32 %v3447, %v3784
      %v3899 = vadd.f32 %v3448, %v3787
      %v3900 = vadd.f32 %v3449, %v3798
      %v3901 = vadd.f32 %v3450, %v3801
      %v3902 = vadd.f32 %v3451, %v3812
      %v3903 = vadd.f32 %v3452, %v3815
      %v3904 = vadd.f32 %v3453, %v3826
      %v3905 = vadd.f32 %v3454, %v3829
      %v3906 = vadd.f32 %v3455, %v3840
      %v3907 = vadd.f32 %v3456, %v3843
      %v3908 = vadd.f32 %v3457, %v3854
      %v3909 = vadd.f32 %v3458, %v3857
      %v3910 = vadd.f32 %v3459, %v3868
      %v3911 = vadd.f32 %v3460, %v3871
      %s3912 = scalar_lea.vmem [#allocation2], 1216
      %v3913 = vld [vmem:[%s3912] sm:$0xff]
      %v3914 = vld [vmem:[%s3912 + $0x8] sm:$0xff]
      %v3915 = vld [vmem:[%s3912 + $0x10] sm:$0xff]
      %v3916 = vld [vmem:[%s3912 + $0x18] sm:$0xff]
      %v3917 = vld [vmem:[%s3912 + $0x20] sm:$0xff]
      %v3918 = vld [vmem:[%s3912 + $0x28] sm:$0xff]
      %v3919 = vld [vmem:[%s3912 + $0x30] sm:$0xff]
      %v3920 = vld [vmem:[%s3912 + $0x38] sm:$0xff]
      %v3921 = vld [vmem:[%s3912 + $0x40] sm:$0xff]
      %v3922 = vld [vmem:[%s3912 + $0x48] sm:$0xff]
      %v3923 = vld [vmem:[%s3912 + $0x50] sm:$0xff]
      %v3924 = vld [vmem:[%s3912 + $0x58] sm:$0xff]
      %v3925 = vld [vmem:[%s3912 + $0x60] sm:$0xff]
      %v3926 = vld [vmem:[%s3912 + $0x68] sm:$0xff]
      %v3927 = vld [vmem:[%s3912 + $0x70] sm:$0xff]
      %v3928 = vld [vmem:[%s3912 + $0x78] sm:$0xff]
      %v3929 = vld [vmem:[%s3912 + $0x80] sm:$0xff]
      %v3930 = vld [vmem:[%s3912 + $0x88] sm:$0xff]
      %v3931 = vld [vmem:[%s3912 + $0x90] sm:$0xff]
      %v3932 = vld [vmem:[%s3912 + $0x98] sm:$0xff]
      %v3933 = vld [vmem:[%s3912 + $0xa0] sm:$0xff]
      %v3934 = vld [vmem:[%s3912 + $0xa8] sm:$0xff]
      %v3935 = vld [vmem:[%s3912 + $0xb0] sm:$0xff]
      %v3936 = vld [vmem:[%s3912 + $0xb8] sm:$0xff]
      %v3937 = vld [vmem:[%s3912 + $0xc0] sm:$0xff]
      %v3938 = vld [vmem:[%s3912 + $0xc8] sm:$0xff]
      %v3939 = vld [vmem:[%s3912 + $0xd0] sm:$0xff]
      %v3940 = vld [vmem:[%s3912 + $0xd8] sm:$0xff]
      %v3941 = vld [vmem:[%s3912 + $0xe0] sm:$0xff]
      %v3942 = vld [vmem:[%s3912 + $0xe8] sm:$0xff]
      %v3943 = vld [vmem:[%s3912 + $0xf0] sm:$0xff]
      %v3944 = vld [vmem:[%s3912 + $0xf8] sm:$0xff]
      %v3945 = vld [vmem:[%s3912 + $0x100] sm:$0xff]
      %v3946 = vld [vmem:[%s3912 + $0x108] sm:$0xff]
      %v3947 = vld [vmem:[%s3912 + $0x110] sm:$0xff]
      %v3948 = vld [vmem:[%s3912 + $0x118] sm:$0xff]
      %v3949 = vld [vmem:[%s3912 + $0x120] sm:$0xff]
      %v3950 = vld [vmem:[%s3912 + $0x128] sm:$0xff]
      %v3951 = vld [vmem:[%s3912 + $0x130] sm:$0xff]
      %v3952 = vld [vmem:[%s3912 + $0x138] sm:$0xff]
      %v3953 = vld [vmem:[%s3912 + $0x140] sm:$0xff]
      %v3954 = vld [vmem:[%s3912 + $0x148] sm:$0xff]
      %v3955 = vld [vmem:[%s3912 + $0x150] sm:$0xff]
      %v3956 = vld [vmem:[%s3912 + $0x158] sm:$0xff]
      %v3957 = vld [vmem:[%s3912 + $0x160] sm:$0xff]
      %v3958 = vld [vmem:[%s3912 + $0x168] sm:$0xff]
      %v3959 = vld [vmem:[%s3912 + $0x170] sm:$0xff]
      %v3960 = vld [vmem:[%s3912 + $0x178] sm:$0xff]
      %v3961 = vld [vmem:[%s3912 + $0x180] sm:$0xff]
      %v3962 = vld [vmem:[%s3912 + $0x188] sm:$0xff]
      %v3963 = vld [vmem:[%s3912 + $0x190] sm:$0xff]
      %v3964 = vld [vmem:[%s3912 + $0x198] sm:$0xff]
      %v3965 = vld [vmem:[%s3912 + $0x1a0] sm:$0xff]
      %v3966 = vld [vmem:[%s3912 + $0x1a8] sm:$0xff]
      %v3967 = vld [vmem:[%s3912 + $0x1b0] sm:$0xff]
      %v3968 = vld [vmem:[%s3912 + $0x1b8] sm:$0xff]
      %v3969 = vld [vmem:[%s3912 + $0x1c0] sm:$0xff]
      %v3970 = vld [vmem:[%s3912 + $0x1c8] sm:$0xff]
      %v3971 = vld [vmem:[%s3912 + $0x1d0] sm:$0xff]
      %v3972 = vld [vmem:[%s3912 + $0x1d8] sm:$0xff]
      %v3973 = vld [vmem:[%s3912 + $0x1e0] sm:$0xff]
      %v3974 = vld [vmem:[%s3912 + $0x1e8] sm:$0xff]
      %v3975 = vld [vmem:[%s3912 + $0x1f0] sm:$0xff]
      %v3976 = vld [vmem:[%s3912 + $0x1f8] sm:$0xff]
      %v3977 = vpack.c.bf16 %v3914, %v3913
      %v3978 = vpack.c.bf16 %v3916, %v3915
      %v3979 = vpack.c.bf16 %v3918, %v3917
      %v3980 = vpack.c.bf16 %v3920, %v3919
      %v3981 = vpack.c.bf16 %v3922, %v3921
      %v3982 = vpack.c.bf16 %v3924, %v3923
      %v3983 = vpack.c.bf16 %v3926, %v3925
      %v3984 = vpack.c.bf16 %v3928, %v3927
      %v3985 = vpack.c.bf16 %v3930, %v3929
      %v3986 = vpack.c.bf16 %v3932, %v3931
      %v3987 = vpack.c.bf16 %v3934, %v3933
      %v3988 = vpack.c.bf16 %v3936, %v3935
      %v3989 = vpack.c.bf16 %v3938, %v3937
      %v3990 = vpack.c.bf16 %v3940, %v3939
      %v3991 = vpack.c.bf16 %v3942, %v3941
      %v3992 = vpack.c.bf16 %v3944, %v3943
      %v3993 = vpack.c.bf16 %v3946, %v3945
      %v3994 = vpack.c.bf16 %v3948, %v3947
      %v3995 = vpack.c.bf16 %v3950, %v3949
      %v3996 = vpack.c.bf16 %v3952, %v3951
      %v3997 = vpack.c.bf16 %v3954, %v3953
      %v3998 = vpack.c.bf16 %v3956, %v3955
      %v3999 = vpack.c.bf16 %v3958, %v3957
      %v4000 = vpack.c.bf16 %v3960, %v3959
      %v4001 = vpack.c.bf16 %v3962, %v3961
      %v4002 = vpack.c.bf16 %v3964, %v3963
      %v4003 = vpack.c.bf16 %v3966, %v3965
      %v4004 = vpack.c.bf16 %v3968, %v3967
      %v4005 = vpack.c.bf16 %v3970, %v3969
      %v4006 = vpack.c.bf16 %v3972, %v3971
      %v4007 = vpack.c.bf16 %v3974, %v3973
      %v4008 = vpack.c.bf16 %v3976, %v3975
      %s4009 = scalar_lea.vmem %s1, 512
      %v4010 = vld [vmem:[%s4009] sm:$0xf]
      %v4011 = vld [vmem:[%s4009 + $0x4] sm:$0xf]
      %v4012 = vld [vmem:[%s4009 + $0x8] sm:$0xf]
      %v4013 = vld [vmem:[%s4009 + $0xc] sm:$0xf]
      %v4014 = vld [vmem:[%s4009 + $0x10] sm:$0xf]
      %v4015 = vld [vmem:[%s4009 + $0x14] sm:$0xf]
      %v4016 = vld [vmem:[%s4009 + $0x18] sm:$0xf]
      %v4017 = vld [vmem:[%s4009 + $0x1c] sm:$0xf]
      %v4018 = vld [vmem:[%s4009 + $0x20] sm:$0xf]
      %v4019 = vld [vmem:[%s4009 + $0x24] sm:$0xf]
      %v4020 = vld [vmem:[%s4009 + $0x28] sm:$0xf]
      %v4021 = vld [vmem:[%s4009 + $0x2c] sm:$0xf]
      %v4022 = vld [vmem:[%s4009 + $0x30] sm:$0xf]
      %v4023 = vld [vmem:[%s4009 + $0x34] sm:$0xf]
      %v4024 = vld [vmem:[%s4009 + $0x38] sm:$0xf]
      %v4025 = vld [vmem:[%s4009 + $0x3c] sm:$0xf]
      %v4042 = vunpack.c.l.b16 %v4010
      %v4043 = vunpack.c.l.b16 %v4011
      %v4044 = vunpack.c.l.b16 %v4012
      %v4045 = vunpack.c.l.b16 %v4013
      %v4046 = vunpack.c.l.b16 %v4014
      %v4047 = vunpack.c.l.b16 %v4015
      %v4048 = vunpack.c.l.b16 %v4016
      %v4049 = vunpack.c.l.b16 %v4017
      %v4050 = vunpack.c.l.b16 %v4018
      %v4051 = vunpack.c.l.b16 %v4019
      %v4052 = vunpack.c.l.b16 %v4020
      %v4053 = vunpack.c.l.b16 %v4021
      %v4054 = vunpack.c.l.b16 %v4022
      %v4055 = vunpack.c.l.b16 %v4023
      %v4056 = vunpack.c.l.b16 %v4024
      %v4057 = vunpack.c.l.b16 %v4025
      %v4058 = vpack.c.b16 %v4043, %v4042
      %v4059 = vpack.c.b16 %v4045, %v4044
      %v4060 = vpack.c.b16 %v4047, %v4046
      %v4061 = vpack.c.b16 %v4049, %v4048
      %v4062 = vpack.c.b16 %v4051, %v4050
      %v4063 = vpack.c.b16 %v4053, %v4052
      %v4064 = vpack.c.b16 %v4055, %v4054
      %v4065 = vpack.c.b16 %v4057, %v4056
      %4074 = vmatprep.subr.bf16.mxu0 0
      %4075 = vmatpush1.bf16.msra.mxu0 %v4065
      %4076 = vmatprep.subr.bf16.mxu0 0
      %4077 = vmatpush1.bf16.msra.mxu0 %v4064
      %4078 = vmatprep.subr.bf16.mxu0 0
      %4079 = vmatpush1.bf16.msra.mxu0 %v4063
      %4080 = vmatprep.subr.bf16.mxu0 0
      %4081 = vmatpush1.bf16.msra.mxu0 %v4062
      %4082 = vmatprep.subr.bf16.mxu0 0
      %4083 = vmatpush1.bf16.msra.mxu0 %v4061
      %4084 = vmatprep.subr.bf16.mxu0 0
      %4085 = vmatpush1.bf16.msra.mxu0 %v4060
      %4086 = vmatprep.subr.bf16.mxu0 0
      %4087 = vmatpush1.bf16.msra.mxu0 %v4059
      %4088 = vmatprep.subr.bf16.mxu0 0
      %4089 = vmatpush1.bf16.msra.mxu0 %v4058
      %4090 = vmatprep.subr.bf16.mxu0 0
      %4091 = vmatpush2.bf16.msra.mxu0 0
      %4092 = vmatprep.subr.bf16.mxu0 0
      %4093 = vmatpush2.bf16.msra.mxu0 0
      %4094 = vmatprep.subr.bf16.mxu0 0
      %4095 = vmatpush2.bf16.msra.mxu0 0
      %4096 = vmatprep.subr.bf16.mxu0 0
      %4097 = vmatpush2.bf16.msra.mxu0 0
      %4098 = vmatprep.subr.bf16.mxu0 0
      %4099 = vmatpush2.bf16.msra.mxu0 0
      %4100 = vmatprep.subr.bf16.mxu0 0
      %4101 = vmatpush2.bf16.msra.mxu0 0
      %4102 = vmatprep.subr.bf16.mxu0 0
      %4103 = vmatpush2.bf16.msra.mxu0 0
      %4104 = vmatprep.subr.bf16.mxu0 0
      %4105 = vmatpush2.bf16.msra.mxu0 0
      %4106 = vmatprep.mubr.bf16.mxu0 0
      %4107 = vmatmul.mubr.bf16.gmra.mxu0 %v3977
      %v4108 = vpop.f32.mrf.mxu0
      %v4109 = vadd.f32 0.0, %v4108
      %v4110 = vpop.f32.mrf.mxu0
      %v4111 = vpop.f32.mrf.mxu0
      %v4112 = vadd.f32 0.0, %v4111
      %v4113 = vpop.f32.mrf.mxu0
      %4114 = vmatprep.mubr.bf16.mxu0 0
      %4115 = vmatmul.mubr.bf16.gmra.mxu0 %v3978
      %v4116 = vpop.f32.mrf.mxu0
      %v4117 = vpop.f32.mrf.mxu0
      %v4118 = vpop.f32.mrf.mxu0
      %v4119 = vpop.f32.mrf.mxu0
      %4120 = vmatprep.mubr.bf16.mxu0 0
      %4121 = vmatmul.mubr.bf16.gmra.mxu0 %v3979
      %v4122 = vpop.f32.mrf.mxu0
      %v4123 = vadd.f32 0.0, %v4122
      %v4124 = vpop.f32.mrf.mxu0
      %v4125 = vpop.f32.mrf.mxu0
      %v4126 = vadd.f32 0.0, %v4125
      %v4127 = vpop.f32.mrf.mxu0
      %4128 = vmatprep.mubr.bf16.mxu0 0
      %4129 = vmatmul.mubr.bf16.gmra.mxu0 %v3980
      %v4130 = vpop.f32.mrf.mxu0
      %v4131 = vpop.f32.mrf.mxu0
      %v4132 = vpop.f32.mrf.mxu0
      %v4133 = vpop.f32.mrf.mxu0
      %4134 = vmatprep.mubr.bf16.mxu0 0
      %4135 = vmatmul.mubr.bf16.gmra.mxu0 %v3981
      %v4136 = vpop.f32.mrf.mxu0
      %v4137 = vadd.f32 0.0, %v4136
      %v4138 = vpop.f32.mrf.mxu0
      %v4139 = vpop.f32.mrf.mxu0
      %v4140 = vadd.f32 0.0, %v4139
      %v4141 = vpop.f32.mrf.mxu0
      %4142 = vmatprep.mubr.bf16.mxu0 0
      %4143 = vmatmul.mubr.bf16.gmra.mxu0 %v3982
      %v4144 = vpop.f32.mrf.mxu0
      %v4145 = vpop.f32.mrf.mxu0
      %v4146 = vpop.f32.mrf.mxu0
      %v4147 = vpop.f32.mrf.mxu0
      %4148 = vmatprep.mubr.bf16.mxu0 0
      %4149 = vmatmul.mubr.bf16.gmra.mxu0 %v3983
      %v4150 = vpop.f32.mrf.mxu0
      %v4151 = vadd.f32 0.0, %v4150
      %v4152 = vpop.f32.mrf.mxu0
      %v4153 = vpop.f32.mrf.mxu0
      %v4154 = vadd.f32 0.0, %v4153
      %v4155 = vpop.f32.mrf.mxu0
      %4156 = vmatprep.mubr.bf16.mxu0 0
      %4157 = vmatmul.mubr.bf16.gmra.mxu0 %v3984
      %v4158 = vpop.f32.mrf.mxu0
      %v4159 = vpop.f32.mrf.mxu0
      %v4160 = vpop.f32.mrf.mxu0
      %v4161 = vpop.f32.mrf.mxu0
      %4162 = vmatprep.mubr.bf16.mxu0 0
      %4163 = vmatmul.mubr.bf16.gmra.mxu0 %v3985
      %v4164 = vpop.f32.mrf.mxu0
      %v4165 = vadd.f32 0.0, %v4164
      %v4166 = vpop.f32.mrf.mxu0
      %v4167 = vpop.f32.mrf.mxu0
      %v4168 = vadd.f32 0.0, %v4167
      %v4169 = vpop.f32.mrf.mxu0
      %4170 = vmatprep.mubr.bf16.mxu0 0
      %4171 = vmatmul.mubr.bf16.gmra.mxu0 %v3986
      %v4172 = vpop.f32.mrf.mxu0
      %v4173 = vpop.f32.mrf.mxu0
      %v4174 = vpop.f32.mrf.mxu0
      %v4175 = vpop.f32.mrf.mxu0
      %4176 = vmatprep.mubr.bf16.mxu0 0
      %4177 = vmatmul.mubr.bf16.gmra.mxu0 %v3987
      %v4178 = vpop.f32.mrf.mxu0
      %v4179 = vadd.f32 0.0, %v4178
      %v4180 = vpop.f32.mrf.mxu0
      %v4181 = vpop.f32.mrf.mxu0
      %v4182 = vadd.f32 0.0, %v4181
      %v4183 = vpop.f32.mrf.mxu0
      %4184 = vmatprep.mubr.bf16.mxu0 0
      %4185 = vmatmul.mubr.bf16.gmra.mxu0 %v3988
      %v4186 = vpop.f32.mrf.mxu0
      %v4187 = vpop.f32.mrf.mxu0
      %v4188 = vpop.f32.mrf.mxu0
      %v4189 = vpop.f32.mrf.mxu0
      %4190 = vmatprep.mubr.bf16.mxu0 0
      %4191 = vmatmul.mubr.bf16.gmra.mxu0 %v3989
      %v4192 = vpop.f32.mrf.mxu0
      %v4193 = vadd.f32 0.0, %v4192
      %v4194 = vpop.f32.mrf.mxu0
      %v4195 = vpop.f32.mrf.mxu0
      %v4196 = vadd.f32 0.0, %v4195
      %v4197 = vpop.f32.mrf.mxu0
      %4198 = vmatprep.mubr.bf16.mxu0 0
      %4199 = vmatmul.mubr.bf16.gmra.mxu0 %v3990
      %v4200 = vpop.f32.mrf.mxu0
      %v4201 = vpop.f32.mrf.mxu0
      %v4202 = vpop.f32.mrf.mxu0
      %v4203 = vpop.f32.mrf.mxu0
      %4204 = vmatprep.mubr.bf16.mxu0 0
      %4205 = vmatmul.mubr.bf16.gmra.mxu0 %v3991
      %v4206 = vpop.f32.mrf.mxu0
      %v4207 = vadd.f32 0.0, %v4206
      %v4208 = vpop.f32.mrf.mxu0
      %v4209 = vpop.f32.mrf.mxu0
      %v4210 = vadd.f32 0.0, %v4209
      %v4211 = vpop.f32.mrf.mxu0
      %4212 = vmatprep.mubr.bf16.mxu0 0
      %4213 = vmatmul.mubr.bf16.gmra.mxu0 %v3992
      %v4214 = vpop.f32.mrf.mxu0
      %v4215 = vpop.f32.mrf.mxu0
      %v4216 = vpop.f32.mrf.mxu0
      %v4217 = vpop.f32.mrf.mxu0
      %4218 = vmatprep.mubr.bf16.mxu0 0
      %4219 = vmatmul.mubr.bf16.gmra.mxu0 %v3993
      %v4220 = vpop.f32.mrf.mxu0
      %v4221 = vadd.f32 0.0, %v4220
      %v4222 = vpop.f32.mrf.mxu0
      %v4223 = vpop.f32.mrf.mxu0
      %v4224 = vadd.f32 0.0, %v4223
      %v4225 = vpop.f32.mrf.mxu0
      %4226 = vmatprep.mubr.bf16.mxu0 0
      %4227 = vmatmul.mubr.bf16.gmra.mxu0 %v3994
      %v4228 = vpop.f32.mrf.mxu0
      %v4229 = vpop.f32.mrf.mxu0
      %v4230 = vpop.f32.mrf.mxu0
      %v4231 = vpop.f32.mrf.mxu0
      %4232 = vmatprep.mubr.bf16.mxu0 0
      %4233 = vmatmul.mubr.bf16.gmra.mxu0 %v3995
      %v4234 = vpop.f32.mrf.mxu0
      %v4235 = vadd.f32 0.0, %v4234
      %v4236 = vpop.f32.mrf.mxu0
      %v4237 = vpop.f32.mrf.mxu0
      %v4238 = vadd.f32 0.0, %v4237
      %v4239 = vpop.f32.mrf.mxu0
      %4240 = vmatprep.mubr.bf16.mxu0 0
      %4241 = vmatmul.mubr.bf16.gmra.mxu0 %v3996
      %v4242 = vpop.f32.mrf.mxu0
      %v4243 = vpop.f32.mrf.mxu0
      %v4244 = vpop.f32.mrf.mxu0
      %v4245 = vpop.f32.mrf.mxu0
      %4246 = vmatprep.mubr.bf16.mxu0 0
      %4247 = vmatmul.mubr.bf16.gmra.mxu0 %v3997
      %v4248 = vpop.f32.mrf.mxu0
      %v4249 = vadd.f32 0.0, %v4248
      %v4250 = vpop.f32.mrf.mxu0
      %v4251 = vpop.f32.mrf.mxu0
      %v4252 = vadd.f32 0.0, %v4251
      %v4253 = vpop.f32.mrf.mxu0
      %4254 = vmatprep.mubr.bf16.mxu0 0
      %4255 = vmatmul.mubr.bf16.gmra.mxu0 %v3998
      %v4256 = vpop.f32.mrf.mxu0
      %v4257 = vpop.f32.mrf.mxu0
      %v4258 = vpop.f32.mrf.mxu0
      %v4259 = vpop.f32.mrf.mxu0
      %4260 = vmatprep.mubr.bf16.mxu0 0
      %4261 = vmatmul.mubr.bf16.gmra.mxu0 %v3999
      %v4262 = vpop.f32.mrf.mxu0
      %v4263 = vadd.f32 0.0, %v4262
      %v4264 = vpop.f32.mrf.mxu0
      %v4265 = vpop.f32.mrf.mxu0
      %v4266 = vadd.f32 0.0, %v4265
      %v4267 = vpop.f32.mrf.mxu0
      %4268 = vmatprep.mubr.bf16.mxu0 0
      %4269 = vmatmul.mubr.bf16.gmra.mxu0 %v4000
      %v4270 = vpop.f32.mrf.mxu0
      %v4271 = vpop.f32.mrf.mxu0
      %v4272 = vpop.f32.mrf.mxu0
      %v4273 = vpop.f32.mrf.mxu0
      %4274 = vmatprep.mubr.bf16.mxu0 0
      %4275 = vmatmul.mubr.bf16.gmra.mxu0 %v4001
      %v4276 = vpop.f32.mrf.mxu0
      %v4277 = vadd.f32 0.0, %v4276
      %v4278 = vpop.f32.mrf.mxu0
      %v4279 = vpop.f32.mrf.mxu0
      %v4280 = vadd.f32 0.0, %v4279
      %v4281 = vpop.f32.mrf.mxu0
      %4282 = vmatprep.mubr.bf16.mxu0 0
      %4283 = vmatmul.mubr.bf16.gmra.mxu0 %v4002
      %v4284 = vpop.f32.mrf.mxu0
      %v4285 = vpop.f32.mrf.mxu0
      %v4286 = vpop.f32.mrf.mxu0
      %v4287 = vpop.f32.mrf.mxu0
      %4288 = vmatprep.mubr.bf16.mxu0 0
      %4289 = vmatmul.mubr.bf16.gmra.mxu0 %v4003
      %v4290 = vpop.f32.mrf.mxu0
      %v4291 = vadd.f32 0.0, %v4290
      %v4292 = vpop.f32.mrf.mxu0
      %v4293 = vpop.f32.mrf.mxu0
      %v4294 = vadd.f32 0.0, %v4293
      %v4295 = vpop.f32.mrf.mxu0
      %4296 = vmatprep.mubr.bf16.mxu0 0
      %4297 = vmatmul.mubr.bf16.gmra.mxu0 %v4004
      %v4298 = vpop.f32.mrf.mxu0
      %v4299 = vpop.f32.mrf.mxu0
      %v4300 = vpop.f32.mrf.mxu0
      %v4301 = vpop.f32.mrf.mxu0
      %4302 = vmatprep.mubr.bf16.mxu0 0
      %4303 = vmatmul.mubr.bf16.gmra.mxu0 %v4005
      %v4304 = vpop.f32.mrf.mxu0
      %v4305 = vadd.f32 0.0, %v4304
      %v4306 = vpop.f32.mrf.mxu0
      %v4307 = vpop.f32.mrf.mxu0
      %v4308 = vadd.f32 0.0, %v4307
      %v4309 = vpop.f32.mrf.mxu0
      %4310 = vmatprep.mubr.bf16.mxu0 0
      %4311 = vmatmul.mubr.bf16.gmra.mxu0 %v4006
      %v4312 = vpop.f32.mrf.mxu0
      %v4313 = vpop.f32.mrf.mxu0
      %v4314 = vpop.f32.mrf.mxu0
      %v4315 = vpop.f32.mrf.mxu0
      %4316 = vmatprep.mubr.bf16.mxu0 0
      %4317 = vmatmul.mubr.bf16.gmra.mxu0 %v4007
      %v4318 = vpop.f32.mrf.mxu0
      %v4319 = vadd.f32 0.0, %v4318
      %v4320 = vpop.f32.mrf.mxu0
      %v4321 = vpop.f32.mrf.mxu0
      %v4322 = vadd.f32 0.0, %v4321
      %v4323 = vpop.f32.mrf.mxu0
      %4324 = vmatprep.mubr.bf16.mxu0 0
      %4325 = vmatmul.mubr.bf16.gmra.mxu0 %v4008
      %v4326 = vpop.f32.mrf.mxu0
      %v4327 = vpop.f32.mrf.mxu0
      %v4328 = vpop.f32.mrf.mxu0
      %v4329 = vpop.f32.mrf.mxu0
      %4330 = vdwg.mxu0
      %v4331 = vadd.f32 %v3880, %v4109
      %v4332 = vadd.f32 %v3881, %v4112
      %v4333 = vadd.f32 %v3882, %v4123
      %v4334 = vadd.f32 %v3883, %v4126
      %v4335 = vadd.f32 %v3884, %v4137
      %v4336 = vadd.f32 %v3885, %v4140
      %v4337 = vadd.f32 %v3886, %v4151
      %v4338 = vadd.f32 %v3887, %v4154
      %v4339 = vadd.f32 %v3888, %v4165
      %v4340 = vadd.f32 %v3889, %v4168
      %v4341 = vadd.f32 %v3890, %v4179
      %v4342 = vadd.f32 %v3891, %v4182
      %v4343 = vadd.f32 %v3892, %v4193
      %v4344 = vadd.f32 %v3893, %v4196
      %v4345 = vadd.f32 %v3894, %v4207
      %v4346 = vadd.f32 %v3895, %v4210
      %v4347 = vadd.f32 %v3896, %v4221
      %v4348 = vadd.f32 %v3897, %v4224
      %v4349 = vadd.f32 %v3898, %v4235
      %v4350 = vadd.f32 %v3899, %v4238
      %v4351 = vadd.f32 %v3900, %v4249
      %v4352 = vadd.f32 %v3901, %v4252
      %v4353 = vadd.f32 %v3902, %v4263
      %v4354 = vadd.f32 %v3903, %v4266
      %v4355 = vadd.f32 %v3904, %v4277
      %v4356 = vadd.f32 %v3905, %v4280
      %v4357 = vadd.f32 %v3906, %v4291
      %v4358 = vadd.f32 %v3907, %v4294
      %v4359 = vadd.f32 %v3908, %v4305
      %v4360 = vadd.f32 %v3909, %v4308
      %v4361 = vadd.f32 %v3910, %v4319
      %v4362 = vadd.f32 %v3911, %v4322
      %4363 = vst [vmem:[%s177] sm:$0xff] %v4331
      %4364 = vst [vmem:[%s177 + $0x8] sm:$0xff] %v4332
      %4365 = vst [vmem:[%s177 + $0x10] sm:$0xff] %v4333
      %4366 = vst [vmem:[%s177 + $0x18] sm:$0xff] %v4334
      %4367 = vst [vmem:[%s177 + $0x20] sm:$0xff] %v4335
      %4368 = vst [vmem:[%s177 + $0x28] sm:$0xff] %v4336
      %4369 = vst [vmem:[%s177 + $0x30] sm:$0xff] %v4337
      %4370 = vst [vmem:[%s177 + $0x38] sm:$0xff] %v4338
      %4371 = vst [vmem:[%s177 + $0x40] sm:$0xff] %v4339
      %4372 = vst [vmem:[%s177 + $0x48] sm:$0xff] %v4340
      %4373 = vst [vmem:[%s177 + $0x50] sm:$0xff] %v4341
      %4374 = vst [vmem:[%s177 + $0x58] sm:$0xff] %v4342
      %4375 = vst [vmem:[%s177 + $0x60] sm:$0xff] %v4343
      %4376 = vst [vmem:[%s177 + $0x68] sm:$0xff] %v4344
      %4377 = vst [vmem:[%s177 + $0x70] sm:$0xff] %v4345
      %4378 = vst [vmem:[%s177 + $0x78] sm:$0xff] %v4346
      %4379 = vst [vmem:[%s177 + $0x80] sm:$0xff] %v4347
      %4380 = vst [vmem:[%s177 + $0x88] sm:$0xff] %v4348
      %4381 = vst [vmem:[%s177 + $0x90] sm:$0xff] %v4349
      %4382 = vst [vmem:[%s177 + $0x98] sm:$0xff] %v4350
      %4383 = vst [vmem:[%s177 + $0xa0] sm:$0xff] %v4351
      %4384 = vst [vmem:[%s177 + $0xa8] sm:$0xff] %v4352
      %4385 = vst [vmem:[%s177 + $0xb0] sm:$0xff] %v4353
      %4386 = vst [vmem:[%s177 + $0xb8] sm:$0xff] %v4354
      %4387 = vst [vmem:[%s177 + $0xc0] sm:$0xff] %v4355
      %4388 = vst [vmem:[%s177 + $0xc8] sm:$0xff] %v4356
      %4389 = vst [vmem:[%s177 + $0xd0] sm:$0xff] %v4357
      %4390 = vst [vmem:[%s177 + $0xd8] sm:$0xff] %v4358
      %4391 = vst [vmem:[%s177 + $0xe0] sm:$0xff] %v4359
      %4392 = vst [vmem:[%s177 + $0xe8] sm:$0xff] %v4360
      %4393 = vst [vmem:[%s177 + $0xf0] sm:$0xff] %v4361
      %4394 = vst [vmem:[%s177 + $0xf8] sm:$0xff] %v4362
      %v4395 = vadd.f32 %v4331, %v4332
      %v4396 = vadd.f32 %v4395, %v4333
      %v4397 = vadd.f32 %v4396, %v4334
      %v4398 = vadd.f32 %v4397, %v4335
      %v4399 = vadd.f32 %v4398, %v4336
      %v4400 = vadd.f32 %v4399, %v4337
      %v4401 = vadd.f32 %v4400, %v4338
      %v4402 = vadd.f32 %v4401, %v4339
      %v4403 = vadd.f32 %v4402, %v4340
      %v4404 = vadd.f32 %v4403, %v4341
      %v4405 = vadd.f32 %v4404, %v4342
      %v4406 = vadd.f32 %v4405, %v4343
      %v4407 = vadd.f32 %v4406, %v4344
      %v4408 = vadd.f32 %v4407, %v4345
      %v4409 = vadd.f32 %v4408, %v4346
      %v4410 = vadd.f32 %v4409, %v4347
      %v4411 = vadd.f32 %v4410, %v4348
      %v4412 = vadd.f32 %v4411, %v4349
      %v4413 = vadd.f32 %v4412, %v4350
      %v4414 = vadd.f32 %v4413, %v4351
      %v4415 = vadd.f32 %v4414, %v4352
      %v4416 = vadd.f32 %v4415, %v4353
      %v4417 = vadd.f32 %v4416, %v4354
      %v4418 = vadd.f32 %v4417, %v4355
      %v4419 = vadd.f32 %v4418, %v4356
      %v4420 = vadd.f32 %v4419, %v4357
      %v4421 = vadd.f32 %v4420, %v4358
      %v4422 = vadd.f32 %v4421, %v4359
      %v4423 = vadd.f32 %v4422, %v4360
      %v4424 = vadd.f32 %v4423, %v4361
      %v4425 = vadd.f32 %v4424, %v4362
      %v4426 = vrot.slane %v4425, 4
      %v4427 = vadd.f32 %v4425, %v4426
      %v4428 = vrot.slane %v4427, 2
      %v4429 = vadd.f32 %v4427, %v4428
      %v4430 = vrot.slane %v4429, 1
      %v4431 = vadd.f32 %v4429, %v4430
      %4432 = vst [vmem:[%s181] sm:$0x1] %v4431
      %v4433 = vmul.f32 %v4331, %v4331
      %v4434 = vmul.f32 %v4332, %v4332
      %v4435 = vmul.f32 %v4333, %v4333
      %v4436 = vmul.f32 %v4334, %v4334
      %v4437 = vmul.f32 %v4335, %v4335
      %v4438 = vmul.f32 %v4336, %v4336
      %v4439 = vmul.f32 %v4337, %v4337
      %v4440 = vmul.f32 %v4338, %v4338
      %v4441 = vmul.f32 %v4339, %v4339
      %v4442 = vmul.f32 %v4340, %v4340
      %v4443 = vmul.f32 %v4341, %v4341
      %v4444 = vmul.f32 %v4342, %v4342
      %v4445 = vmul.f32 %v4343, %v4343
      %v4446 = vmul.f32 %v4344, %v4344
      %v4447 = vmul.f32 %v4345, %v4345
      %v4448 = vmul.f32 %v4346, %v4346
      %v4449 = vmul.f32 %v4347, %v4347
      %v4450 = vmul.f32 %v4348, %v4348
      %v4451 = vmul.f32 %v4349, %v4349
      %v4452 = vmul.f32 %v4350, %v4350
      %v4453 = vmul.f32 %v4351, %v4351
      %v4454 = vmul.f32 %v4352, %v4352
      %v4455 = vmul.f32 %v4353, %v4353
      %v4456 = vmul.f32 %v4354, %v4354
      %v4457 = vmul.f32 %v4355, %v4355
      %v4458 = vmul.f32 %v4356, %v4356
      %v4459 = vmul.f32 %v4357, %v4357
      %v4460 = vmul.f32 %v4358, %v4358
      %v4461 = vmul.f32 %v4359, %v4359
      %v4462 = vmul.f32 %v4360, %v4360
      %v4463 = vmul.f32 %v4361, %v4361
      %v4464 = vmul.f32 %v4362, %v4362
      %v4465 = vadd.f32 %v4433, %v4434
      %v4466 = vadd.f32 %v4465, %v4435
      %v4467 = vadd.f32 %v4466, %v4436
      %v4468 = vadd.f32 %v4467, %v4437
      %v4469 = vadd.f32 %v4468, %v4438
      %v4470 = vadd.f32 %v4469, %v4439
      %v4471 = vadd.f32 %v4470, %v4440
      %v4472 = vadd.f32 %v4471, %v4441
      %v4473 = vadd.f32 %v4472, %v4442
      %v4474 = vadd.f32 %v4473, %v4443
      %v4475 = vadd.f32 %v4474, %v4444
      %v4476 = vadd.f32 %v4475, %v4445
      %v4477 = vadd.f32 %v4476, %v4446
      %v4478 = vadd.f32 %v4477, %v4447
      %v4479 = vadd.f32 %v4478, %v4448
      %v4480 = vadd.f32 %v4479, %v4449
      %v4481 = vadd.f32 %v4480, %v4450
      %v4482 = vadd.f32 %v4481, %v4451
      %v4483 = vadd.f32 %v4482, %v4452
      %v4484 = vadd.f32 %v4483, %v4453
      %v4485 = vadd.f32 %v4484, %v4454
      %v4486 = vadd.f32 %v4485, %v4455
      %v4487 = vadd.f32 %v4486, %v4456
      %v4488 = vadd.f32 %v4487, %v4457
      %v4489 = vadd.f32 %v4488, %v4458
      %v4490 = vadd.f32 %v4489, %v4459
      %v4491 = vadd.f32 %v4490, %v4460
      %v4492 = vadd.f32 %v4491, %v4461
      %v4493 = vadd.f32 %v4492, %v4462
      %v4494 = vadd.f32 %v4493, %v4463
      %v4495 = vadd.f32 %v4494, %v4464
      %v4496 = vrot.slane %v4495, 4
      %v4497 = vadd.f32 %v4495, %v4496
      %v4498 = vrot.slane %v4497, 2
      %v4499 = vadd.f32 %v4497, %v4498
      %v4500 = vrot.slane %v4499, 1
      %v4501 = vadd.f32 %v4499, %v4500
      %4502 = vst [vmem:[%s181 + $0x1] sm:$0x1] %v4501
      %p4503 = scmp.lt.s32.totalorder %s15, 1
      %s4504 = scalar_select %p4503, %s15, 1
      %s4505 = smul.addr %s4504, 32
      %s4506 = smul.addr %s4505, 8
      %s4507 = scalar_lea.vmem %s2, %s4506
      %p4508 = scmp.lt.s32.totalorder %s15, 1
      %s4509 = scalar_select %p4508, %s15, 1
      %s4510 = smul.addr %s4509, 2
      %s4511 = scalar_lea.vmem %s3, %s4510
      // Predicated region
      $region29: #{basic_block_forward.3} parent=27 // pred_check
        %p4512 = pneg %p80
      $region30: #{basic_block_forward.3} parent=27 // pred_check_branch
        %4514 = sbr.rel (%p4512) target = $region32
      $region31: #{basic_block_forward.3} parent=27 // pred_region
        _
      $region32: #{basic_block_forward.3} parent=27 // pred_fallthru
        _
      // Predicated region
      $region33: #{basic_block_forward.3} parent=27 // pred_check
        %p4515 = pneg %p106
      $region34: #{basic_block_forward.3} parent=27 // pred_check_branch
        %4517 = sbr.rel (%p4515) target = $region36
      $region35: #{basic_block_forward.3} parent=27 // pred_region
        _
      $region36: #{basic_block_forward.3} parent=27 // pred_fallthru
        _
    $region28: #{basic_block_forward.3} parent=5 // pred_fallthru
      _
    %p4518 = scmp.le.s32.totalorder 2, %s10
    // Predicated region
    $region37: #{basic_block_forward.3} parent=5 // pred_check
      %p4519 = pneg %p4518
    $region38: #{basic_block_forward.3} parent=5 // pred_check_branch
      %4521 = sbr.rel (%p4519) target = $region40
    $region39: #{basic_block_forward.3} parent=5 // pred_region
      %s4522 = ssub.s32 %s10, 2
      // Predicated region
      $region41: #{basic_block_forward.3} parent=39 // pred_check
        %p4523 = pneg %p86
      $region42: #{basic_block_forward.3} parent=39 // pred_check_branch
        %4525 = sbr.rel (%p4523) target = $region44
      $region43: #{basic_block_forward.3} parent=39 // pred_region
        %p4526 = scmp.lt.s32.totalorder %s16, 1
        %s4527 = scalar_select %p4526, %s16, 1
        %s4528 = smul.addr %s4527, 32
        %s4529 = smul.addr %s4528, 8
        %s4530 = scalar_lea.vmem %s2, %s4529
      $region44: #{basic_block_forward.3} parent=39 // pred_fallthru
        _
      // Predicated region
      $region45: #{basic_block_forward.3} parent=39 // pred_check
        %p4531 = pneg %p112
      $region46: #{basic_block_forward.3} parent=39 // pred_check_branch
        %4533 = sbr.rel (%p4531) target = $region48
      $region47: #{basic_block_forward.3} parent=39 // pred_region
        %p4534 = scmp.lt.s32.totalorder %s16, 1
        %s4535 = scalar_select %p4534, %s16, 1
        %s4536 = smul.addr %s4535, 2
        %s4537 = scalar_lea.vmem %s3, %s4536
      $region48: #{basic_block_forward.3} parent=39 // pred_fallthru
        _
    $region40: #{basic_block_forward.3} parent=5 // pred_fallthru
      _
  $region6: #{basic_block_forward.3} parent=0 // loop_footer
    %s14 = sadd.s32 1, %s10
  $region7: #{basic_block_forward.3} parent=0 // loop_footer_branch
    %9 = sbr.rel target = $region3
  $region8: #{basic_block_forward.3} parent=0 // loop_exit
    _

// kernel: basic_block_forward.4
$region0: #{basic_block_forward.4}
  #allocation0 [shape = 'u32[]', space=smem, size = 0x4, offset = 0x4, fixed_abs, tag = 'smem constant byte address 0x4 - core index']
  #allocation1 [shape = 'u32[144,128]{1,0:T(1,128)}', space=vmem, size = 0x12000, scoped, tag = 'internal scratch']
  #allocation2 [shape = 'f32[3,18,32,128]{3,2,1,0:T(8,128)}', space=vmem, size = 0xd8000, scoped, tag = 'scratch operand']
  %s0 = inlined_call_operand.vmem [shape: f32[2,16,16,128], index: 0, kind: input, shape index: {}]
  %s1 = inlined_call_operand.vmem [shape: f32[1,128], index: 1, kind: input, shape index: {}]
  %s2 = inlined_call_operand.vmem [shape: f32[1,128], index: 2, kind: input, shape index: {}]
  %s3 = inlined_call_operand.vmem [shape: bf16[9,128,128], index: 3, kind: input, shape index: {}]
  %s4 = inlined_call_operand.vmem [shape: f32[2,16,16,128], index: 4, kind: output, shape index: {0}]
  %s5 = inlined_call_operand.vmem [shape: f32[2,2,128], index: 5, kind: output, shape index: {1}]
  %6 = xla_tuple %s4, %s5
  %s7 = sld [smem:[#allocation0]]
  $region57: #{basic_block_forward.4} parent=0
    _
  %s9 = ssub.s32 1, %s7
  %s10 = scalar_select 0, %s9, %s7
  loop: start=0, step=1, limit=4
  $region2: #{basic_block_forward.4} parent=0 // loop_pre_header
    _
  $region3: #{basic_block_forward.4} parent=0 // loop_header
    %s12 = sphi 0, %s16
    %p13 = scmp.ge.s32.totalorder %s12, 4
    %s22 = sphi 0, %s24
    %s25 = sphi 0, %s22
    %s26 = sphi 0, %s25
    %s42 = sphi 0, %s26
    %s46 = sphi 0, %s46
    %s48 = sphi 0, %s46
    %s49 = sphi 0, %s48
    %s63 = sphi 0, %s49
    %s67 = sphi 0, %s67
    %s69 = sphi 0, %s67
    %s70 = sphi 0, %s69
    %s84 = sphi 0, %s70
    %s88 = sphi 0, %s88
    %s90 = sphi 0, %s88
    %s91 = sphi 0, %s90
    %s105 = sphi 0, %s91
    %s111 = sphi 0, %s113
    %s114 = sphi 0, %s111
    %s115 = sphi 0, %s114
    %s131 = sphi 0, %s115
    %s137 = sphi 0, %s139
    %s140 = sphi 0, %s137
    %s141 = sphi 0, %s140
    %s157 = sphi 0, %s141
  $region4: #{basic_block_forward.4} parent=0 // loop_header_branch
    %15 = sbr.rel (%p13) target = $region8
  $region5: #{basic_block_forward.4} parent=0 // loop_body
    %s17 = ssub.s32 %s12, 1
    %s18 = ssub.s32 %s12, 2
    %s19 = sadd.s32 %s12, 1
    %s20 = ssub.s32 %s12, %s19
    %p21 = scmp.eq.s32.totalorder %s20, 0
    %s23 = sadd.s32 %s22, 1
    %s24 = scalar_select %p21, %s22, %s23
    %p27 = pneg %p21
    %p28 = scmp.eq.s32.totalorder %s12, 1
    %p29 = por %p27, %p28
    %p30 = scmp.ne.s32.totalorder %s22, %s25
    %p31 = scmp.eq.s32.totalorder %s12, 0
    %p32 = por %p30, %p31
    %p33 = scmp.ne.s32.totalorder %s22, %s25
    %p34 = scmp.eq.s32.totalorder %s17, 1
    %p35 = por %p33, %p34
    %p36 = scmp.ne.s32.totalorder %s25, %s26
    %p37 = scmp.eq.s32.totalorder %s17, 0
    %p38 = por %p36, %p37
    %p39 = scmp.ne.s32.totalorder %s25, %s26
    %p40 = scmp.eq.s32.totalorder %s18, 1
    %p41 = por %p39, %p40
    %p43 = scmp.ne.s32.totalorder %s26, %s42
    %p44 = scmp.eq.s32.totalorder %s18, 0
    %p45 = por %p43, %p44
    %s47 = sadd.s32 %s46, 1
    %p50 = scmp.eq.s32.totalorder %s12, 1
    %p51 = scmp.ne.s32.totalorder %s46, %s48
    %p52 = scmp.eq.s32.totalorder %s12, 0
    %p53 = por %p51, %p52
    %p54 = scmp.ne.s32.totalorder %s46, %s48
    %p55 = scmp.eq.s32.totalorder %s17, 1
    %p56 = por %p54, %p55
    %p57 = scmp.ne.s32.totalorder %s48, %s49
    %p58 = scmp.eq.s32.totalorder %s17, 0
    %p59 = por %p57, %p58
    %p60 = scmp.ne.s32.totalorder %s48, %s49
    %p61 = scmp.eq.s32.totalorder %s18, 1
    %p62 = por %p60, %p61
    %p64 = scmp.ne.s32.totalorder %s49, %s63
    %p65 = scmp.eq.s32.totalorder %s18, 0
    %p66 = por %p64, %p65
    %s68 = sadd.s32 %s67, 1
    %p71 = scmp.eq.s32.totalorder %s12, 1
    %p72 = scmp.ne.s32.totalorder %s67, %s69
    %p73 = scmp.eq.s32.totalorder %s12, 0
    %p74 = por %p72, %p73
    %p75 = scmp.ne.s32.totalorder %s67, %s69
    %p76 = scmp.eq.s32.totalorder %s17, 1
    %p77 = por %p75, %p76
    %p78 = scmp.ne.s32.totalorder %s69, %s70
    %p79 = scmp.eq.s32.totalorder %s17, 0
    %p80 = por %p78, %p79
    %p81 = scmp.ne.s32.totalorder %s69, %s70
    %p82 = scmp.eq.s32.totalorder %s18, 1
    %p83 = por %p81, %p82
    %p85 = scmp.ne.s32.totalorder %s70, %s84
    %p86 = scmp.eq.s32.totalorder %s18, 0
    %p87 = por %p85, %p86
    %s89 = sadd.s32 %s88, 1
    %p92 = scmp.eq.s32.totalorder %s12, 1
    %p93 = scmp.ne.s32.totalorder %s88, %s90
    %p94 = scmp.eq.s32.totalorder %s12, 0
    %p95 = por %p93, %p94
    %p96 = scmp.ne.s32.totalorder %s88, %s90
    %p97 = scmp.eq.s32.totalorder %s17, 1
    %p98 = por %p96, %p97
    %p99 = scmp.ne.s32.totalorder %s90, %s91
    %p100 = scmp.eq.s32.totalorder %s17, 0
    %p101 = por %p99, %p100
    %p102 = scmp.ne.s32.totalorder %s90, %s91
    %p103 = scmp.eq.s32.totalorder %s18, 1
    %p104 = por %p102, %p103
    %p106 = scmp.ne.s32.totalorder %s91, %s105
    %p107 = scmp.eq.s32.totalorder %s18, 0
    %p108 = por %p106, %p107
    %s109 = ssub.s32 %s12, %s19
    %p110 = scmp.eq.s32.totalorder %s109, 0
    %s112 = sadd.s32 %s111, 1
    %s113 = scalar_select %p110, %s111, %s112
    %p116 = pneg %p110
    %p117 = scmp.eq.s32.totalorder %s12, 1
    %p118 = por %p116, %p117
    %p119 = scmp.ne.s32.totalorder %s111, %s114
    %p120 = scmp.eq.s32.totalorder %s12, 0
    %p121 = por %p119, %p120
    %p122 = scmp.ne.s32.totalorder %s111, %s114
    %p123 = scmp.eq.s32.totalorder %s17, 1
    %p124 = por %p122, %p123
    %p125 = scmp.ne.s32.totalorder %s114, %s115
    %p126 = scmp.eq.s32.totalorder %s17, 0
    %p127 = por %p125, %p126
    %p128 = scmp.ne.s32.totalorder %s114, %s115
    %p129 = scmp.eq.s32.totalorder %s18, 1
    %p130 = por %p128, %p129
    %p132 = scmp.ne.s32.totalorder %s115, %s131
    %p133 = scmp.eq.s32.totalorder %s18, 0
    %p134 = por %p132, %p133
    %s135 = ssub.s32 %s12, %s19
    %p136 = scmp.eq.s32.totalorder %s135, 0
    %s138 = sadd.s32 %s137, 1
    %s139 = scalar_select %p136, %s137, %s138
    %p142 = pneg %p136
    %p143 = scmp.eq.s32.totalorder %s12, 1
    %p144 = por %p142, %p143
    %p145 = scmp.ne.s32.totalorder %s137, %s140
    %p146 = scmp.eq.s32.totalorder %s12, 0
    %p147 = por %p145, %p146
    %p148 = scmp.ne.s32.totalorder %s137, %s140
    %p149 = scmp.eq.s32.totalorder %s17, 1
    %p150 = por %p148, %p149
    %p151 = scmp.ne.s32.totalorder %s140, %s141
    %p152 = scmp.eq.s32.totalorder %s17, 0
    %p153 = por %p151, %p152
    %p154 = scmp.ne.s32.totalorder %s140, %s141
    %p155 = scmp.eq.s32.totalorder %s18, 1
    %p156 = por %p154, %p155
    %p158 = scmp.ne.s32.totalorder %s141, %s157
    %p159 = scmp.eq.s32.totalorder %s18, 0
    %p160 = por %p158, %p159
    %p161 = scmp.le.s32.totalorder 1, %s12
    %p162 = scmp.lt.s32.totalorder %s12, 3
    %p163 = pnand %p161, %p162
    %p164 = pneg %p163
    // Predicated region
    $region9: #{basic_block_forward.4} parent=5 // pred_check
      _
    $region10: #{basic_block_forward.4} parent=5 // pred_check_branch
      %166 = sbr.rel (%p163) target = $region12
    $region11: #{basic_block_forward.4} parent=5 // pred_region
      %s167 = ssub.s32 %s12, 1
      // Predicated region
      $region13: #{basic_block_forward.4} parent=11 // pred_check
        %p168 = pneg %p59
      $region14: #{basic_block_forward.4} parent=11 // pred_check_branch
        %170 = sbr.rel (%p168) target = $region16
      $region15: #{basic_block_forward.4} parent=11 // pred_region
        _
      $region16: #{basic_block_forward.4} parent=11 // pred_fallthru
        _
      // Predicated region
      $region17: #{basic_block_forward.4} parent=11 // pred_check
        %p171 = pneg %p80
      $region18: #{basic_block_forward.4} parent=11 // pred_check_branch
        %173 = sbr.rel (%p171) target = $region20
      $region19: #{basic_block_forward.4} parent=11 // pred_region
        _
      $region20: #{basic_block_forward.4} parent=11 // pred_fallthru
        _
      // Predicated region
      $region21: #{basic_block_forward.4} parent=11 // pred_check
        %p174 = pneg %p101
      $region22: #{basic_block_forward.4} parent=11 // pred_check_branch
        %176 = sbr.rel (%p174) target = $region24
      $region23: #{basic_block_forward.4} parent=11 // pred_region
        _
      $region24: #{basic_block_forward.4} parent=11 // pred_fallthru
        _
    $region12: #{basic_block_forward.4} parent=5 // pred_fallthru
      _
    %p177 = scmp.lt.s32.totalorder %s12, 2
    // Predicated region
    $region25: #{basic_block_forward.4} parent=5 // pred_check
      %p178 = pneg %p177
    $region26: #{basic_block_forward.4} parent=5 // pred_check_branch
      %180 = sbr.rel (%p178) target = $region28
    $region27: #{basic_block_forward.4} parent=5 // pred_region
      // Predicated region
      $region29: #{basic_block_forward.4} parent=27 // pred_check
        %p181 = pneg %p32
      $region30: #{basic_block_forward.4} parent=27 // pred_check_branch
        %183 = sbr.rel (%p181) target = $region32
      $region31: #{basic_block_forward.4} parent=27 // pred_region
        %p184 = scmp.lt.s32.totalorder %s12, 1
        %s185 = scalar_select %p184, %s12, 1
        %s186 = smul.addr %s185, 32
        %s187 = smul.addr %s186, 8
        %s188 = scalar_lea.vmem %s0, %s187
      $region32: #{basic_block_forward.4} parent=27 // pred_fallthru
        _
    $region28: #{basic_block_forward.4} parent=5 // pred_fallthru
      _
    %p189 = scmp.le.s32.totalorder 1, %s12
    %p190 = scmp.lt.s32.totalorder %s12, 3
    %p191 = pnand %p189, %p190
    %p192 = pneg %p191
    // Predicated region
    $region33: #{basic_block_forward.4} parent=5 // pred_check
      _
    $region34: #{basic_block_forward.4} parent=5 // pred_check_branch
      %194 = sbr.rel (%p191) target = $region36
    $region35: #{basic_block_forward.4} parent=5 // pred_region
      %s195 = ssub.s32 %s12, 1
      %p196 = scmp.lt.s32.totalorder %s17, 1
      %s197 = scalar_select %p196, %s17, 1
      %s198 = smul.addr %s197, 32
      %s199 = smul.addr %s198, 8
      %s200 = scalar_lea.vmem %s0, %s199
      %p201 = pneg %p38
      %p202 = pneg %p35
      %p203 = pneg %p59
      %p204 = pneg %p56
      %p205 = pneg %p80
      %p206 = pneg %p77
      %p207 = pneg %p101
      %p208 = pneg %p98
      %p209 = pneg %p127
      %p210 = pneg %p124
      %p211 = scmp.lt.s32.totalorder %s17, 1
      %s212 = scalar_select %p211, %s17, 1
      %s213 = smul.addr %s212, 32
      %s214 = smul.addr %s213, 8
      %s215 = scalar_lea.vmem %s4, %s214
      %p216 = pneg %p153
      %p217 = pneg %p150
      %p218 = scmp.lt.s32.totalorder %s17, 1
      %s219 = scalar_select %p218, %s17, 1
      %s220 = smul.addr %s219, 2
      %s221 = scalar_lea.vmem %s5, %s220
      %p222 = scmp.lt.s32.totalorder %s17, 1
      %s223 = scalar_select %p222, %s17, 1
      %s224 = smul.addr %s223, 32
      %s225 = smul.addr %s224, 8
      %s226 = scalar_lea.vmem %s0, %s225
      %p227 = scmp.lt.s32.totalorder %s17, 1
      %s228 = scalar_select %p227, %s17, 1
      %s229 = smul.addr %s228, 32
      %s230 = smul.addr %s229, 8
      %s231 = scalar_lea.vmem %s4, %s230
      %p232 = scmp.lt.s32.totalorder %s17, 1
      %s233 = scalar_select %p232, %s17, 1
      %s234 = smul.addr %s233, 2
      %s235 = scalar_lea.vmem %s5, %s234
      %v237 = vld [vmem:[%s226] sm:$0xff]
      %v238 = vld [vmem:[%s226 + $0x8] sm:$0xff]
      %v239 = vld [vmem:[%s226 + $0x10] sm:$0xff]
      %v240 = vld [vmem:[%s226 + $0x18] sm:$0xff]
      %v241 = vld [vmem:[%s226 + $0x20] sm:$0xff]
      %v242 = vld [vmem:[%s226 + $0x28] sm:$0xff]
      %v243 = vld [vmem:[%s226 + $0x30] sm:$0xff]
      %v244 = vld [vmem:[%s226 + $0x38] sm:$0xff]
      %v245 = vld [vmem:[%s226 + $0x40] sm:$0xff]
      %v246 = vld [vmem:[%s226 + $0x48] sm:$0xff]
      %v247 = vld [vmem:[%s226 + $0x50] sm:$0xff]
      %v248 = vld [vmem:[%s226 + $0x58] sm:$0xff]
      %v249 = vld [vmem:[%s226 + $0x60] sm:$0xff]
      %v250 = vld [vmem:[%s226 + $0x68] sm:$0xff]
      %v251 = vld [vmem:[%s226 + $0x70] sm:$0xff]
      %v252 = vld [vmem:[%s226 + $0x78] sm:$0xff]
      %v253 = vld [vmem:[%s226 + $0x80] sm:$0xff]
      %v254 = vld [vmem:[%s226 + $0x88] sm:$0xff]
      %v255 = vld [vmem:[%s226 + $0x90] sm:$0xff]
      %v256 = vld [vmem:[%s226 + $0x98] sm:$0xff]
      %v257 = vld [vmem:[%s226 + $0xa0] sm:$0xff]
      %v258 = vld [vmem:[%s226 + $0xa8] sm:$0xff]
      %v259 = vld [vmem:[%s226 + $0xb0] sm:$0xff]
      %v260 = vld [vmem:[%s226 + $0xb8] sm:$0xff]
      %v261 = vld [vmem:[%s226 + $0xc0] sm:$0xff]
      %v262 = vld [vmem:[%s226 + $0xc8] sm:$0xff]
      %v263 = vld [vmem:[%s226 + $0xd0] sm:$0xff]
      %v264 = vld [vmem:[%s226 + $0xd8] sm:$0xff]
      %v265 = vld [vmem:[%s226 + $0xe0] sm:$0xff]
      %v266 = vld [vmem:[%s226 + $0xe8] sm:$0xff]
      %v267 = vld [vmem:[%s226 + $0xf0] sm:$0xff]
      %v268 = vld [vmem:[%s226 + $0xf8] sm:$0xff]
      %v269 = vld [vmem:[%s1] sm:$0x1]
      %v271 = vlaneseq
      %v272 = vshrl.u32 %v271, 7
      %v273 = vsub.s32 0, %v272
      %v274 = vrot.slane %v269, %v273
      %v276 = vmul.f32 %v237, %v274
      %v277 = vmul.f32 %v238, %v274
      %v278 = vmul.f32 %v239, %v274
      %v279 = vmul.f32 %v240, %v274
      %v280 = vmul.f32 %v241, %v274
      %v281 = vmul.f32 %v242, %v274
      %v282 = vmul.f32 %v243, %v274
      %v283 = vmul.f32 %v244, %v274
      %v284 = vmul.f32 %v245, %v274
      %v285 = vmul.f32 %v246, %v274
      %v286 = vmul.f32 %v247, %v274
      %v287 = vmul.f32 %v248, %v274
      %v288 = vmul.f32 %v249, %v274
      %v289 = vmul.f32 %v250, %v274
      %v290 = vmul.f32 %v251, %v274
      %v291 = vmul.f32 %v252, %v274
      %v292 = vmul.f32 %v253, %v274
      %v293 = vmul.f32 %v254, %v274
      %v294 = vmul.f32 %v255, %v274
      %v295 = vmul.f32 %v256, %v274
      %v296 = vmul.f32 %v257, %v274
      %v297 = vmul.f32 %v258, %v274
      %v298 = vmul.f32 %v259, %v274
      %v299 = vmul.f32 %v260, %v274
      %v300 = vmul.f32 %v261, %v274
      %v301 = vmul.f32 %v262, %v274
      %v302 = vmul.f32 %v263, %v274
      %v303 = vmul.f32 %v264, %v274
      %v304 = vmul.f32 %v265, %v274
      %v305 = vmul.f32 %v266, %v274
      %v306 = vmul.f32 %v267, %v274
      %v307 = vmul.f32 %v268, %v274
      %v308 = vld [vmem:[%s2] sm:$0x1]
      %v310 = vlaneseq
      %v311 = vshrl.u32 %v310, 7
      %v312 = vsub.s32 0, %v311
      %v313 = vrot.slane %v308, %v312
      %v315 = vadd.f32 %v276, %v313
      %v316 = vadd.f32 %v277, %v313
      %v317 = vadd.f32 %v278, %v313
      %v318 = vadd.f32 %v279, %v313
      %v319 = vadd.f32 %v280, %v313
      %v320 = vadd.f32 %v281, %v313
      %v321 = vadd.f32 %v282, %v313
      %v322 = vadd.f32 %v283, %v313
      %v323 = vadd.f32 %v284, %v313
      %v324 = vadd.f32 %v285, %v313
      %v325 = vadd.f32 %v286, %v313
      %v326 = vadd.f32 %v287, %v313
      %v327 = vadd.f32 %v288, %v313
      %v328 = vadd.f32 %v289, %v313
      %v329 = vadd.f32 %v290, %v313
      %v330 = vadd.f32 %v291, %v313
      %v331 = vadd.f32 %v292, %v313
      %v332 = vadd.f32 %v293, %v313
      %v333 = vadd.f32 %v294, %v313
      %v334 = vadd.f32 %v295, %v313
      %v335 = vadd.f32 %v296, %v313
      %v336 = vadd.f32 %v297, %v313
      %v337 = vadd.f32 %v298, %v313
      %v338 = vadd.f32 %v299, %v313
      %v339 = vadd.f32 %v300, %v313
      %v340 = vadd.f32 %v301, %v313
      %v341 = vadd.f32 %v302, %v313
      %v342 = vadd.f32 %v303, %v313
      %v343 = vadd.f32 %v304, %v313
      %v344 = vadd.f32 %v305, %v313
      %v345 = vadd.f32 %v306, %v313
      %v346 = vadd.f32 %v307, %v313
      %v347 = vmax.f32 %v315, 0.0
      %v348 = vmax.f32 %v316, 0.0
      %v349 = vmax.f32 %v317, 0.0
      %v350 = vmax.f32 %v318, 0.0
      %v351 = vmax.f32 %v319, 0.0
      %v352 = vmax.f32 %v320, 0.0
      %v353 = vmax.f32 %v321, 0.0
      %v354 = vmax.f32 %v322, 0.0
      %v355 = vmax.f32 %v323, 0.0
      %v356 = vmax.f32 %v324, 0.0
      %v357 = vmax.f32 %v325, 0.0
      %v358 = vmax.f32 %v326, 0.0
      %v359 = vmax.f32 %v327, 0.0
      %v360 = vmax.f32 %v328, 0.0
      %v361 = vmax.f32 %v329, 0.0
      %v362 = vmax.f32 %v330, 0.0
      %v363 = vmax.f32 %v331, 0.0
      %v364 = vmax.f32 %v332, 0.0
      %v365 = vmax.f32 %v333, 0.0
      %v366 = vmax.f32 %v334, 0.0
      %v367 = vmax.f32 %v335, 0.0
      %v368 = vmax.f32 %v336, 0.0
      %v369 = vmax.f32 %v337, 0.0
      %v370 = vmax.f32 %v338, 0.0
      %v371 = vmax.f32 %v339, 0.0
      %v372 = vmax.f32 %v340, 0.0
      %v373 = vmax.f32 %v341, 0.0
      %v374 = vmax.f32 %v342, 0.0
      %v375 = vmax.f32 %v343, 0.0
      %v376 = vmax.f32 %v344, 0.0
      %v377 = vmax.f32 %v345, 0.0
      %v378 = vmax.f32 %v346, 0.0
      %379 = vst [vmem:[#allocation2] sm:$0xff] 0.0
      %380 = vst [vmem:[#allocation2 + $0x8] sm:$0xff] 0.0
      %381 = vst [vmem:[#allocation2 + $0x10] sm:$0xff] 0.0
      %382 = vst [vmem:[#allocation2 + $0x18] sm:$0xff] 0.0
      %s383 = scalar_lea.vmem [#allocation2], 544
      %384 = vst [vmem:[%s383] sm:$0xff] 0.0
      %385 = vst [vmem:[%s383 + $0x8] sm:$0xff] 0.0
      %386 = vst [vmem:[%s383 + $0x10] sm:$0xff] 0.0
      %387 = vst [vmem:[%s383 + $0x18] sm:$0xff] 0.0
      %s388 = scalar_lea.vmem [#allocation2], 576
      %389 = vst [vmem:[%s388] sm:$0xff] 0.0
      %390 = vst [vmem:[%s388 + $0x8] sm:$0xff] 0.0
      %391 = vst [vmem:[%s388 + $0x10] sm:$0xff] 0.0
      %392 = vst [vmem:[%s388 + $0x18] sm:$0xff] 0.0
      %s393 = scalar_lea.vmem [#allocation2], 1120
      %394 = vst [vmem:[%s393] sm:$0xff] 0.0
      %395 = vst [vmem:[%s393 + $0x8] sm:$0xff] 0.0
      %396 = vst [vmem:[%s393 + $0x10] sm:$0xff] 0.0
      %397 = vst [vmem:[%s393 + $0x18] sm:$0xff] 0.0
      %s398 = scalar_lea.vmem [#allocation2], 1152
      %399 = vst [vmem:[%s398] sm:$0xff] 0.0
      %400 = vst [vmem:[%s398 + $0x8] sm:$0xff] 0.0
      %401 = vst [vmem:[%s398 + $0x10] sm:$0xff] 0.0
      %402 = vst [vmem:[%s398 + $0x18] sm:$0xff] 0.0
      %s403 = scalar_lea.vmem [#allocation2], 1696
      %404 = vst [vmem:[%s403] sm:$0xff] 0.0
      %405 = vst [vmem:[%s403 + $0x8] sm:$0xff] 0.0
      %406 = vst [vmem:[%s403 + $0x10] sm:$0xff] 0.0
      %407 = vst [vmem:[%s403 + $0x18] sm:$0xff] 0.0
      %s408 = scalar_lea.vmem [#allocation2], 32
      %409 = vst [vmem:[%s408] sm:$0x1] 0.0
      %410 = vst [vmem:[%s408 + $0x20] sm:$0x1] 0.0
      %411 = vst [vmem:[%s408 + $0x40] sm:$0x1] 0.0
      %412 = vst [vmem:[%s408 + $0x60] sm:$0x1] 0.0
      %413 = vst [vmem:[%s408 + $0x80] sm:$0x1] 0.0
      %414 = vst [vmem:[%s408 + $0xa0] sm:$0x1] 0.0
      %415 = vst [vmem:[%s408 + $0xc0] sm:$0x1] 0.0
      %416 = vst [vmem:[%s408 + $0xe0] sm:$0x1] 0.0
      %417 = vst [vmem:[%s408 + $0x100] sm:$0x1] 0.0
      %418 = vst [vmem:[%s408 + $0x120] sm:$0x1] 0.0
      %419 = vst [vmem:[%s408 + $0x140] sm:$0x1] 0.0
      %420 = vst [vmem:[%s408 + $0x160] sm:$0x1] 0.0
      %421 = vst [vmem:[%s408 + $0x180] sm:$0x1] 0.0
      %422 = vst [vmem:[%s408 + $0x1a0] sm:$0x1] 0.0
      %423 = vst [vmem:[%s408 + $0x1c0] sm:$0x1] 0.0
      %424 = vst [vmem:[%s408 + $0x1e0] sm:$0x1] 0.0
      %s425 = scalar_lea.vmem [#allocation2], 1184
      %426 = vst [vmem:[%s425 + $0xf] sm:$0x1] 0.0
      %427 = vst [vmem:[%s425 + $0x2f] sm:$0x1] 0.0
      %428 = vst [vmem:[%s425 + $0x4f] sm:$0x1] 0.0
      %429 = vst [vmem:[%s425 + $0x6f] sm:$0x1] 0.0
      %430 = vst [vmem:[%s425 + $0x8f] sm:$0x1] 0.0
      %431 = vst [vmem:[%s425 + $0xaf] sm:$0x1] 0.0
      %432 = vst [vmem:[%s425 + $0xcf] sm:$0x1] 0.0
      %433 = vst [vmem:[%s425 + $0xef] sm:$0x1] 0.0
      %434 = vst [vmem:[%s425 + $0x10f] sm:$0x1] 0.0
      %435 = vst [vmem:[%s425 + $0x12f] sm:$0x1] 0.0
      %436 = vst [vmem:[%s425 + $0x14f] sm:$0x1] 0.0
      %437 = vst [vmem:[%s425 + $0x16f] sm:$0x1] 0.0
      %438 = vst [vmem:[%s425 + $0x18f] sm:$0x1] 0.0
      %439 = vst [vmem:[%s425 + $0x1af] sm:$0x1] 0.0
      %440 = vst [vmem:[%s425 + $0x1cf] sm:$0x1] 0.0
      %441 = vst [vmem:[%s425 + $0x1ef] sm:$0x1] 0.0
      %s442 = scalar_lea.vmem [#allocation2], 608
      %443 = vst [vmem:[%s442] sm:$0xff] %v347
      %444 = vst [vmem:[%s442 + $0x8] sm:$0xff] %v348
      %445 = vst [vmem:[%s442 + $0x20] sm:$0xff] %v349
      %446 = vst [vmem:[%s442 + $0x28] sm:$0xff] %v350
      %447 = vst [vmem:[%s442 + $0x40] sm:$0xff] %v351
      %448 = vst [vmem:[%s442 + $0x48] sm:$0xff] %v352
      %449 = vst [vmem:[%s442 + $0x60] sm:$0xff] %v353
      %450 = vst [vmem:[%s442 + $0x68] sm:$0xff] %v354
      %451 = vst [vmem:[%s442 + $0x80] sm:$0xff] %v355
      %452 = vst [vmem:[%s442 + $0x88] sm:$0xff] %v356
      %453 = vst [vmem:[%s442 + $0xa0] sm:$0xff] %v357
      %454 = vst [vmem:[%s442 + $0xa8] sm:$0xff] %v358
      %455 = vst [vmem:[%s442 + $0xc0] sm:$0xff] %v359
      %456 = vst [vmem:[%s442 + $0xc8] sm:$0xff] %v360
      %457 = vst [vmem:[%s442 + $0xe0] sm:$0xff] %v361
      %458 = vst [vmem:[%s442 + $0xe8] sm:$0xff] %v362
      %459 = vst [vmem:[%s442 + $0x100] sm:$0xff] %v363
      %460 = vst [vmem:[%s442 + $0x108] sm:$0xff] %v364
      %461 = vst [vmem:[%s442 + $0x120] sm:$0xff] %v365
      %462 = vst [vmem:[%s442 + $0x128] sm:$0xff] %v366
      %463 = vst [vmem:[%s442 + $0x140] sm:$0xff] %v367
      %464 = vst [vmem:[%s442 + $0x148] sm:$0xff] %v368
      %465 = vst [vmem:[%s442 + $0x160] sm:$0xff] %v369
      %466 = vst [vmem:[%s442 + $0x168] sm:$0xff] %v370
      %467 = vst [vmem:[%s442 + $0x180] sm:$0xff] %v371
      %468 = vst [vmem:[%s442 + $0x188] sm:$0xff] %v372
      %469 = vst [vmem:[%s442 + $0x1a0] sm:$0xff] %v373
      %470 = vst [vmem:[%s442 + $0x1a8] sm:$0xff] %v374
      %471 = vst [vmem:[%s442 + $0x1c0] sm:$0xff] %v375
      %472 = vst [vmem:[%s442 + $0x1c8] sm:$0xff] %v376
      %473 = vst [vmem:[%s442 + $0x1e0] sm:$0xff] %v377
      %474 = vst [vmem:[%s442 + $0x1e8] sm:$0xff] %v378
      %475 = vst [vmem:[%s408 + $0x1] sm:$0xff] %v347
      %476 = vst [vmem:[%s408 + $0x9] sm:$0x7f] %v348
      %477 = vst [vmem:[%s408 + $0x21] sm:$0xff] %v349
      %478 = vst [vmem:[%s408 + $0x29] sm:$0x7f] %v350
      %479 = vst [vmem:[%s408 + $0x41] sm:$0xff] %v351
      %480 = vst [vmem:[%s408 + $0x49] sm:$0x7f] %v352
      %481 = vst [vmem:[%s408 + $0x61] sm:$0xff] %v353
      %482 = vst [vmem:[%s408 + $0x69] sm:$0x7f] %v354
      %483 = vst [vmem:[%s408 + $0x81] sm:$0xff] %v355
      %484 = vst [vmem:[%s408 + $0x89] sm:$0x7f] %v356
      %485 = vst [vmem:[%s408 + $0xa1] sm:$0xff] %v357
      %486 = vst [vmem:[%s408 + $0xa9] sm:$0x7f] %v358
      %487 = vst [vmem:[%s408 + $0xc1] sm:$0xff] %v359
      %488 = vst [vmem:[%s408 + $0xc9] sm:$0x7f] %v360
      %489 = vst [vmem:[%s408 + $0xe1] sm:$0xff] %v361
      %490 = vst [vmem:[%s408 + $0xe9] sm:$0x7f] %v362
      %491 = vst [vmem:[%s408 + $0x101] sm:$0xff] %v363
      %492 = vst [vmem:[%s408 + $0x109] sm:$0x7f] %v364
      %493 = vst [vmem:[%s408 + $0x121] sm:$0xff] %v365
      %494 = vst [vmem:[%s408 + $0x129] sm:$0x7f] %v366
      %495 = vst [vmem:[%s408 + $0x141] sm:$0xff] %v367
      %496 = vst [vmem:[%s408 + $0x149] sm:$0x7f] %v368
      %497 = vst [vmem:[%s408 + $0x161] sm:$0xff] %v369
      %498 = vst [vmem:[%s408 + $0x169] sm:$0x7f] %v370
      %499 = vst [vmem:[%s408 + $0x181] sm:$0xff] %v371
      %500 = vst [vmem:[%s408 + $0x189] sm:$0x7f] %v372
      %501 = vst [vmem:[%s408 + $0x1a1] sm:$0xff] %v373
      %502 = vst [vmem:[%s408 + $0x1a9] sm:$0x7f] %v374
      %503 = vst [vmem:[%s408 + $0x1c1] sm:$0xff] %v375
      %504 = vst [vmem:[%s408 + $0x1c9] sm:$0x7f] %v376
      %505 = vst [vmem:[%s408 + $0x1e1] sm:$0xff] %v377
      %506 = vst [vmem:[%s408 + $0x1e9] sm:$0x7f] %v378
      %507 = vst [vmem:[%s425 - $0x1] sm:$0xfe] %v347
      %508 = vst [vmem:[%s425 + $0x7] sm:$0xff] %v348
      %509 = vst [vmem:[%s425 + $0x1f] sm:$0xfe] %v349
      %510 = vst [vmem:[%s425 + $0x27] sm:$0xff] %v350
      %511 = vst [vmem:[%s425 + $0x3f] sm:$0xfe] %v351
      %512 = vst [vmem:[%s425 + $0x47] sm:$0xff] %v352
      %513 = vst [vmem:[%s425 + $0x5f] sm:$0xfe] %v353
      %514 = vst [vmem:[%s425 + $0x67] sm:$0xff] %v354
      %515 = vst [vmem:[%s425 + $0x7f] sm:$0xfe] %v355
      %516 = vst [vmem:[%s425 + $0x87] sm:$0xff] %v356
      %517 = vst [vmem:[%s425 + $0x9f] sm:$0xfe] %v357
      %518 = vst [vmem:[%s425 + $0xa7] sm:$0xff] %v358
      %519 = vst [vmem:[%s425 + $0xbf] sm:$0xfe] %v359
      %520 = vst [vmem:[%s425 + $0xc7] sm:$0xff] %v360
      %521 = vst [vmem:[%s425 + $0xdf] sm:$0xfe] %v361
      %522 = vst [vmem:[%s425 + $0xe7] sm:$0xff] %v362
      %523 = vst [vmem:[%s425 + $0xff] sm:$0xfe] %v363
      %524 = vst [vmem:[%s425 + $0x107] sm:$0xff] %v364
      %525 = vst [vmem:[%s425 + $0x11f] sm:$0xfe] %v365
      %526 = vst [vmem:[%s425 + $0x127] sm:$0xff] %v366
      %527 = vst [vmem:[%s425 + $0x13f] sm:$0xfe] %v367
      %528 = vst [vmem:[%s425 + $0x147] sm:$0xff] %v368
      %529 = vst [vmem:[%s425 + $0x15f] sm:$0xfe] %v369
      %530 = vst [vmem:[%s425 + $0x167] sm:$0xff] %v370
      %531 = vst [vmem:[%s425 + $0x17f] sm:$0xfe] %v371
      %532 = vst [vmem:[%s425 + $0x187] sm:$0xff] %v372
      %533 = vst [vmem:[%s425 + $0x19f] sm:$0xfe] %v373
      %534 = vst [vmem:[%s425 + $0x1a7] sm:$0xff] %v374
      %535 = vst [vmem:[%s425 + $0x1bf] sm:$0xfe] %v375
      %536 = vst [vmem:[%s425 + $0x1c7] sm:$0xff] %v376
      %537 = vst [vmem:[%s425 + $0x1df] sm:$0xfe] %v377
      %538 = vst [vmem:[%s425 + $0x1e7] sm:$0xff] %v378
      %v539 = vld [vmem:[#allocation2] sm:$0xff]
      %v540 = vld [vmem:[#allocation2 + $0x8] sm:$0xff]
      %v541 = vld [vmem:[#allocation2 + $0x10] sm:$0xff]
      %v542 = vld [vmem:[#allocation2 + $0x18] sm:$0xff]
      %v543 = vld [vmem:[#allocation2 + $0x20] sm:$0xff]
      %v544 = vld [vmem:[#allocation2 + $0x28] sm:$0xff]
      %v545 = vld [vmem:[#allocation2 + $0x30] sm:$0xff]
      %v546 = vld [vmem:[#allocation2 + $0x38] sm:$0xff]
      %v547 = vld [vmem:[#allocation2 + $0x40] sm:$0xff]
      %v548 = vld [vmem:[#allocation2 + $0x48] sm:$0xff]
      %v549 = vld [vmem:[#allocation2 + $0x50] sm:$0xff]
      %v550 = vld [vmem:[#allocation2 + $0x58] sm:$0xff]
      %v551 = vld [vmem:[#allocation2 + $0x60] sm:$0xff]
      %v552 = vld [vmem:[#allocation2 + $0x68] sm:$0xff]
      %v553 = vld [vmem:[#allocation2 + $0x70] sm:$0xff]
      %v554 = vld [vmem:[#allocation2 + $0x78] sm:$0xff]
      %v555 = vld [vmem:[#allocation2 + $0x80] sm:$0xff]
      %v556 = vld [vmem:[#allocation2 + $0x88] sm:$0xff]
      %v557 = vld [vmem:[#allocation2 + $0x90] sm:$0xff]
      %v558 = vld [vmem:[#allocation2 + $0x98] sm:$0xff]
      %v559 = vld [vmem:[#allocation2 + $0xa0] sm:$0xff]
      %v560 = vld [vmem:[#allocation2 + $0xa8] sm:$0xff]
      %v561 = vld [vmem:[#allocation2 + $0xb0] sm:$0xff]
      %v562 = vld [vmem:[#allocation2 + $0xb8] sm:$0xff]
      %v563 = vld [vmem:[#allocation2 + $0xc0] sm:$0xff]
      %v564 = vld [vmem:[#allocation2 + $0xc8] sm:$0xff]
      %v565 = vld [vmem:[#allocation2 + $0xd0] sm:$0xff]
      %v566 = vld [vmem:[#allocation2 + $0xd8] sm:$0xff]
      %v567 = vld [vmem:[#allocation2 + $0xe0] sm:$0xff]
      %v568 = vld [vmem:[#allocation2 + $0xe8] sm:$0xff]
      %v569 = vld [vmem:[#allocation2 + $0xf0] sm:$0xff]
      %v570 = vld [vmem:[#allocation2 + $0xf8] sm:$0xff]
      %v571 = vld [vmem:[#allocation2 + $0x100] sm:$0xff]
      %v572 = vld [vmem:[#allocation2 + $0x108] sm:$0xff]
      %v573 = vld [vmem:[#allocation2 + $0x110] sm:$0xff]
      %v574 = vld [vmem:[#allocation2 + $0x118] sm:$0xff]
      %v575 = vld [vmem:[#allocation2 + $0x120] sm:$0xff]
      %v576 = vld [vmem:[#allocation2 + $0x128] sm:$0xff]
      %v577 = vld [vmem:[#allocation2 + $0x130] sm:$0xff]
      %v578 = vld [vmem:[#allocation2 + $0x138] sm:$0xff]
      %v579 = vld [vmem:[#allocation2 + $0x140] sm:$0xff]
      %v580 = vld [vmem:[#allocation2 + $0x148] sm:$0xff]
      %v581 = vld [vmem:[#allocation2 + $0x150] sm:$0xff]
      %v582 = vld [vmem:[#allocation2 + $0x158] sm:$0xff]
      %v583 = vld [vmem:[#allocation2 + $0x160] sm:$0xff]
      %v584 = vld [vmem:[#allocation2 + $0x168] sm:$0xff]
      %v585 = vld [vmem:[#allocation2 + $0x170] sm:$0xff]
      %v586 = vld [vmem:[#allocation2 + $0x178] sm:$0xff]
      %v587 = vld [vmem:[#allocation2 + $0x180] sm:$0xff]
      %v588 = vld [vmem:[#allocation2 + $0x188] sm:$0xff]
      %v589 = vld [vmem:[#allocation2 + $0x190] sm:$0xff]
      %v590 = vld [vmem:[#allocation2 + $0x198] sm:$0xff]
      %v591 = vld [vmem:[#allocation2 + $0x1a0] sm:$0xff]
      %v592 = vld [vmem:[#allocation2 + $0x1a8] sm:$0xff]
      %v593 = vld [vmem:[#allocation2 + $0x1b0] sm:$0xff]
      %v594 = vld [vmem:[#allocation2 + $0x1b8] sm:$0xff]
      %v595 = vld [vmem:[#allocation2 + $0x1c0] sm:$0xff]
      %v596 = vld [vmem:[#allocation2 + $0x1c8] sm:$0xff]
      %v597 = vld [vmem:[#allocation2 + $0x1d0] sm:$0xff]
      %v598 = vld [vmem:[#allocation2 + $0x1d8] sm:$0xff]
      %v599 = vld [vmem:[#allocation2 + $0x1e0] sm:$0xff]
      %v600 = vld [vmem:[#allocation2 + $0x1e8] sm:$0xff]
      %v601 = vld [vmem:[#allocation2 + $0x1f0] sm:$0xff]
      %v602 = vld [vmem:[#allocation2 + $0x1f8] sm:$0xff]
      %v603 = vpack.c.bf16 %v540, %v539
      %v604 = vpack.c.bf16 %v542, %v541
      %v605 = vpack.c.bf16 %v544, %v543
      %v606 = vpack.c.bf16 %v546, %v545
      %v607 = vpack.c.bf16 %v548, %v547
      %v608 = vpack.c.bf16 %v550, %v549
      %v609 = vpack.c.bf16 %v552, %v551
      %v610 = vpack.c.bf16 %v554, %v553
      %v611 = vpack.c.bf16 %v556, %v555
      %v612 = vpack.c.bf16 %v558, %v557
      %v613 = vpack.c.bf16 %v560, %v559
      %v614 = vpack.c.bf16 %v562, %v561
      %v615 = vpack.c.bf16 %v564, %v563
      %v616 = vpack.c.bf16 %v566, %v565
      %v617 = vpack.c.bf16 %v568, %v567
      %v618 = vpack.c.bf16 %v570, %v569
      %v619 = vpack.c.bf16 %v572, %v571
      %v620 = vpack.c.bf16 %v574, %v573
      %v621 = vpack.c.bf16 %v576, %v575
      %v622 = vpack.c.bf16 %v578, %v577
      %v623 = vpack.c.bf16 %v580, %v579
      %v624 = vpack.c.bf16 %v582, %v581
      %v625 = vpack.c.bf16 %v584, %v583
      %v626 = vpack.c.bf16 %v586, %v585
      %v627 = vpack.c.bf16 %v588, %v587
      %v628 = vpack.c.bf16 %v590, %v589
      %v629 = vpack.c.bf16 %v592, %v591
      %v630 = vpack.c.bf16 %v594, %v593
      %v631 = vpack.c.bf16 %v596, %v595
      %v632 = vpack.c.bf16 %v598, %v597
      %v633 = vpack.c.bf16 %v600, %v599
      %v634 = vpack.c.bf16 %v602, %v601
      %v635 = vld [vmem:[%s3] sm:$0xf]
      %v636 = vld [vmem:[%s3 + $0x4] sm:$0xf]
      %v637 = vld [vmem:[%s3 + $0x8] sm:$0xf]
      %v638 = vld [vmem:[%s3 + $0xc] sm:$0xf]
      %v639 = vld [vmem:[%s3 + $0x10] sm:$0xf]
      %v640 = vld [vmem:[%s3 + $0x14] sm:$0xf]
      %v641 = vld [vmem:[%s3 + $0x18] sm:$0xf]
      %v642 = vld [vmem:[%s3 + $0x1c] sm:$0xf]
      %v643 = vld [vmem:[%s3 + $0x20] sm:$0xf]
      %v644 = vld [vmem:[%s3 + $0x24] sm:$0xf]
      %v645 = vld [vmem:[%s3 + $0x28] sm:$0xf]
      %v646 = vld [vmem:[%s3 + $0x2c] sm:$0xf]
      %v647 = vld [vmem:[%s3 + $0x30] sm:$0xf]
      %v648 = vld [vmem:[%s3 + $0x34] sm:$0xf]
      %v649 = vld [vmem:[%s3 + $0x38] sm:$0xf]
      %v650 = vld [vmem:[%s3 + $0x3c] sm:$0xf]
      %v651 = vld [vmem:[%s388] sm:$0xff]
      %v652 = vld [vmem:[%s388 + $0x8] sm:$0xff]
      %v653 = vld [vmem:[%s388 + $0x10] sm:$0xff]
      %v654 = vld [vmem:[%s388 + $0x18] sm:$0xff]
      %v655 = vld [vmem:[%s388 + $0x20] sm:$0xff]
      %v656 = vld [vmem:[%s388 + $0x28] sm:$0xff]
      %v657 = vld [vmem:[%s388 + $0x30] sm:$0xff]
      %v658 = vld [vmem:[%s388 + $0x38] sm:$0xff]
      %v659 = vld [vmem:[%s388 + $0x40] sm:$0xff]
      %v660 = vld [vmem:[%s388 + $0x48] sm:$0xff]
      %v661 = vld [vmem:[%s388 + $0x50] sm:$0xff]
      %v662 = vld [vmem:[%s388 + $0x58] sm:$0xff]
      %v663 = vld [vmem:[%s388 + $0x60] sm:$0xff]
      %v664 = vld [vmem:[%s388 + $0x68] sm:$0xff]
      %v665 = vld [vmem:[%s388 + $0x70] sm:$0xff]
      %v666 = vld [vmem:[%s388 + $0x78] sm:$0xff]
      %v667 = vld [vmem:[%s388 + $0x80] sm:$0xff]
      %v668 = vld [vmem:[%s388 + $0x88] sm:$0xff]
      %v669 = vld [vmem:[%s388 + $0x90] sm:$0xff]
      %v670 = vld [vmem:[%s388 + $0x98] sm:$0xff]
      %v671 = vld [vmem:[%s388 + $0xa0] sm:$0xff]
      %v672 = vld [vmem:[%s388 + $0xa8] sm:$0xff]
      %v673 = vld [vmem:[%s388 + $0xb0] sm:$0xff]
      %v674 = vld [vmem:[%s388 + $0xb8] sm:$0xff]
      %v675 = vld [vmem:[%s388 + $0xc0] sm:$0xff]
      %v676 = vld [vmem:[%s388 + $0xc8] sm:$0xff]
      %v677 = vld [vmem:[%s388 + $0xd0] sm:$0xff]
      %v678 = vld [vmem:[%s388 + $0xd8] sm:$0xff]
      %v679 = vld [vmem:[%s388 + $0xe0] sm:$0xff]
      %v680 = vld [vmem:[%s388 + $0xe8] sm:$0xff]
      %v681 = vld [vmem:[%s388 + $0xf0] sm:$0xff]
      %v682 = vld [vmem:[%s388 + $0xf8] sm:$0xff]
      %v683 = vld [vmem:[%s388 + $0x100] sm:$0xff]
      %v684 = vld [vmem:[%s388 + $0x108] sm:$0xff]
      %v685 = vld [vmem:[%s388 + $0x110] sm:$0xff]
      %v686 = vld [vmem:[%s388 + $0x118] sm:$0xff]
      %v687 = vld [vmem:[%s388 + $0x120] sm:$0xff]
      %v688 = vld [vmem:[%s388 + $0x128] sm:$0xff]
      %v689 = vld [vmem:[%s388 + $0x130] sm:$0xff]
      %v690 = vld [vmem:[%s388 + $0x138] sm:$0xff]
      %v691 = vld [vmem:[%s388 + $0x140] sm:$0xff]
      %v692 = vld [vmem:[%s388 + $0x148] sm:$0xff]
      %v693 = vld [vmem:[%s388 + $0x150] sm:$0xff]
      %v694 = vld [vmem:[%s388 + $0x158] sm:$0xff]
      %v695 = vld [vmem:[%s388 + $0x160] sm:$0xff]
      %v696 = vld [vmem:[%s388 + $0x168] sm:$0xff]
      %v697 = vld [vmem:[%s388 + $0x170] sm:$0xff]
      %v698 = vld [vmem:[%s388 + $0x178] sm:$0xff]
      %v699 = vld [vmem:[%s388 + $0x180] sm:$0xff]
      %v700 = vld [vmem:[%s388 + $0x188] sm:$0xff]
      %v701 = vld [vmem:[%s388 + $0x190] sm:$0xff]
      %v702 = vld [vmem:[%s388 + $0x198] sm:$0xff]
      %v703 = vld [vmem:[%s388 + $0x1a0] sm:$0xff]
      %v704 = vld [vmem:[%s388 + $0x1a8] sm:$0xff]
      %v705 = vld [vmem:[%s388 + $0x1b0] sm:$0xff]
      %v706 = vld [vmem:[%s388 + $0x1b8] sm:$0xff]
      %v707 = vld [vmem:[%s388 + $0x1c0] sm:$0xff]
      %v708 = vld [vmem:[%s388 + $0x1c8] sm:$0xff]
      %v709 = vld [vmem:[%s388 + $0x1d0] sm:$0xff]
      %v710 = vld [vmem:[%s388 + $0x1d8] sm:$0xff]
      %v711 = vld [vmem:[%s388 + $0x1e0] sm:$0xff]
      %v712 = vld [vmem:[%s388 + $0x1e8] sm:$0xff]
      %v713 = vld [vmem:[%s388 + $0x1f0] sm:$0xff]
      %v714 = vld [vmem:[%s388 + $0x1f8] sm:$0xff]
      %v715 = vpack.c.bf16 %v652, %v651
      %v716 = vpack.c.bf16 %v654, %v653
      %v717 = vpack.c.bf16 %v656, %v655
      %v718 = vpack.c.bf16 %v658, %v657
      %v719 = vpack.c.bf16 %v660, %v659
      %v720 = vpack.c.bf16 %v662, %v661
      %v721 = vpack.c.bf16 %v664, %v663
      %v722 = vpack.c.bf16 %v666, %v665
      %v723 = vpack.c.bf16 %v668, %v667
      %v724 = vpack.c.bf16 %v670, %v669
      %v725 = vpack.c.bf16 %v672, %v671
      %v726 = vpack.c.bf16 %v674, %v673
      %v727 = vpack.c.bf16 %v676, %v675
      %v728 = vpack.c.bf16 %v678, %v677
      %v729 = vpack.c.bf16 %v680, %v679
      %v730 = vpack.c.bf16 %v682, %v681
      %v731 = vpack.c.bf16 %v684, %v683
      %v732 = vpack.c.bf16 %v686, %v685
      %v733 = vpack.c.bf16 %v688, %v687
      %v734 = vpack.c.bf16 %v690, %v689
      %v735 = vpack.c.bf16 %v692, %v691
      %v736 = vpack.c.bf16 %v694, %v693
      %v737 = vpack.c.bf16 %v696, %v695
      %v738 = vpack.c.bf16 %v698, %v697
      %v739 = vpack.c.bf16 %v700, %v699
      %v740 = vpack.c.bf16 %v702, %v701
      %v741 = vpack.c.bf16 %v704, %v703
      %v742 = vpack.c.bf16 %v706, %v705
      %v743 = vpack.c.bf16 %v708, %v707
      %v744 = vpack.c.bf16 %v710, %v709
      %v745 = vpack.c.bf16 %v712, %v711
      %v746 = vpack.c.bf16 %v714, %v713
      %s747 = scalar_lea.vmem %s3, 64
      %v748 = vld [vmem:[%s747] sm:$0xf]
      %v749 = vld [vmem:[%s747 + $0x4] sm:$0xf]
      %v750 = vld [vmem:[%s747 + $0x8] sm:$0xf]
      %v751 = vld [vmem:[%s747 + $0xc] sm:$0xf]
      %v752 = vld [vmem:[%s747 + $0x10] sm:$0xf]
      %v753 = vld [vmem:[%s747 + $0x14] sm:$0xf]
      %v754 = vld [vmem:[%s747 + $0x18] sm:$0xf]
      %v755 = vld [vmem:[%s747 + $0x1c] sm:$0xf]
      %v756 = vld [vmem:[%s747 + $0x20] sm:$0xf]
      %v757 = vld [vmem:[%s747 + $0x24] sm:$0xf]
      %v758 = vld [vmem:[%s747 + $0x28] sm:$0xf]
      %v759 = vld [vmem:[%s747 + $0x2c] sm:$0xf]
      %v760 = vld [vmem:[%s747 + $0x30] sm:$0xf]
      %v761 = vld [vmem:[%s747 + $0x34] sm:$0xf]
      %v762 = vld [vmem:[%s747 + $0x38] sm:$0xf]
      %v763 = vld [vmem:[%s747 + $0x3c] sm:$0xf]
      %v780 = vunpack.c.l.b16 %v748
      %v781 = vunpack.c.l.b16 %v749
      %v782 = vunpack.c.l.b16 %v750
      %v783 = vunpack.c.l.b16 %v751
      %v784 = vunpack.c.l.b16 %v752
      %v785 = vunpack.c.l.b16 %v753
      %v786 = vunpack.c.l.b16 %v754
      %v787 = vunpack.c.l.b16 %v755
      %v788 = vunpack.c.l.b16 %v756
      %v789 = vunpack.c.l.b16 %v757
      %v790 = vunpack.c.l.b16 %v758
      %v791 = vunpack.c.l.b16 %v759
      %v792 = vunpack.c.l.b16 %v760
      %v793 = vunpack.c.l.b16 %v761
      %v794 = vunpack.c.l.b16 %v762
      %v795 = vunpack.c.l.b16 %v763
      %v796 = vpack.c.b16 %v781, %v780
      %v797 = vpack.c.b16 %v783, %v782
      %v798 = vpack.c.b16 %v785, %v784
      %v799 = vpack.c.b16 %v787, %v786
      %v800 = vpack.c.b16 %v789, %v788
      %v801 = vpack.c.b16 %v791, %v790
      %v802 = vpack.c.b16 %v793, %v792
      %v803 = vpack.c.b16 %v795, %v794
      %812 = vmatprep.subr.bf16.mxu0 0
      %813 = vmatpush1.bf16.msra.mxu0 %v803
      %814 = vmatprep.subr.bf16.mxu0 0
      %815 = vmatpush1.bf16.msra.mxu0 %v802
      %816 = vmatprep.subr.bf16.mxu0 0
      %817 = vmatpush1.bf16.msra.mxu0 %v801
      %818 = vmatprep.subr.bf16.mxu0 0
      %819 = vmatpush1.bf16.msra.mxu0 %v800
      %820 = vmatprep.subr.bf16.mxu0 0
      %821 = vmatpush1.bf16.msra.mxu0 %v799
      %822 = vmatprep.subr.bf16.mxu0 0
      %823 = vmatpush1.bf16.msra.mxu0 %v798
      %824 = vmatprep.subr.bf16.mxu0 0
      %825 = vmatpush1.bf16.msra.mxu0 %v797
      %826 = vmatprep.subr.bf16.mxu0 0
      %827 = vmatpush1.bf16.msra.mxu0 %v796
      %828 = vmatprep.subr.bf16.mxu0 0
      %829 = vmatpush2.bf16.msra.mxu0 0
      %830 = vmatprep.subr.bf16.mxu0 0
      %831 = vmatpush2.bf16.msra.mxu0 0
      %832 = vmatprep.subr.bf16.mxu0 0
      %833 = vmatpush2.bf16.msra.mxu0 0
      %834 = vmatprep.subr.bf16.mxu0 0
      %835 = vmatpush2.bf16.msra.mxu0 0
      %836 = vmatprep.subr.bf16.mxu0 0
      %837 = vmatpush2.bf16.msra.mxu0 0
      %838 = vmatprep.subr.bf16.mxu0 0
      %839 = vmatpush2.bf16.msra.mxu0 0
      %840 = vmatprep.subr.bf16.mxu0 0
      %841 = vmatpush2.bf16.msra.mxu0 0
      %842 = vmatprep.subr.bf16.mxu0 0
      %843 = vmatpush2.bf16.msra.mxu0 0
      %844 = vmatprep.mubr.bf16.mxu0 0
      %845 = vmatmul.mubr.bf16.gmra.mxu0 %v715
      %v846 = vpop.f32.mrf.mxu0
      %v847 = vadd.f32 0.0, %v846
      %v848 = vpop.f32.mrf.mxu0
      %v849 = vpop.f32.mrf.mxu0
      %v850 = vadd.f32 0.0, %v849
      %v851 = vpop.f32.mrf.mxu0
      %852 = vmatprep.mubr.bf16.mxu0 0
      %853 = vmatmul.mubr.bf16.gmra.mxu0 %v716
      %v854 = vpop.f32.mrf.mxu0
      %v855 = vpop.f32.mrf.mxu0
      %v856 = vpop.f32.mrf.mxu0
      %v857 = vpop.f32.mrf.mxu0
      %858 = vmatprep.mubr.bf16.mxu0 0
      %859 = vmatmul.mubr.bf16.gmra.mxu0 %v717
      %v860 = vpop.f32.mrf.mxu0
      %v861 = vadd.f32 0.0, %v860
      %v862 = vpop.f32.mrf.mxu0
      %v863 = vpop.f32.mrf.mxu0
      %v864 = vadd.f32 0.0, %v863
      %v865 = vpop.f32.mrf.mxu0
      %866 = vmatprep.mubr.bf16.mxu0 0
      %867 = vmatmul.mubr.bf16.gmra.mxu0 %v718
      %v868 = vpop.f32.mrf.mxu0
      %v869 = vpop.f32.mrf.mxu0
      %v870 = vpop.f32.mrf.mxu0
      %v871 = vpop.f32.mrf.mxu0
      %872 = vmatprep.mubr.bf16.mxu0 0
      %873 = vmatmul.mubr.bf16.gmra.mxu0 %v719
      %v874 = vpop.f32.mrf.mxu0
      %v875 = vadd.f32 0.0, %v874
      %v876 = vpop.f32.mrf.mxu0
      %v877 = vpop.f32.mrf.mxu0
      %v878 = vadd.f32 0.0, %v877
      %v879 = vpop.f32.mrf.mxu0
      %880 = vmatprep.mubr.bf16.mxu0 0
      %881 = vmatmul.mubr.bf16.gmra.mxu0 %v720
      %v882 = vpop.f32.mrf.mxu0
      %v883 = vpop.f32.mrf.mxu0
      %v884 = vpop.f32.mrf.mxu0
      %v885 = vpop.f32.mrf.mxu0
      %886 = vmatprep.mubr.bf16.mxu0 0
      %887 = vmatmul.mubr.bf16.gmra.mxu0 %v721
      %v888 = vpop.f32.mrf.mxu0
      %v889 = vadd.f32 0.0, %v888
      %v890 = vpop.f32.mrf.mxu0
      %v891 = vpop.f32.mrf.mxu0
      %v892 = vadd.f32 0.0, %v891
      %v893 = vpop.f32.mrf.mxu0
      %894 = vmatprep.mubr.bf16.mxu0 0
      %895 = vmatmul.mubr.bf16.gmra.mxu0 %v722
      %v896 = vpop.f32.mrf.mxu0
      %v897 = vpop.f32.mrf.mxu0
      %v898 = vpop.f32.mrf.mxu0
      %v899 = vpop.f32.mrf.mxu0
      %900 = vmatprep.mubr.bf16.mxu0 0
      %901 = vmatmul.mubr.bf16.gmra.mxu0 %v723
      %v902 = vpop.f32.mrf.mxu0
      %v903 = vadd.f32 0.0, %v902
      %v904 = vpop.f32.mrf.mxu0
      %v905 = vpop.f32.mrf.mxu0
      %v906 = vadd.f32 0.0, %v905
      %v907 = vpop.f32.mrf.mxu0
      %908 = vmatprep.mubr.bf16.mxu0 0
      %909 = vmatmul.mubr.bf16.gmra.mxu0 %v724
      %v910 = vpop.f32.mrf.mxu0
      %v911 = vpop.f32.mrf.mxu0
      %v912 = vpop.f32.mrf.mxu0
      %v913 = vpop.f32.mrf.mxu0
      %914 = vmatprep.mubr.bf16.mxu0 0
      %915 = vmatmul.mubr.bf16.gmra.mxu0 %v725
      %v916 = vpop.f32.mrf.mxu0
      %v917 = vadd.f32 0.0, %v916
      %v918 = vpop.f32.mrf.mxu0
      %v919 = vpop.f32.mrf.mxu0
      %v920 = vadd.f32 0.0, %v919
      %v921 = vpop.f32.mrf.mxu0
      %922 = vmatprep.mubr.bf16.mxu0 0
      %923 = vmatmul.mubr.bf16.gmra.mxu0 %v726
      %v924 = vpop.f32.mrf.mxu0
      %v925 = vpop.f32.mrf.mxu0
      %v926 = vpop.f32.mrf.mxu0
      %v927 = vpop.f32.mrf.mxu0
      %928 = vmatprep.mubr.bf16.mxu0 0
      %929 = vmatmul.mubr.bf16.gmra.mxu0 %v727
      %v930 = vpop.f32.mrf.mxu0
      %v931 = vadd.f32 0.0, %v930
      %v932 = vpop.f32.mrf.mxu0
      %v933 = vpop.f32.mrf.mxu0
      %v934 = vadd.f32 0.0, %v933
      %v935 = vpop.f32.mrf.mxu0
      %936 = vmatprep.mubr.bf16.mxu0 0
      %937 = vmatmul.mubr.bf16.gmra.mxu0 %v728
      %v938 = vpop.f32.mrf.mxu0
      %v939 = vpop.f32.mrf.mxu0
      %v940 = vpop.f32.mrf.mxu0
      %v941 = vpop.f32.mrf.mxu0
      %942 = vmatprep.mubr.bf16.mxu0 0
      %943 = vmatmul.mubr.bf16.gmra.mxu0 %v729
      %v944 = vpop.f32.mrf.mxu0
      %v945 = vadd.f32 0.0, %v944
      %v946 = vpop.f32.mrf.mxu0
      %v947 = vpop.f32.mrf.mxu0
      %v948 = vadd.f32 0.0, %v947
      %v949 = vpop.f32.mrf.mxu0
      %950 = vmatprep.mubr.bf16.mxu0 0
      %951 = vmatmul.mubr.bf16.gmra.mxu0 %v730
      %v952 = vpop.f32.mrf.mxu0
      %v953 = vpop.f32.mrf.mxu0
      %v954 = vpop.f32.mrf.mxu0
      %v955 = vpop.f32.mrf.mxu0
      %956 = vmatprep.mubr.bf16.mxu0 0
      %957 = vmatmul.mubr.bf16.gmra.mxu0 %v731
      %v958 = vpop.f32.mrf.mxu0
      %v959 = vadd.f32 0.0, %v958
      %v960 = vpop.f32.mrf.mxu0
      %v961 = vpop.f32.mrf.mxu0
      %v962 = vadd.f32 0.0, %v961
      %v963 = vpop.f32.mrf.mxu0
      %964 = vmatprep.mubr.bf16.mxu0 0
      %965 = vmatmul.mubr.bf16.gmra.mxu0 %v732
      %v966 = vpop.f32.mrf.mxu0
      %v967 = vpop.f32.mrf.mxu0
      %v968 = vpop.f32.mrf.mxu0
      %v969 = vpop.f32.mrf.mxu0
      %970 = vmatprep.mubr.bf16.mxu0 0
      %971 = vmatmul.mubr.bf16.gmra.mxu0 %v733
      %v972 = vpop.f32.mrf.mxu0
      %v973 = vadd.f32 0.0, %v972
      %v974 = vpop.f32.mrf.mxu0
      %v975 = vpop.f32.mrf.mxu0
      %v976 = vadd.f32 0.0, %v975
      %v977 = vpop.f32.mrf.mxu0
      %978 = vmatprep.mubr.bf16.mxu0 0
      %979 = vmatmul.mubr.bf16.gmra.mxu0 %v734
      %v980 = vpop.f32.mrf.mxu0
      %v981 = vpop.f32.mrf.mxu0
      %v982 = vpop.f32.mrf.mxu0
      %v983 = vpop.f32.mrf.mxu0
      %984 = vmatprep.mubr.bf16.mxu0 0
      %985 = vmatmul.mubr.bf16.gmra.mxu0 %v735
      %v986 = vpop.f32.mrf.mxu0
      %v987 = vadd.f32 0.0, %v986
      %v988 = vpop.f32.mrf.mxu0
      %v989 = vpop.f32.mrf.mxu0
      %v990 = vadd.f32 0.0, %v989
      %v991 = vpop.f32.mrf.mxu0
      %992 = vmatprep.mubr.bf16.mxu0 0
      %993 = vmatmul.mubr.bf16.gmra.mxu0 %v736
      %v994 = vpop.f32.mrf.mxu0
      %v995 = vpop.f32.mrf.mxu0
      %v996 = vpop.f32.mrf.mxu0
      %v997 = vpop.f32.mrf.mxu0
      %998 = vmatprep.mubr.bf16.mxu0 0
      %999 = vmatmul.mubr.bf16.gmra.mxu0 %v737
      %v1000 = vpop.f32.mrf.mxu0
      %v1001 = vadd.f32 0.0, %v1000
      %v1002 = vpop.f32.mrf.mxu0
      %v1003 = vpop.f32.mrf.mxu0
      %v1004 = vadd.f32 0.0, %v1003
      %v1005 = vpop.f32.mrf.mxu0
      %1006 = vmatprep.mubr.bf16.mxu0 0
      %1007 = vmatmul.mubr.bf16.gmra.mxu0 %v738
      %v1008 = vpop.f32.mrf.mxu0
      %v1009 = vpop.f32.mrf.mxu0
      %v1010 = vpop.f32.mrf.mxu0
      %v1011 = vpop.f32.mrf.mxu0
      %1012 = vmatprep.mubr.bf16.mxu0 0
      %1013 = vmatmul.mubr.bf16.gmra.mxu0 %v739
      %v1014 = vpop.f32.mrf.mxu0
      %v1015 = vadd.f32 0.0, %v1014
      %v1016 = vpop.f32.mrf.mxu0
      %v1017 = vpop.f32.mrf.mxu0
      %v1018 = vadd.f32 0.0, %v1017
      %v1019 = vpop.f32.mrf.mxu0
      %1020 = vmatprep.mubr.bf16.mxu0 0
      %1021 = vmatmul.mubr.bf16.gmra.mxu0 %v740
      %v1022 = vpop.f32.mrf.mxu0
      %v1023 = vpop.f32.mrf.mxu0
      %v1024 = vpop.f32.mrf.mxu0
      %v1025 = vpop.f32.mrf.mxu0
      %1026 = vmatprep.mubr.bf16.mxu0 0
      %1027 = vmatmul.mubr.bf16.gmra.mxu0 %v741
      %v1028 = vpop.f32.mrf.mxu0
      %v1029 = vadd.f32 0.0, %v1028
      %v1030 = vpop.f32.mrf.mxu0
      %v1031 = vpop.f32.mrf.mxu0
      %v1032 = vadd.f32 0.0, %v1031
      %v1033 = vpop.f32.mrf.mxu0
      %1034 = vmatprep.mubr.bf16.mxu0 0
      %1035 = vmatmul.mubr.bf16.gmra.mxu0 %v742
      %v1036 = vpop.f32.mrf.mxu0
      %v1037 = vpop.f32.mrf.mxu0
      %v1038 = vpop.f32.mrf.mxu0
      %v1039 = vpop.f32.mrf.mxu0
      %1040 = vmatprep.mubr.bf16.mxu0 0
      %1041 = vmatmul.mubr.bf16.gmra.mxu0 %v743
      %v1042 = vpop.f32.mrf.mxu0
      %v1043 = vadd.f32 0.0, %v1042
      %v1044 = vpop.f32.mrf.mxu0
      %v1045 = vpop.f32.mrf.mxu0
      %v1046 = vadd.f32 0.0, %v1045
      %v1047 = vpop.f32.mrf.mxu0
      %1048 = vmatprep.mubr.bf16.mxu0 0
      %1049 = vmatmul.mubr.bf16.gmra.mxu0 %v744
      %v1050 = vpop.f32.mrf.mxu0
      %v1051 = vpop.f32.mrf.mxu0
      %v1052 = vpop.f32.mrf.mxu0
      %v1053 = vpop.f32.mrf.mxu0
      %1054 = vmatprep.mubr.bf16.mxu0 0
      %1055 = vmatmul.mubr.bf16.gmra.mxu0 %v745
      %v1056 = vpop.f32.mrf.mxu0
      %v1057 = vadd.f32 0.0, %v1056
      %v1058 = vpop.f32.mrf.mxu0
      %v1059 = vpop.f32.mrf.mxu0
      %v1060 = vadd.f32 0.0, %v1059
      %v1061 = vpop.f32.mrf.mxu0
      %1062 = vmatprep.mubr.bf16.mxu0 0
      %1063 = vmatmul.mubr.bf16.gmra.mxu0 %v746
      %v1064 = vpop.f32.mrf.mxu0
      %v1065 = vpop.f32.mrf.mxu0
      %v1066 = vpop.f32.mrf.mxu0
      %v1067 = vpop.f32.mrf.mxu0
      %1068 = vdwg.mxu0
      %v1085 = vunpack.c.l.b16 %v635
      %v1086 = vunpack.c.l.b16 %v636
      %v1087 = vunpack.c.l.b16 %v637
      %v1088 = vunpack.c.l.b16 %v638
      %v1089 = vunpack.c.l.b16 %v639
      %v1090 = vunpack.c.l.b16 %v640
      %v1091 = vunpack.c.l.b16 %v641
      %v1092 = vunpack.c.l.b16 %v642
      %v1093 = vunpack.c.l.b16 %v643
      %v1094 = vunpack.c.l.b16 %v644
      %v1095 = vunpack.c.l.b16 %v645
      %v1096 = vunpack.c.l.b16 %v646
      %v1097 = vunpack.c.l.b16 %v647
      %v1098 = vunpack.c.l.b16 %v648
      %v1099 = vunpack.c.l.b16 %v649
      %v1100 = vunpack.c.l.b16 %v650
      %v1101 = vpack.c.b16 %v1086, %v1085
      %v1102 = vpack.c.b16 %v1088, %v1087
      %v1103 = vpack.c.b16 %v1090, %v1089
      %v1104 = vpack.c.b16 %v1092, %v1091
      %v1105 = vpack.c.b16 %v1094, %v1093
      %v1106 = vpack.c.b16 %v1096, %v1095
      %v1107 = vpack.c.b16 %v1098, %v1097
      %v1108 = vpack.c.b16 %v1100, %v1099
      %1117 = vmatprep.subr.bf16.mxu0 0
      %1118 = vmatpush1.bf16.msra.mxu0 %v1108
      %1119 = vmatprep.subr.bf16.mxu0 0
      %1120 = vmatpush1.bf16.msra.mxu0 %v1107
      %1121 = vmatprep.subr.bf16.mxu0 0
      %1122 = vmatpush1.bf16.msra.mxu0 %v1106
      %1123 = vmatprep.subr.bf16.mxu0 0
      %1124 = vmatpush1.bf16.msra.mxu0 %v1105
      %1125 = vmatprep.subr.bf16.mxu0 0
      %1126 = vmatpush1.bf16.msra.mxu0 %v1104
      %1127 = vmatprep.subr.bf16.mxu0 0
      %1128 = vmatpush1.bf16.msra.mxu0 %v1103
      %1129 = vmatprep.subr.bf16.mxu0 0
      %1130 = vmatpush1.bf16.msra.mxu0 %v1102
      %1131 = vmatprep.subr.bf16.mxu0 0
      %1132 = vmatpush1.bf16.msra.mxu0 %v1101
      %1133 = vmatprep.subr.bf16.mxu0 0
      %1134 = vmatpush2.bf16.msra.mxu0 0
      %1135 = vmatprep.subr.bf16.mxu0 0
      %1136 = vmatpush2.bf16.msra.mxu0 0
      %1137 = vmatprep.subr.bf16.mxu0 0
      %1138 = vmatpush2.bf16.msra.mxu0 0
      %1139 = vmatprep.subr.bf16.mxu0 0
      %1140 = vmatpush2.bf16.msra.mxu0 0
      %1141 = vmatprep.subr.bf16.mxu0 0
      %1142 = vmatpush2.bf16.msra.mxu0 0
      %1143 = vmatprep.subr.bf16.mxu0 0
      %1144 = vmatpush2.bf16.msra.mxu0 0
      %1145 = vmatprep.subr.bf16.mxu0 0
      %1146 = vmatpush2.bf16.msra.mxu0 0
      %1147 = vmatprep.subr.bf16.mxu0 0
      %1148 = vmatpush2.bf16.msra.mxu0 0
      %1149 = vmatprep.mubr.bf16.mxu0 0
      %1150 = vmatmul.mubr.bf16.gmra.mxu0 %v603
      %v1151 = vpop.f32.mrf.mxu0
      %v1152 = vadd.f32 %v847, %v1151
      %v1153 = vpop.f32.mrf.mxu0
      %v1154 = vpop.f32.mrf.mxu0
      %v1155 = vadd.f32 %v850, %v1154
      %v1156 = vpop.f32.mrf.mxu0
      %1157 = vmatprep.mubr.bf16.mxu0 0
      %1158 = vmatmul.mubr.bf16.gmra.mxu0 %v604
      %v1159 = vpop.f32.mrf.mxu0
      %v1160 = vpop.f32.mrf.mxu0
      %v1161 = vpop.f32.mrf.mxu0
      %v1162 = vpop.f32.mrf.mxu0
      %1163 = vmatprep.mubr.bf16.mxu0 0
      %1164 = vmatmul.mubr.bf16.gmra.mxu0 %v605
      %v1165 = vpop.f32.mrf.mxu0
      %v1166 = vadd.f32 %v861, %v1165
      %v1167 = vpop.f32.mrf.mxu0
      %v1168 = vpop.f32.mrf.mxu0
      %v1169 = vadd.f32 %v864, %v1168
      %v1170 = vpop.f32.mrf.mxu0
      %1171 = vmatprep.mubr.bf16.mxu0 0
      %1172 = vmatmul.mubr.bf16.gmra.mxu0 %v606
      %v1173 = vpop.f32.mrf.mxu0
      %v1174 = vpop.f32.mrf.mxu0
      %v1175 = vpop.f32.mrf.mxu0
      %v1176 = vpop.f32.mrf.mxu0
      %1177 = vmatprep.mubr.bf16.mxu0 0
      %1178 = vmatmul.mubr.bf16.gmra.mxu0 %v607
      %v1179 = vpop.f32.mrf.mxu0
      %v1180 = vadd.f32 %v875, %v1179
      %v1181 = vpop.f32.mrf.mxu0
      %v1182 = vpop.f32.mrf.mxu0
      %v1183 = vadd.f32 %v878, %v1182
      %v1184 = vpop.f32.mrf.mxu0
      %1185 = vmatprep.mubr.bf16.mxu0 0
      %1186 = vmatmul.mubr.bf16.gmra.mxu0 %v608
      %v1187 = vpop.f32.mrf.mxu0
      %v1188 = vpop.f32.mrf.mxu0
      %v1189 = vpop.f32.mrf.mxu0
      %v1190 = vpop.f32.mrf.mxu0
      %1191 = vmatprep.mubr.bf16.mxu0 0
      %1192 = vmatmul.mubr.bf16.gmra.mxu0 %v609
      %v1193 = vpop.f32.mrf.mxu0
      %v1194 = vadd.f32 %v889, %v1193
      %v1195 = vpop.f32.mrf.mxu0
      %v1196 = vpop.f32.mrf.mxu0
      %v1197 = vadd.f32 %v892, %v1196
      %v1198 = vpop.f32.mrf.mxu0
      %1199 = vmatprep.mubr.bf16.mxu0 0
      %1200 = vmatmul.mubr.bf16.gmra.mxu0 %v610
      %v1201 = vpop.f32.mrf.mxu0
      %v1202 = vpop.f32.mrf.mxu0
      %v1203 = vpop.f32.mrf.mxu0
      %v1204 = vpop.f32.mrf.mxu0
      %1205 = vmatprep.mubr.bf16.mxu0 0
      %1206 = vmatmul.mubr.bf16.gmra.mxu0 %v611
      %v1207 = vpop.f32.mrf.mxu0
      %v1208 = vadd.f32 %v903, %v1207
      %v1209 = vpop.f32.mrf.mxu0
      %v1210 = vpop.f32.mrf.mxu0
      %v1211 = vadd.f32 %v906, %v1210
      %v1212 = vpop.f32.mrf.mxu0
      %1213 = vmatprep.mubr.bf16.mxu0 0
      %1214 = vmatmul.mubr.bf16.gmra.mxu0 %v612
      %v1215 = vpop.f32.mrf.mxu0
      %v1216 = vpop.f32.mrf.mxu0
      %v1217 = vpop.f32.mrf.mxu0
      %v1218 = vpop.f32.mrf.mxu0
      %1219 = vmatprep.mubr.bf16.mxu0 0
      %1220 = vmatmul.mubr.bf16.gmra.mxu0 %v613
      %v1221 = vpop.f32.mrf.mxu0
      %v1222 = vadd.f32 %v917, %v1221
      %v1223 = vpop.f32.mrf.mxu0
      %v1224 = vpop.f32.mrf.mxu0
      %v1225 = vadd.f32 %v920, %v1224
      %v1226 = vpop.f32.mrf.mxu0
      %1227 = vmatprep.mubr.bf16.mxu0 0
      %1228 = vmatmul.mubr.bf16.gmra.mxu0 %v614
      %v1229 = vpop.f32.mrf.mxu0
      %v1230 = vpop.f32.mrf.mxu0
      %v1231 = vpop.f32.mrf.mxu0
      %v1232 = vpop.f32.mrf.mxu0
      %1233 = vmatprep.mubr.bf16.mxu0 0
      %1234 = vmatmul.mubr.bf16.gmra.mxu0 %v615
      %v1235 = vpop.f32.mrf.mxu0
      %v1236 = vadd.f32 %v931, %v1235
      %v1237 = vpop.f32.mrf.mxu0
      %v1238 = vpop.f32.mrf.mxu0
      %v1239 = vadd.f32 %v934, %v1238
      %v1240 = vpop.f32.mrf.mxu0
      %1241 = vmatprep.mubr.bf16.mxu0 0
      %1242 = vmatmul.mubr.bf16.gmra.mxu0 %v616
      %v1243 = vpop.f32.mrf.mxu0
      %v1244 = vpop.f32.mrf.mxu0
      %v1245 = vpop.f32.mrf.mxu0
      %v1246 = vpop.f32.mrf.mxu0
      %1247 = vmatprep.mubr.bf16.mxu0 0
      %1248 = vmatmul.mubr.bf16.gmra.mxu0 %v617
      %v1249 = vpop.f32.mrf.mxu0
      %v1250 = vadd.f32 %v945, %v1249
      %v1251 = vpop.f32.mrf.mxu0
      %v1252 = vpop.f32.mrf.mxu0
      %v1253 = vadd.f32 %v948, %v1252
      %v1254 = vpop.f32.mrf.mxu0
      %1255 = vmatprep.mubr.bf16.mxu0 0
      %1256 = vmatmul.mubr.bf16.gmra.mxu0 %v618
      %v1257 = vpop.f32.mrf.mxu0
      %v1258 = vpop.f32.mrf.mxu0
      %v1259 = vpop.f32.mrf.mxu0
      %v1260 = vpop.f32.mrf.mxu0
      %1261 = vmatprep.mubr.bf16.mxu0 0
      %1262 = vmatmul.mubr.bf16.gmra.mxu0 %v619
      %v1263 = vpop.f32.mrf.mxu0
      %v1264 = vadd.f32 %v959, %v1263
      %v1265 = vpop.f32.mrf.mxu0
      %v1266 = vpop.f32.mrf.mxu0
      %v1267 = vadd.f32 %v962, %v1266
      %v1268 = vpop.f32.mrf.mxu0
      %1269 = vmatprep.mubr.bf16.mxu0 0
      %1270 = vmatmul.mubr.bf16.gmra.mxu0 %v620
      %v1271 = vpop.f32.mrf.mxu0
      %v1272 = vpop.f32.mrf.mxu0
      %v1273 = vpop.f32.mrf.mxu0
      %v1274 = vpop.f32.mrf.mxu0
      %1275 = vmatprep.mubr.bf16.mxu0 0
      %1276 = vmatmul.mubr.bf16.gmra.mxu0 %v621
      %v1277 = vpop.f32.mrf.mxu0
      %v1278 = vadd.f32 %v973, %v1277
      %v1279 = vpop.f32.mrf.mxu0
      %v1280 = vpop.f32.mrf.mxu0
      %v1281 = vadd.f32 %v976, %v1280
      %v1282 = vpop.f32.mrf.mxu0
      %1283 = vmatprep.mubr.bf16.mxu0 0
      %1284 = vmatmul.mubr.bf16.gmra.mxu0 %v622
      %v1285 = vpop.f32.mrf.mxu0
      %v1286 = vpop.f32.mrf.mxu0
      %v1287 = vpop.f32.mrf.mxu0
      %v1288 = vpop.f32.mrf.mxu0
      %1289 = vmatprep.mubr.bf16.mxu0 0
      %1290 = vmatmul.mubr.bf16.gmra.mxu0 %v623
      %v1291 = vpop.f32.mrf.mxu0
      %v1292 = vadd.f32 %v987, %v1291
      %v1293 = vpop.f32.mrf.mxu0
      %v1294 = vpop.f32.mrf.mxu0
      %v1295 = vadd.f32 %v990, %v1294
      %v1296 = vpop.f32.mrf.mxu0
      %1297 = vmatprep.mubr.bf16.mxu0 0
      %1298 = vmatmul.mubr.bf16.gmra.mxu0 %v624
      %v1299 = vpop.f32.mrf.mxu0
      %v1300 = vpop.f32.mrf.mxu0
      %v1301 = vpop.f32.mrf.mxu0
      %v1302 = vpop.f32.mrf.mxu0
      %1303 = vmatprep.mubr.bf16.mxu0 0
      %1304 = vmatmul.mubr.bf16.gmra.mxu0 %v625
      %v1305 = vpop.f32.mrf.mxu0
      %v1306 = vadd.f32 %v1001, %v1305
      %v1307 = vpop.f32.mrf.mxu0
      %v1308 = vpop.f32.mrf.mxu0
      %v1309 = vadd.f32 %v1004, %v1308
      %v1310 = vpop.f32.mrf.mxu0
      %1311 = vmatprep.mubr.bf16.mxu0 0
      %1312 = vmatmul.mubr.bf16.gmra.mxu0 %v626
      %v1313 = vpop.f32.mrf.mxu0
      %v1314 = vpop.f32.mrf.mxu0
      %v1315 = vpop.f32.mrf.mxu0
      %v1316 = vpop.f32.mrf.mxu0
      %1317 = vmatprep.mubr.bf16.mxu0 0
      %1318 = vmatmul.mubr.bf16.gmra.mxu0 %v627
      %v1319 = vpop.f32.mrf.mxu0
      %v1320 = vadd.f32 %v1015, %v1319
      %v1321 = vpop.f32.mrf.mxu0
      %v1322 = vpop.f32.mrf.mxu0
      %v1323 = vadd.f32 %v1018, %v1322
      %v1324 = vpop.f32.mrf.mxu0
      %1325 = vmatprep.mubr.bf16.mxu0 0
      %1326 = vmatmul.mubr.bf16.gmra.mxu0 %v628
      %v1327 = vpop.f32.mrf.mxu0
      %v1328 = vpop.f32.mrf.mxu0
      %v1329 = vpop.f32.mrf.mxu0
      %v1330 = vpop.f32.mrf.mxu0
      %1331 = vmatprep.mubr.bf16.mxu0 0
      %1332 = vmatmul.mubr.bf16.gmra.mxu0 %v629
      %v1333 = vpop.f32.mrf.mxu0
      %v1334 = vadd.f32 %v1029, %v1333
      %v1335 = vpop.f32.mrf.mxu0
      %v1336 = vpop.f32.mrf.mxu0
      %v1337 = vadd.f32 %v1032, %v1336
      %v1338 = vpop.f32.mrf.mxu0
      %1339 = vmatprep.mubr.bf16.mxu0 0
      %1340 = vmatmul.mubr.bf16.gmra.mxu0 %v630
      %v1341 = vpop.f32.mrf.mxu0
      %v1342 = vpop.f32.mrf.mxu0
      %v1343 = vpop.f32.mrf.mxu0
      %v1344 = vpop.f32.mrf.mxu0
      %1345 = vmatprep.mubr.bf16.mxu0 0
      %1346 = vmatmul.mubr.bf16.gmra.mxu0 %v631
      %v1347 = vpop.f32.mrf.mxu0
      %v1348 = vadd.f32 %v1043, %v1347
      %v1349 = vpop.f32.mrf.mxu0
      %v1350 = vpop.f32.mrf.mxu0
      %v1351 = vadd.f32 %v1046, %v1350
      %v1352 = vpop.f32.mrf.mxu0
      %1353 = vmatprep.mubr.bf16.mxu0 0
      %1354 = vmatmul.mubr.bf16.gmra.mxu0 %v632
      %v1355 = vpop.f32.mrf.mxu0
      %v1356 = vpop.f32.mrf.mxu0
      %v1357 = vpop.f32.mrf.mxu0
      %v1358 = vpop.f32.mrf.mxu0
      %1359 = vmatprep.mubr.bf16.mxu0 0
      %1360 = vmatmul.mubr.bf16.gmra.mxu0 %v633
      %v1361 = vpop.f32.mrf.mxu0
      %v1362 = vadd.f32 %v1057, %v1361
      %v1363 = vpop.f32.mrf.mxu0
      %v1364 = vpop.f32.mrf.mxu0
      %v1365 = vadd.f32 %v1060, %v1364
      %v1366 = vpop.f32.mrf.mxu0
      %1367 = vmatprep.mubr.bf16.mxu0 0
      %1368 = vmatmul.mubr.bf16.gmra.mxu0 %v634
      %v1369 = vpop.f32.mrf.mxu0
      %v1370 = vpop.f32.mrf.mxu0
      %v1371 = vpop.f32.mrf.mxu0
      %v1372 = vpop.f32.mrf.mxu0
      %1373 = vdwg.mxu0
      %v1374 = vld [vmem:[%s398] sm:$0xff]
      %v1375 = vld [vmem:[%s398 + $0x8] sm:$0xff]
      %v1376 = vld [vmem:[%s398 + $0x10] sm:$0xff]
      %v1377 = vld [vmem:[%s398 + $0x18] sm:$0xff]
      %v1378 = vld [vmem:[%s398 + $0x20] sm:$0xff]
      %v1379 = vld [vmem:[%s398 + $0x28] sm:$0xff]
      %v1380 = vld [vmem:[%s398 + $0x30] sm:$0xff]
      %v1381 = vld [vmem:[%s398 + $0x38] sm:$0xff]
      %v1382 = vld [vmem:[%s398 + $0x40] sm:$0xff]
      %v1383 = vld [vmem:[%s398 + $0x48] sm:$0xff]
      %v1384 = vld [vmem:[%s398 + $0x50] sm:$0xff]
      %v1385 = vld [vmem:[%s398 + $0x58] sm:$0xff]
      %v1386 = vld [vmem:[%s398 + $0x60] sm:$0xff]
      %v1387 = vld [vmem:[%s398 + $0x68] sm:$0xff]
      %v1388 = vld [vmem:[%s398 + $0x70] sm:$0xff]
      %v1389 = vld [vmem:[%s398 + $0x78] sm:$0xff]
      %v1390 = vld [vmem:[%s398 + $0x80] sm:$0xff]
      %v1391 = vld [vmem:[%s398 + $0x88] sm:$0xff]
      %v1392 = vld [vmem:[%s398 + $0x90] sm:$0xff]
      %v1393 = vld [vmem:[%s398 + $0x98] sm:$0xff]
      %v1394 = vld [vmem:[%s398 + $0xa0] sm:$0xff]
      %v1395 = vld [vmem:[%s398 + $0xa8] sm:$0xff]
      %v1396 = vld [vmem:[%s398 + $0xb0] sm:$0xff]
      %v1397 = vld [vmem:[%s398 + $0xb8] sm:$0xff]
      %v1398 = vld [vmem:[%s398 + $0xc0] sm:$0xff]
      %v1399 = vld [vmem:[%s398 + $0xc8] sm:$0xff]
      %v1400 = vld [vmem:[%s398 + $0xd0] sm:$0xff]
      %v1401 = vld [vmem:[%s398 + $0xd8] sm:$0xff]
      %v1402 = vld [vmem:[%s398 + $0xe0] sm:$0xff]
      %v1403 = vld [vmem:[%s398 + $0xe8] sm:$0xff]
      %v1404 = vld [vmem:[%s398 + $0xf0] sm:$0xff]
      %v1405 = vld [vmem:[%s398 + $0xf8] sm:$0xff]
      %v1406 = vld [vmem:[%s398 + $0x100] sm:$0xff]
      %v1407 = vld [vmem:[%s398 + $0x108] sm:$0xff]
      %v1408 = vld [vmem:[%s398 + $0x110] sm:$0xff]
      %v1409 = vld [vmem:[%s398 + $0x118] sm:$0xff]
      %v1410 = vld [vmem:[%s398 + $0x120] sm:$0xff]
      %v1411 = vld [vmem:[%s398 + $0x128] sm:$0xff]
      %v1412 = vld [vmem:[%s398 + $0x130] sm:$0xff]
      %v1413 = vld [vmem:[%s398 + $0x138] sm:$0xff]
      %v1414 = vld [vmem:[%s398 + $0x140] sm:$0xff]
      %v1415 = vld [vmem:[%s398 + $0x148] sm:$0xff]
      %v1416 = vld [vmem:[%s398 + $0x150] sm:$0xff]
      %v1417 = vld [vmem:[%s398 + $0x158] sm:$0xff]
      %v1418 = vld [vmem:[%s398 + $0x160] sm:$0xff]
      %v1419 = vld [vmem:[%s398 + $0x168] sm:$0xff]
      %v1420 = vld [vmem:[%s398 + $0x170] sm:$0xff]
      %v1421 = vld [vmem:[%s398 + $0x178] sm:$0xff]
      %v1422 = vld [vmem:[%s398 + $0x180] sm:$0xff]
      %v1423 = vld [vmem:[%s398 + $0x188] sm:$0xff]
      %v1424 = vld [vmem:[%s398 + $0x190] sm:$0xff]
      %v1425 = vld [vmem:[%s398 + $0x198] sm:$0xff]
      %v1426 = vld [vmem:[%s398 + $0x1a0] sm:$0xff]
      %v1427 = vld [vmem:[%s398 + $0x1a8] sm:$0xff]
      %v1428 = vld [vmem:[%s398 + $0x1b0] sm:$0xff]
      %v1429 = vld [vmem:[%s398 + $0x1b8] sm:$0xff]
      %v1430 = vld [vmem:[%s398 + $0x1c0] sm:$0xff]
      %v1431 = vld [vmem:[%s398 + $0x1c8] sm:$0xff]
      %v1432 = vld [vmem:[%s398 + $0x1d0] sm:$0xff]
      %v1433 = vld [vmem:[%s398 + $0x1d8] sm:$0xff]
      %v1434 = vld [vmem:[%s398 + $0x1e0] sm:$0xff]
      %v1435 = vld [vmem:[%s398 + $0x1e8] sm:$0xff]
      %v1436 = vld [vmem:[%s398 + $0x1f0] sm:$0xff]
      %v1437 = vld [vmem:[%s398 + $0x1f8] sm:$0xff]
      %v1438 = vpack.c.bf16 %v1375, %v1374
      %v1439 = vpack.c.bf16 %v1377, %v1376
      %v1440 = vpack.c.bf16 %v1379, %v1378
      %v1441 = vpack.c.bf16 %v1381, %v1380
      %v1442 = vpack.c.bf16 %v1383, %v1382
      %v1443 = vpack.c.bf16 %v1385, %v1384
      %v1444 = vpack.c.bf16 %v1387, %v1386
      %v1445 = vpack.c.bf16 %v1389, %v1388
      %v1446 = vpack.c.bf16 %v1391, %v1390
      %v1447 = vpack.c.bf16 %v1393, %v1392
      %v1448 = vpack.c.bf16 %v1395, %v1394
      %v1449 = vpack.c.bf16 %v1397, %v1396
      %v1450 = vpack.c.bf16 %v1399, %v1398
      %v1451 = vpack.c.bf16 %v1401, %v1400
      %v1452 = vpack.c.bf16 %v1403, %v1402
      %v1453 = vpack.c.bf16 %v1405, %v1404
      %v1454 = vpack.c.bf16 %v1407, %v1406
      %v1455 = vpack.c.bf16 %v1409, %v1408
      %v1456 = vpack.c.bf16 %v1411, %v1410
      %v1457 = vpack.c.bf16 %v1413, %v1412
      %v1458 = vpack.c.bf16 %v1415, %v1414
      %v1459 = vpack.c.bf16 %v1417, %v1416
      %v1460 = vpack.c.bf16 %v1419, %v1418
      %v1461 = vpack.c.bf16 %v1421, %v1420
      %v1462 = vpack.c.bf16 %v1423, %v1422
      %v1463 = vpack.c.bf16 %v1425, %v1424
      %v1464 = vpack.c.bf16 %v1427, %v1426
      %v1465 = vpack.c.bf16 %v1429, %v1428
      %v1466 = vpack.c.bf16 %v1431, %v1430
      %v1467 = vpack.c.bf16 %v1433, %v1432
      %v1468 = vpack.c.bf16 %v1435, %v1434
      %v1469 = vpack.c.bf16 %v1437, %v1436
      %s1470 = scalar_lea.vmem %s3, 128
      %v1471 = vld [vmem:[%s1470] sm:$0xf]
      %v1472 = vld [vmem:[%s1470 + $0x4] sm:$0xf]
      %v1473 = vld [vmem:[%s1470 + $0x8] sm:$0xf]
      %v1474 = vld [vmem:[%s1470 + $0xc] sm:$0xf]
      %v1475 = vld [vmem:[%s1470 + $0x10] sm:$0xf]
      %v1476 = vld [vmem:[%s1470 + $0x14] sm:$0xf]
      %v1477 = vld [vmem:[%s1470 + $0x18] sm:$0xf]
      %v1478 = vld [vmem:[%s1470 + $0x1c] sm:$0xf]
      %v1479 = vld [vmem:[%s1470 + $0x20] sm:$0xf]
      %v1480 = vld [vmem:[%s1470 + $0x24] sm:$0xf]
      %v1481 = vld [vmem:[%s1470 + $0x28] sm:$0xf]
      %v1482 = vld [vmem:[%s1470 + $0x2c] sm:$0xf]
      %v1483 = vld [vmem:[%s1470 + $0x30] sm:$0xf]
      %v1484 = vld [vmem:[%s1470 + $0x34] sm:$0xf]
      %v1485 = vld [vmem:[%s1470 + $0x38] sm:$0xf]
      %v1486 = vld [vmem:[%s1470 + $0x3c] sm:$0xf]
      %v1503 = vunpack.c.l.b16 %v1471
      %v1504 = vunpack.c.l.b16 %v1472
      %v1505 = vunpack.c.l.b16 %v1473
      %v1506 = vunpack.c.l.b16 %v1474
      %v1507 = vunpack.c.l.b16 %v1475
      %v1508 = vunpack.c.l.b16 %v1476
      %v1509 = vunpack.c.l.b16 %v1477
      %v1510 = vunpack.c.l.b16 %v1478
      %v1511 = vunpack.c.l.b16 %v1479
      %v1512 = vunpack.c.l.b16 %v1480
      %v1513 = vunpack.c.l.b16 %v1481
      %v1514 = vunpack.c.l.b16 %v1482
      %v1515 = vunpack.c.l.b16 %v1483
      %v1516 = vunpack.c.l.b16 %v1484
      %v1517 = vunpack.c.l.b16 %v1485
      %v1518 = vunpack.c.l.b16 %v1486
      %v1519 = vpack.c.b16 %v1504, %v1503
      %v1520 = vpack.c.b16 %v1506, %v1505
      %v1521 = vpack.c.b16 %v1508, %v1507
      %v1522 = vpack.c.b16 %v1510, %v1509
      %v1523 = vpack.c.b16 %v1512, %v1511
      %v1524 = vpack.c.b16 %v1514, %v1513
      %v1525 = vpack.c.b16 %v1516, %v1515
      %v1526 = vpack.c.b16 %v1518, %v1517
      %1535 = vmatprep.subr.bf16.mxu0 0
      %1536 = vmatpush1.bf16.msra.mxu0 %v1526
      %1537 = vmatprep.subr.bf16.mxu0 0
      %1538 = vmatpush1.bf16.msra.mxu0 %v1525
      %1539 = vmatprep.subr.bf16.mxu0 0
      %1540 = vmatpush1.bf16.msra.mxu0 %v1524
      %1541 = vmatprep.subr.bf16.mxu0 0
      %1542 = vmatpush1.bf16.msra.mxu0 %v1523
      %1543 = vmatprep.subr.bf16.mxu0 0
      %1544 = vmatpush1.bf16.msra.mxu0 %v1522
      %1545 = vmatprep.subr.bf16.mxu0 0
      %1546 = vmatpush1.bf16.msra.mxu0 %v1521
      %1547 = vmatprep.subr.bf16.mxu0 0
      %1548 = vmatpush1.bf16.msra.mxu0 %v1520
      %1549 = vmatprep.subr.bf16.mxu0 0
      %1550 = vmatpush1.bf16.msra.mxu0 %v1519
      %1551 = vmatprep.subr.bf16.mxu0 0
      %1552 = vmatpush2.bf16.msra.mxu0 0
      %1553 = vmatprep.subr.bf16.mxu0 0
      %1554 = vmatpush2.bf16.msra.mxu0 0
      %1555 = vmatprep.subr.bf16.mxu0 0
      %1556 = vmatpush2.bf16.msra.mxu0 0
      %1557 = vmatprep.subr.bf16.mxu0 0
      %1558 = vmatpush2.bf16.msra.mxu0 0
      %1559 = vmatprep.subr.bf16.mxu0 0
      %1560 = vmatpush2.bf16.msra.mxu0 0
      %1561 = vmatprep.subr.bf16.mxu0 0
      %1562 = vmatpush2.bf16.msra.mxu0 0
      %1563 = vmatprep.subr.bf16.mxu0 0
      %1564 = vmatpush2.bf16.msra.mxu0 0
      %1565 = vmatprep.subr.bf16.mxu0 0
      %1566 = vmatpush2.bf16.msra.mxu0 0
      %1567 = vmatprep.mubr.bf16.mxu0 0
      %1568 = vmatmul.mubr.bf16.gmra.mxu0 %v1438
      %v1569 = vpop.f32.mrf.mxu0
      %v1570 = vadd.f32 0.0, %v1569
      %v1571 = vpop.f32.mrf.mxu0
      %v1572 = vpop.f32.mrf.mxu0
      %v1573 = vadd.f32 0.0, %v1572
      %v1574 = vpop.f32.mrf.mxu0
      %1575 = vmatprep.mubr.bf16.mxu0 0
      %1576 = vmatmul.mubr.bf16.gmra.mxu0 %v1439
      %v1577 = vpop.f32.mrf.mxu0
      %v1578 = vpop.f32.mrf.mxu0
      %v1579 = vpop.f32.mrf.mxu0
      %v1580 = vpop.f32.mrf.mxu0
      %1581 = vmatprep.mubr.bf16.mxu0 0
      %1582 = vmatmul.mubr.bf16.gmra.mxu0 %v1440
      %v1583 = vpop.f32.mrf.mxu0
      %v1584 = vadd.f32 0.0, %v1583
      %v1585 = vpop.f32.mrf.mxu0
      %v1586 = vpop.f32.mrf.mxu0
      %v1587 = vadd.f32 0.0, %v1586
      %v1588 = vpop.f32.mrf.mxu0
      %1589 = vmatprep.mubr.bf16.mxu0 0
      %1590 = vmatmul.mubr.bf16.gmra.mxu0 %v1441
      %v1591 = vpop.f32.mrf.mxu0
      %v1592 = vpop.f32.mrf.mxu0
      %v1593 = vpop.f32.mrf.mxu0
      %v1594 = vpop.f32.mrf.mxu0
      %1595 = vmatprep.mubr.bf16.mxu0 0
      %1596 = vmatmul.mubr.bf16.gmra.mxu0 %v1442
      %v1597 = vpop.f32.mrf.mxu0
      %v1598 = vadd.f32 0.0, %v1597
      %v1599 = vpop.f32.mrf.mxu0
      %v1600 = vpop.f32.mrf.mxu0
      %v1601 = vadd.f32 0.0, %v1600
      %v1602 = vpop.f32.mrf.mxu0
      %1603 = vmatprep.mubr.bf16.mxu0 0
      %1604 = vmatmul.mubr.bf16.gmra.mxu0 %v1443
      %v1605 = vpop.f32.mrf.mxu0
      %v1606 = vpop.f32.mrf.mxu0
      %v1607 = vpop.f32.mrf.mxu0
      %v1608 = vpop.f32.mrf.mxu0
      %1609 = vmatprep.mubr.bf16.mxu0 0
      %1610 = vmatmul.mubr.bf16.gmra.mxu0 %v1444
      %v1611 = vpop.f32.mrf.mxu0
      %v1612 = vadd.f32 0.0, %v1611
      %v1613 = vpop.f32.mrf.mxu0
      %v1614 = vpop.f32.mrf.mxu0
      %v1615 = vadd.f32 0.0, %v1614
      %v1616 = vpop.f32.mrf.mxu0
      %1617 = vmatprep.mubr.bf16.mxu0 0
      %1618 = vmatmul.mubr.bf16.gmra.mxu0 %v1445
      %v1619 = vpop.f32.mrf.mxu0
      %v1620 = vpop.f32.mrf.mxu0
      %v1621 = vpop.f32.mrf.mxu0
      %v1622 = vpop.f32.mrf.mxu0
      %1623 = vmatprep.mubr.bf16.mxu0 0
      %1624 = vmatmul.mubr.bf16.gmra.mxu0 %v1446
      %v1625 = vpop.f32.mrf.mxu0
      %v1626 = vadd.f32 0.0, %v1625
      %v1627 = vpop.f32.mrf.mxu0
      %v1628 = vpop.f32.mrf.mxu0
      %v1629 = vadd.f32 0.0, %v1628
      %v1630 = vpop.f32.mrf.mxu0
      %1631 = vmatprep.mubr.bf16.mxu0 0
      %1632 = vmatmul.mubr.bf16.gmra.mxu0 %v1447
      %v1633 = vpop.f32.mrf.mxu0
      %v1634 = vpop.f32.mrf.mxu0
      %v1635 = vpop.f32.mrf.mxu0
      %v1636 = vpop.f32.mrf.mxu0
      %1637 = vmatprep.mubr.bf16.mxu0 0
      %1638 = vmatmul.mubr.bf16.gmra.mxu0 %v1448
      %v1639 = vpop.f32.mrf.mxu0
      %v1640 = vadd.f32 0.0, %v1639
      %v1641 = vpop.f32.mrf.mxu0
      %v1642 = vpop.f32.mrf.mxu0
      %v1643 = vadd.f32 0.0, %v1642
      %v1644 = vpop.f32.mrf.mxu0
      %1645 = vmatprep.mubr.bf16.mxu0 0
      %1646 = vmatmul.mubr.bf16.gmra.mxu0 %v1449
      %v1647 = vpop.f32.mrf.mxu0
      %v1648 = vpop.f32.mrf.mxu0
      %v1649 = vpop.f32.mrf.mxu0
      %v1650 = vpop.f32.mrf.mxu0
      %1651 = vmatprep.mubr.bf16.mxu0 0
      %1652 = vmatmul.mubr.bf16.gmra.mxu0 %v1450
      %v1653 = vpop.f32.mrf.mxu0
      %v1654 = vadd.f32 0.0, %v1653
      %v1655 = vpop.f32.mrf.mxu0
      %v1656 = vpop.f32.mrf.mxu0
      %v1657 = vadd.f32 0.0, %v1656
      %v1658 = vpop.f32.mrf.mxu0
      %1659 = vmatprep.mubr.bf16.mxu0 0
      %1660 = vmatmul.mubr.bf16.gmra.mxu0 %v1451
      %v1661 = vpop.f32.mrf.mxu0
      %v1662 = vpop.f32.mrf.mxu0
      %v1663 = vpop.f32.mrf.mxu0
      %v1664 = vpop.f32.mrf.mxu0
      %1665 = vmatprep.mubr.bf16.mxu0 0
      %1666 = vmatmul.mubr.bf16.gmra.mxu0 %v1452
      %v1667 = vpop.f32.mrf.mxu0
      %v1668 = vadd.f32 0.0, %v1667
      %v1669 = vpop.f32.mrf.mxu0
      %v1670 = vpop.f32.mrf.mxu0
      %v1671 = vadd.f32 0.0, %v1670
      %v1672 = vpop.f32.mrf.mxu0
      %1673 = vmatprep.mubr.bf16.mxu0 0
      %1674 = vmatmul.mubr.bf16.gmra.mxu0 %v1453
      %v1675 = vpop.f32.mrf.mxu0
      %v1676 = vpop.f32.mrf.mxu0
      %v1677 = vpop.f32.mrf.mxu0
      %v1678 = vpop.f32.mrf.mxu0
      %1679 = vmatprep.mubr.bf16.mxu0 0
      %1680 = vmatmul.mubr.bf16.gmra.mxu0 %v1454
      %v1681 = vpop.f32.mrf.mxu0
      %v1682 = vadd.f32 0.0, %v1681
      %v1683 = vpop.f32.mrf.mxu0
      %v1684 = vpop.f32.mrf.mxu0
      %v1685 = vadd.f32 0.0, %v1684
      %v1686 = vpop.f32.mrf.mxu0
      %1687 = vmatprep.mubr.bf16.mxu0 0
      %1688 = vmatmul.mubr.bf16.gmra.mxu0 %v1455
      %v1689 = vpop.f32.mrf.mxu0
      %v1690 = vpop.f32.mrf.mxu0
      %v1691 = vpop.f32.mrf.mxu0
      %v1692 = vpop.f32.mrf.mxu0
      %1693 = vmatprep.mubr.bf16.mxu0 0
      %1694 = vmatmul.mubr.bf16.gmra.mxu0 %v1456
      %v1695 = vpop.f32.mrf.mxu0
      %v1696 = vadd.f32 0.0, %v1695
      %v1697 = vpop.f32.mrf.mxu0
      %v1698 = vpop.f32.mrf.mxu0
      %v1699 = vadd.f32 0.0, %v1698
      %v1700 = vpop.f32.mrf.mxu0
      %1701 = vmatprep.mubr.bf16.mxu0 0
      %1702 = vmatmul.mubr.bf16.gmra.mxu0 %v1457
      %v1703 = vpop.f32.mrf.mxu0
      %v1704 = vpop.f32.mrf.mxu0
      %v1705 = vpop.f32.mrf.mxu0
      %v1706 = vpop.f32.mrf.mxu0
      %1707 = vmatprep.mubr.bf16.mxu0 0
      %1708 = vmatmul.mubr.bf16.gmra.mxu0 %v1458
      %v1709 = vpop.f32.mrf.mxu0
      %v1710 = vadd.f32 0.0, %v1709
      %v1711 = vpop.f32.mrf.mxu0
      %v1712 = vpop.f32.mrf.mxu0
      %v1713 = vadd.f32 0.0, %v1712
      %v1714 = vpop.f32.mrf.mxu0
      %1715 = vmatprep.mubr.bf16.mxu0 0
      %1716 = vmatmul.mubr.bf16.gmra.mxu0 %v1459
      %v1717 = vpop.f32.mrf.mxu0
      %v1718 = vpop.f32.mrf.mxu0
      %v1719 = vpop.f32.mrf.mxu0
      %v1720 = vpop.f32.mrf.mxu0
      %1721 = vmatprep.mubr.bf16.mxu0 0
      %1722 = vmatmul.mubr.bf16.gmra.mxu0 %v1460
      %v1723 = vpop.f32.mrf.mxu0
      %v1724 = vadd.f32 0.0, %v1723
      %v1725 = vpop.f32.mrf.mxu0
      %v1726 = vpop.f32.mrf.mxu0
      %v1727 = vadd.f32 0.0, %v1726
      %v1728 = vpop.f32.mrf.mxu0
      %1729 = vmatprep.mubr.bf16.mxu0 0
      %1730 = vmatmul.mubr.bf16.gmra.mxu0 %v1461
      %v1731 = vpop.f32.mrf.mxu0
      %v1732 = vpop.f32.mrf.mxu0
      %v1733 = vpop.f32.mrf.mxu0
      %v1734 = vpop.f32.mrf.mxu0
      %1735 = vmatprep.mubr.bf16.mxu0 0
      %1736 = vmatmul.mubr.bf16.gmra.mxu0 %v1462
      %v1737 = vpop.f32.mrf.mxu0
      %v1738 = vadd.f32 0.0, %v1737
      %v1739 = vpop.f32.mrf.mxu0
      %v1740 = vpop.f32.mrf.mxu0
      %v1741 = vadd.f32 0.0, %v1740
      %v1742 = vpop.f32.mrf.mxu0
      %1743 = vmatprep.mubr.bf16.mxu0 0
      %1744 = vmatmul.mubr.bf16.gmra.mxu0 %v1463
      %v1745 = vpop.f32.mrf.mxu0
      %v1746 = vpop.f32.mrf.mxu0
      %v1747 = vpop.f32.mrf.mxu0
      %v1748 = vpop.f32.mrf.mxu0
      %1749 = vmatprep.mubr.bf16.mxu0 0
      %1750 = vmatmul.mubr.bf16.gmra.mxu0 %v1464
      %v1751 = vpop.f32.mrf.mxu0
      %v1752 = vadd.f32 0.0, %v1751
      %v1753 = vpop.f32.mrf.mxu0
      %v1754 = vpop.f32.mrf.mxu0
      %v1755 = vadd.f32 0.0, %v1754
      %v1756 = vpop.f32.mrf.mxu0
      %1757 = vmatprep.mubr.bf16.mxu0 0
      %1758 = vmatmul.mubr.bf16.gmra.mxu0 %v1465
      %v1759 = vpop.f32.mrf.mxu0
      %v1760 = vpop.f32.mrf.mxu0
      %v1761 = vpop.f32.mrf.mxu0
      %v1762 = vpop.f32.mrf.mxu0
      %1763 = vmatprep.mubr.bf16.mxu0 0
      %1764 = vmatmul.mubr.bf16.gmra.mxu0 %v1466
      %v1765 = vpop.f32.mrf.mxu0
      %v1766 = vadd.f32 0.0, %v1765
      %v1767 = vpop.f32.mrf.mxu0
      %v1768 = vpop.f32.mrf.mxu0
      %v1769 = vadd.f32 0.0, %v1768
      %v1770 = vpop.f32.mrf.mxu0
      %1771 = vmatprep.mubr.bf16.mxu0 0
      %1772 = vmatmul.mubr.bf16.gmra.mxu0 %v1467
      %v1773 = vpop.f32.mrf.mxu0
      %v1774 = vpop.f32.mrf.mxu0
      %v1775 = vpop.f32.mrf.mxu0
      %v1776 = vpop.f32.mrf.mxu0
      %1777 = vmatprep.mubr.bf16.mxu0 0
      %1778 = vmatmul.mubr.bf16.gmra.mxu0 %v1468
      %v1779 = vpop.f32.mrf.mxu0
      %v1780 = vadd.f32 0.0, %v1779
      %v1781 = vpop.f32.mrf.mxu0
      %v1782 = vpop.f32.mrf.mxu0
      %v1783 = vadd.f32 0.0, %v1782
      %v1784 = vpop.f32.mrf.mxu0
      %1785 = vmatprep.mubr.bf16.mxu0 0
      %1786 = vmatmul.mubr.bf16.gmra.mxu0 %v1469
      %v1787 = vpop.f32.mrf.mxu0
      %v1788 = vpop.f32.mrf.mxu0
      %v1789 = vpop.f32.mrf.mxu0
      %v1790 = vpop.f32.mrf.mxu0
      %1791 = vdwg.mxu0
      %v1792 = vadd.f32 %v1152, %v1570
      %v1793 = vadd.f32 %v1155, %v1573
      %v1794 = vadd.f32 %v1166, %v1584
      %v1795 = vadd.f32 %v1169, %v1587
      %v1796 = vadd.f32 %v1180, %v1598
      %v1797 = vadd.f32 %v1183, %v1601
      %v1798 = vadd.f32 %v1194, %v1612
      %v1799 = vadd.f32 %v1197, %v1615
      %v1800 = vadd.f32 %v1208, %v1626
      %v1801 = vadd.f32 %v1211, %v1629
      %v1802 = vadd.f32 %v1222, %v1640
      %v1803 = vadd.f32 %v1225, %v1643
      %v1804 = vadd.f32 %v1236, %v1654
      %v1805 = vadd.f32 %v1239, %v1657
      %v1806 = vadd.f32 %v1250, %v1668
      %v1807 = vadd.f32 %v1253, %v1671
      %v1808 = vadd.f32 %v1264, %v1682
      %v1809 = vadd.f32 %v1267, %v1685
      %v1810 = vadd.f32 %v1278, %v1696
      %v1811 = vadd.f32 %v1281, %v1699
      %v1812 = vadd.f32 %v1292, %v1710
      %v1813 = vadd.f32 %v1295, %v1713
      %v1814 = vadd.f32 %v1306, %v1724
      %v1815 = vadd.f32 %v1309, %v1727
      %v1816 = vadd.f32 %v1320, %v1738
      %v1817 = vadd.f32 %v1323, %v1741
      %v1818 = vadd.f32 %v1334, %v1752
      %v1819 = vadd.f32 %v1337, %v1755
      %v1820 = vadd.f32 %v1348, %v1766
      %v1821 = vadd.f32 %v1351, %v1769
      %v1822 = vadd.f32 %v1362, %v1780
      %v1823 = vadd.f32 %v1365, %v1783
      %v1824 = vld [vmem:[%s408] sm:$0xff]
      %v1825 = vld [vmem:[%s408 + $0x8] sm:$0xff]
      %v1826 = vld [vmem:[%s408 + $0x10] sm:$0xff]
      %v1827 = vld [vmem:[%s408 + $0x18] sm:$0xff]
      %v1828 = vld [vmem:[%s408 + $0x20] sm:$0xff]
      %v1829 = vld [vmem:[%s408 + $0x28] sm:$0xff]
      %v1830 = vld [vmem:[%s408 + $0x30] sm:$0xff]
      %v1831 = vld [vmem:[%s408 + $0x38] sm:$0xff]
      %v1832 = vld [vmem:[%s408 + $0x40] sm:$0xff]
      %v1833 = vld [vmem:[%s408 + $0x48] sm:$0xff]
      %v1834 = vld [vmem:[%s408 + $0x50] sm:$0xff]
      %v1835 = vld [vmem:[%s408 + $0x58] sm:$0xff]
      %v1836 = vld [vmem:[%s408 + $0x60] sm:$0xff]
      %v1837 = vld [vmem:[%s408 + $0x68] sm:$0xff]
      %v1838 = vld [vmem:[%s408 + $0x70] sm:$0xff]
      %v1839 = vld [vmem:[%s408 + $0x78] sm:$0xff]
      %v1840 = vld [vmem:[%s408 + $0x80] sm:$0xff]
      %v1841 = vld [vmem:[%s408 + $0x88] sm:$0xff]
      %v1842 = vld [vmem:[%s408 + $0x90] sm:$0xff]
      %v1843 = vld [vmem:[%s408 + $0x98] sm:$0xff]
      %v1844 = vld [vmem:[%s408 + $0xa0] sm:$0xff]
      %v1845 = vld [vmem:[%s408 + $0xa8] sm:$0xff]
      %v1846 = vld [vmem:[%s408 + $0xb0] sm:$0xff]
      %v1847 = vld [vmem:[%s408 + $0xb8] sm:$0xff]
      %v1848 = vld [vmem:[%s408 + $0xc0] sm:$0xff]
      %v1849 = vld [vmem:[%s408 + $0xc8] sm:$0xff]
      %v1850 = vld [vmem:[%s408 + $0xd0] sm:$0xff]
      %v1851 = vld [vmem:[%s408 + $0xd8] sm:$0xff]
      %v1852 = vld [vmem:[%s408 + $0xe0] sm:$0xff]
      %v1853 = vld [vmem:[%s408 + $0xe8] sm:$0xff]
      %v1854 = vld [vmem:[%s408 + $0xf0] sm:$0xff]
      %v1855 = vld [vmem:[%s408 + $0xf8] sm:$0xff]
      %v1856 = vld [vmem:[%s408 + $0x100] sm:$0xff]
      %v1857 = vld [vmem:[%s408 + $0x108] sm:$0xff]
      %v1858 = vld [vmem:[%s408 + $0x110] sm:$0xff]
      %v1859 = vld [vmem:[%s408 + $0x118] sm:$0xff]
      %v1860 = vld [vmem:[%s408 + $0x120] sm:$0xff]
      %v1861 = vld [vmem:[%s408 + $0x128] sm:$0xff]
      %v1862 = vld [vmem:[%s408 + $0x130] sm:$0xff]
      %v1863 = vld [vmem:[%s408 + $0x138] sm:$0xff]
      %v1864 = vld [vmem:[%s408 + $0x140] sm:$0xff]
      %v1865 = vld [vmem:[%s408 + $0x148] sm:$0xff]
      %v1866 = vld [vmem:[%s408 + $0x150] sm:$0xff]
      %v1867 = vld [vmem:[%s408 + $0x158] sm:$0xff]
      %v1868 = vld [vmem:[%s408 + $0x160] sm:$0xff]
      %v1869 = vld [vmem:[%s408 + $0x168] sm:$0xff]
      %v1870 = vld [vmem:[%s408 + $0x170] sm:$0xff]
      %v1871 = vld [vmem:[%s408 + $0x178] sm:$0xff]
      %v1872 = vld [vmem:[%s408 + $0x180] sm:$0xff]
      %v1873 = vld [vmem:[%s408 + $0x188] sm:$0xff]
      %v1874 = vld [vmem:[%s408 + $0x190] sm:$0xff]
      %v1875 = vld [vmem:[%s408 + $0x198] sm:$0xff]
      %v1876 = vld [vmem:[%s408 + $0x1a0] sm:$0xff]
      %v1877 = vld [vmem:[%s408 + $0x1a8] sm:$0xff]
      %v1878 = vld [vmem:[%s408 + $0x1b0] sm:$0xff]
      %v1879 = vld [vmem:[%s408 + $0x1b8] sm:$0xff]
      %v1880 = vld [vmem:[%s408 + $0x1c0] sm:$0xff]
      %v1881 = vld [vmem:[%s408 + $0x1c8] sm:$0xff]
      %v1882 = vld [vmem:[%s408 + $0x1d0] sm:$0xff]
      %v1883 = vld [vmem:[%s408 + $0x1d8] sm:$0xff]
      %v1884 = vld [vmem:[%s408 + $0x1e0] sm:$0xff]
      %v1885 = vld [vmem:[%s408 + $0x1e8] sm:$0xff]
      %v1886 = vld [vmem:[%s408 + $0x1f0] sm:$0xff]
      %v1887 = vld [vmem:[%s408 + $0x1f8] sm:$0xff]
      %v1888 = vpack.c.bf16 %v1825, %v1824
      %v1889 = vpack.c.bf16 %v1827, %v1826
      %v1890 = vpack.c.bf16 %v1829, %v1828
      %v1891 = vpack.c.bf16 %v1831, %v1830
      %v1892 = vpack.c.bf16 %v1833, %v1832
      %v1893 = vpack.c.bf16 %v1835, %v1834
      %v1894 = vpack.c.bf16 %v1837, %v1836
      %v1895 = vpack.c.bf16 %v1839, %v1838
      %v1896 = vpack.c.bf16 %v1841, %v1840
      %v1897 = vpack.c.bf16 %v1843, %v1842
      %v1898 = vpack.c.bf16 %v1845, %v1844
      %v1899 = vpack.c.bf16 %v1847, %v1846
      %v1900 = vpack.c.bf16 %v1849, %v1848
      %v1901 = vpack.c.bf16 %v1851, %v1850
      %v1902 = vpack.c.bf16 %v1853, %v1852
      %v1903 = vpack.c.bf16 %v1855, %v1854
      %v1904 = vpack.c.bf16 %v1857, %v1856
      %v1905 = vpack.c.bf16 %v1859, %v1858
      %v1906 = vpack.c.bf16 %v1861, %v1860
      %v1907 = vpack.c.bf16 %v1863, %v1862
      %v1908 = vpack.c.bf16 %v1865, %v1864
      %v1909 = vpack.c.bf16 %v1867, %v1866
      %v1910 = vpack.c.bf16 %v1869, %v1868
      %v1911 = vpack.c.bf16 %v1871, %v1870
      %v1912 = vpack.c.bf16 %v1873, %v1872
      %v1913 = vpack.c.bf16 %v1875, %v1874
      %v1914 = vpack.c.bf16 %v1877, %v1876
      %v1915 = vpack.c.bf16 %v1879, %v1878
      %v1916 = vpack.c.bf16 %v1881, %v1880
      %v1917 = vpack.c.bf16 %v1883, %v1882
      %v1918 = vpack.c.bf16 %v1885, %v1884
      %v1919 = vpack.c.bf16 %v1887, %v1886
      %s1920 = scalar_lea.vmem %s3, 192
      %v1921 = vld [vmem:[%s1920] sm:$0xf]
      %v1922 = vld [vmem:[%s1920 + $0x4] sm:$0xf]
      %v1923 = vld [vmem:[%s1920 + $0x8] sm:$0xf]
      %v1924 = vld [vmem:[%s1920 + $0xc] sm:$0xf]
      %v1925 = vld [vmem:[%s1920 + $0x10] sm:$0xf]
      %v1926 = vld [vmem:[%s1920 + $0x14] sm:$0xf]
      %v1927 = vld [vmem:[%s1920 + $0x18] sm:$0xf]
      %v1928 = vld [vmem:[%s1920 + $0x1c] sm:$0xf]
      %v1929 = vld [vmem:[%s1920 + $0x20] sm:$0xf]
      %v1930 = vld [vmem:[%s1920 + $0x24] sm:$0xf]
      %v1931 = vld [vmem:[%s1920 + $0x28] sm:$0xf]
      %v1932 = vld [vmem:[%s1920 + $0x2c] sm:$0xf]
      %v1933 = vld [vmem:[%s1920 + $0x30] sm:$0xf]
      %v1934 = vld [vmem:[%s1920 + $0x34] sm:$0xf]
      %v1935 = vld [vmem:[%s1920 + $0x38] sm:$0xf]
      %v1936 = vld [vmem:[%s1920 + $0x3c] sm:$0xf]
      %v1953 = vunpack.c.l.b16 %v1921
      %v1954 = vunpack.c.l.b16 %v1922
      %v1955 = vunpack.c.l.b16 %v1923
      %v1956 = vunpack.c.l.b16 %v1924
      %v1957 = vunpack.c.l.b16 %v1925
      %v1958 = vunpack.c.l.b16 %v1926
      %v1959 = vunpack.c.l.b16 %v1927
      %v1960 = vunpack.c.l.b16 %v1928
      %v1961 = vunpack.c.l.b16 %v1929
      %v1962 = vunpack.c.l.b16 %v1930
      %v1963 = vunpack.c.l.b16 %v1931
      %v1964 = vunpack.c.l.b16 %v1932
      %v1965 = vunpack.c.l.b16 %v1933
      %v1966 = vunpack.c.l.b16 %v1934
      %v1967 = vunpack.c.l.b16 %v1935
      %v1968 = vunpack.c.l.b16 %v1936
      %v1969 = vpack.c.b16 %v1954, %v1953
      %v1970 = vpack.c.b16 %v1956, %v1955
      %v1971 = vpack.c.b16 %v1958, %v1957
      %v1972 = vpack.c.b16 %v1960, %v1959
      %v1973 = vpack.c.b16 %v1962, %v1961
      %v1974 = vpack.c.b16 %v1964, %v1963
      %v1975 = vpack.c.b16 %v1966, %v1965
      %v1976 = vpack.c.b16 %v1968, %v1967
      %1985 = vmatprep.subr.bf16.mxu0 0
      %1986 = vmatpush1.bf16.msra.mxu0 %v1976
      %1987 = vmatprep.subr.bf16.mxu0 0
      %1988 = vmatpush1.bf16.msra.mxu0 %v1975
      %1989 = vmatprep.subr.bf16.mxu0 0
      %1990 = vmatpush1.bf16.msra.mxu0 %v1974
      %1991 = vmatprep.subr.bf16.mxu0 0
      %1992 = vmatpush1.bf16.msra.mxu0 %v1973
      %1993 = vmatprep.subr.bf16.mxu0 0
      %1994 = vmatpush1.bf16.msra.mxu0 %v1972
      %1995 = vmatprep.subr.bf16.mxu0 0
      %1996 = vmatpush1.bf16.msra.mxu0 %v1971
      %1997 = vmatprep.subr.bf16.mxu0 0
      %1998 = vmatpush1.bf16.msra.mxu0 %v1970
      %1999 = vmatprep.subr.bf16.mxu0 0
      %2000 = vmatpush1.bf16.msra.mxu0 %v1969
      %2001 = vmatprep.subr.bf16.mxu0 0
      %2002 = vmatpush2.bf16.msra.mxu0 0
      %2003 = vmatprep.subr.bf16.mxu0 0
      %2004 = vmatpush2.bf16.msra.mxu0 0
      %2005 = vmatprep.subr.bf16.mxu0 0
      %2006 = vmatpush2.bf16.msra.mxu0 0
      %2007 = vmatprep.subr.bf16.mxu0 0
      %2008 = vmatpush2.bf16.msra.mxu0 0
      %2009 = vmatprep.subr.bf16.mxu0 0
      %2010 = vmatpush2.bf16.msra.mxu0 0
      %2011 = vmatprep.subr.bf16.mxu0 0
      %2012 = vmatpush2.bf16.msra.mxu0 0
      %2013 = vmatprep.subr.bf16.mxu0 0
      %2014 = vmatpush2.bf16.msra.mxu0 0
      %2015 = vmatprep.subr.bf16.mxu0 0
      %2016 = vmatpush2.bf16.msra.mxu0 0
      %2017 = vmatprep.mubr.bf16.mxu0 0
      %2018 = vmatmul.mubr.bf16.gmra.mxu0 %v1888
      %v2019 = vpop.f32.mrf.mxu0
      %v2020 = vadd.f32 0.0, %v2019
      %v2021 = vpop.f32.mrf.mxu0
      %v2022 = vpop.f32.mrf.mxu0
      %v2023 = vadd.f32 0.0, %v2022
      %v2024 = vpop.f32.mrf.mxu0
      %2025 = vmatprep.mubr.bf16.mxu0 0
      %2026 = vmatmul.mubr.bf16.gmra.mxu0 %v1889
      %v2027 = vpop.f32.mrf.mxu0
      %v2028 = vpop.f32.mrf.mxu0
      %v2029 = vpop.f32.mrf.mxu0
      %v2030 = vpop.f32.mrf.mxu0
      %2031 = vmatprep.mubr.bf16.mxu0 0
      %2032 = vmatmul.mubr.bf16.gmra.mxu0 %v1890
      %v2033 = vpop.f32.mrf.mxu0
      %v2034 = vadd.f32 0.0, %v2033
      %v2035 = vpop.f32.mrf.mxu0
      %v2036 = vpop.f32.mrf.mxu0
      %v2037 = vadd.f32 0.0, %v2036
      %v2038 = vpop.f32.mrf.mxu0
      %2039 = vmatprep.mubr.bf16.mxu0 0
      %2040 = vmatmul.mubr.bf16.gmra.mxu0 %v1891
      %v2041 = vpop.f32.mrf.mxu0
      %v2042 = vpop.f32.mrf.mxu0
      %v2043 = vpop.f32.mrf.mxu0
      %v2044 = vpop.f32.mrf.mxu0
      %2045 = vmatprep.mubr.bf16.mxu0 0
      %2046 = vmatmul.mubr.bf16.gmra.mxu0 %v1892
      %v2047 = vpop.f32.mrf.mxu0
      %v2048 = vadd.f32 0.0, %v2047
      %v2049 = vpop.f32.mrf.mxu0
      %v2050 = vpop.f32.mrf.mxu0
      %v2051 = vadd.f32 0.0, %v2050
      %v2052 = vpop.f32.mrf.mxu0
      %2053 = vmatprep.mubr.bf16.mxu0 0
      %2054 = vmatmul.mubr.bf16.gmra.mxu0 %v1893
      %v2055 = vpop.f32.mrf.mxu0
      %v2056 = vpop.f32.mrf.mxu0
      %v2057 = vpop.f32.mrf.mxu0
      %v2058 = vpop.f32.mrf.mxu0
      %2059 = vmatprep.mubr.bf16.mxu0 0
      %2060 = vmatmul.mubr.bf16.gmra.mxu0 %v1894
      %v2061 = vpop.f32.mrf.mxu0
      %v2062 = vadd.f32 0.0, %v2061
      %v2063 = vpop.f32.mrf.mxu0
      %v2064 = vpop.f32.mrf.mxu0
      %v2065 = vadd.f32 0.0, %v2064
      %v2066 = vpop.f32.mrf.mxu0
      %2067 = vmatprep.mubr.bf16.mxu0 0
      %2068 = vmatmul.mubr.bf16.gmra.mxu0 %v1895
      %v2069 = vpop.f32.mrf.mxu0
      %v2070 = vpop.f32.mrf.mxu0
      %v2071 = vpop.f32.mrf.mxu0
      %v2072 = vpop.f32.mrf.mxu0
      %2073 = vmatprep.mubr.bf16.mxu0 0
      %2074 = vmatmul.mubr.bf16.gmra.mxu0 %v1896
      %v2075 = vpop.f32.mrf.mxu0
      %v2076 = vadd.f32 0.0, %v2075
      %v2077 = vpop.f32.mrf.mxu0
      %v2078 = vpop.f32.mrf.mxu0
      %v2079 = vadd.f32 0.0, %v2078
      %v2080 = vpop.f32.mrf.mxu0
      %2081 = vmatprep.mubr.bf16.mxu0 0
      %2082 = vmatmul.mubr.bf16.gmra.mxu0 %v1897
      %v2083 = vpop.f32.mrf.mxu0
      %v2084 = vpop.f32.mrf.mxu0
      %v2085 = vpop.f32.mrf.mxu0
      %v2086 = vpop.f32.mrf.mxu0
      %2087 = vmatprep.mubr.bf16.mxu0 0
      %2088 = vmatmul.mubr.bf16.gmra.mxu0 %v1898
      %v2089 = vpop.f32.mrf.mxu0
      %v2090 = vadd.f32 0.0, %v2089
      %v2091 = vpop.f32.mrf.mxu0
      %v2092 = vpop.f32.mrf.mxu0
      %v2093 = vadd.f32 0.0, %v2092
      %v2094 = vpop.f32.mrf.mxu0
      %2095 = vmatprep.mubr.bf16.mxu0 0
      %2096 = vmatmul.mubr.bf16.gmra.mxu0 %v1899
      %v2097 = vpop.f32.mrf.mxu0
      %v2098 = vpop.f32.mrf.mxu0
      %v2099 = vpop.f32.mrf.mxu0
      %v2100 = vpop.f32.mrf.mxu0
      %2101 = vmatprep.mubr.bf16.mxu0 0
      %2102 = vmatmul.mubr.bf16.gmra.mxu0 %v1900
      %v2103 = vpop.f32.mrf.mxu0
      %v2104 = vadd.f32 0.0, %v2103
      %v2105 = vpop.f32.mrf.mxu0
      %v2106 = vpop.f32.mrf.mxu0
      %v2107 = vadd.f32 0.0, %v2106
      %v2108 = vpop.f32.mrf.mxu0
      %2109 = vmatprep.mubr.bf16.mxu0 0
      %2110 = vmatmul.mubr.bf16.gmra.mxu0 %v1901
      %v2111 = vpop.f32.mrf.mxu0
      %v2112 = vpop.f32.mrf.mxu0
      %v2113 = vpop.f32.mrf.mxu0
      %v2114 = vpop.f32.mrf.mxu0
      %2115 = vmatprep.mubr.bf16.mxu0 0
      %2116 = vmatmul.mubr.bf16.gmra.mxu0 %v1902
      %v2117 = vpop.f32.mrf.mxu0
      %v2118 = vadd.f32 0.0, %v2117
      %v2119 = vpop.f32.mrf.mxu0
      %v2120 = vpop.f32.mrf.mxu0
      %v2121 = vadd.f32 0.0, %v2120
      %v2122 = vpop.f32.mrf.mxu0
      %2123 = vmatprep.mubr.bf16.mxu0 0
      %2124 = vmatmul.mubr.bf16.gmra.mxu0 %v1903
      %v2125 = vpop.f32.mrf.mxu0
      %v2126 = vpop.f32.mrf.mxu0
      %v2127 = vpop.f32.mrf.mxu0
      %v2128 = vpop.f32.mrf.mxu0
      %2129 = vmatprep.mubr.bf16.mxu0 0
      %2130 = vmatmul.mubr.bf16.gmra.mxu0 %v1904
      %v2131 = vpop.f32.mrf.mxu0
      %v2132 = vadd.f32 0.0, %v2131
      %v2133 = vpop.f32.mrf.mxu0
      %v2134 = vpop.f32.mrf.mxu0
      %v2135 = vadd.f32 0.0, %v2134
      %v2136 = vpop.f32.mrf.mxu0
      %2137 = vmatprep.mubr.bf16.mxu0 0
      %2138 = vmatmul.mubr.bf16.gmra.mxu0 %v1905
      %v2139 = vpop.f32.mrf.mxu0
      %v2140 = vpop.f32.mrf.mxu0
      %v2141 = vpop.f32.mrf.mxu0
      %v2142 = vpop.f32.mrf.mxu0
      %2143 = vmatprep.mubr.bf16.mxu0 0
      %2144 = vmatmul.mubr.bf16.gmra.mxu0 %v1906
      %v2145 = vpop.f32.mrf.mxu0
      %v2146 = vadd.f32 0.0, %v2145
      %v2147 = vpop.f32.mrf.mxu0
      %v2148 = vpop.f32.mrf.mxu0
      %v2149 = vadd.f32 0.0, %v2148
      %v2150 = vpop.f32.mrf.mxu0
      %2151 = vmatprep.mubr.bf16.mxu0 0
      %2152 = vmatmul.mubr.bf16.gmra.mxu0 %v1907
      %v2153 = vpop.f32.mrf.mxu0
      %v2154 = vpop.f32.mrf.mxu0
      %v2155 = vpop.f32.mrf.mxu0
      %v2156 = vpop.f32.mrf.mxu0
      %2157 = vmatprep.mubr.bf16.mxu0 0
      %2158 = vmatmul.mubr.bf16.gmra.mxu0 %v1908
      %v2159 = vpop.f32.mrf.mxu0
      %v2160 = vadd.f32 0.0, %v2159
      %v2161 = vpop.f32.mrf.mxu0
      %v2162 = vpop.f32.mrf.mxu0
      %v2163 = vadd.f32 0.0, %v2162
      %v2164 = vpop.f32.mrf.mxu0
      %2165 = vmatprep.mubr.bf16.mxu0 0
      %2166 = vmatmul.mubr.bf16.gmra.mxu0 %v1909
      %v2167 = vpop.f32.mrf.mxu0
      %v2168 = vpop.f32.mrf.mxu0
      %v2169 = vpop.f32.mrf.mxu0
      %v2170 = vpop.f32.mrf.mxu0
      %2171 = vmatprep.mubr.bf16.mxu0 0
      %2172 = vmatmul.mubr.bf16.gmra.mxu0 %v1910
      %v2173 = vpop.f32.mrf.mxu0
      %v2174 = vadd.f32 0.0, %v2173
      %v2175 = vpop.f32.mrf.mxu0
      %v2176 = vpop.f32.mrf.mxu0
      %v2177 = vadd.f32 0.0, %v2176
      %v2178 = vpop.f32.mrf.mxu0
      %2179 = vmatprep.mubr.bf16.mxu0 0
      %2180 = vmatmul.mubr.bf16.gmra.mxu0 %v1911
      %v2181 = vpop.f32.mrf.mxu0
      %v2182 = vpop.f32.mrf.mxu0
      %v2183 = vpop.f32.mrf.mxu0
      %v2184 = vpop.f32.mrf.mxu0
      %2185 = vmatprep.mubr.bf16.mxu0 0
      %2186 = vmatmul.mubr.bf16.gmra.mxu0 %v1912
      %v2187 = vpop.f32.mrf.mxu0
      %v2188 = vadd.f32 0.0, %v2187
      %v2189 = vpop.f32.mrf.mxu0
      %v2190 = vpop.f32.mrf.mxu0
      %v2191 = vadd.f32 0.0, %v2190
      %v2192 = vpop.f32.mrf.mxu0
      %2193 = vmatprep.mubr.bf16.mxu0 0
      %2194 = vmatmul.mubr.bf16.gmra.mxu0 %v1913
      %v2195 = vpop.f32.mrf.mxu0
      %v2196 = vpop.f32.mrf.mxu0
      %v2197 = vpop.f32.mrf.mxu0
      %v2198 = vpop.f32.mrf.mxu0
      %2199 = vmatprep.mubr.bf16.mxu0 0
      %2200 = vmatmul.mubr.bf16.gmra.mxu0 %v1914
      %v2201 = vpop.f32.mrf.mxu0
      %v2202 = vadd.f32 0.0, %v2201
      %v2203 = vpop.f32.mrf.mxu0
      %v2204 = vpop.f32.mrf.mxu0
      %v2205 = vadd.f32 0.0, %v2204
      %v2206 = vpop.f32.mrf.mxu0
      %2207 = vmatprep.mubr.bf16.mxu0 0
      %2208 = vmatmul.mubr.bf16.gmra.mxu0 %v1915
      %v2209 = vpop.f32.mrf.mxu0
      %v2210 = vpop.f32.mrf.mxu0
      %v2211 = vpop.f32.mrf.mxu0
      %v2212 = vpop.f32.mrf.mxu0
      %2213 = vmatprep.mubr.bf16.mxu0 0
      %2214 = vmatmul.mubr.bf16.gmra.mxu0 %v1916
      %v2215 = vpop.f32.mrf.mxu0
      %v2216 = vadd.f32 0.0, %v2215
      %v2217 = vpop.f32.mrf.mxu0
      %v2218 = vpop.f32.mrf.mxu0
      %v2219 = vadd.f32 0.0, %v2218
      %v2220 = vpop.f32.mrf.mxu0
      %2221 = vmatprep.mubr.bf16.mxu0 0
      %2222 = vmatmul.mubr.bf16.gmra.mxu0 %v1917
      %v2223 = vpop.f32.mrf.mxu0
      %v2224 = vpop.f32.mrf.mxu0
      %v2225 = vpop.f32.mrf.mxu0
      %v2226 = vpop.f32.mrf.mxu0
      %2227 = vmatprep.mubr.bf16.mxu0 0
      %2228 = vmatmul.mubr.bf16.gmra.mxu0 %v1918
      %v2229 = vpop.f32.mrf.mxu0
      %v2230 = vadd.f32 0.0, %v2229
      %v2231 = vpop.f32.mrf.mxu0
      %v2232 = vpop.f32.mrf.mxu0
      %v2233 = vadd.f32 0.0, %v2232
      %v2234 = vpop.f32.mrf.mxu0
      %2235 = vmatprep.mubr.bf16.mxu0 0
      %2236 = vmatmul.mubr.bf16.gmra.mxu0 %v1919
      %v2237 = vpop.f32.mrf.mxu0
      %v2238 = vpop.f32.mrf.mxu0
      %v2239 = vpop.f32.mrf.mxu0
      %v2240 = vpop.f32.mrf.mxu0
      %2241 = vdwg.mxu0
      %v2242 = vadd.f32 %v1792, %v2020
      %v2243 = vadd.f32 %v1793, %v2023
      %v2244 = vadd.f32 %v1794, %v2034
      %v2245 = vadd.f32 %v1795, %v2037
      %v2246 = vadd.f32 %v1796, %v2048
      %v2247 = vadd.f32 %v1797, %v2051
      %v2248 = vadd.f32 %v1798, %v2062
      %v2249 = vadd.f32 %v1799, %v2065
      %v2250 = vadd.f32 %v1800, %v2076
      %v2251 = vadd.f32 %v1801, %v2079
      %v2252 = vadd.f32 %v1802, %v2090
      %v2253 = vadd.f32 %v1803, %v2093
      %v2254 = vadd.f32 %v1804, %v2104
      %v2255 = vadd.f32 %v1805, %v2107
      %v2256 = vadd.f32 %v1806, %v2118
      %v2257 = vadd.f32 %v1807, %v2121
      %v2258 = vadd.f32 %v1808, %v2132
      %v2259 = vadd.f32 %v1809, %v2135
      %v2260 = vadd.f32 %v1810, %v2146
      %v2261 = vadd.f32 %v1811, %v2149
      %v2262 = vadd.f32 %v1812, %v2160
      %v2263 = vadd.f32 %v1813, %v2163
      %v2264 = vadd.f32 %v1814, %v2174
      %v2265 = vadd.f32 %v1815, %v2177
      %v2266 = vadd.f32 %v1816, %v2188
      %v2267 = vadd.f32 %v1817, %v2191
      %v2268 = vadd.f32 %v1818, %v2202
      %v2269 = vadd.f32 %v1819, %v2205
      %v2270 = vadd.f32 %v1820, %v2216
      %v2271 = vadd.f32 %v1821, %v2219
      %v2272 = vadd.f32 %v1822, %v2230
      %v2273 = vadd.f32 %v1823, %v2233
      %v2274 = vld [vmem:[%s442] sm:$0xff]
      %v2275 = vld [vmem:[%s442 + $0x8] sm:$0xff]
      %v2276 = vld [vmem:[%s442 + $0x10] sm:$0xff]
      %v2277 = vld [vmem:[%s442 + $0x18] sm:$0xff]
      %v2278 = vld [vmem:[%s442 + $0x20] sm:$0xff]
      %v2279 = vld [vmem:[%s442 + $0x28] sm:$0xff]
      %v2280 = vld [vmem:[%s442 + $0x30] sm:$0xff]
      %v2281 = vld [vmem:[%s442 + $0x38] sm:$0xff]
      %v2282 = vld [vmem:[%s442 + $0x40] sm:$0xff]
      %v2283 = vld [vmem:[%s442 + $0x48] sm:$0xff]
      %v2284 = vld [vmem:[%s442 + $0x50] sm:$0xff]
      %v2285 = vld [vmem:[%s442 + $0x58] sm:$0xff]
      %v2286 = vld [vmem:[%s442 + $0x60] sm:$0xff]
      %v2287 = vld [vmem:[%s442 + $0x68] sm:$0xff]
      %v2288 = vld [vmem:[%s442 + $0x70] sm:$0xff]
      %v2289 = vld [vmem:[%s442 + $0x78] sm:$0xff]
      %v2290 = vld [vmem:[%s442 + $0x80] sm:$0xff]
      %v2291 = vld [vmem:[%s442 + $0x88] sm:$0xff]
      %v2292 = vld [vmem:[%s442 + $0x90] sm:$0xff]
      %v2293 = vld [vmem:[%s442 + $0x98] sm:$0xff]
      %v2294 = vld [vmem:[%s442 + $0xa0] sm:$0xff]
      %v2295 = vld [vmem:[%s442 + $0xa8] sm:$0xff]
      %v2296 = vld [vmem:[%s442 + $0xb0] sm:$0xff]
      %v2297 = vld [vmem:[%s442 + $0xb8] sm:$0xff]
      %v2298 = vld [vmem:[%s442 + $0xc0] sm:$0xff]
      %v2299 = vld [vmem:[%s442 + $0xc8] sm:$0xff]
      %v2300 = vld [vmem:[%s442 + $0xd0] sm:$0xff]
      %v2301 = vld [vmem:[%s442 + $0xd8] sm:$0xff]
      %v2302 = vld [vmem:[%s442 + $0xe0] sm:$0xff]
      %v2303 = vld [vmem:[%s442 + $0xe8] sm:$0xff]
      %v2304 = vld [vmem:[%s442 + $0xf0] sm:$0xff]
      %v2305 = vld [vmem:[%s442 + $0xf8] sm:$0xff]
      %v2306 = vld [vmem:[%s442 + $0x100] sm:$0xff]
      %v2307 = vld [vmem:[%s442 + $0x108] sm:$0xff]
      %v2308 = vld [vmem:[%s442 + $0x110] sm:$0xff]
      %v2309 = vld [vmem:[%s442 + $0x118] sm:$0xff]
      %v2310 = vld [vmem:[%s442 + $0x120] sm:$0xff]
      %v2311 = vld [vmem:[%s442 + $0x128] sm:$0xff]
      %v2312 = vld [vmem:[%s442 + $0x130] sm:$0xff]
      %v2313 = vld [vmem:[%s442 + $0x138] sm:$0xff]
      %v2314 = vld [vmem:[%s442 + $0x140] sm:$0xff]
      %v2315 = vld [vmem:[%s442 + $0x148] sm:$0xff]
      %v2316 = vld [vmem:[%s442 + $0x150] sm:$0xff]
      %v2317 = vld [vmem:[%s442 + $0x158] sm:$0xff]
      %v2318 = vld [vmem:[%s442 + $0x160] sm:$0xff]
      %v2319 = vld [vmem:[%s442 + $0x168] sm:$0xff]
      %v2320 = vld [vmem:[%s442 + $0x170] sm:$0xff]
      %v2321 = vld [vmem:[%s442 + $0x178] sm:$0xff]
      %v2322 = vld [vmem:[%s442 + $0x180] sm:$0xff]
      %v2323 = vld [vmem:[%s442 + $0x188] sm:$0xff]
      %v2324 = vld [vmem:[%s442 + $0x190] sm:$0xff]
      %v2325 = vld [vmem:[%s442 + $0x198] sm:$0xff]
      %v2326 = vld [vmem:[%s442 + $0x1a0] sm:$0xff]
      %v2327 = vld [vmem:[%s442 + $0x1a8] sm:$0xff]
      %v2328 = vld [vmem:[%s442 + $0x1b0] sm:$0xff]
      %v2329 = vld [vmem:[%s442 + $0x1b8] sm:$0xff]
      %v2330 = vld [vmem:[%s442 + $0x1c0] sm:$0xff]
      %v2331 = vld [vmem:[%s442 + $0x1c8] sm:$0xff]
      %v2332 = vld [vmem:[%s442 + $0x1d0] sm:$0xff]
      %v2333 = vld [vmem:[%s442 + $0x1d8] sm:$0xff]
      %v2334 = vld [vmem:[%s442 + $0x1e0] sm:$0xff]
      %v2335 = vld [vmem:[%s442 + $0x1e8] sm:$0xff]
      %v2336 = vld [vmem:[%s442 + $0x1f0] sm:$0xff]
      %v2337 = vld [vmem:[%s442 + $0x1f8] sm:$0xff]
      %v2338 = vpack.c.bf16 %v2275, %v2274
      %v2339 = vpack.c.bf16 %v2277, %v2276
      %v2340 = vpack.c.bf16 %v2279, %v2278
      %v2341 = vpack.c.bf16 %v2281, %v2280
      %v2342 = vpack.c.bf16 %v2283, %v2282
      %v2343 = vpack.c.bf16 %v2285, %v2284
      %v2344 = vpack.c.bf16 %v2287, %v2286
      %v2345 = vpack.c.bf16 %v2289, %v2288
      %v2346 = vpack.c.bf16 %v2291, %v2290
      %v2347 = vpack.c.bf16 %v2293, %v2292
      %v2348 = vpack.c.bf16 %v2295, %v2294
      %v2349 = vpack.c.bf16 %v2297, %v2296
      %v2350 = vpack.c.bf16 %v2299, %v2298
      %v2351 = vpack.c.bf16 %v2301, %v2300
      %v2352 = vpack.c.bf16 %v2303, %v2302
      %v2353 = vpack.c.bf16 %v2305, %v2304
      %v2354 = vpack.c.bf16 %v2307, %v2306
      %v2355 = vpack.c.bf16 %v2309, %v2308
      %v2356 = vpack.c.bf16 %v2311, %v2310
      %v2357 = vpack.c.bf16 %v2313, %v2312
      %v2358 = vpack.c.bf16 %v2315, %v2314
      %v2359 = vpack.c.bf16 %v2317, %v2316
      %v2360 = vpack.c.bf16 %v2319, %v2318
      %v2361 = vpack.c.bf16 %v2321, %v2320
      %v2362 = vpack.c.bf16 %v2323, %v2322
      %v2363 = vpack.c.bf16 %v2325, %v2324
      %v2364 = vpack.c.bf16 %v2327, %v2326
      %v2365 = vpack.c.bf16 %v2329, %v2328
      %v2366 = vpack.c.bf16 %v2331, %v2330
      %v2367 = vpack.c.bf16 %v2333, %v2332
      %v2368 = vpack.c.bf16 %v2335, %v2334
      %v2369 = vpack.c.bf16 %v2337, %v2336
      %s2370 = scalar_lea.vmem %s3, 256
      %v2371 = vld [vmem:[%s2370] sm:$0xf]
      %v2372 = vld [vmem:[%s2370 + $0x4] sm:$0xf]
      %v2373 = vld [vmem:[%s2370 + $0x8] sm:$0xf]
      %v2374 = vld [vmem:[%s2370 + $0xc] sm:$0xf]
      %v2375 = vld [vmem:[%s2370 + $0x10] sm:$0xf]
      %v2376 = vld [vmem:[%s2370 + $0x14] sm:$0xf]
      %v2377 = vld [vmem:[%s2370 + $0x18] sm:$0xf]
      %v2378 = vld [vmem:[%s2370 + $0x1c] sm:$0xf]
      %v2379 = vld [vmem:[%s2370 + $0x20] sm:$0xf]
      %v2380 = vld [vmem:[%s2370 + $0x24] sm:$0xf]
      %v2381 = vld [vmem:[%s2370 + $0x28] sm:$0xf]
      %v2382 = vld [vmem:[%s2370 + $0x2c] sm:$0xf]
      %v2383 = vld [vmem:[%s2370 + $0x30] sm:$0xf]
      %v2384 = vld [vmem:[%s2370 + $0x34] sm:$0xf]
      %v2385 = vld [vmem:[%s2370 + $0x38] sm:$0xf]
      %v2386 = vld [vmem:[%s2370 + $0x3c] sm:$0xf]
      %v2403 = vunpack.c.l.b16 %v2371
      %v2404 = vunpack.c.l.b16 %v2372
      %v2405 = vunpack.c.l.b16 %v2373
      %v2406 = vunpack.c.l.b16 %v2374
      %v2407 = vunpack.c.l.b16 %v2375
      %v2408 = vunpack.c.l.b16 %v2376
      %v2409 = vunpack.c.l.b16 %v2377
      %v2410 = vunpack.c.l.b16 %v2378
      %v2411 = vunpack.c.l.b16 %v2379
      %v2412 = vunpack.c.l.b16 %v2380
      %v2413 = vunpack.c.l.b16 %v2381
      %v2414 = vunpack.c.l.b16 %v2382
      %v2415 = vunpack.c.l.b16 %v2383
      %v2416 = vunpack.c.l.b16 %v2384
      %v2417 = vunpack.c.l.b16 %v2385
      %v2418 = vunpack.c.l.b16 %v2386
      %v2419 = vpack.c.b16 %v2404, %v2403
      %v2420 = vpack.c.b16 %v2406, %v2405
      %v2421 = vpack.c.b16 %v2408, %v2407
      %v2422 = vpack.c.b16 %v2410, %v2409
      %v2423 = vpack.c.b16 %v2412, %v2411
      %v2424 = vpack.c.b16 %v2414, %v2413
      %v2425 = vpack.c.b16 %v2416, %v2415
      %v2426 = vpack.c.b16 %v2418, %v2417
      %2435 = vmatprep.subr.bf16.mxu0 0
      %2436 = vmatpush1.bf16.msra.mxu0 %v2426
      %2437 = vmatprep.subr.bf16.mxu0 0
      %2438 = vmatpush1.bf16.msra.mxu0 %v2425
      %2439 = vmatprep.subr.bf16.mxu0 0
      %2440 = vmatpush1.bf16.msra.mxu0 %v2424
      %2441 = vmatprep.subr.bf16.mxu0 0
      %2442 = vmatpush1.bf16.msra.mxu0 %v2423
      %2443 = vmatprep.subr.bf16.mxu0 0
      %2444 = vmatpush1.bf16.msra.mxu0 %v2422
      %2445 = vmatprep.subr.bf16.mxu0 0
      %2446 = vmatpush1.bf16.msra.mxu0 %v2421
      %2447 = vmatprep.subr.bf16.mxu0 0
      %2448 = vmatpush1.bf16.msra.mxu0 %v2420
      %2449 = vmatprep.subr.bf16.mxu0 0
      %2450 = vmatpush1.bf16.msra.mxu0 %v2419
      %2451 = vmatprep.subr.bf16.mxu0 0
      %2452 = vmatpush2.bf16.msra.mxu0 0
      %2453 = vmatprep.subr.bf16.mxu0 0
      %2454 = vmatpush2.bf16.msra.mxu0 0
      %2455 = vmatprep.subr.bf16.mxu0 0
      %2456 = vmatpush2.bf16.msra.mxu0 0
      %2457 = vmatprep.subr.bf16.mxu0 0
      %2458 = vmatpush2.bf16.msra.mxu0 0
      %2459 = vmatprep.subr.bf16.mxu0 0
      %2460 = vmatpush2.bf16.msra.mxu0 0
      %2461 = vmatprep.subr.bf16.mxu0 0
      %2462 = vmatpush2.bf16.msra.mxu0 0
      %2463 = vmatprep.subr.bf16.mxu0 0
      %2464 = vmatpush2.bf16.msra.mxu0 0
      %2465 = vmatprep.subr.bf16.mxu0 0
      %2466 = vmatpush2.bf16.msra.mxu0 0
      %2467 = vmatprep.mubr.bf16.mxu0 0
      %2468 = vmatmul.mubr.bf16.gmra.mxu0 %v2338
      %v2469 = vpop.f32.mrf.mxu0
      %v2470 = vadd.f32 0.0, %v2469
      %v2471 = vpop.f32.mrf.mxu0
      %v2472 = vpop.f32.mrf.mxu0
      %v2473 = vadd.f32 0.0, %v2472
      %v2474 = vpop.f32.mrf.mxu0
      %2475 = vmatprep.mubr.bf16.mxu0 0
      %2476 = vmatmul.mubr.bf16.gmra.mxu0 %v2339
      %v2477 = vpop.f32.mrf.mxu0
      %v2478 = vpop.f32.mrf.mxu0
      %v2479 = vpop.f32.mrf.mxu0
      %v2480 = vpop.f32.mrf.mxu0
      %2481 = vmatprep.mubr.bf16.mxu0 0
      %2482 = vmatmul.mubr.bf16.gmra.mxu0 %v2340
      %v2483 = vpop.f32.mrf.mxu0
      %v2484 = vadd.f32 0.0, %v2483
      %v2485 = vpop.f32.mrf.mxu0
      %v2486 = vpop.f32.mrf.mxu0
      %v2487 = vadd.f32 0.0, %v2486
      %v2488 = vpop.f32.mrf.mxu0
      %2489 = vmatprep.mubr.bf16.mxu0 0
      %2490 = vmatmul.mubr.bf16.gmra.mxu0 %v2341
      %v2491 = vpop.f32.mrf.mxu0
      %v2492 = vpop.f32.mrf.mxu0
      %v2493 = vpop.f32.mrf.mxu0
      %v2494 = vpop.f32.mrf.mxu0
      %2495 = vmatprep.mubr.bf16.mxu0 0
      %2496 = vmatmul.mubr.bf16.gmra.mxu0 %v2342
      %v2497 = vpop.f32.mrf.mxu0
      %v2498 = vadd.f32 0.0, %v2497
      %v2499 = vpop.f32.mrf.mxu0
      %v2500 = vpop.f32.mrf.mxu0
      %v2501 = vadd.f32 0.0, %v2500
      %v2502 = vpop.f32.mrf.mxu0
      %2503 = vmatprep.mubr.bf16.mxu0 0
      %2504 = vmatmul.mubr.bf16.gmra.mxu0 %v2343
      %v2505 = vpop.f32.mrf.mxu0
      %v2506 = vpop.f32.mrf.mxu0
      %v2507 = vpop.f32.mrf.mxu0
      %v2508 = vpop.f32.mrf.mxu0
      %2509 = vmatprep.mubr.bf16.mxu0 0
      %2510 = vmatmul.mubr.bf16.gmra.mxu0 %v2344
      %v2511 = vpop.f32.mrf.mxu0
      %v2512 = vadd.f32 0.0, %v2511
      %v2513 = vpop.f32.mrf.mxu0
      %v2514 = vpop.f32.mrf.mxu0
      %v2515 = vadd.f32 0.0, %v2514
      %v2516 = vpop.f32.mrf.mxu0
      %2517 = vmatprep.mubr.bf16.mxu0 0
      %2518 = vmatmul.mubr.bf16.gmra.mxu0 %v2345
      %v2519 = vpop.f32.mrf.mxu0
      %v2520 = vpop.f32.mrf.mxu0
      %v2521 = vpop.f32.mrf.mxu0
      %v2522 = vpop.f32.mrf.mxu0
      %2523 = vmatprep.mubr.bf16.mxu0 0
      %2524 = vmatmul.mubr.bf16.gmra.mxu0 %v2346
      %v2525 = vpop.f32.mrf.mxu0
      %v2526 = vadd.f32 0.0, %v2525
      %v2527 = vpop.f32.mrf.mxu0
      %v2528 = vpop.f32.mrf.mxu0
      %v2529 = vadd.f32 0.0, %v2528
      %v2530 = vpop.f32.mrf.mxu0
      %2531 = vmatprep.mubr.bf16.mxu0 0
      %2532 = vmatmul.mubr.bf16.gmra.mxu0 %v2347
      %v2533 = vpop.f32.mrf.mxu0
      %v2534 = vpop.f32.mrf.mxu0
      %v2535 = vpop.f32.mrf.mxu0
      %v2536 = vpop.f32.mrf.mxu0
      %2537 = vmatprep.mubr.bf16.mxu0 0
      %2538 = vmatmul.mubr.bf16.gmra.mxu0 %v2348
      %v2539 = vpop.f32.mrf.mxu0
      %v2540 = vadd.f32 0.0, %v2539
      %v2541 = vpop.f32.mrf.mxu0
      %v2542 = vpop.f32.mrf.mxu0
      %v2543 = vadd.f32 0.0, %v2542
      %v2544 = vpop.f32.mrf.mxu0
      %2545 = vmatprep.mubr.bf16.mxu0 0
      %2546 = vmatmul.mubr.bf16.gmra.mxu0 %v2349
      %v2547 = vpop.f32.mrf.mxu0
      %v2548 = vpop.f32.mrf.mxu0
      %v2549 = vpop.f32.mrf.mxu0
      %v2550 = vpop.f32.mrf.mxu0
      %2551 = vmatprep.mubr.bf16.mxu0 0
      %2552 = vmatmul.mubr.bf16.gmra.mxu0 %v2350
      %v2553 = vpop.f32.mrf.mxu0
      %v2554 = vadd.f32 0.0, %v2553
      %v2555 = vpop.f32.mrf.mxu0
      %v2556 = vpop.f32.mrf.mxu0
      %v2557 = vadd.f32 0.0, %v2556
      %v2558 = vpop.f32.mrf.mxu0
      %2559 = vmatprep.mubr.bf16.mxu0 0
      %2560 = vmatmul.mubr.bf16.gmra.mxu0 %v2351
      %v2561 = vpop.f32.mrf.mxu0
      %v2562 = vpop.f32.mrf.mxu0
      %v2563 = vpop.f32.mrf.mxu0
      %v2564 = vpop.f32.mrf.mxu0
      %2565 = vmatprep.mubr.bf16.mxu0 0
      %2566 = vmatmul.mubr.bf16.gmra.mxu0 %v2352
      %v2567 = vpop.f32.mrf.mxu0
      %v2568 = vadd.f32 0.0, %v2567
      %v2569 = vpop.f32.mrf.mxu0
      %v2570 = vpop.f32.mrf.mxu0
      %v2571 = vadd.f32 0.0, %v2570
      %v2572 = vpop.f32.mrf.mxu0
      %2573 = vmatprep.mubr.bf16.mxu0 0
      %2574 = vmatmul.mubr.bf16.gmra.mxu0 %v2353
      %v2575 = vpop.f32.mrf.mxu0
      %v2576 = vpop.f32.mrf.mxu0
      %v2577 = vpop.f32.mrf.mxu0
      %v2578 = vpop.f32.mrf.mxu0
      %2579 = vmatprep.mubr.bf16.mxu0 0
      %2580 = vmatmul.mubr.bf16.gmra.mxu0 %v2354
      %v2581 = vpop.f32.mrf.mxu0
      %v2582 = vadd.f32 0.0, %v2581
      %v2583 = vpop.f32.mrf.mxu0
      %v2584 = vpop.f32.mrf.mxu0
      %v2585 = vadd.f32 0.0, %v2584
      %v2586 = vpop.f32.mrf.mxu0
      %2587 = vmatprep.mubr.bf16.mxu0 0
      %2588 = vmatmul.mubr.bf16.gmra.mxu0 %v2355
      %v2589 = vpop.f32.mrf.mxu0
      %v2590 = vpop.f32.mrf.mxu0
      %v2591 = vpop.f32.mrf.mxu0
      %v2592 = vpop.f32.mrf.mxu0
      %2593 = vmatprep.mubr.bf16.mxu0 0
      %2594 = vmatmul.mubr.bf16.gmra.mxu0 %v2356
      %v2595 = vpop.f32.mrf.mxu0
      %v2596 = vadd.f32 0.0, %v2595
      %v2597 = vpop.f32.mrf.mxu0
      %v2598 = vpop.f32.mrf.mxu0
      %v2599 = vadd.f32 0.0, %v2598
      %v2600 = vpop.f32.mrf.mxu0
      %2601 = vmatprep.mubr.bf16.mxu0 0
      %2602 = vmatmul.mubr.bf16.gmra.mxu0 %v2357
      %v2603 = vpop.f32.mrf.mxu0
      %v2604 = vpop.f32.mrf.mxu0
      %v2605 = vpop.f32.mrf.mxu0
      %v2606 = vpop.f32.mrf.mxu0
      %2607 = vmatprep.mubr.bf16.mxu0 0
      %2608 = vmatmul.mubr.bf16.gmra.mxu0 %v2358
      %v2609 = vpop.f32.mrf.mxu0
      %v2610 = vadd.f32 0.0, %v2609
      %v2611 = vpop.f32.mrf.mxu0
      %v2612 = vpop.f32.mrf.mxu0
      %v2613 = vadd.f32 0.0, %v2612
      %v2614 = vpop.f32.mrf.mxu0
      %2615 = vmatprep.mubr.bf16.mxu0 0
      %2616 = vmatmul.mubr.bf16.gmra.mxu0 %v2359
      %v2617 = vpop.f32.mrf.mxu0
      %v2618 = vpop.f32.mrf.mxu0
      %v2619 = vpop.f32.mrf.mxu0
      %v2620 = vpop.f32.mrf.mxu0
      %2621 = vmatprep.mubr.bf16.mxu0 0
      %2622 = vmatmul.mubr.bf16.gmra.mxu0 %v2360
      %v2623 = vpop.f32.mrf.mxu0
      %v2624 = vadd.f32 0.0, %v2623
      %v2625 = vpop.f32.mrf.mxu0
      %v2626 = vpop.f32.mrf.mxu0
      %v2627 = vadd.f32 0.0, %v2626
      %v2628 = vpop.f32.mrf.mxu0
      %2629 = vmatprep.mubr.bf16.mxu0 0
      %2630 = vmatmul.mubr.bf16.gmra.mxu0 %v2361
      %v2631 = vpop.f32.mrf.mxu0
      %v2632 = vpop.f32.mrf.mxu0
      %v2633 = vpop.f32.mrf.mxu0
      %v2634 = vpop.f32.mrf.mxu0
      %2635 = vmatprep.mubr.bf16.mxu0 0
      %2636 = vmatmul.mubr.bf16.gmra.mxu0 %v2362
      %v2637 = vpop.f32.mrf.mxu0
      %v2638 = vadd.f32 0.0, %v2637
      %v2639 = vpop.f32.mrf.mxu0
      %v2640 = vpop.f32.mrf.mxu0
      %v2641 = vadd.f32 0.0, %v2640
      %v2642 = vpop.f32.mrf.mxu0
      %2643 = vmatprep.mubr.bf16.mxu0 0
      %2644 = vmatmul.mubr.bf16.gmra.mxu0 %v2363
      %v2645 = vpop.f32.mrf.mxu0
      %v2646 = vpop.f32.mrf.mxu0
      %v2647 = vpop.f32.mrf.mxu0
      %v2648 = vpop.f32.mrf.mxu0
      %2649 = vmatprep.mubr.bf16.mxu0 0
      %2650 = vmatmul.mubr.bf16.gmra.mxu0 %v2364
      %v2651 = vpop.f32.mrf.mxu0
      %v2652 = vadd.f32 0.0, %v2651
      %v2653 = vpop.f32.mrf.mxu0
      %v2654 = vpop.f32.mrf.mxu0
      %v2655 = vadd.f32 0.0, %v2654
      %v2656 = vpop.f32.mrf.mxu0
      %2657 = vmatprep.mubr.bf16.mxu0 0
      %2658 = vmatmul.mubr.bf16.gmra.mxu0 %v2365
      %v2659 = vpop.f32.mrf.mxu0
      %v2660 = vpop.f32.mrf.mxu0
      %v2661 = vpop.f32.mrf.mxu0
      %v2662 = vpop.f32.mrf.mxu0
      %2663 = vmatprep.mubr.bf16.mxu0 0
      %2664 = vmatmul.mubr.bf16.gmra.mxu0 %v2366
      %v2665 = vpop.f32.mrf.mxu0
      %v2666 = vadd.f32 0.0, %v2665
      %v2667 = vpop.f32.mrf.mxu0
      %v2668 = vpop.f32.mrf.mxu0
      %v2669 = vadd.f32 0.0, %v2668
      %v2670 = vpop.f32.mrf.mxu0
      %2671 = vmatprep.mubr.bf16.mxu0 0
      %2672 = vmatmul.mubr.bf16.gmra.mxu0 %v2367
      %v2673 = vpop.f32.mrf.mxu0
      %v2674 = vpop.f32.mrf.mxu0
      %v2675 = vpop.f32.mrf.mxu0
      %v2676 = vpop.f32.mrf.mxu0
      %2677 = vmatprep.mubr.bf16.mxu0 0
      %2678 = vmatmul.mubr.bf16.gmra.mxu0 %v2368
      %v2679 = vpop.f32.mrf.mxu0
      %v2680 = vadd.f32 0.0, %v2679
      %v2681 = vpop.f32.mrf.mxu0
      %v2682 = vpop.f32.mrf.mxu0
      %v2683 = vadd.f32 0.0, %v2682
      %v2684 = vpop.f32.mrf.mxu0
      %2685 = vmatprep.mubr.bf16.mxu0 0
      %2686 = vmatmul.mubr.bf16.gmra.mxu0 %v2369
      %v2687 = vpop.f32.mrf.mxu0
      %v2688 = vpop.f32.mrf.mxu0
      %v2689 = vpop.f32.mrf.mxu0
      %v2690 = vpop.f32.mrf.mxu0
      %2691 = vdwg.mxu0
      %v2692 = vadd.f32 %v2242, %v2470
      %v2693 = vadd.f32 %v2243, %v2473
      %v2694 = vadd.f32 %v2244, %v2484
      %v2695 = vadd.f32 %v2245, %v2487
      %v2696 = vadd.f32 %v2246, %v2498
      %v2697 = vadd.f32 %v2247, %v2501
      %v2698 = vadd.f32 %v2248, %v2512
      %v2699 = vadd.f32 %v2249, %v2515
      %v2700 = vadd.f32 %v2250, %v2526
      %v2701 = vadd.f32 %v2251, %v2529
      %v2702 = vadd.f32 %v2252, %v2540
      %v2703 = vadd.f32 %v2253, %v2543
      %v2704 = vadd.f32 %v2254, %v2554
      %v2705 = vadd.f32 %v2255, %v2557
      %v2706 = vadd.f32 %v2256, %v2568
      %v2707 = vadd.f32 %v2257, %v2571
      %v2708 = vadd.f32 %v2258, %v2582
      %v2709 = vadd.f32 %v2259, %v2585
      %v2710 = vadd.f32 %v2260, %v2596
      %v2711 = vadd.f32 %v2261, %v2599
      %v2712 = vadd.f32 %v2262, %v2610
      %v2713 = vadd.f32 %v2263, %v2613
      %v2714 = vadd.f32 %v2264, %v2624
      %v2715 = vadd.f32 %v2265, %v2627
      %v2716 = vadd.f32 %v2266, %v2638
      %v2717 = vadd.f32 %v2267, %v2641
      %v2718 = vadd.f32 %v2268, %v2652
      %v2719 = vadd.f32 %v2269, %v2655
      %v2720 = vadd.f32 %v2270, %v2666
      %v2721 = vadd.f32 %v2271, %v2669
      %v2722 = vadd.f32 %v2272, %v2680
      %v2723 = vadd.f32 %v2273, %v2683
      %v2724 = vld [vmem:[%s425] sm:$0xff]
      %v2725 = vld [vmem:[%s425 + $0x8] sm:$0xff]
      %v2726 = vld [vmem:[%s425 + $0x10] sm:$0xff]
      %v2727 = vld [vmem:[%s425 + $0x18] sm:$0xff]
      %v2728 = vld [vmem:[%s425 + $0x20] sm:$0xff]
      %v2729 = vld [vmem:[%s425 + $0x28] sm:$0xff]
      %v2730 = vld [vmem:[%s425 + $0x30] sm:$0xff]
      %v2731 = vld [vmem:[%s425 + $0x38] sm:$0xff]
      %v2732 = vld [vmem:[%s425 + $0x40] sm:$0xff]
      %v2733 = vld [vmem:[%s425 + $0x48] sm:$0xff]
      %v2734 = vld [vmem:[%s425 + $0x50] sm:$0xff]
      %v2735 = vld [vmem:[%s425 + $0x58] sm:$0xff]
      %v2736 = vld [vmem:[%s425 + $0x60] sm:$0xff]
      %v2737 = vld [vmem:[%s425 + $0x68] sm:$0xff]
      %v2738 = vld [vmem:[%s425 + $0x70] sm:$0xff]
      %v2739 = vld [vmem:[%s425 + $0x78] sm:$0xff]
      %v2740 = vld [vmem:[%s425 + $0x80] sm:$0xff]
      %v2741 = vld [vmem:[%s425 + $0x88] sm:$0xff]
      %v2742 = vld [vmem:[%s425 + $0x90] sm:$0xff]
      %v2743 = vld [vmem:[%s425 + $0x98] sm:$0xff]
      %v2744 = vld [vmem:[%s425 + $0xa0] sm:$0xff]
      %v2745 = vld [vmem:[%s425 + $0xa8] sm:$0xff]
      %v2746 = vld [vmem:[%s425 + $0xb0] sm:$0xff]
      %v2747 = vld [vmem:[%s425 + $0xb8] sm:$0xff]
      %v2748 = vld [vmem:[%s425 + $0xc0] sm:$0xff]
      %v2749 = vld [vmem:[%s425 + $0xc8] sm:$0xff]
      %v2750 = vld [vmem:[%s425 + $0xd0] sm:$0xff]
      %v2751 = vld [vmem:[%s425 + $0xd8] sm:$0xff]
      %v2752 = vld [vmem:[%s425 + $0xe0] sm:$0xff]
      %v2753 = vld [vmem:[%s425 + $0xe8] sm:$0xff]
      %v2754 = vld [vmem:[%s425 + $0xf0] sm:$0xff]
      %v2755 = vld [vmem:[%s425 + $0xf8] sm:$0xff]
      %v2756 = vld [vmem:[%s425 + $0x100] sm:$0xff]
      %v2757 = vld [vmem:[%s425 + $0x108] sm:$0xff]
      %v2758 = vld [vmem:[%s425 + $0x110] sm:$0xff]
      %v2759 = vld [vmem:[%s425 + $0x118] sm:$0xff]
      %v2760 = vld [vmem:[%s425 + $0x120] sm:$0xff]
      %v2761 = vld [vmem:[%s425 + $0x128] sm:$0xff]
      %v2762 = vld [vmem:[%s425 + $0x130] sm:$0xff]
      %v2763 = vld [vmem:[%s425 + $0x138] sm:$0xff]
      %v2764 = vld [vmem:[%s425 + $0x140] sm:$0xff]
      %v2765 = vld [vmem:[%s425 + $0x148] sm:$0xff]
      %v2766 = vld [vmem:[%s425 + $0x150] sm:$0xff]
      %v2767 = vld [vmem:[%s425 + $0x158] sm:$0xff]
      %v2768 = vld [vmem:[%s425 + $0x160] sm:$0xff]
      %v2769 = vld [vmem:[%s425 + $0x168] sm:$0xff]
      %v2770 = vld [vmem:[%s425 + $0x170] sm:$0xff]
      %v2771 = vld [vmem:[%s425 + $0x178] sm:$0xff]
      %v2772 = vld [vmem:[%s425 + $0x180] sm:$0xff]
      %v2773 = vld [vmem:[%s425 + $0x188] sm:$0xff]
      %v2774 = vld [vmem:[%s425 + $0x190] sm:$0xff]
      %v2775 = vld [vmem:[%s425 + $0x198] sm:$0xff]
      %v2776 = vld [vmem:[%s425 + $0x1a0] sm:$0xff]
      %v2777 = vld [vmem:[%s425 + $0x1a8] sm:$0xff]
      %v2778 = vld [vmem:[%s425 + $0x1b0] sm:$0xff]
      %v2779 = vld [vmem:[%s425 + $0x1b8] sm:$0xff]
      %v2780 = vld [vmem:[%s425 + $0x1c0] sm:$0xff]
      %v2781 = vld [vmem:[%s425 + $0x1c8] sm:$0xff]
      %v2782 = vld [vmem:[%s425 + $0x1d0] sm:$0xff]
      %v2783 = vld [vmem:[%s425 + $0x1d8] sm:$0xff]
      %v2784 = vld [vmem:[%s425 + $0x1e0] sm:$0xff]
      %v2785 = vld [vmem:[%s425 + $0x1e8] sm:$0xff]
      %v2786 = vld [vmem:[%s425 + $0x1f0] sm:$0xff]
      %v2787 = vld [vmem:[%s425 + $0x1f8] sm:$0xff]
      %v2788 = vpack.c.bf16 %v2725, %v2724
      %v2789 = vpack.c.bf16 %v2727, %v2726
      %v2790 = vpack.c.bf16 %v2729, %v2728
      %v2791 = vpack.c.bf16 %v2731, %v2730
      %v2792 = vpack.c.bf16 %v2733, %v2732
      %v2793 = vpack.c.bf16 %v2735, %v2734
      %v2794 = vpack.c.bf16 %v2737, %v2736
      %v2795 = vpack.c.bf16 %v2739, %v2738
      %v2796 = vpack.c.bf16 %v2741, %v2740
      %v2797 = vpack.c.bf16 %v2743, %v2742
      %v2798 = vpack.c.bf16 %v2745, %v2744
      %v2799 = vpack.c.bf16 %v2747, %v2746
      %v2800 = vpack.c.bf16 %v2749, %v2748
      %v2801 = vpack.c.bf16 %v2751, %v2750
      %v2802 = vpack.c.bf16 %v2753, %v2752
      %v2803 = vpack.c.bf16 %v2755, %v2754
      %v2804 = vpack.c.bf16 %v2757, %v2756
      %v2805 = vpack.c.bf16 %v2759, %v2758
      %v2806 = vpack.c.bf16 %v2761, %v2760
      %v2807 = vpack.c.bf16 %v2763, %v2762
      %v2808 = vpack.c.bf16 %v2765, %v2764
      %v2809 = vpack.c.bf16 %v2767, %v2766
      %v2810 = vpack.c.bf16 %v2769, %v2768
      %v2811 = vpack.c.bf16 %v2771, %v2770
      %v2812 = vpack.c.bf16 %v2773, %v2772
      %v2813 = vpack.c.bf16 %v2775, %v2774
      %v2814 = vpack.c.bf16 %v2777, %v2776
      %v2815 = vpack.c.bf16 %v2779, %v2778
      %v2816 = vpack.c.bf16 %v2781, %v2780
      %v2817 = vpack.c.bf16 %v2783, %v2782
      %v2818 = vpack.c.bf16 %v2785, %v2784
      %v2819 = vpack.c.bf16 %v2787, %v2786
      %s2820 = scalar_lea.vmem %s3, 320
      %v2821 = vld [vmem:[%s2820] sm:$0xf]
      %v2822 = vld [vmem:[%s2820 + $0x4] sm:$0xf]
      %v2823 = vld [vmem:[%s2820 + $0x8] sm:$0xf]
      %v2824 = vld [vmem:[%s2820 + $0xc] sm:$0xf]
      %v2825 = vld [vmem:[%s2820 + $0x10] sm:$0xf]
      %v2826 = vld [vmem:[%s2820 + $0x14] sm:$0xf]
      %v2827 = vld [vmem:[%s2820 + $0x18] sm:$0xf]
      %v2828 = vld [vmem:[%s2820 + $0x1c] sm:$0xf]
      %v2829 = vld [vmem:[%s2820 + $0x20] sm:$0xf]
      %v2830 = vld [vmem:[%s2820 + $0x24] sm:$0xf]
      %v2831 = vld [vmem:[%s2820 + $0x28] sm:$0xf]
      %v2832 = vld [vmem:[%s2820 + $0x2c] sm:$0xf]
      %v2833 = vld [vmem:[%s2820 + $0x30] sm:$0xf]
      %v2834 = vld [vmem:[%s2820 + $0x34] sm:$0xf]
      %v2835 = vld [vmem:[%s2820 + $0x38] sm:$0xf]
      %v2836 = vld [vmem:[%s2820 + $0x3c] sm:$0xf]
      %v2853 = vunpack.c.l.b16 %v2821
      %v2854 = vunpack.c.l.b16 %v2822
      %v2855 = vunpack.c.l.b16 %v2823
      %v2856 = vunpack.c.l.b16 %v2824
      %v2857 = vunpack.c.l.b16 %v2825
      %v2858 = vunpack.c.l.b16 %v2826
      %v2859 = vunpack.c.l.b16 %v2827
      %v2860 = vunpack.c.l.b16 %v2828
      %v2861 = vunpack.c.l.b16 %v2829
      %v2862 = vunpack.c.l.b16 %v2830
      %v2863 = vunpack.c.l.b16 %v2831
      %v2864 = vunpack.c.l.b16 %v2832
      %v2865 = vunpack.c.l.b16 %v2833
      %v2866 = vunpack.c.l.b16 %v2834
      %v2867 = vunpack.c.l.b16 %v2835
      %v2868 = vunpack.c.l.b16 %v2836
      %v2869 = vpack.c.b16 %v2854, %v2853
      %v2870 = vpack.c.b16 %v2856, %v2855
      %v2871 = vpack.c.b16 %v2858, %v2857
      %v2872 = vpack.c.b16 %v2860, %v2859
      %v2873 = vpack.c.b16 %v2862, %v2861
      %v2874 = vpack.c.b16 %v2864, %v2863
      %v2875 = vpack.c.b16 %v2866, %v2865
      %v2876 = vpack.c.b16 %v2868, %v2867
      %2885 = vmatprep.subr.bf16.mxu0 0
      %2886 = vmatpush1.bf16.msra.mxu0 %v2876
      %2887 = vmatprep.subr.bf16.mxu0 0
      %2888 = vmatpush1.bf16.msra.mxu0 %v2875
      %2889 = vmatprep.subr.bf16.mxu0 0
      %2890 = vmatpush1.bf16.msra.mxu0 %v2874
      %2891 = vmatprep.subr.bf16.mxu0 0
      %2892 = vmatpush1.bf16.msra.mxu0 %v2873
      %2893 = vmatprep.subr.bf16.mxu0 0
      %2894 = vmatpush1.bf16.msra.mxu0 %v2872
      %2895 = vmatprep.subr.bf16.mxu0 0
      %2896 = vmatpush1.bf16.msra.mxu0 %v2871
      %2897 = vmatprep.subr.bf16.mxu0 0
      %2898 = vmatpush1.bf16.msra.mxu0 %v2870
      %2899 = vmatprep.subr.bf16.mxu0 0
      %2900 = vmatpush1.bf16.msra.mxu0 %v2869
      %2901 = vmatprep.subr.bf16.mxu0 0
      %2902 = vmatpush2.bf16.msra.mxu0 0
      %2903 = vmatprep.subr.bf16.mxu0 0
      %2904 = vmatpush2.bf16.msra.mxu0 0
      %2905 = vmatprep.subr.bf16.mxu0 0
      %2906 = vmatpush2.bf16.msra.mxu0 0
      %2907 = vmatprep.subr.bf16.mxu0 0
      %2908 = vmatpush2.bf16.msra.mxu0 0
      %2909 = vmatprep.subr.bf16.mxu0 0
      %2910 = vmatpush2.bf16.msra.mxu0 0
      %2911 = vmatprep.subr.bf16.mxu0 0
      %2912 = vmatpush2.bf16.msra.mxu0 0
      %2913 = vmatprep.subr.bf16.mxu0 0
      %2914 = vmatpush2.bf16.msra.mxu0 0
      %2915 = vmatprep.subr.bf16.mxu0 0
      %2916 = vmatpush2.bf16.msra.mxu0 0
      %2917 = vmatprep.mubr.bf16.mxu0 0
      %2918 = vmatmul.mubr.bf16.gmra.mxu0 %v2788
      %v2919 = vpop.f32.mrf.mxu0
      %v2920 = vadd.f32 0.0, %v2919
      %v2921 = vpop.f32.mrf.mxu0
      %v2922 = vpop.f32.mrf.mxu0
      %v2923 = vadd.f32 0.0, %v2922
      %v2924 = vpop.f32.mrf.mxu0
      %2925 = vmatprep.mubr.bf16.mxu0 0
      %2926 = vmatmul.mubr.bf16.gmra.mxu0 %v2789
      %v2927 = vpop.f32.mrf.mxu0
      %v2928 = vpop.f32.mrf.mxu0
      %v2929 = vpop.f32.mrf.mxu0
      %v2930 = vpop.f32.mrf.mxu0
      %2931 = vmatprep.mubr.bf16.mxu0 0
      %2932 = vmatmul.mubr.bf16.gmra.mxu0 %v2790
      %v2933 = vpop.f32.mrf.mxu0
      %v2934 = vadd.f32 0.0, %v2933
      %v2935 = vpop.f32.mrf.mxu0
      %v2936 = vpop.f32.mrf.mxu0
      %v2937 = vadd.f32 0.0, %v2936
      %v2938 = vpop.f32.mrf.mxu0
      %2939 = vmatprep.mubr.bf16.mxu0 0
      %2940 = vmatmul.mubr.bf16.gmra.mxu0 %v2791
      %v2941 = vpop.f32.mrf.mxu0
      %v2942 = vpop.f32.mrf.mxu0
      %v2943 = vpop.f32.mrf.mxu0
      %v2944 = vpop.f32.mrf.mxu0
      %2945 = vmatprep.mubr.bf16.mxu0 0
      %2946 = vmatmul.mubr.bf16.gmra.mxu0 %v2792
      %v2947 = vpop.f32.mrf.mxu0
      %v2948 = vadd.f32 0.0, %v2947
      %v2949 = vpop.f32.mrf.mxu0
      %v2950 = vpop.f32.mrf.mxu0
      %v2951 = vadd.f32 0.0, %v2950
      %v2952 = vpop.f32.mrf.mxu0
      %2953 = vmatprep.mubr.bf16.mxu0 0
      %2954 = vmatmul.mubr.bf16.gmra.mxu0 %v2793
      %v2955 = vpop.f32.mrf.mxu0
      %v2956 = vpop.f32.mrf.mxu0
      %v2957 = vpop.f32.mrf.mxu0
      %v2958 = vpop.f32.mrf.mxu0
      %2959 = vmatprep.mubr.bf16.mxu0 0
      %2960 = vmatmul.mubr.bf16.gmra.mxu0 %v2794
      %v2961 = vpop.f32.mrf.mxu0
      %v2962 = vadd.f32 0.0, %v2961
      %v2963 = vpop.f32.mrf.mxu0
      %v2964 = vpop.f32.mrf.mxu0
      %v2965 = vadd.f32 0.0, %v2964
      %v2966 = vpop.f32.mrf.mxu0
      %2967 = vmatprep.mubr.bf16.mxu0 0
      %2968 = vmatmul.mubr.bf16.gmra.mxu0 %v2795
      %v2969 = vpop.f32.mrf.mxu0
      %v2970 = vpop.f32.mrf.mxu0
      %v2971 = vpop.f32.mrf.mxu0
      %v2972 = vpop.f32.mrf.mxu0
      %2973 = vmatprep.mubr.bf16.mxu0 0
      %2974 = vmatmul.mubr.bf16.gmra.mxu0 %v2796
      %v2975 = vpop.f32.mrf.mxu0
      %v2976 = vadd.f32 0.0, %v2975
      %v2977 = vpop.f32.mrf.mxu0
      %v2978 = vpop.f32.mrf.mxu0
      %v2979 = vadd.f32 0.0, %v2978
      %v2980 = vpop.f32.mrf.mxu0
      %2981 = vmatprep.mubr.bf16.mxu0 0
      %2982 = vmatmul.mubr.bf16.gmra.mxu0 %v2797
      %v2983 = vpop.f32.mrf.mxu0
      %v2984 = vpop.f32.mrf.mxu0
      %v2985 = vpop.f32.mrf.mxu0
      %v2986 = vpop.f32.mrf.mxu0
      %2987 = vmatprep.mubr.bf16.mxu0 0
      %2988 = vmatmul.mubr.bf16.gmra.mxu0 %v2798
      %v2989 = vpop.f32.mrf.mxu0
      %v2990 = vadd.f32 0.0, %v2989
      %v2991 = vpop.f32.mrf.mxu0
      %v2992 = vpop.f32.mrf.mxu0
      %v2993 = vadd.f32 0.0, %v2992
      %v2994 = vpop.f32.mrf.mxu0
      %2995 = vmatprep.mubr.bf16.mxu0 0
      %2996 = vmatmul.mubr.bf16.gmra.mxu0 %v2799
      %v2997 = vpop.f32.mrf.mxu0
      %v2998 = vpop.f32.mrf.mxu0
      %v2999 = vpop.f32.mrf.mxu0
      %v3000 = vpop.f32.mrf.mxu0
      %3001 = vmatprep.mubr.bf16.mxu0 0
      %3002 = vmatmul.mubr.bf16.gmra.mxu0 %v2800
      %v3003 = vpop.f32.mrf.mxu0
      %v3004 = vadd.f32 0.0, %v3003
      %v3005 = vpop.f32.mrf.mxu0
      %v3006 = vpop.f32.mrf.mxu0
      %v3007 = vadd.f32 0.0, %v3006
      %v3008 = vpop.f32.mrf.mxu0
      %3009 = vmatprep.mubr.bf16.mxu0 0
      %3010 = vmatmul.mubr.bf16.gmra.mxu0 %v2801
      %v3011 = vpop.f32.mrf.mxu0
      %v3012 = vpop.f32.mrf.mxu0
      %v3013 = vpop.f32.mrf.mxu0
      %v3014 = vpop.f32.mrf.mxu0
      %3015 = vmatprep.mubr.bf16.mxu0 0
      %3016 = vmatmul.mubr.bf16.gmra.mxu0 %v2802
      %v3017 = vpop.f32.mrf.mxu0
      %v3018 = vadd.f32 0.0, %v3017
      %v3019 = vpop.f32.mrf.mxu0
      %v3020 = vpop.f32.mrf.mxu0
      %v3021 = vadd.f32 0.0, %v3020
      %v3022 = vpop.f32.mrf.mxu0
      %3023 = vmatprep.mubr.bf16.mxu0 0
      %3024 = vmatmul.mubr.bf16.gmra.mxu0 %v2803
      %v3025 = vpop.f32.mrf.mxu0
      %v3026 = vpop.f32.mrf.mxu0
      %v3027 = vpop.f32.mrf.mxu0
      %v3028 = vpop.f32.mrf.mxu0
      %3029 = vmatprep.mubr.bf16.mxu0 0
      %3030 = vmatmul.mubr.bf16.gmra.mxu0 %v2804
      %v3031 = vpop.f32.mrf.mxu0
      %v3032 = vadd.f32 0.0, %v3031
      %v3033 = vpop.f32.mrf.mxu0
      %v3034 = vpop.f32.mrf.mxu0
      %v3035 = vadd.f32 0.0, %v3034
      %v3036 = vpop.f32.mrf.mxu0
      %3037 = vmatprep.mubr.bf16.mxu0 0
      %3038 = vmatmul.mubr.bf16.gmra.mxu0 %v2805
      %v3039 = vpop.f32.mrf.mxu0
      %v3040 = vpop.f32.mrf.mxu0
      %v3041 = vpop.f32.mrf.mxu0
      %v3042 = vpop.f32.mrf.mxu0
      %3043 = vmatprep.mubr.bf16.mxu0 0
      %3044 = vmatmul.mubr.bf16.gmra.mxu0 %v2806
      %v3045 = vpop.f32.mrf.mxu0
      %v3046 = vadd.f32 0.0, %v3045
      %v3047 = vpop.f32.mrf.mxu0
      %v3048 = vpop.f32.mrf.mxu0
      %v3049 = vadd.f32 0.0, %v3048
      %v3050 = vpop.f32.mrf.mxu0
      %3051 = vmatprep.mubr.bf16.mxu0 0
      %3052 = vmatmul.mubr.bf16.gmra.mxu0 %v2807
      %v3053 = vpop.f32.mrf.mxu0
      %v3054 = vpop.f32.mrf.mxu0
      %v3055 = vpop.f32.mrf.mxu0
      %v3056 = vpop.f32.mrf.mxu0
      %3057 = vmatprep.mubr.bf16.mxu0 0
      %3058 = vmatmul.mubr.bf16.gmra.mxu0 %v2808
      %v3059 = vpop.f32.mrf.mxu0
      %v3060 = vadd.f32 0.0, %v3059
      %v3061 = vpop.f32.mrf.mxu0
      %v3062 = vpop.f32.mrf.mxu0
      %v3063 = vadd.f32 0.0, %v3062
      %v3064 = vpop.f32.mrf.mxu0
      %3065 = vmatprep.mubr.bf16.mxu0 0
      %3066 = vmatmul.mubr.bf16.gmra.mxu0 %v2809
      %v3067 = vpop.f32.mrf.mxu0
      %v3068 = vpop.f32.mrf.mxu0
      %v3069 = vpop.f32.mrf.mxu0
      %v3070 = vpop.f32.mrf.mxu0
      %3071 = vmatprep.mubr.bf16.mxu0 0
      %3072 = vmatmul.mubr.bf16.gmra.mxu0 %v2810
      %v3073 = vpop.f32.mrf.mxu0
      %v3074 = vadd.f32 0.0, %v3073
      %v3075 = vpop.f32.mrf.mxu0
      %v3076 = vpop.f32.mrf.mxu0
      %v3077 = vadd.f32 0.0, %v3076
      %v3078 = vpop.f32.mrf.mxu0
      %3079 = vmatprep.mubr.bf16.mxu0 0
      %3080 = vmatmul.mubr.bf16.gmra.mxu0 %v2811
      %v3081 = vpop.f32.mrf.mxu0
      %v3082 = vpop.f32.mrf.mxu0
      %v3083 = vpop.f32.mrf.mxu0
      %v3084 = vpop.f32.mrf.mxu0
      %3085 = vmatprep.mubr.bf16.mxu0 0
      %3086 = vmatmul.mubr.bf16.gmra.mxu0 %v2812
      %v3087 = vpop.f32.mrf.mxu0
      %v3088 = vadd.f32 0.0, %v3087
      %v3089 = vpop.f32.mrf.mxu0
      %v3090 = vpop.f32.mrf.mxu0
      %v3091 = vadd.f32 0.0, %v3090
      %v3092 = vpop.f32.mrf.mxu0
      %3093 = vmatprep.mubr.bf16.mxu0 0
      %3094 = vmatmul.mubr.bf16.gmra.mxu0 %v2813
      %v3095 = vpop.f32.mrf.mxu0
      %v3096 = vpop.f32.mrf.mxu0
      %v3097 = vpop.f32.mrf.mxu0
      %v3098 = vpop.f32.mrf.mxu0
      %3099 = vmatprep.mubr.bf16.mxu0 0
      %3100 = vmatmul.mubr.bf16.gmra.mxu0 %v2814
      %v3101 = vpop.f32.mrf.mxu0
      %v3102 = vadd.f32 0.0, %v3101
      %v3103 = vpop.f32.mrf.mxu0
      %v3104 = vpop.f32.mrf.mxu0
      %v3105 = vadd.f32 0.0, %v3104
      %v3106 = vpop.f32.mrf.mxu0
      %3107 = vmatprep.mubr.bf16.mxu0 0
      %3108 = vmatmul.mubr.bf16.gmra.mxu0 %v2815
      %v3109 = vpop.f32.mrf.mxu0
      %v3110 = vpop.f32.mrf.mxu0
      %v3111 = vpop.f32.mrf.mxu0
      %v3112 = vpop.f32.mrf.mxu0
      %3113 = vmatprep.mubr.bf16.mxu0 0
      %3114 = vmatmul.mubr.bf16.gmra.mxu0 %v2816
      %v3115 = vpop.f32.mrf.mxu0
      %v3116 = vadd.f32 0.0, %v3115
      %v3117 = vpop.f32.mrf.mxu0
      %v3118 = vpop.f32.mrf.mxu0
      %v3119 = vadd.f32 0.0, %v3118
      %v3120 = vpop.f32.mrf.mxu0
      %3121 = vmatprep.mubr.bf16.mxu0 0
      %3122 = vmatmul.mubr.bf16.gmra.mxu0 %v2817
      %v3123 = vpop.f32.mrf.mxu0
      %v3124 = vpop.f32.mrf.mxu0
      %v3125 = vpop.f32.mrf.mxu0
      %v3126 = vpop.f32.mrf.mxu0
      %3127 = vmatprep.mubr.bf16.mxu0 0
      %3128 = vmatmul.mubr.bf16.gmra.mxu0 %v2818
      %v3129 = vpop.f32.mrf.mxu0
      %v3130 = vadd.f32 0.0, %v3129
      %v3131 = vpop.f32.mrf.mxu0
      %v3132 = vpop.f32.mrf.mxu0
      %v3133 = vadd.f32 0.0, %v3132
      %v3134 = vpop.f32.mrf.mxu0
      %3135 = vmatprep.mubr.bf16.mxu0 0
      %3136 = vmatmul.mubr.bf16.gmra.mxu0 %v2819
      %v3137 = vpop.f32.mrf.mxu0
      %v3138 = vpop.f32.mrf.mxu0
      %v3139 = vpop.f32.mrf.mxu0
      %v3140 = vpop.f32.mrf.mxu0
      %3141 = vdwg.mxu0
      %v3142 = vadd.f32 %v2692, %v2920
      %v3143 = vadd.f32 %v2693, %v2923
      %v3144 = vadd.f32 %v2694, %v2934
      %v3145 = vadd.f32 %v2695, %v2937
      %v3146 = vadd.f32 %v2696, %v2948
      %v3147 = vadd.f32 %v2697, %v2951
      %v3148 = vadd.f32 %v2698, %v2962
      %v3149 = vadd.f32 %v2699, %v2965
      %v3150 = vadd.f32 %v2700, %v2976
      %v3151 = vadd.f32 %v2701, %v2979
      %v3152 = vadd.f32 %v2702, %v2990
      %v3153 = vadd.f32 %v2703, %v2993
      %v3154 = vadd.f32 %v2704, %v3004
      %v3155 = vadd.f32 %v2705, %v3007
      %v3156 = vadd.f32 %v2706, %v3018
      %v3157 = vadd.f32 %v2707, %v3021
      %v3158 = vadd.f32 %v2708, %v3032
      %v3159 = vadd.f32 %v2709, %v3035
      %v3160 = vadd.f32 %v2710, %v3046
      %v3161 = vadd.f32 %v2711, %v3049
      %v3162 = vadd.f32 %v2712, %v3060
      %v3163 = vadd.f32 %v2713, %v3063
      %v3164 = vadd.f32 %v2714, %v3074
      %v3165 = vadd.f32 %v2715, %v3077
      %v3166 = vadd.f32 %v2716, %v3088
      %v3167 = vadd.f32 %v2717, %v3091
      %v3168 = vadd.f32 %v2718, %v3102
      %v3169 = vadd.f32 %v2719, %v3105
      %v3170 = vadd.f32 %v2720, %v3116
      %v3171 = vadd.f32 %v2721, %v3119
      %v3172 = vadd.f32 %v2722, %v3130
      %v3173 = vadd.f32 %v2723, %v3133
      %s3174 = scalar_lea.vmem [#allocation2], 64
      %v3175 = vld [vmem:[%s3174] sm:$0xff]
      %v3176 = vld [vmem:[%s3174 + $0x8] sm:$0xff]
      %v3177 = vld [vmem:[%s3174 + $0x10] sm:$0xff]
      %v3178 = vld [vmem:[%s3174 + $0x18] sm:$0xff]
      %v3179 = vld [vmem:[%s3174 + $0x20] sm:$0xff]
      %v3180 = vld [vmem:[%s3174 + $0x28] sm:$0xff]
      %v3181 = vld [vmem:[%s3174 + $0x30] sm:$0xff]
      %v3182 = vld [vmem:[%s3174 + $0x38] sm:$0xff]
      %v3183 = vld [vmem:[%s3174 + $0x40] sm:$0xff]
      %v3184 = vld [vmem:[%s3174 + $0x48] sm:$0xff]
      %v3185 = vld [vmem:[%s3174 + $0x50] sm:$0xff]
      %v3186 = vld [vmem:[%s3174 + $0x58] sm:$0xff]
      %v3187 = vld [vmem:[%s3174 + $0x60] sm:$0xff]
      %v3188 = vld [vmem:[%s3174 + $0x68] sm:$0xff]
      %v3189 = vld [vmem:[%s3174 + $0x70] sm:$0xff]
      %v3190 = vld [vmem:[%s3174 + $0x78] sm:$0xff]
      %v3191 = vld [vmem:[%s3174 + $0x80] sm:$0xff]
      %v3192 = vld [vmem:[%s3174 + $0x88] sm:$0xff]
      %v3193 = vld [vmem:[%s3174 + $0x90] sm:$0xff]
      %v3194 = vld [vmem:[%s3174 + $0x98] sm:$0xff]
      %v3195 = vld [vmem:[%s3174 + $0xa0] sm:$0xff]
      %v3196 = vld [vmem:[%s3174 + $0xa8] sm:$0xff]
      %v3197 = vld [vmem:[%s3174 + $0xb0] sm:$0xff]
      %v3198 = vld [vmem:[%s3174 + $0xb8] sm:$0xff]
      %v3199 = vld [vmem:[%s3174 + $0xc0] sm:$0xff]
      %v3200 = vld [vmem:[%s3174 + $0xc8] sm:$0xff]
      %v3201 = vld [vmem:[%s3174 + $0xd0] sm:$0xff]
      %v3202 = vld [vmem:[%s3174 + $0xd8] sm:$0xff]
      %v3203 = vld [vmem:[%s3174 + $0xe0] sm:$0xff]
      %v3204 = vld [vmem:[%s3174 + $0xe8] sm:$0xff]
      %v3205 = vld [vmem:[%s3174 + $0xf0] sm:$0xff]
      %v3206 = vld [vmem:[%s3174 + $0xf8] sm:$0xff]
      %v3207 = vld [vmem:[%s3174 + $0x100] sm:$0xff]
      %v3208 = vld [vmem:[%s3174 + $0x108] sm:$0xff]
      %v3209 = vld [vmem:[%s3174 + $0x110] sm:$0xff]
      %v3210 = vld [vmem:[%s3174 + $0x118] sm:$0xff]
      %v3211 = vld [vmem:[%s3174 + $0x120] sm:$0xff]
      %v3212 = vld [vmem:[%s3174 + $0x128] sm:$0xff]
      %v3213 = vld [vmem:[%s3174 + $0x130] sm:$0xff]
      %v3214 = vld [vmem:[%s3174 + $0x138] sm:$0xff]
      %v3215 = vld [vmem:[%s3174 + $0x140] sm:$0xff]
      %v3216 = vld [vmem:[%s3174 + $0x148] sm:$0xff]
      %v3217 = vld [vmem:[%s3174 + $0x150] sm:$0xff]
      %v3218 = vld [vmem:[%s3174 + $0x158] sm:$0xff]
      %v3219 = vld [vmem:[%s3174 + $0x160] sm:$0xff]
      %v3220 = vld [vmem:[%s3174 + $0x168] sm:$0xff]
      %v3221 = vld [vmem:[%s3174 + $0x170] sm:$0xff]
      %v3222 = vld [vmem:[%s3174 + $0x178] sm:$0xff]
      %v3223 = vld [vmem:[%s3174 + $0x180] sm:$0xff]
      %v3224 = vld [vmem:[%s3174 + $0x188] sm:$0xff]
      %v3225 = vld [vmem:[%s3174 + $0x190] sm:$0xff]
      %v3226 = vld [vmem:[%s3174 + $0x198] sm:$0xff]
      %v3227 = vld [vmem:[%s3174 + $0x1a0] sm:$0xff]
      %v3228 = vld [vmem:[%s3174 + $0x1a8] sm:$0xff]
      %v3229 = vld [vmem:[%s3174 + $0x1b0] sm:$0xff]
      %v3230 = vld [vmem:[%s3174 + $0x1b8] sm:$0xff]
      %v3231 = vld [vmem:[%s3174 + $0x1c0] sm:$0xff]
      %v3232 = vld [vmem:[%s3174 + $0x1c8] sm:$0xff]
      %v3233 = vld [vmem:[%s3174 + $0x1d0] sm:$0xff]
      %v3234 = vld [vmem:[%s3174 + $0x1d8] sm:$0xff]
      %v3235 = vld [vmem:[%s3174 + $0x1e0] sm:$0xff]
      %v3236 = vld [vmem:[%s3174 + $0x1e8] sm:$0xff]
      %v3237 = vld [vmem:[%s3174 + $0x1f0] sm:$0xff]
      %v3238 = vld [vmem:[%s3174 + $0x1f8] sm:$0xff]
      %v3239 = vpack.c.bf16 %v3176, %v3175
      %v3240 = vpack.c.bf16 %v3178, %v3177
      %v3241 = vpack.c.bf16 %v3180, %v3179
      %v3242 = vpack.c.bf16 %v3182, %v3181
      %v3243 = vpack.c.bf16 %v3184, %v3183
      %v3244 = vpack.c.bf16 %v3186, %v3185
      %v3245 = vpack.c.bf16 %v3188, %v3187
      %v3246 = vpack.c.bf16 %v3190, %v3189
      %v3247 = vpack.c.bf16 %v3192, %v3191
      %v3248 = vpack.c.bf16 %v3194, %v3193
      %v3249 = vpack.c.bf16 %v3196, %v3195
      %v3250 = vpack.c.bf16 %v3198, %v3197
      %v3251 = vpack.c.bf16 %v3200, %v3199
      %v3252 = vpack.c.bf16 %v3202, %v3201
      %v3253 = vpack.c.bf16 %v3204, %v3203
      %v3254 = vpack.c.bf16 %v3206, %v3205
      %v3255 = vpack.c.bf16 %v3208, %v3207
      %v3256 = vpack.c.bf16 %v3210, %v3209
      %v3257 = vpack.c.bf16 %v3212, %v3211
      %v3258 = vpack.c.bf16 %v3214, %v3213
      %v3259 = vpack.c.bf16 %v3216, %v3215
      %v3260 = vpack.c.bf16 %v3218, %v3217
      %v3261 = vpack.c.bf16 %v3220, %v3219
      %v3262 = vpack.c.bf16 %v3222, %v3221
      %v3263 = vpack.c.bf16 %v3224, %v3223
      %v3264 = vpack.c.bf16 %v3226, %v3225
      %v3265 = vpack.c.bf16 %v3228, %v3227
      %v3266 = vpack.c.bf16 %v3230, %v3229
      %v3267 = vpack.c.bf16 %v3232, %v3231
      %v3268 = vpack.c.bf16 %v3234, %v3233
      %v3269 = vpack.c.bf16 %v3236, %v3235
      %v3270 = vpack.c.bf16 %v3238, %v3237
      %s3271 = scalar_lea.vmem %s3, 384
      %v3272 = vld [vmem:[%s3271] sm:$0xf]
      %v3273 = vld [vmem:[%s3271 + $0x4] sm:$0xf]
      %v3274 = vld [vmem:[%s3271 + $0x8] sm:$0xf]
      %v3275 = vld [vmem:[%s3271 + $0xc] sm:$0xf]
      %v3276 = vld [vmem:[%s3271 + $0x10] sm:$0xf]
      %v3277 = vld [vmem:[%s3271 + $0x14] sm:$0xf]
      %v3278 = vld [vmem:[%s3271 + $0x18] sm:$0xf]
      %v3279 = vld [vmem:[%s3271 + $0x1c] sm:$0xf]
      %v3280 = vld [vmem:[%s3271 + $0x20] sm:$0xf]
      %v3281 = vld [vmem:[%s3271 + $0x24] sm:$0xf]
      %v3282 = vld [vmem:[%s3271 + $0x28] sm:$0xf]
      %v3283 = vld [vmem:[%s3271 + $0x2c] sm:$0xf]
      %v3284 = vld [vmem:[%s3271 + $0x30] sm:$0xf]
      %v3285 = vld [vmem:[%s3271 + $0x34] sm:$0xf]
      %v3286 = vld [vmem:[%s3271 + $0x38] sm:$0xf]
      %v3287 = vld [vmem:[%s3271 + $0x3c] sm:$0xf]
      %v3304 = vunpack.c.l.b16 %v3272
      %v3305 = vunpack.c.l.b16 %v3273
      %v3306 = vunpack.c.l.b16 %v3274
      %v3307 = vunpack.c.l.b16 %v3275
      %v3308 = vunpack.c.l.b16 %v3276
      %v3309 = vunpack.c.l.b16 %v3277
      %v3310 = vunpack.c.l.b16 %v3278
      %v3311 = vunpack.c.l.b16 %v3279
      %v3312 = vunpack.c.l.b16 %v3280
      %v3313 = vunpack.c.l.b16 %v3281
      %v3314 = vunpack.c.l.b16 %v3282
      %v3315 = vunpack.c.l.b16 %v3283
      %v3316 = vunpack.c.l.b16 %v3284
      %v3317 = vunpack.c.l.b16 %v3285
      %v3318 = vunpack.c.l.b16 %v3286
      %v3319 = vunpack.c.l.b16 %v3287
      %v3320 = vpack.c.b16 %v3305, %v3304
      %v3321 = vpack.c.b16 %v3307, %v3306
      %v3322 = vpack.c.b16 %v3309, %v3308
      %v3323 = vpack.c.b16 %v3311, %v3310
      %v3324 = vpack.c.b16 %v3313, %v3312
      %v3325 = vpack.c.b16 %v3315, %v3314
      %v3326 = vpack.c.b16 %v3317, %v3316
      %v3327 = vpack.c.b16 %v3319, %v3318
      %3336 = vmatprep.subr.bf16.mxu0 0
      %3337 = vmatpush1.bf16.msra.mxu0 %v3327
      %3338 = vmatprep.subr.bf16.mxu0 0
      %3339 = vmatpush1.bf16.msra.mxu0 %v3326
      %3340 = vmatprep.subr.bf16.mxu0 0
      %3341 = vmatpush1.bf16.msra.mxu0 %v3325
      %3342 = vmatprep.subr.bf16.mxu0 0
      %3343 = vmatpush1.bf16.msra.mxu0 %v3324
      %3344 = vmatprep.subr.bf16.mxu0 0
      %3345 = vmatpush1.bf16.msra.mxu0 %v3323
      %3346 = vmatprep.subr.bf16.mxu0 0
      %3347 = vmatpush1.bf16.msra.mxu0 %v3322
      %3348 = vmatprep.subr.bf16.mxu0 0
      %3349 = vmatpush1.bf16.msra.mxu0 %v3321
      %3350 = vmatprep.subr.bf16.mxu0 0
      %3351 = vmatpush1.bf16.msra.mxu0 %v3320
      %3352 = vmatprep.subr.bf16.mxu0 0
      %3353 = vmatpush2.bf16.msra.mxu0 0
      %3354 = vmatprep.subr.bf16.mxu0 0
      %3355 = vmatpush2.bf16.msra.mxu0 0
      %3356 = vmatprep.subr.bf16.mxu0 0
      %3357 = vmatpush2.bf16.msra.mxu0 0
      %3358 = vmatprep.subr.bf16.mxu0 0
      %3359 = vmatpush2.bf16.msra.mxu0 0
      %3360 = vmatprep.subr.bf16.mxu0 0
      %3361 = vmatpush2.bf16.msra.mxu0 0
      %3362 = vmatprep.subr.bf16.mxu0 0
      %3363 = vmatpush2.bf16.msra.mxu0 0
      %3364 = vmatprep.subr.bf16.mxu0 0
      %3365 = vmatpush2.bf16.msra.mxu0 0
      %3366 = vmatprep.subr.bf16.mxu0 0
      %3367 = vmatpush2.bf16.msra.mxu0 0
      %3368 = vmatprep.mubr.bf16.mxu0 0
      %3369 = vmatmul.mubr.bf16.gmra.mxu0 %v3239
      %v3370 = vpop.f32.mrf.mxu0
      %v3371 = vadd.f32 0.0, %v3370
      %v3372 = vpop.f32.mrf.mxu0
      %v3373 = vpop.f32.mrf.mxu0
      %v3374 = vadd.f32 0.0, %v3373
      %v3375 = vpop.f32.mrf.mxu0
      %3376 = vmatprep.mubr.bf16.mxu0 0
      %3377 = vmatmul.mubr.bf16.gmra.mxu0 %v3240
      %v3378 = vpop.f32.mrf.mxu0
      %v3379 = vpop.f32.mrf.mxu0
      %v3380 = vpop.f32.mrf.mxu0
      %v3381 = vpop.f32.mrf.mxu0
      %3382 = vmatprep.mubr.bf16.mxu0 0
      %3383 = vmatmul.mubr.bf16.gmra.mxu0 %v3241
      %v3384 = vpop.f32.mrf.mxu0
      %v3385 = vadd.f32 0.0, %v3384
      %v3386 = vpop.f32.mrf.mxu0
      %v3387 = vpop.f32.mrf.mxu0
      %v3388 = vadd.f32 0.0, %v3387
      %v3389 = vpop.f32.mrf.mxu0
      %3390 = vmatprep.mubr.bf16.mxu0 0
      %3391 = vmatmul.mubr.bf16.gmra.mxu0 %v3242
      %v3392 = vpop.f32.mrf.mxu0
      %v3393 = vpop.f32.mrf.mxu0
      %v3394 = vpop.f32.mrf.mxu0
      %v3395 = vpop.f32.mrf.mxu0
      %3396 = vmatprep.mubr.bf16.mxu0 0
      %3397 = vmatmul.mubr.bf16.gmra.mxu0 %v3243
      %v3398 = vpop.f32.mrf.mxu0
      %v3399 = vadd.f32 0.0, %v3398
      %v3400 = vpop.f32.mrf.mxu0
      %v3401 = vpop.f32.mrf.mxu0
      %v3402 = vadd.f32 0.0, %v3401
      %v3403 = vpop.f32.mrf.mxu0
      %3404 = vmatprep.mubr.bf16.mxu0 0
      %3405 = vmatmul.mubr.bf16.gmra.mxu0 %v3244
      %v3406 = vpop.f32.mrf.mxu0
      %v3407 = vpop.f32.mrf.mxu0
      %v3408 = vpop.f32.mrf.mxu0
      %v3409 = vpop.f32.mrf.mxu0
      %3410 = vmatprep.mubr.bf16.mxu0 0
      %3411 = vmatmul.mubr.bf16.gmra.mxu0 %v3245
      %v3412 = vpop.f32.mrf.mxu0
      %v3413 = vadd.f32 0.0, %v3412
      %v3414 = vpop.f32.mrf.mxu0
      %v3415 = vpop.f32.mrf.mxu0
      %v3416 = vadd.f32 0.0, %v3415
      %v3417 = vpop.f32.mrf.mxu0
      %3418 = vmatprep.mubr.bf16.mxu0 0
      %3419 = vmatmul.mubr.bf16.gmra.mxu0 %v3246
      %v3420 = vpop.f32.mrf.mxu0
      %v3421 = vpop.f32.mrf.mxu0
      %v3422 = vpop.f32.mrf.mxu0
      %v3423 = vpop.f32.mrf.mxu0
      %3424 = vmatprep.mubr.bf16.mxu0 0
      %3425 = vmatmul.mubr.bf16.gmra.mxu0 %v3247
      %v3426 = vpop.f32.mrf.mxu0
      %v3427 = vadd.f32 0.0, %v3426
      %v3428 = vpop.f32.mrf.mxu0
      %v3429 = vpop.f32.mrf.mxu0
      %v3430 = vadd.f32 0.0, %v3429
      %v3431 = vpop.f32.mrf.mxu0
      %3432 = vmatprep.mubr.bf16.mxu0 0
      %3433 = vmatmul.mubr.bf16.gmra.mxu0 %v3248
      %v3434 = vpop.f32.mrf.mxu0
      %v3435 = vpop.f32.mrf.mxu0
      %v3436 = vpop.f32.mrf.mxu0
      %v3437 = vpop.f32.mrf.mxu0
      %3438 = vmatprep.mubr.bf16.mxu0 0
      %3439 = vmatmul.mubr.bf16.gmra.mxu0 %v3249
      %v3440 = vpop.f32.mrf.mxu0
      %v3441 = vadd.f32 0.0, %v3440
      %v3442 = vpop.f32.mrf.mxu0
      %v3443 = vpop.f32.mrf.mxu0
      %v3444 = vadd.f32 0.0, %v3443
      %v3445 = vpop.f32.mrf.mxu0
      %3446 = vmatprep.mubr.bf16.mxu0 0
      %3447 = vmatmul.mubr.bf16.gmra.mxu0 %v3250
      %v3448 = vpop.f32.mrf.mxu0
      %v3449 = vpop.f32.mrf.mxu0
      %v3450 = vpop.f32.mrf.mxu0
      %v3451 = vpop.f32.mrf.mxu0
      %3452 = vmatprep.mubr.bf16.mxu0 0
      %3453 = vmatmul.mubr.bf16.gmra.mxu0 %v3251
      %v3454 = vpop.f32.mrf.mxu0
      %v3455 = vadd.f32 0.0, %v3454
      %v3456 = vpop.f32.mrf.mxu0
      %v3457 = vpop.f32.mrf.mxu0
      %v3458 = vadd.f32 0.0, %v3457
      %v3459 = vpop.f32.mrf.mxu0
      %3460 = vmatprep.mubr.bf16.mxu0 0
      %3461 = vmatmul.mubr.bf16.gmra.mxu0 %v3252
      %v3462 = vpop.f32.mrf.mxu0
      %v3463 = vpop.f32.mrf.mxu0
      %v3464 = vpop.f32.mrf.mxu0
      %v3465 = vpop.f32.mrf.mxu0
      %3466 = vmatprep.mubr.bf16.mxu0 0
      %3467 = vmatmul.mubr.bf16.gmra.mxu0 %v3253
      %v3468 = vpop.f32.mrf.mxu0
      %v3469 = vadd.f32 0.0, %v3468
      %v3470 = vpop.f32.mrf.mxu0
      %v3471 = vpop.f32.mrf.mxu0
      %v3472 = vadd.f32 0.0, %v3471
      %v3473 = vpop.f32.mrf.mxu0
      %3474 = vmatprep.mubr.bf16.mxu0 0
      %3475 = vmatmul.mubr.bf16.gmra.mxu0 %v3254
      %v3476 = vpop.f32.mrf.mxu0
      %v3477 = vpop.f32.mrf.mxu0
      %v3478 = vpop.f32.mrf.mxu0
      %v3479 = vpop.f32.mrf.mxu0
      %3480 = vmatprep.mubr.bf16.mxu0 0
      %3481 = vmatmul.mubr.bf16.gmra.mxu0 %v3255
      %v3482 = vpop.f32.mrf.mxu0
      %v3483 = vadd.f32 0.0, %v3482
      %v3484 = vpop.f32.mrf.mxu0
      %v3485 = vpop.f32.mrf.mxu0
      %v3486 = vadd.f32 0.0, %v3485
      %v3487 = vpop.f32.mrf.mxu0
      %3488 = vmatprep.mubr.bf16.mxu0 0
      %3489 = vmatmul.mubr.bf16.gmra.mxu0 %v3256
      %v3490 = vpop.f32.mrf.mxu0
      %v3491 = vpop.f32.mrf.mxu0
      %v3492 = vpop.f32.mrf.mxu0
      %v3493 = vpop.f32.mrf.mxu0
      %3494 = vmatprep.mubr.bf16.mxu0 0
      %3495 = vmatmul.mubr.bf16.gmra.mxu0 %v3257
      %v3496 = vpop.f32.mrf.mxu0
      %v3497 = vadd.f32 0.0, %v3496
      %v3498 = vpop.f32.mrf.mxu0
      %v3499 = vpop.f32.mrf.mxu0
      %v3500 = vadd.f32 0.0, %v3499
      %v3501 = vpop.f32.mrf.mxu0
      %3502 = vmatprep.mubr.bf16.mxu0 0
      %3503 = vmatmul.mubr.bf16.gmra.mxu0 %v3258
      %v3504 = vpop.f32.mrf.mxu0
      %v3505 = vpop.f32.mrf.mxu0
      %v3506 = vpop.f32.mrf.mxu0
      %v3507 = vpop.f32.mrf.mxu0
      %3508 = vmatprep.mubr.bf16.mxu0 0
      %3509 = vmatmul.mubr.bf16.gmra.mxu0 %v3259
      %v3510 = vpop.f32.mrf.mxu0
      %v3511 = vadd.f32 0.0, %v3510
      %v3512 = vpop.f32.mrf.mxu0
      %v3513 = vpop.f32.mrf.mxu0
      %v3514 = vadd.f32 0.0, %v3513
      %v3515 = vpop.f32.mrf.mxu0
      %3516 = vmatprep.mubr.bf16.mxu0 0
      %3517 = vmatmul.mubr.bf16.gmra.mxu0 %v3260
      %v3518 = vpop.f32.mrf.mxu0
      %v3519 = vpop.f32.mrf.mxu0
      %v3520 = vpop.f32.mrf.mxu0
      %v3521 = vpop.f32.mrf.mxu0
      %3522 = vmatprep.mubr.bf16.mxu0 0
      %3523 = vmatmul.mubr.bf16.gmra.mxu0 %v3261
      %v3524 = vpop.f32.mrf.mxu0
      %v3525 = vadd.f32 0.0, %v3524
      %v3526 = vpop.f32.mrf.mxu0
      %v3527 = vpop.f32.mrf.mxu0
      %v3528 = vadd.f32 0.0, %v3527
      %v3529 = vpop.f32.mrf.mxu0
      %3530 = vmatprep.mubr.bf16.mxu0 0
      %3531 = vmatmul.mubr.bf16.gmra.mxu0 %v3262
      %v3532 = vpop.f32.mrf.mxu0
      %v3533 = vpop.f32.mrf.mxu0
      %v3534 = vpop.f32.mrf.mxu0
      %v3535 = vpop.f32.mrf.mxu0
      %3536 = vmatprep.mubr.bf16.mxu0 0
      %3537 = vmatmul.mubr.bf16.gmra.mxu0 %v3263
      %v3538 = vpop.f32.mrf.mxu0
      %v3539 = vadd.f32 0.0, %v3538
      %v3540 = vpop.f32.mrf.mxu0
      %v3541 = vpop.f32.mrf.mxu0
      %v3542 = vadd.f32 0.0, %v3541
      %v3543 = vpop.f32.mrf.mxu0
      %3544 = vmatprep.mubr.bf16.mxu0 0
      %3545 = vmatmul.mubr.bf16.gmra.mxu0 %v3264
      %v3546 = vpop.f32.mrf.mxu0
      %v3547 = vpop.f32.mrf.mxu0
      %v3548 = vpop.f32.mrf.mxu0
      %v3549 = vpop.f32.mrf.mxu0
      %3550 = vmatprep.mubr.bf16.mxu0 0
      %3551 = vmatmul.mubr.bf16.gmra.mxu0 %v3265
      %v3552 = vpop.f32.mrf.mxu0
      %v3553 = vadd.f32 0.0, %v3552
      %v3554 = vpop.f32.mrf.mxu0
      %v3555 = vpop.f32.mrf.mxu0
      %v3556 = vadd.f32 0.0, %v3555
      %v3557 = vpop.f32.mrf.mxu0
      %3558 = vmatprep.mubr.bf16.mxu0 0
      %3559 = vmatmul.mubr.bf16.gmra.mxu0 %v3266
      %v3560 = vpop.f32.mrf.mxu0
      %v3561 = vpop.f32.mrf.mxu0
      %v3562 = vpop.f32.mrf.mxu0
      %v3563 = vpop.f32.mrf.mxu0
      %3564 = vmatprep.mubr.bf16.mxu0 0
      %3565 = vmatmul.mubr.bf16.gmra.mxu0 %v3267
      %v3566 = vpop.f32.mrf.mxu0
      %v3567 = vadd.f32 0.0, %v3566
      %v3568 = vpop.f32.mrf.mxu0
      %v3569 = vpop.f32.mrf.mxu0
      %v3570 = vadd.f32 0.0, %v3569
      %v3571 = vpop.f32.mrf.mxu0
      %3572 = vmatprep.mubr.bf16.mxu0 0
      %3573 = vmatmul.mubr.bf16.gmra.mxu0 %v3268
      %v3574 = vpop.f32.mrf.mxu0
      %v3575 = vpop.f32.mrf.mxu0
      %v3576 = vpop.f32.mrf.mxu0
      %v3577 = vpop.f32.mrf.mxu0
      %3578 = vmatprep.mubr.bf16.mxu0 0
      %3579 = vmatmul.mubr.bf16.gmra.mxu0 %v3269
      %v3580 = vpop.f32.mrf.mxu0
      %v3581 = vadd.f32 0.0, %v3580
      %v3582 = vpop.f32.mrf.mxu0
      %v3583 = vpop.f32.mrf.mxu0
      %v3584 = vadd.f32 0.0, %v3583
      %v3585 = vpop.f32.mrf.mxu0
      %3586 = vmatprep.mubr.bf16.mxu0 0
      %3587 = vmatmul.mubr.bf16.gmra.mxu0 %v3270
      %v3588 = vpop.f32.mrf.mxu0
      %v3589 = vpop.f32.mrf.mxu0
      %v3590 = vpop.f32.mrf.mxu0
      %v3591 = vpop.f32.mrf.mxu0
      %3592 = vdwg.mxu0
      %v3593 = vadd.f32 %v3142, %v3371
      %v3594 = vadd.f32 %v3143, %v3374
      %v3595 = vadd.f32 %v3144, %v3385
      %v3596 = vadd.f32 %v3145, %v3388
      %v3597 = vadd.f32 %v3146, %v3399
      %v3598 = vadd.f32 %v3147, %v3402
      %v3599 = vadd.f32 %v3148, %v3413
      %v3600 = vadd.f32 %v3149, %v3416
      %v3601 = vadd.f32 %v3150, %v3427
      %v3602 = vadd.f32 %v3151, %v3430
      %v3603 = vadd.f32 %v3152, %v3441
      %v3604 = vadd.f32 %v3153, %v3444
      %v3605 = vadd.f32 %v3154, %v3455
      %v3606 = vadd.f32 %v3155, %v3458
      %v3607 = vadd.f32 %v3156, %v3469
      %v3608 = vadd.f32 %v3157, %v3472
      %v3609 = vadd.f32 %v3158, %v3483
      %v3610 = vadd.f32 %v3159, %v3486
      %v3611 = vadd.f32 %v3160, %v3497
      %v3612 = vadd.f32 %v3161, %v3500
      %v3613 = vadd.f32 %v3162, %v3511
      %v3614 = vadd.f32 %v3163, %v3514
      %v3615 = vadd.f32 %v3164, %v3525
      %v3616 = vadd.f32 %v3165, %v3528
      %v3617 = vadd.f32 %v3166, %v3539
      %v3618 = vadd.f32 %v3167, %v3542
      %v3619 = vadd.f32 %v3168, %v3553
      %v3620 = vadd.f32 %v3169, %v3556
      %v3621 = vadd.f32 %v3170, %v3567
      %v3622 = vadd.f32 %v3171, %v3570
      %v3623 = vadd.f32 %v3172, %v3581
      %v3624 = vadd.f32 %v3173, %v3584
      %s3625 = scalar_lea.vmem [#allocation2], 640
      %v3626 = vld [vmem:[%s3625] sm:$0xff]
      %v3627 = vld [vmem:[%s3625 + $0x8] sm:$0xff]
      %v3628 = vld [vmem:[%s3625 + $0x10] sm:$0xff]
      %v3629 = vld [vmem:[%s3625 + $0x18] sm:$0xff]
      %v3630 = vld [vmem:[%s3625 + $0x20] sm:$0xff]
      %v3631 = vld [vmem:[%s3625 + $0x28] sm:$0xff]
      %v3632 = vld [vmem:[%s3625 + $0x30] sm:$0xff]
      %v3633 = vld [vmem:[%s3625 + $0x38] sm:$0xff]
      %v3634 = vld [vmem:[%s3625 + $0x40] sm:$0xff]
      %v3635 = vld [vmem:[%s3625 + $0x48] sm:$0xff]
      %v3636 = vld [vmem:[%s3625 + $0x50] sm:$0xff]
      %v3637 = vld [vmem:[%s3625 + $0x58] sm:$0xff]
      %v3638 = vld [vmem:[%s3625 + $0x60] sm:$0xff]
      %v3639 = vld [vmem:[%s3625 + $0x68] sm:$0xff]
      %v3640 = vld [vmem:[%s3625 + $0x70] sm:$0xff]
      %v3641 = vld [vmem:[%s3625 + $0x78] sm:$0xff]
      %v3642 = vld [vmem:[%s3625 + $0x80] sm:$0xff]
      %v3643 = vld [vmem:[%s3625 + $0x88] sm:$0xff]
      %v3644 = vld [vmem:[%s3625 + $0x90] sm:$0xff]
      %v3645 = vld [vmem:[%s3625 + $0x98] sm:$0xff]
      %v3646 = vld [vmem:[%s3625 + $0xa0] sm:$0xff]
      %v3647 = vld [vmem:[%s3625 + $0xa8] sm:$0xff]
      %v3648 = vld [vmem:[%s3625 + $0xb0] sm:$0xff]
      %v3649 = vld [vmem:[%s3625 + $0xb8] sm:$0xff]
      %v3650 = vld [vmem:[%s3625 + $0xc0] sm:$0xff]
      %v3651 = vld [vmem:[%s3625 + $0xc8] sm:$0xff]
      %v3652 = vld [vmem:[%s3625 + $0xd0] sm:$0xff]
      %v3653 = vld [vmem:[%s3625 + $0xd8] sm:$0xff]
      %v3654 = vld [vmem:[%s3625 + $0xe0] sm:$0xff]
      %v3655 = vld [vmem:[%s3625 + $0xe8] sm:$0xff]
      %v3656 = vld [vmem:[%s3625 + $0xf0] sm:$0xff]
      %v3657 = vld [vmem:[%s3625 + $0xf8] sm:$0xff]
      %v3658 = vld [vmem:[%s3625 + $0x100] sm:$0xff]
      %v3659 = vld [vmem:[%s3625 + $0x108] sm:$0xff]
      %v3660 = vld [vmem:[%s3625 + $0x110] sm:$0xff]
      %v3661 = vld [vmem:[%s3625 + $0x118] sm:$0xff]
      %v3662 = vld [vmem:[%s3625 + $0x120] sm:$0xff]
      %v3663 = vld [vmem:[%s3625 + $0x128] sm:$0xff]
      %v3664 = vld [vmem:[%s3625 + $0x130] sm:$0xff]
      %v3665 = vld [vmem:[%s3625 + $0x138] sm:$0xff]
      %v3666 = vld [vmem:[%s3625 + $0x140] sm:$0xff]
      %v3667 = vld [vmem:[%s3625 + $0x148] sm:$0xff]
      %v3668 = vld [vmem:[%s3625 + $0x150] sm:$0xff]
      %v3669 = vld [vmem:[%s3625 + $0x158] sm:$0xff]
      %v3670 = vld [vmem:[%s3625 + $0x160] sm:$0xff]
      %v3671 = vld [vmem:[%s3625 + $0x168] sm:$0xff]
      %v3672 = vld [vmem:[%s3625 + $0x170] sm:$0xff]
      %v3673 = vld [vmem:[%s3625 + $0x178] sm:$0xff]
      %v3674 = vld [vmem:[%s3625 + $0x180] sm:$0xff]
      %v3675 = vld [vmem:[%s3625 + $0x188] sm:$0xff]
      %v3676 = vld [vmem:[%s3625 + $0x190] sm:$0xff]
      %v3677 = vld [vmem:[%s3625 + $0x198] sm:$0xff]
      %v3678 = vld [vmem:[%s3625 + $0x1a0] sm:$0xff]
      %v3679 = vld [vmem:[%s3625 + $0x1a8] sm:$0xff]
      %v3680 = vld [vmem:[%s3625 + $0x1b0] sm:$0xff]
      %v3681 = vld [vmem:[%s3625 + $0x1b8] sm:$0xff]
      %v3682 = vld [vmem:[%s3625 + $0x1c0] sm:$0xff]
      %v3683 = vld [vmem:[%s3625 + $0x1c8] sm:$0xff]
      %v3684 = vld [vmem:[%s3625 + $0x1d0] sm:$0xff]
      %v3685 = vld [vmem:[%s3625 + $0x1d8] sm:$0xff]
      %v3686 = vld [vmem:[%s3625 + $0x1e0] sm:$0xff]
      %v3687 = vld [vmem:[%s3625 + $0x1e8] sm:$0xff]
      %v3688 = vld [vmem:[%s3625 + $0x1f0] sm:$0xff]
      %v3689 = vld [vmem:[%s3625 + $0x1f8] sm:$0xff]
      %v3690 = vpack.c.bf16 %v3627, %v3626
      %v3691 = vpack.c.bf16 %v3629, %v3628
      %v3692 = vpack.c.bf16 %v3631, %v3630
      %v3693 = vpack.c.bf16 %v3633, %v3632
      %v3694 = vpack.c.bf16 %v3635, %v3634
      %v3695 = vpack.c.bf16 %v3637, %v3636
      %v3696 = vpack.c.bf16 %v3639, %v3638
      %v3697 = vpack.c.bf16 %v3641, %v3640
      %v3698 = vpack.c.bf16 %v3643, %v3642
      %v3699 = vpack.c.bf16 %v3645, %v3644
      %v3700 = vpack.c.bf16 %v3647, %v3646
      %v3701 = vpack.c.bf16 %v3649, %v3648
      %v3702 = vpack.c.bf16 %v3651, %v3650
      %v3703 = vpack.c.bf16 %v3653, %v3652
      %v3704 = vpack.c.bf16 %v3655, %v3654
      %v3705 = vpack.c.bf16 %v3657, %v3656
      %v3706 = vpack.c.bf16 %v3659, %v3658
      %v3707 = vpack.c.bf16 %v3661, %v3660
      %v3708 = vpack.c.bf16 %v3663, %v3662
      %v3709 = vpack.c.bf16 %v3665, %v3664
      %v3710 = vpack.c.bf16 %v3667, %v3666
      %v3711 = vpack.c.bf16 %v3669, %v3668
      %v3712 = vpack.c.bf16 %v3671, %v3670
      %v3713 = vpack.c.bf16 %v3673, %v3672
      %v3714 = vpack.c.bf16 %v3675, %v3674
      %v3715 = vpack.c.bf16 %v3677, %v3676
      %v3716 = vpack.c.bf16 %v3679, %v3678
      %v3717 = vpack.c.bf16 %v3681, %v3680
      %v3718 = vpack.c.bf16 %v3683, %v3682
      %v3719 = vpack.c.bf16 %v3685, %v3684
      %v3720 = vpack.c.bf16 %v3687, %v3686
      %v3721 = vpack.c.bf16 %v3689, %v3688
      %s3722 = scalar_lea.vmem %s3, 448
      %v3723 = vld [vmem:[%s3722] sm:$0xf]
      %v3724 = vld [vmem:[%s3722 + $0x4] sm:$0xf]
      %v3725 = vld [vmem:[%s3722 + $0x8] sm:$0xf]
      %v3726 = vld [vmem:[%s3722 + $0xc] sm:$0xf]
      %v3727 = vld [vmem:[%s3722 + $0x10] sm:$0xf]
      %v3728 = vld [vmem:[%s3722 + $0x14] sm:$0xf]
      %v3729 = vld [vmem:[%s3722 + $0x18] sm:$0xf]
      %v3730 = vld [vmem:[%s3722 + $0x1c] sm:$0xf]
      %v3731 = vld [vmem:[%s3722 + $0x20] sm:$0xf]
      %v3732 = vld [vmem:[%s3722 + $0x24] sm:$0xf]
      %v3733 = vld [vmem:[%s3722 + $0x28] sm:$0xf]
      %v3734 = vld [vmem:[%s3722 + $0x2c] sm:$0xf]
      %v3735 = vld [vmem:[%s3722 + $0x30] sm:$0xf]
      %v3736 = vld [vmem:[%s3722 + $0x34] sm:$0xf]
      %v3737 = vld [vmem:[%s3722 + $0x38] sm:$0xf]
      %v3738 = vld [vmem:[%s3722 + $0x3c] sm:$0xf]
      %v3755 = vunpack.c.l.b16 %v3723
      %v3756 = vunpack.c.l.b16 %v3724
      %v3757 = vunpack.c.l.b16 %v3725
      %v3758 = vunpack.c.l.b16 %v3726
      %v3759 = vunpack.c.l.b16 %v3727
      %v3760 = vunpack.c.l.b16 %v3728
      %v3761 = vunpack.c.l.b16 %v3729
      %v3762 = vunpack.c.l.b16 %v3730
      %v3763 = vunpack.c.l.b16 %v3731
      %v3764 = vunpack.c.l.b16 %v3732
      %v3765 = vunpack.c.l.b16 %v3733
      %v3766 = vunpack.c.l.b16 %v3734
      %v3767 = vunpack.c.l.b16 %v3735
      %v3768 = vunpack.c.l.b16 %v3736
      %v3769 = vunpack.c.l.b16 %v3737
      %v3770 = vunpack.c.l.b16 %v3738
      %v3771 = vpack.c.b16 %v3756, %v3755
      %v3772 = vpack.c.b16 %v3758, %v3757
      %v3773 = vpack.c.b16 %v3760, %v3759
      %v3774 = vpack.c.b16 %v3762, %v3761
      %v3775 = vpack.c.b16 %v3764, %v3763
      %v3776 = vpack.c.b16 %v3766, %v3765
      %v3777 = vpack.c.b16 %v3768, %v3767
      %v3778 = vpack.c.b16 %v3770, %v3769
      %3787 = vmatprep.subr.bf16.mxu0 0
      %3788 = vmatpush1.bf16.msra.mxu0 %v3778
      %3789 = vmatprep.subr.bf16.mxu0 0
      %3790 = vmatpush1.bf16.msra.mxu0 %v3777
      %3791 = vmatprep.subr.bf16.mxu0 0
      %3792 = vmatpush1.bf16.msra.mxu0 %v3776
      %3793 = vmatprep.subr.bf16.mxu0 0
      %3794 = vmatpush1.bf16.msra.mxu0 %v3775
      %3795 = vmatprep.subr.bf16.mxu0 0
      %3796 = vmatpush1.bf16.msra.mxu0 %v3774
      %3797 = vmatprep.subr.bf16.mxu0 0
      %3798 = vmatpush1.bf16.msra.mxu0 %v3773
      %3799 = vmatprep.subr.bf16.mxu0 0
      %3800 = vmatpush1.bf16.msra.mxu0 %v3772
      %3801 = vmatprep.subr.bf16.mxu0 0
      %3802 = vmatpush1.bf16.msra.mxu0 %v3771
      %3803 = vmatprep.subr.bf16.mxu0 0
      %3804 = vmatpush2.bf16.msra.mxu0 0
      %3805 = vmatprep.subr.bf16.mxu0 0
      %3806 = vmatpush2.bf16.msra.mxu0 0
      %3807 = vmatprep.subr.bf16.mxu0 0
      %3808 = vmatpush2.bf16.msra.mxu0 0
      %3809 = vmatprep.subr.bf16.mxu0 0
      %3810 = vmatpush2.bf16.msra.mxu0 0
      %3811 = vmatprep.subr.bf16.mxu0 0
      %3812 = vmatpush2.bf16.msra.mxu0 0
      %3813 = vmatprep.subr.bf16.mxu0 0
      %3814 = vmatpush2.bf16.msra.mxu0 0
      %3815 = vmatprep.subr.bf16.mxu0 0
      %3816 = vmatpush2.bf16.msra.mxu0 0
      %3817 = vmatprep.subr.bf16.mxu0 0
      %3818 = vmatpush2.bf16.msra.mxu0 0
      %3819 = vmatprep.mubr.bf16.mxu0 0
      %3820 = vmatmul.mubr.bf16.gmra.mxu0 %v3690
      %v3821 = vpop.f32.mrf.mxu0
      %v3822 = vadd.f32 0.0, %v3821
      %v3823 = vpop.f32.mrf.mxu0
      %v3824 = vpop.f32.mrf.mxu0
      %v3825 = vadd.f32 0.0, %v3824
      %v3826 = vpop.f32.mrf.mxu0
      %3827 = vmatprep.mubr.bf16.mxu0 0
      %3828 = vmatmul.mubr.bf16.gmra.mxu0 %v3691
      %v3829 = vpop.f32.mrf.mxu0
      %v3830 = vpop.f32.mrf.mxu0
      %v3831 = vpop.f32.mrf.mxu0
      %v3832 = vpop.f32.mrf.mxu0
      %3833 = vmatprep.mubr.bf16.mxu0 0
      %3834 = vmatmul.mubr.bf16.gmra.mxu0 %v3692
      %v3835 = vpop.f32.mrf.mxu0
      %v3836 = vadd.f32 0.0, %v3835
      %v3837 = vpop.f32.mrf.mxu0
      %v3838 = vpop.f32.mrf.mxu0
      %v3839 = vadd.f32 0.0, %v3838
      %v3840 = vpop.f32.mrf.mxu0
      %3841 = vmatprep.mubr.bf16.mxu0 0
      %3842 = vmatmul.mubr.bf16.gmra.mxu0 %v3693
      %v3843 = vpop.f32.mrf.mxu0
      %v3844 = vpop.f32.mrf.mxu0
      %v3845 = vpop.f32.mrf.mxu0
      %v3846 = vpop.f32.mrf.mxu0
      %3847 = vmatprep.mubr.bf16.mxu0 0
      %3848 = vmatmul.mubr.bf16.gmra.mxu0 %v3694
      %v3849 = vpop.f32.mrf.mxu0
      %v3850 = vadd.f32 0.0, %v3849
      %v3851 = vpop.f32.mrf.mxu0
      %v3852 = vpop.f32.mrf.mxu0
      %v3853 = vadd.f32 0.0, %v3852
      %v3854 = vpop.f32.mrf.mxu0
      %3855 = vmatprep.mubr.bf16.mxu0 0
      %3856 = vmatmul.mubr.bf16.gmra.mxu0 %v3695
      %v3857 = vpop.f32.mrf.mxu0
      %v3858 = vpop.f32.mrf.mxu0
      %v3859 = vpop.f32.mrf.mxu0
      %v3860 = vpop.f32.mrf.mxu0
      %3861 = vmatprep.mubr.bf16.mxu0 0
      %3862 = vmatmul.mubr.bf16.gmra.mxu0 %v3696
      %v3863 = vpop.f32.mrf.mxu0
      %v3864 = vadd.f32 0.0, %v3863
      %v3865 = vpop.f32.mrf.mxu0
      %v3866 = vpop.f32.mrf.mxu0
      %v3867 = vadd.f32 0.0, %v3866
      %v3868 = vpop.f32.mrf.mxu0
      %3869 = vmatprep.mubr.bf16.mxu0 0
      %3870 = vmatmul.mubr.bf16.gmra.mxu0 %v3697
      %v3871 = vpop.f32.mrf.mxu0
      %v3872 = vpop.f32.mrf.mxu0
      %v3873 = vpop.f32.mrf.mxu0
      %v3874 = vpop.f32.mrf.mxu0
      %3875 = vmatprep.mubr.bf16.mxu0 0
      %3876 = vmatmul.mubr.bf16.gmra.mxu0 %v3698
      %v3877 = vpop.f32.mrf.mxu0
      %v3878 = vadd.f32 0.0, %v3877
      %v3879 = vpop.f32.mrf.mxu0
      %v3880 = vpop.f32.mrf.mxu0
      %v3881 = vadd.f32 0.0, %v3880
      %v3882 = vpop.f32.mrf.mxu0
      %3883 = vmatprep.mubr.bf16.mxu0 0
      %3884 = vmatmul.mubr.bf16.gmra.mxu0 %v3699
      %v3885 = vpop.f32.mrf.mxu0
      %v3886 = vpop.f32.mrf.mxu0
      %v3887 = vpop.f32.mrf.mxu0
      %v3888 = vpop.f32.mrf.mxu0
      %3889 = vmatprep.mubr.bf16.mxu0 0
      %3890 = vmatmul.mubr.bf16.gmra.mxu0 %v3700
      %v3891 = vpop.f32.mrf.mxu0
      %v3892 = vadd.f32 0.0, %v3891
      %v3893 = vpop.f32.mrf.mxu0
      %v3894 = vpop.f32.mrf.mxu0
      %v3895 = vadd.f32 0.0, %v3894
      %v3896 = vpop.f32.mrf.mxu0
      %3897 = vmatprep.mubr.bf16.mxu0 0
      %3898 = vmatmul.mubr.bf16.gmra.mxu0 %v3701
      %v3899 = vpop.f32.mrf.mxu0
      %v3900 = vpop.f32.mrf.mxu0
      %v3901 = vpop.f32.mrf.mxu0
      %v3902 = vpop.f32.mrf.mxu0
      %3903 = vmatprep.mubr.bf16.mxu0 0
      %3904 = vmatmul.mubr.bf16.gmra.mxu0 %v3702
      %v3905 = vpop.f32.mrf.mxu0
      %v3906 = vadd.f32 0.0, %v3905
      %v3907 = vpop.f32.mrf.mxu0
      %v3908 = vpop.f32.mrf.mxu0
      %v3909 = vadd.f32 0.0, %v3908
      %v3910 = vpop.f32.mrf.mxu0
      %3911 = vmatprep.mubr.bf16.mxu0 0
      %3912 = vmatmul.mubr.bf16.gmra.mxu0 %v3703
      %v3913 = vpop.f32.mrf.mxu0
      %v3914 = vpop.f32.mrf.mxu0
      %v3915 = vpop.f32.mrf.mxu0
      %v3916 = vpop.f32.mrf.mxu0
      %3917 = vmatprep.mubr.bf16.mxu0 0
      %3918 = vmatmul.mubr.bf16.gmra.mxu0 %v3704
      %v3919 = vpop.f32.mrf.mxu0
      %v3920 = vadd.f32 0.0, %v3919
      %v3921 = vpop.f32.mrf.mxu0
      %v3922 = vpop.f32.mrf.mxu0
      %v3923 = vadd.f32 0.0, %v3922
      %v3924 = vpop.f32.mrf.mxu0
      %3925 = vmatprep.mubr.bf16.mxu0 0
      %3926 = vmatmul.mubr.bf16.gmra.mxu0 %v3705
      %v3927 = vpop.f32.mrf.mxu0
      %v3928 = vpop.f32.mrf.mxu0
      %v3929 = vpop.f32.mrf.mxu0
      %v3930 = vpop.f32.mrf.mxu0
      %3931 = vmatprep.mubr.bf16.mxu0 0
      %3932 = vmatmul.mubr.bf16.gmra.mxu0 %v3706
      %v3933 = vpop.f32.mrf.mxu0
      %v3934 = vadd.f32 0.0, %v3933
      %v3935 = vpop.f32.mrf.mxu0
      %v3936 = vpop.f32.mrf.mxu0
      %v3937 = vadd.f32 0.0, %v3936
      %v3938 = vpop.f32.mrf.mxu0
      %3939 = vmatprep.mubr.bf16.mxu0 0
      %3940 = vmatmul.mubr.bf16.gmra.mxu0 %v3707
      %v3941 = vpop.f32.mrf.mxu0
      %v3942 = vpop.f32.mrf.mxu0
      %v3943 = vpop.f32.mrf.mxu0
      %v3944 = vpop.f32.mrf.mxu0
      %3945 = vmatprep.mubr.bf16.mxu0 0
      %3946 = vmatmul.mubr.bf16.gmra.mxu0 %v3708
      %v3947 = vpop.f32.mrf.mxu0
      %v3948 = vadd.f32 0.0, %v3947
      %v3949 = vpop.f32.mrf.mxu0
      %v3950 = vpop.f32.mrf.mxu0
      %v3951 = vadd.f32 0.0, %v3950
      %v3952 = vpop.f32.mrf.mxu0
      %3953 = vmatprep.mubr.bf16.mxu0 0
      %3954 = vmatmul.mubr.bf16.gmra.mxu0 %v3709
      %v3955 = vpop.f32.mrf.mxu0
      %v3956 = vpop.f32.mrf.mxu0
      %v3957 = vpop.f32.mrf.mxu0
      %v3958 = vpop.f32.mrf.mxu0
      %3959 = vmatprep.mubr.bf16.mxu0 0
      %3960 = vmatmul.mubr.bf16.gmra.mxu0 %v3710
      %v3961 = vpop.f32.mrf.mxu0
      %v3962 = vadd.f32 0.0, %v3961
      %v3963 = vpop.f32.mrf.mxu0
      %v3964 = vpop.f32.mrf.mxu0
      %v3965 = vadd.f32 0.0, %v3964
      %v3966 = vpop.f32.mrf.mxu0
      %3967 = vmatprep.mubr.bf16.mxu0 0
      %3968 = vmatmul.mubr.bf16.gmra.mxu0 %v3711
      %v3969 = vpop.f32.mrf.mxu0
      %v3970 = vpop.f32.mrf.mxu0
      %v3971 = vpop.f32.mrf.mxu0
      %v3972 = vpop.f32.mrf.mxu0
      %3973 = vmatprep.mubr.bf16.mxu0 0
      %3974 = vmatmul.mubr.bf16.gmra.mxu0 %v3712
      %v3975 = vpop.f32.mrf.mxu0
      %v3976 = vadd.f32 0.0, %v3975
      %v3977 = vpop.f32.mrf.mxu0
      %v3978 = vpop.f32.mrf.mxu0
      %v3979 = vadd.f32 0.0, %v3978
      %v3980 = vpop.f32.mrf.mxu0
      %3981 = vmatprep.mubr.bf16.mxu0 0
      %3982 = vmatmul.mubr.bf16.gmra.mxu0 %v3713
      %v3983 = vpop.f32.mrf.mxu0
      %v3984 = vpop.f32.mrf.mxu0
      %v3985 = vpop.f32.mrf.mxu0
      %v3986 = vpop.f32.mrf.mxu0
      %3987 = vmatprep.mubr.bf16.mxu0 0
      %3988 = vmatmul.mubr.bf16.gmra.mxu0 %v3714
      %v3989 = vpop.f32.mrf.mxu0
      %v3990 = vadd.f32 0.0, %v3989
      %v3991 = vpop.f32.mrf.mxu0
      %v3992 = vpop.f32.mrf.mxu0
      %v3993 = vadd.f32 0.0, %v3992
      %v3994 = vpop.f32.mrf.mxu0
      %3995 = vmatprep.mubr.bf16.mxu0 0
      %3996 = vmatmul.mubr.bf16.gmra.mxu0 %v3715
      %v3997 = vpop.f32.mrf.mxu0
      %v3998 = vpop.f32.mrf.mxu0
      %v3999 = vpop.f32.mrf.mxu0
      %v4000 = vpop.f32.mrf.mxu0
      %4001 = vmatprep.mubr.bf16.mxu0 0
      %4002 = vmatmul.mubr.bf16.gmra.mxu0 %v3716
      %v4003 = vpop.f32.mrf.mxu0
      %v4004 = vadd.f32 0.0, %v4003
      %v4005 = vpop.f32.mrf.mxu0
      %v4006 = vpop.f32.mrf.mxu0
      %v4007 = vadd.f32 0.0, %v4006
      %v4008 = vpop.f32.mrf.mxu0
      %4009 = vmatprep.mubr.bf16.mxu0 0
      %4010 = vmatmul.mubr.bf16.gmra.mxu0 %v3717
      %v4011 = vpop.f32.mrf.mxu0
      %v4012 = vpop.f32.mrf.mxu0
      %v4013 = vpop.f32.mrf.mxu0
      %v4014 = vpop.f32.mrf.mxu0
      %4015 = vmatprep.mubr.bf16.mxu0 0
      %4016 = vmatmul.mubr.bf16.gmra.mxu0 %v3718
      %v4017 = vpop.f32.mrf.mxu0
      %v4018 = vadd.f32 0.0, %v4017
      %v4019 = vpop.f32.mrf.mxu0
      %v4020 = vpop.f32.mrf.mxu0
      %v4021 = vadd.f32 0.0, %v4020
      %v4022 = vpop.f32.mrf.mxu0
      %4023 = vmatprep.mubr.bf16.mxu0 0
      %4024 = vmatmul.mubr.bf16.gmra.mxu0 %v3719
      %v4025 = vpop.f32.mrf.mxu0
      %v4026 = vpop.f32.mrf.mxu0
      %v4027 = vpop.f32.mrf.mxu0
      %v4028 = vpop.f32.mrf.mxu0
      %4029 = vmatprep.mubr.bf16.mxu0 0
      %4030 = vmatmul.mubr.bf16.gmra.mxu0 %v3720
      %v4031 = vpop.f32.mrf.mxu0
      %v4032 = vadd.f32 0.0, %v4031
      %v4033 = vpop.f32.mrf.mxu0
      %v4034 = vpop.f32.mrf.mxu0
      %v4035 = vadd.f32 0.0, %v4034
      %v4036 = vpop.f32.mrf.mxu0
      %4037 = vmatprep.mubr.bf16.mxu0 0
      %4038 = vmatmul.mubr.bf16.gmra.mxu0 %v3721
      %v4039 = vpop.f32.mrf.mxu0
      %v4040 = vpop.f32.mrf.mxu0
      %v4041 = vpop.f32.mrf.mxu0
      %v4042 = vpop.f32.mrf.mxu0
      %4043 = vdwg.mxu0
      %v4044 = vadd.f32 %v3593, %v3822
      %v4045 = vadd.f32 %v3594, %v3825
      %v4046 = vadd.f32 %v3595, %v3836
      %v4047 = vadd.f32 %v3596, %v3839
      %v4048 = vadd.f32 %v3597, %v3850
      %v4049 = vadd.f32 %v3598, %v3853
      %v4050 = vadd.f32 %v3599, %v3864
      %v4051 = vadd.f32 %v3600, %v3867
      %v4052 = vadd.f32 %v3601, %v3878
      %v4053 = vadd.f32 %v3602, %v3881
      %v4054 = vadd.f32 %v3603, %v3892
      %v4055 = vadd.f32 %v3604, %v3895
      %v4056 = vadd.f32 %v3605, %v3906
      %v4057 = vadd.f32 %v3606, %v3909
      %v4058 = vadd.f32 %v3607, %v3920
      %v4059 = vadd.f32 %v3608, %v3923
      %v4060 = vadd.f32 %v3609, %v3934
      %v4061 = vadd.f32 %v3610, %v3937
      %v4062 = vadd.f32 %v3611, %v3948
      %v4063 = vadd.f32 %v3612, %v3951
      %v4064 = vadd.f32 %v3613, %v3962
      %v4065 = vadd.f32 %v3614, %v3965
      %v4066 = vadd.f32 %v3615, %v3976
      %v4067 = vadd.f32 %v3616, %v3979
      %v4068 = vadd.f32 %v3617, %v3990
      %v4069 = vadd.f32 %v3618, %v3993
      %v4070 = vadd.f32 %v3619, %v4004
      %v4071 = vadd.f32 %v3620, %v4007
      %v4072 = vadd.f32 %v3621, %v4018
      %v4073 = vadd.f32 %v3622, %v4021
      %v4074 = vadd.f32 %v3623, %v4032
      %v4075 = vadd.f32 %v3624, %v4035
      %s4076 = scalar_lea.vmem [#allocation2], 1216
      %v4077 = vld [vmem:[%s4076] sm:$0xff]
      %v4078 = vld [vmem:[%s4076 + $0x8] sm:$0xff]
      %v4079 = vld [vmem:[%s4076 + $0x10] sm:$0xff]
      %v4080 = vld [vmem:[%s4076 + $0x18] sm:$0xff]
      %v4081 = vld [vmem:[%s4076 + $0x20] sm:$0xff]
      %v4082 = vld [vmem:[%s4076 + $0x28] sm:$0xff]
      %v4083 = vld [vmem:[%s4076 + $0x30] sm:$0xff]
      %v4084 = vld [vmem:[%s4076 + $0x38] sm:$0xff]
      %v4085 = vld [vmem:[%s4076 + $0x40] sm:$0xff]
      %v4086 = vld [vmem:[%s4076 + $0x48] sm:$0xff]
      %v4087 = vld [vmem:[%s4076 + $0x50] sm:$0xff]
      %v4088 = vld [vmem:[%s4076 + $0x58] sm:$0xff]
      %v4089 = vld [vmem:[%s4076 + $0x60] sm:$0xff]
      %v4090 = vld [vmem:[%s4076 + $0x68] sm:$0xff]
      %v4091 = vld [vmem:[%s4076 + $0x70] sm:$0xff]
      %v4092 = vld [vmem:[%s4076 + $0x78] sm:$0xff]
      %v4093 = vld [vmem:[%s4076 + $0x80] sm:$0xff]
      %v4094 = vld [vmem:[%s4076 + $0x88] sm:$0xff]
      %v4095 = vld [vmem:[%s4076 + $0x90] sm:$0xff]
      %v4096 = vld [vmem:[%s4076 + $0x98] sm:$0xff]
      %v4097 = vld [vmem:[%s4076 + $0xa0] sm:$0xff]
      %v4098 = vld [vmem:[%s4076 + $0xa8] sm:$0xff]
      %v4099 = vld [vmem:[%s4076 + $0xb0] sm:$0xff]
      %v4100 = vld [vmem:[%s4076 + $0xb8] sm:$0xff]
      %v4101 = vld [vmem:[%s4076 + $0xc0] sm:$0xff]
      %v4102 = vld [vmem:[%s4076 + $0xc8] sm:$0xff]
      %v4103 = vld [vmem:[%s4076 + $0xd0] sm:$0xff]
      %v4104 = vld [vmem:[%s4076 + $0xd8] sm:$0xff]
      %v4105 = vld [vmem:[%s4076 + $0xe0] sm:$0xff]
      %v4106 = vld [vmem:[%s4076 + $0xe8] sm:$0xff]
      %v4107 = vld [vmem:[%s4076 + $0xf0] sm:$0xff]
      %v4108 = vld [vmem:[%s4076 + $0xf8] sm:$0xff]
      %v4109 = vld [vmem:[%s4076 + $0x100] sm:$0xff]
      %v4110 = vld [vmem:[%s4076 + $0x108] sm:$0xff]
      %v4111 = vld [vmem:[%s4076 + $0x110] sm:$0xff]
      %v4112 = vld [vmem:[%s4076 + $0x118] sm:$0xff]
      %v4113 = vld [vmem:[%s4076 + $0x120] sm:$0xff]
      %v4114 = vld [vmem:[%s4076 + $0x128] sm:$0xff]
      %v4115 = vld [vmem:[%s4076 + $0x130] sm:$0xff]
      %v4116 = vld [vmem:[%s4076 + $0x138] sm:$0xff]
      %v4117 = vld [vmem:[%s4076 + $0x140] sm:$0xff]
      %v4118 = vld [vmem:[%s4076 + $0x148] sm:$0xff]
      %v4119 = vld [vmem:[%s4076 + $0x150] sm:$0xff]
      %v4120 = vld [vmem:[%s4076 + $0x158] sm:$0xff]
      %v4121 = vld [vmem:[%s4076 + $0x160] sm:$0xff]
      %v4122 = vld [vmem:[%s4076 + $0x168] sm:$0xff]
      %v4123 = vld [vmem:[%s4076 + $0x170] sm:$0xff]
      %v4124 = vld [vmem:[%s4076 + $0x178] sm:$0xff]
      %v4125 = vld [vmem:[%s4076 + $0x180] sm:$0xff]
      %v4126 = vld [vmem:[%s4076 + $0x188] sm:$0xff]
      %v4127 = vld [vmem:[%s4076 + $0x190] sm:$0xff]
      %v4128 = vld [vmem:[%s4076 + $0x198] sm:$0xff]
      %v4129 = vld [vmem:[%s4076 + $0x1a0] sm:$0xff]
      %v4130 = vld [vmem:[%s4076 + $0x1a8] sm:$0xff]
      %v4131 = vld [vmem:[%s4076 + $0x1b0] sm:$0xff]
      %v4132 = vld [vmem:[%s4076 + $0x1b8] sm:$0xff]
      %v4133 = vld [vmem:[%s4076 + $0x1c0] sm:$0xff]
      %v4134 = vld [vmem:[%s4076 + $0x1c8] sm:$0xff]
      %v4135 = vld [vmem:[%s4076 + $0x1d0] sm:$0xff]
      %v4136 = vld [vmem:[%s4076 + $0x1d8] sm:$0xff]
      %v4137 = vld [vmem:[%s4076 + $0x1e0] sm:$0xff]
      %v4138 = vld [vmem:[%s4076 + $0x1e8] sm:$0xff]
      %v4139 = vld [vmem:[%s4076 + $0x1f0] sm:$0xff]
      %v4140 = vld [vmem:[%s4076 + $0x1f8] sm:$0xff]
      %v4141 = vpack.c.bf16 %v4078, %v4077
      %v4142 = vpack.c.bf16 %v4080, %v4079
      %v4143 = vpack.c.bf16 %v4082, %v4081
      %v4144 = vpack.c.bf16 %v4084, %v4083
      %v4145 = vpack.c.bf16 %v4086, %v4085
      %v4146 = vpack.c.bf16 %v4088, %v4087
      %v4147 = vpack.c.bf16 %v4090, %v4089
      %v4148 = vpack.c.bf16 %v4092, %v4091
      %v4149 = vpack.c.bf16 %v4094, %v4093
      %v4150 = vpack.c.bf16 %v4096, %v4095
      %v4151 = vpack.c.bf16 %v4098, %v4097
      %v4152 = vpack.c.bf16 %v4100, %v4099
      %v4153 = vpack.c.bf16 %v4102, %v4101
      %v4154 = vpack.c.bf16 %v4104, %v4103
      %v4155 = vpack.c.bf16 %v4106, %v4105
      %v4156 = vpack.c.bf16 %v4108, %v4107
      %v4157 = vpack.c.bf16 %v4110, %v4109
      %v4158 = vpack.c.bf16 %v4112, %v4111
      %v4159 = vpack.c.bf16 %v4114, %v4113
      %v4160 = vpack.c.bf16 %v4116, %v4115
      %v4161 = vpack.c.bf16 %v4118, %v4117
      %v4162 = vpack.c.bf16 %v4120, %v4119
      %v4163 = vpack.c.bf16 %v4122, %v4121
      %v4164 = vpack.c.bf16 %v4124, %v4123
      %v4165 = vpack.c.bf16 %v4126, %v4125
      %v4166 = vpack.c.bf16 %v4128, %v4127
      %v4167 = vpack.c.bf16 %v4130, %v4129
      %v4168 = vpack.c.bf16 %v4132, %v4131
      %v4169 = vpack.c.bf16 %v4134, %v4133
      %v4170 = vpack.c.bf16 %v4136, %v4135
      %v4171 = vpack.c.bf16 %v4138, %v4137
      %v4172 = vpack.c.bf16 %v4140, %v4139
      %s4173 = scalar_lea.vmem %s3, 512
      %v4174 = vld [vmem:[%s4173] sm:$0xf]
      %v4175 = vld [vmem:[%s4173 + $0x4] sm:$0xf]
      %v4176 = vld [vmem:[%s4173 + $0x8] sm:$0xf]
      %v4177 = vld [vmem:[%s4173 + $0xc] sm:$0xf]
      %v4178 = vld [vmem:[%s4173 + $0x10] sm:$0xf]
      %v4179 = vld [vmem:[%s4173 + $0x14] sm:$0xf]
      %v4180 = vld [vmem:[%s4173 + $0x18] sm:$0xf]
      %v4181 = vld [vmem:[%s4173 + $0x1c] sm:$0xf]
      %v4182 = vld [vmem:[%s4173 + $0x20] sm:$0xf]
      %v4183 = vld [vmem:[%s4173 + $0x24] sm:$0xf]
      %v4184 = vld [vmem:[%s4173 + $0x28] sm:$0xf]
      %v4185 = vld [vmem:[%s4173 + $0x2c] sm:$0xf]
      %v4186 = vld [vmem:[%s4173 + $0x30] sm:$0xf]
      %v4187 = vld [vmem:[%s4173 + $0x34] sm:$0xf]
      %v4188 = vld [vmem:[%s4173 + $0x38] sm:$0xf]
      %v4189 = vld [vmem:[%s4173 + $0x3c] sm:$0xf]
      %v4206 = vunpack.c.l.b16 %v4174
      %v4207 = vunpack.c.l.b16 %v4175
      %v4208 = vunpack.c.l.b16 %v4176
      %v4209 = vunpack.c.l.b16 %v4177
      %v4210 = vunpack.c.l.b16 %v4178
      %v4211 = vunpack.c.l.b16 %v4179
      %v4212 = vunpack.c.l.b16 %v4180
      %v4213 = vunpack.c.l.b16 %v4181
      %v4214 = vunpack.c.l.b16 %v4182
      %v4215 = vunpack.c.l.b16 %v4183
      %v4216 = vunpack.c.l.b16 %v4184
      %v4217 = vunpack.c.l.b16 %v4185
      %v4218 = vunpack.c.l.b16 %v4186
      %v4219 = vunpack.c.l.b16 %v4187
      %v4220 = vunpack.c.l.b16 %v4188
      %v4221 = vunpack.c.l.b16 %v4189
      %v4222 = vpack.c.b16 %v4207, %v4206
      %v4223 = vpack.c.b16 %v4209, %v4208
      %v4224 = vpack.c.b16 %v4211, %v4210
      %v4225 = vpack.c.b16 %v4213, %v4212
      %v4226 = vpack.c.b16 %v4215, %v4214
      %v4227 = vpack.c.b16 %v4217, %v4216
      %v4228 = vpack.c.b16 %v4219, %v4218
      %v4229 = vpack.c.b16 %v4221, %v4220
      %4238 = vmatprep.subr.bf16.mxu0 0
      %4239 = vmatpush1.bf16.msra.mxu0 %v4229
      %4240 = vmatprep.subr.bf16.mxu0 0
      %4241 = vmatpush1.bf16.msra.mxu0 %v4228
      %4242 = vmatprep.subr.bf16.mxu0 0
      %4243 = vmatpush1.bf16.msra.mxu0 %v4227
      %4244 = vmatprep.subr.bf16.mxu0 0
      %4245 = vmatpush1.bf16.msra.mxu0 %v4226
      %4246 = vmatprep.subr.bf16.mxu0 0
      %4247 = vmatpush1.bf16.msra.mxu0 %v4225
      %4248 = vmatprep.subr.bf16.mxu0 0
      %4249 = vmatpush1.bf16.msra.mxu0 %v4224
      %4250 = vmatprep.subr.bf16.mxu0 0
      %4251 = vmatpush1.bf16.msra.mxu0 %v4223
      %4252 = vmatprep.subr.bf16.mxu0 0
      %4253 = vmatpush1.bf16.msra.mxu0 %v4222
      %4254 = vmatprep.subr.bf16.mxu0 0
      %4255 = vmatpush2.bf16.msra.mxu0 0
      %4256 = vmatprep.subr.bf16.mxu0 0
      %4257 = vmatpush2.bf16.msra.mxu0 0
      %4258 = vmatprep.subr.bf16.mxu0 0
      %4259 = vmatpush2.bf16.msra.mxu0 0
      %4260 = vmatprep.subr.bf16.mxu0 0
      %4261 = vmatpush2.bf16.msra.mxu0 0
      %4262 = vmatprep.subr.bf16.mxu0 0
      %4263 = vmatpush2.bf16.msra.mxu0 0
      %4264 = vmatprep.subr.bf16.mxu0 0
      %4265 = vmatpush2.bf16.msra.mxu0 0
      %4266 = vmatprep.subr.bf16.mxu0 0
      %4267 = vmatpush2.bf16.msra.mxu0 0
      %4268 = vmatprep.subr.bf16.mxu0 0
      %4269 = vmatpush2.bf16.msra.mxu0 0
      %4270 = vmatprep.mubr.bf16.mxu0 0
      %4271 = vmatmul.mubr.bf16.gmra.mxu0 %v4141
      %v4272 = vpop.f32.mrf.mxu0
      %v4273 = vadd.f32 0.0, %v4272
      %v4274 = vpop.f32.mrf.mxu0
      %v4275 = vpop.f32.mrf.mxu0
      %v4276 = vadd.f32 0.0, %v4275
      %v4277 = vpop.f32.mrf.mxu0
      %4278 = vmatprep.mubr.bf16.mxu0 0
      %4279 = vmatmul.mubr.bf16.gmra.mxu0 %v4142
      %v4280 = vpop.f32.mrf.mxu0
      %v4281 = vpop.f32.mrf.mxu0
      %v4282 = vpop.f32.mrf.mxu0
      %v4283 = vpop.f32.mrf.mxu0
      %4284 = vmatprep.mubr.bf16.mxu0 0
      %4285 = vmatmul.mubr.bf16.gmra.mxu0 %v4143
      %v4286 = vpop.f32.mrf.mxu0
      %v4287 = vadd.f32 0.0, %v4286
      %v4288 = vpop.f32.mrf.mxu0
      %v4289 = vpop.f32.mrf.mxu0
      %v4290 = vadd.f32 0.0, %v4289
      %v4291 = vpop.f32.mrf.mxu0
      %4292 = vmatprep.mubr.bf16.mxu0 0
      %4293 = vmatmul.mubr.bf16.gmra.mxu0 %v4144
      %v4294 = vpop.f32.mrf.mxu0
      %v4295 = vpop.f32.mrf.mxu0
      %v4296 = vpop.f32.mrf.mxu0
      %v4297 = vpop.f32.mrf.mxu0
      %4298 = vmatprep.mubr.bf16.mxu0 0
      %4299 = vmatmul.mubr.bf16.gmra.mxu0 %v4145
      %v4300 = vpop.f32.mrf.mxu0
      %v4301 = vadd.f32 0.0, %v4300
      %v4302 = vpop.f32.mrf.mxu0
      %v4303 = vpop.f32.mrf.mxu0
      %v4304 = vadd.f32 0.0, %v4303
      %v4305 = vpop.f32.mrf.mxu0
      %4306 = vmatprep.mubr.bf16.mxu0 0
      %4307 = vmatmul.mubr.bf16.gmra.mxu0 %v4146
      %v4308 = vpop.f32.mrf.mxu0
      %v4309 = vpop.f32.mrf.mxu0
      %v4310 = vpop.f32.mrf.mxu0
      %v4311 = vpop.f32.mrf.mxu0
      %4312 = vmatprep.mubr.bf16.mxu0 0
      %4313 = vmatmul.mubr.bf16.gmra.mxu0 %v4147
      %v4314 = vpop.f32.mrf.mxu0
      %v4315 = vadd.f32 0.0, %v4314
      %v4316 = vpop.f32.mrf.mxu0
      %v4317 = vpop.f32.mrf.mxu0
      %v4318 = vadd.f32 0.0, %v4317
      %v4319 = vpop.f32.mrf.mxu0
      %4320 = vmatprep.mubr.bf16.mxu0 0
      %4321 = vmatmul.mubr.bf16.gmra.mxu0 %v4148
      %v4322 = vpop.f32.mrf.mxu0
      %v4323 = vpop.f32.mrf.mxu0
      %v4324 = vpop.f32.mrf.mxu0
      %v4325 = vpop.f32.mrf.mxu0
      %4326 = vmatprep.mubr.bf16.mxu0 0
      %4327 = vmatmul.mubr.bf16.gmra.mxu0 %v4149
      %v4328 = vpop.f32.mrf.mxu0
      %v4329 = vadd.f32 0.0, %v4328
      %v4330 = vpop.f32.mrf.mxu0
      %v4331 = vpop.f32.mrf.mxu0
      %v4332 = vadd.f32 0.0, %v4331
      %v4333 = vpop.f32.mrf.mxu0
      %4334 = vmatprep.mubr.bf16.mxu0 0
      %4335 = vmatmul.mubr.bf16.gmra.mxu0 %v4150
      %v4336 = vpop.f32.mrf.mxu0
      %v4337 = vpop.f32.mrf.mxu0
      %v4338 = vpop.f32.mrf.mxu0
      %v4339 = vpop.f32.mrf.mxu0
      %4340 = vmatprep.mubr.bf16.mxu0 0
      %4341 = vmatmul.mubr.bf16.gmra.mxu0 %v4151
      %v4342 = vpop.f32.mrf.mxu0
      %v4343 = vadd.f32 0.0, %v4342
      %v4344 = vpop.f32.mrf.mxu0
      %v4345 = vpop.f32.mrf.mxu0
      %v4346 = vadd.f32 0.0, %v4345
      %v4347 = vpop.f32.mrf.mxu0
      %4348 = vmatprep.mubr.bf16.mxu0 0
      %4349 = vmatmul.mubr.bf16.gmra.mxu0 %v4152
      %v4350 = vpop.f32.mrf.mxu0
      %v4351 = vpop.f32.mrf.mxu0
      %v4352 = vpop.f32.mrf.mxu0
      %v4353 = vpop.f32.mrf.mxu0
      %4354 = vmatprep.mubr.bf16.mxu0 0
      %4355 = vmatmul.mubr.bf16.gmra.mxu0 %v4153
      %v4356 = vpop.f32.mrf.mxu0
      %v4357 = vadd.f32 0.0, %v4356
      %v4358 = vpop.f32.mrf.mxu0
      %v4359 = vpop.f32.mrf.mxu0
      %v4360 = vadd.f32 0.0, %v4359
      %v4361 = vpop.f32.mrf.mxu0
      %4362 = vmatprep.mubr.bf16.mxu0 0
      %4363 = vmatmul.mubr.bf16.gmra.mxu0 %v4154
      %v4364 = vpop.f32.mrf.mxu0
      %v4365 = vpop.f32.mrf.mxu0
      %v4366 = vpop.f32.mrf.mxu0
      %v4367 = vpop.f32.mrf.mxu0
      %4368 = vmatprep.mubr.bf16.mxu0 0
      %4369 = vmatmul.mubr.bf16.gmra.mxu0 %v4155
      %v4370 = vpop.f32.mrf.mxu0
      %v4371 = vadd.f32 0.0, %v4370
      %v4372 = vpop.f32.mrf.mxu0
      %v4373 = vpop.f32.mrf.mxu0
      %v4374 = vadd.f32 0.0, %v4373
      %v4375 = vpop.f32.mrf.mxu0
      %4376 = vmatprep.mubr.bf16.mxu0 0
      %4377 = vmatmul.mubr.bf16.gmra.mxu0 %v4156
      %v4378 = vpop.f32.mrf.mxu0
      %v4379 = vpop.f32.mrf.mxu0
      %v4380 = vpop.f32.mrf.mxu0
      %v4381 = vpop.f32.mrf.mxu0
      %4382 = vmatprep.mubr.bf16.mxu0 0
      %4383 = vmatmul.mubr.bf16.gmra.mxu0 %v4157
      %v4384 = vpop.f32.mrf.mxu0
      %v4385 = vadd.f32 0.0, %v4384
      %v4386 = vpop.f32.mrf.mxu0
      %v4387 = vpop.f32.mrf.mxu0
      %v4388 = vadd.f32 0.0, %v4387
      %v4389 = vpop.f32.mrf.mxu0
      %4390 = vmatprep.mubr.bf16.mxu0 0
      %4391 = vmatmul.mubr.bf16.gmra.mxu0 %v4158
      %v4392 = vpop.f32.mrf.mxu0
      %v4393 = vpop.f32.mrf.mxu0
      %v4394 = vpop.f32.mrf.mxu0
      %v4395 = vpop.f32.mrf.mxu0
      %4396 = vmatprep.mubr.bf16.mxu0 0
      %4397 = vmatmul.mubr.bf16.gmra.mxu0 %v4159
      %v4398 = vpop.f32.mrf.mxu0
      %v4399 = vadd.f32 0.0, %v4398
      %v4400 = vpop.f32.mrf.mxu0
      %v4401 = vpop.f32.mrf.mxu0
      %v4402 = vadd.f32 0.0, %v4401
      %v4403 = vpop.f32.mrf.mxu0
      %4404 = vmatprep.mubr.bf16.mxu0 0
      %4405 = vmatmul.mubr.bf16.gmra.mxu0 %v4160
      %v4406 = vpop.f32.mrf.mxu0
      %v4407 = vpop.f32.mrf.mxu0
      %v4408 = vpop.f32.mrf.mxu0
      %v4409 = vpop.f32.mrf.mxu0
      %4410 = vmatprep.mubr.bf16.mxu0 0
      %4411 = vmatmul.mubr.bf16.gmra.mxu0 %v4161
      %v4412 = vpop.f32.mrf.mxu0
      %v4413 = vadd.f32 0.0, %v4412
      %v4414 = vpop.f32.mrf.mxu0
      %v4415 = vpop.f32.mrf.mxu0
      %v4416 = vadd.f32 0.0, %v4415
      %v4417 = vpop.f32.mrf.mxu0
      %4418 = vmatprep.mubr.bf16.mxu0 0
      %4419 = vmatmul.mubr.bf16.gmra.mxu0 %v4162
      %v4420 = vpop.f32.mrf.mxu0
      %v4421 = vpop.f32.mrf.mxu0
      %v4422 = vpop.f32.mrf.mxu0
      %v4423 = vpop.f32.mrf.mxu0
      %4424 = vmatprep.mubr.bf16.mxu0 0
      %4425 = vmatmul.mubr.bf16.gmra.mxu0 %v4163
      %v4426 = vpop.f32.mrf.mxu0
      %v4427 = vadd.f32 0.0, %v4426
      %v4428 = vpop.f32.mrf.mxu0
      %v4429 = vpop.f32.mrf.mxu0
      %v4430 = vadd.f32 0.0, %v4429
      %v4431 = vpop.f32.mrf.mxu0
      %4432 = vmatprep.mubr.bf16.mxu0 0
      %4433 = vmatmul.mubr.bf16.gmra.mxu0 %v4164
      %v4434 = vpop.f32.mrf.mxu0
      %v4435 = vpop.f32.mrf.mxu0
      %v4436 = vpop.f32.mrf.mxu0
      %v4437 = vpop.f32.mrf.mxu0
      %4438 = vmatprep.mubr.bf16.mxu0 0
      %4439 = vmatmul.mubr.bf16.gmra.mxu0 %v4165
      %v4440 = vpop.f32.mrf.mxu0
      %v4441 = vadd.f32 0.0, %v4440
      %v4442 = vpop.f32.mrf.mxu0
      %v4443 = vpop.f32.mrf.mxu0
      %v4444 = vadd.f32 0.0, %v4443
      %v4445 = vpop.f32.mrf.mxu0
      %4446 = vmatprep.mubr.bf16.mxu0 0
      %4447 = vmatmul.mubr.bf16.gmra.mxu0 %v4166
      %v4448 = vpop.f32.mrf.mxu0
      %v4449 = vpop.f32.mrf.mxu0
      %v4450 = vpop.f32.mrf.mxu0
      %v4451 = vpop.f32.mrf.mxu0
      %4452 = vmatprep.mubr.bf16.mxu0 0
      %4453 = vmatmul.mubr.bf16.gmra.mxu0 %v4167
      %v4454 = vpop.f32.mrf.mxu0
      %v4455 = vadd.f32 0.0, %v4454
      %v4456 = vpop.f32.mrf.mxu0
      %v4457 = vpop.f32.mrf.mxu0
      %v4458 = vadd.f32 0.0, %v4457
      %v4459 = vpop.f32.mrf.mxu0
      %4460 = vmatprep.mubr.bf16.mxu0 0
      %4461 = vmatmul.mubr.bf16.gmra.mxu0 %v4168
      %v4462 = vpop.f32.mrf.mxu0
      %v4463 = vpop.f32.mrf.mxu0
      %v4464 = vpop.f32.mrf.mxu0
      %v4465 = vpop.f32.mrf.mxu0
      %4466 = vmatprep.mubr.bf16.mxu0 0
      %4467 = vmatmul.mubr.bf16.gmra.mxu0 %v4169
      %v4468 = vpop.f32.mrf.mxu0
      %v4469 = vadd.f32 0.0, %v4468
      %v4470 = vpop.f32.mrf.mxu0
      %v4471 = vpop.f32.mrf.mxu0
      %v4472 = vadd.f32 0.0, %v4471
      %v4473 = vpop.f32.mrf.mxu0
      %4474 = vmatprep.mubr.bf16.mxu0 0
      %4475 = vmatmul.mubr.bf16.gmra.mxu0 %v4170
      %v4476 = vpop.f32.mrf.mxu0
      %v4477 = vpop.f32.mrf.mxu0
      %v4478 = vpop.f32.mrf.mxu0
      %v4479 = vpop.f32.mrf.mxu0
      %4480 = vmatprep.mubr.bf16.mxu0 0
      %4481 = vmatmul.mubr.bf16.gmra.mxu0 %v4171
      %v4482 = vpop.f32.mrf.mxu0
      %v4483 = vadd.f32 0.0, %v4482
      %v4484 = vpop.f32.mrf.mxu0
      %v4485 = vpop.f32.mrf.mxu0
      %v4486 = vadd.f32 0.0, %v4485
      %v4487 = vpop.f32.mrf.mxu0
      %4488 = vmatprep.mubr.bf16.mxu0 0
      %4489 = vmatmul.mubr.bf16.gmra.mxu0 %v4172
      %v4490 = vpop.f32.mrf.mxu0
      %v4491 = vpop.f32.mrf.mxu0
      %v4492 = vpop.f32.mrf.mxu0
      %v4493 = vpop.f32.mrf.mxu0
      %4494 = vdwg.mxu0
      %v4495 = vadd.f32 %v4044, %v4273
      %v4496 = vadd.f32 %v4045, %v4276
      %v4497 = vadd.f32 %v4046, %v4287
      %v4498 = vadd.f32 %v4047, %v4290
      %v4499 = vadd.f32 %v4048, %v4301
      %v4500 = vadd.f32 %v4049, %v4304
      %v4501 = vadd.f32 %v4050, %v4315
      %v4502 = vadd.f32 %v4051, %v4318
      %v4503 = vadd.f32 %v4052, %v4329
      %v4504 = vadd.f32 %v4053, %v4332
      %v4505 = vadd.f32 %v4054, %v4343
      %v4506 = vadd.f32 %v4055, %v4346
      %v4507 = vadd.f32 %v4056, %v4357
      %v4508 = vadd.f32 %v4057, %v4360
      %v4509 = vadd.f32 %v4058, %v4371
      %v4510 = vadd.f32 %v4059, %v4374
      %v4511 = vadd.f32 %v4060, %v4385
      %v4512 = vadd.f32 %v4061, %v4388
      %v4513 = vadd.f32 %v4062, %v4399
      %v4514 = vadd.f32 %v4063, %v4402
      %v4515 = vadd.f32 %v4064, %v4413
      %v4516 = vadd.f32 %v4065, %v4416
      %v4517 = vadd.f32 %v4066, %v4427
      %v4518 = vadd.f32 %v4067, %v4430
      %v4519 = vadd.f32 %v4068, %v4441
      %v4520 = vadd.f32 %v4069, %v4444
      %v4521 = vadd.f32 %v4070, %v4455
      %v4522 = vadd.f32 %v4071, %v4458
      %v4523 = vadd.f32 %v4072, %v4469
      %v4524 = vadd.f32 %v4073, %v4472
      %v4525 = vadd.f32 %v4074, %v4483
      %v4526 = vadd.f32 %v4075, %v4486
      %4527 = vst [vmem:[%s231] sm:$0xff] %v4495
      %4528 = vst [vmem:[%s231 + $0x8] sm:$0xff] %v4496
      %4529 = vst [vmem:[%s231 + $0x10] sm:$0xff] %v4497
      %4530 = vst [vmem:[%s231 + $0x18] sm:$0xff] %v4498
      %4531 = vst [vmem:[%s231 + $0x20] sm:$0xff] %v4499
      %4532 = vst [vmem:[%s231 + $0x28] sm:$0xff] %v4500
      %4533 = vst [vmem:[%s231 + $0x30] sm:$0xff] %v4501
      %4534 = vst [vmem:[%s231 + $0x38] sm:$0xff] %v4502
      %4535 = vst [vmem:[%s231 + $0x40] sm:$0xff] %v4503
      %4536 = vst [vmem:[%s231 + $0x48] sm:$0xff] %v4504
      %4537 = vst [vmem:[%s231 + $0x50] sm:$0xff] %v4505
      %4538 = vst [vmem:[%s231 + $0x58] sm:$0xff] %v4506
      %4539 = vst [vmem:[%s231 + $0x60] sm:$0xff] %v4507
      %4540 = vst [vmem:[%s231 + $0x68] sm:$0xff] %v4508
      %4541 = vst [vmem:[%s231 + $0x70] sm:$0xff] %v4509
      %4542 = vst [vmem:[%s231 + $0x78] sm:$0xff] %v4510
      %4543 = vst [vmem:[%s231 + $0x80] sm:$0xff] %v4511
      %4544 = vst [vmem:[%s231 + $0x88] sm:$0xff] %v4512
      %4545 = vst [vmem:[%s231 + $0x90] sm:$0xff] %v4513
      %4546 = vst [vmem:[%s231 + $0x98] sm:$0xff] %v4514
      %4547 = vst [vmem:[%s231 + $0xa0] sm:$0xff] %v4515
      %4548 = vst [vmem:[%s231 + $0xa8] sm:$0xff] %v4516
      %4549 = vst [vmem:[%s231 + $0xb0] sm:$0xff] %v4517
      %4550 = vst [vmem:[%s231 + $0xb8] sm:$0xff] %v4518
      %4551 = vst [vmem:[%s231 + $0xc0] sm:$0xff] %v4519
      %4552 = vst [vmem:[%s231 + $0xc8] sm:$0xff] %v4520
      %4553 = vst [vmem:[%s231 + $0xd0] sm:$0xff] %v4521
      %4554 = vst [vmem:[%s231 + $0xd8] sm:$0xff] %v4522
      %4555 = vst [vmem:[%s231 + $0xe0] sm:$0xff] %v4523
      %4556 = vst [vmem:[%s231 + $0xe8] sm:$0xff] %v4524
      %4557 = vst [vmem:[%s231 + $0xf0] sm:$0xff] %v4525
      %4558 = vst [vmem:[%s231 + $0xf8] sm:$0xff] %v4526
      %v4559 = vadd.f32 %v4495, %v4496
      %v4560 = vadd.f32 %v4559, %v4497
      %v4561 = vadd.f32 %v4560, %v4498
      %v4562 = vadd.f32 %v4561, %v4499
      %v4563 = vadd.f32 %v4562, %v4500
      %v4564 = vadd.f32 %v4563, %v4501
      %v4565 = vadd.f32 %v4564, %v4502
      %v4566 = vadd.f32 %v4565, %v4503
      %v4567 = vadd.f32 %v4566, %v4504
      %v4568 = vadd.f32 %v4567, %v4505
      %v4569 = vadd.f32 %v4568, %v4506
      %v4570 = vadd.f32 %v4569, %v4507
      %v4571 = vadd.f32 %v4570, %v4508
      %v4572 = vadd.f32 %v4571, %v4509
      %v4573 = vadd.f32 %v4572, %v4510
      %v4574 = vadd.f32 %v4573, %v4511
      %v4575 = vadd.f32 %v4574, %v4512
      %v4576 = vadd.f32 %v4575, %v4513
      %v4577 = vadd.f32 %v4576, %v4514
      %v4578 = vadd.f32 %v4577, %v4515
      %v4579 = vadd.f32 %v4578, %v4516
      %v4580 = vadd.f32 %v4579, %v4517
      %v4581 = vadd.f32 %v4580, %v4518
      %v4582 = vadd.f32 %v4581, %v4519
      %v4583 = vadd.f32 %v4582, %v4520
      %v4584 = vadd.f32 %v4583, %v4521
      %v4585 = vadd.f32 %v4584, %v4522
      %v4586 = vadd.f32 %v4585, %v4523
      %v4587 = vadd.f32 %v4586, %v4524
      %v4588 = vadd.f32 %v4587, %v4525
      %v4589 = vadd.f32 %v4588, %v4526
      %v4590 = vrot.slane %v4589, 4
      %v4591 = vadd.f32 %v4589, %v4590
      %v4592 = vrot.slane %v4591, 2
      %v4593 = vadd.f32 %v4591, %v4592
      %v4594 = vrot.slane %v4593, 1
      %v4595 = vadd.f32 %v4593, %v4594
      %4596 = vst [vmem:[%s235] sm:$0x1] %v4595
      %v4597 = vmul.f32 %v4495, %v4495
      %v4598 = vmul.f32 %v4496, %v4496
      %v4599 = vmul.f32 %v4497, %v4497
      %v4600 = vmul.f32 %v4498, %v4498
      %v4601 = vmul.f32 %v4499, %v4499
      %v4602 = vmul.f32 %v4500, %v4500
      %v4603 = vmul.f32 %v4501, %v4501
      %v4604 = vmul.f32 %v4502, %v4502
      %v4605 = vmul.f32 %v4503, %v4503
      %v4606 = vmul.f32 %v4504, %v4504
      %v4607 = vmul.f32 %v4505, %v4505
      %v4608 = vmul.f32 %v4506, %v4506
      %v4609 = vmul.f32 %v4507, %v4507
      %v4610 = vmul.f32 %v4508, %v4508
      %v4611 = vmul.f32 %v4509, %v4509
      %v4612 = vmul.f32 %v4510, %v4510
      %v4613 = vmul.f32 %v4511, %v4511
      %v4614 = vmul.f32 %v4512, %v4512
      %v4615 = vmul.f32 %v4513, %v4513
      %v4616 = vmul.f32 %v4514, %v4514
      %v4617 = vmul.f32 %v4515, %v4515
      %v4618 = vmul.f32 %v4516, %v4516
      %v4619 = vmul.f32 %v4517, %v4517
      %v4620 = vmul.f32 %v4518, %v4518
      %v4621 = vmul.f32 %v4519, %v4519
      %v4622 = vmul.f32 %v4520, %v4520
      %v4623 = vmul.f32 %v4521, %v4521
      %v4624 = vmul.f32 %v4522, %v4522
      %v4625 = vmul.f32 %v4523, %v4523
      %v4626 = vmul.f32 %v4524, %v4524
      %v4627 = vmul.f32 %v4525, %v4525
      %v4628 = vmul.f32 %v4526, %v4526
      %v4629 = vadd.f32 %v4597, %v4598
      %v4630 = vadd.f32 %v4629, %v4599
      %v4631 = vadd.f32 %v4630, %v4600
      %v4632 = vadd.f32 %v4631, %v4601
      %v4633 = vadd.f32 %v4632, %v4602
      %v4634 = vadd.f32 %v4633, %v4603
      %v4635 = vadd.f32 %v4634, %v4604
      %v4636 = vadd.f32 %v4635, %v4605
      %v4637 = vadd.f32 %v4636, %v4606
      %v4638 = vadd.f32 %v4637, %v4607
      %v4639 = vadd.f32 %v4638, %v4608
      %v4640 = vadd.f32 %v4639, %v4609
      %v4641 = vadd.f32 %v4640, %v4610
      %v4642 = vadd.f32 %v4641, %v4611
      %v4643 = vadd.f32 %v4642, %v4612
      %v4644 = vadd.f32 %v4643, %v4613
      %v4645 = vadd.f32 %v4644, %v4614
      %v4646 = vadd.f32 %v4645, %v4615
      %v4647 = vadd.f32 %v4646, %v4616
      %v4648 = vadd.f32 %v4647, %v4617
      %v4649 = vadd.f32 %v4648, %v4618
      %v4650 = vadd.f32 %v4649, %v4619
      %v4651 = vadd.f32 %v4650, %v4620
      %v4652 = vadd.f32 %v4651, %v4621
      %v4653 = vadd.f32 %v4652, %v4622
      %v4654 = vadd.f32 %v4653, %v4623
      %v4655 = vadd.f32 %v4654, %v4624
      %v4656 = vadd.f32 %v4655, %v4625
      %v4657 = vadd.f32 %v4656, %v4626
      %v4658 = vadd.f32 %v4657, %v4627
      %v4659 = vadd.f32 %v4658, %v4628
      %v4660 = vrot.slane %v4659, 4
      %v4661 = vadd.f32 %v4659, %v4660
      %v4662 = vrot.slane %v4661, 2
      %v4663 = vadd.f32 %v4661, %v4662
      %v4664 = vrot.slane %v4663, 1
      %v4665 = vadd.f32 %v4663, %v4664
      %4666 = vst [vmem:[%s235 + $0x1] sm:$0x1] %v4665
      %p4667 = scmp.lt.s32.totalorder %s17, 1
      %s4668 = scalar_select %p4667, %s17, 1
      %s4669 = smul.addr %s4668, 32
      %s4670 = smul.addr %s4669, 8
      %s4671 = scalar_lea.vmem %s4, %s4670
      %p4672 = scmp.lt.s32.totalorder %s17, 1
      %s4673 = scalar_select %p4672, %s17, 1
      %s4674 = smul.addr %s4673, 2
      %s4675 = scalar_lea.vmem %s5, %s4674
      // Predicated region
      $region37: #{basic_block_forward.4} parent=35 // pred_check
        %p4676 = pneg %p124
      $region38: #{basic_block_forward.4} parent=35 // pred_check_branch
        %4678 = sbr.rel (%p4676) target = $region40
      $region39: #{basic_block_forward.4} parent=35 // pred_region
        _
      $region40: #{basic_block_forward.4} parent=35 // pred_fallthru
        _
      // Predicated region
      $region41: #{basic_block_forward.4} parent=35 // pred_check
        %p4679 = pneg %p150
      $region42: #{basic_block_forward.4} parent=35 // pred_check_branch
        %4681 = sbr.rel (%p4679) target = $region44
      $region43: #{basic_block_forward.4} parent=35 // pred_region
        _
      $region44: #{basic_block_forward.4} parent=35 // pred_fallthru
        _
    $region36: #{basic_block_forward.4} parent=5 // pred_fallthru
      _
    %p4682 = scmp.le.s32.totalorder 2, %s12
    // Predicated region
    $region45: #{basic_block_forward.4} parent=5 // pred_check
      %p4683 = pneg %p4682
    $region46: #{basic_block_forward.4} parent=5 // pred_check_branch
      %4685 = sbr.rel (%p4683) target = $region48
    $region47: #{basic_block_forward.4} parent=5 // pred_region
      %s4686 = ssub.s32 %s12, 2
      // Predicated region
      $region49: #{basic_block_forward.4} parent=47 // pred_check
        %p4687 = pneg %p130
      $region50: #{basic_block_forward.4} parent=47 // pred_check_branch
        %4689 = sbr.rel (%p4687) target = $region52
      $region51: #{basic_block_forward.4} parent=47 // pred_region
        %p4690 = scmp.lt.s32.totalorder %s18, 1
        %s4691 = scalar_select %p4690, %s18, 1
        %s4692 = smul.addr %s4691, 32
        %s4693 = smul.addr %s4692, 8
        %s4694 = scalar_lea.vmem %s4, %s4693
      $region52: #{basic_block_forward.4} parent=47 // pred_fallthru
        _
      // Predicated region
      $region53: #{basic_block_forward.4} parent=47 // pred_check
        %p4695 = pneg %p156
      $region54: #{basic_block_forward.4} parent=47 // pred_check_branch
        %4697 = sbr.rel (%p4695) target = $region56
      $region55: #{basic_block_forward.4} parent=47 // pred_region
        %p4698 = scmp.lt.s32.totalorder %s18, 1
        %s4699 = scalar_select %p4698, %s18, 1
        %s4700 = smul.addr %s4699, 2
        %s4701 = scalar_lea.vmem %s5, %s4700
      $region56: #{basic_block_forward.4} parent=47 // pred_fallthru
        _
    $region48: #{basic_block_forward.4} parent=5 // pred_fallthru
      _
  $region6: #{basic_block_forward.4} parent=0 // loop_footer
    %s16 = sadd.s32 1, %s12
  $region7: #{basic_block_forward.4} parent=0 // loop_footer_branch
    %11 = sbr.rel target = $region3
  $region8: #{basic_block_forward.4} parent=0 // loop_exit
    _

</llo_original>
